<compile_context>
chip_gen: v7x
topology: tpu7x:2x2x1
jax: 0.10.0
libtpu: 0.0.40
codegen_flags: <defaults>
</compile_context>

<pallas_src>
import functools
import math

import jax
import jax.numpy as jnp
import numpy as np
from jax import lax
from jax.experimental import pallas as pl
from jax.experimental.pallas import tpu as pltpu

NEG_SLOPE = 0.2              # FusedLeakyReLU negative slope
ACT_SCALE = math.sqrt(2.0)   # FusedLeakyReLU output scale
# Separable, normalized blur taps: outer(BLUR_TAPS, BLUR_TAPS) == outer([1,3,3,1],[1,3,3,1])/64
BLUR_TAPS = (0.125, 0.375, 0.375, 0.125)


def make_blur_kernel_2d():
    k = np.outer([1.0, 3.0, 3.0, 1.0], [1.0, 3.0, 3.0, 1.0])
    return k / k.sum()


def _leaky_scale(y):
    # leaky_relu(y, 0.2) * sqrt(2) with the scale folded into the select.
    return y * jnp.where(y >= 0.0, ACT_SCALE, ACT_SCALE * NEG_SLOPE)


# ----------------------------------------------------------------------------
# Fused kernel, downsample=True path (conv1+act -> blur -> stride-2 conv2+act)
#
# Column-pair-folded layout: a logical array A[r, w, c] (w of even extent) is
# stored as Af[r, w//2, (w % 2)*C + c]  -- even/odd columns in the two channel
# halves.  This makes every access (including the stride-2 tap gather of conv2)
# a unit-stride static slice.
# ----------------------------------------------------------------------------
def _disc_block_down_kernel(xf_ref, w1_ref, b1_ref, w2_ref, b2_ref, out_ref,
                            xpf, patch, y1pf, hbf, *, H, W, Cin, Cout):
    Wf = W // 2                 # folded width of the input / conv1 output
    Ho, Wo = H // 2, W // 2     # conv2 output spatial size
    C2 = 2 * Cin
    K = 9 * Cin
    f32, bf16 = jnp.float32, jnp.bfloat16

    # ---- stage 0: zero-pad (halo=1) the input into VMEM, folded, bf16 ------
    xpf[...] = jnp.zeros_like(xpf)
    # input col 2m   -> padded col 2m+1 -> block m,   odd  half
    # input col 2m+1 -> padded col 2m+2 -> block m+1, even half
    xpf[1:H + 1, 0:Wf, Cin:C2] = xf_ref[:, :, 0:Cin].astype(bf16)
    xpf[1:H + 1, 1:Wf + 1, 0:Cin] = xf_ref[:, :, Cin:C2].astype(bf16)

    # ---- stage 1: conv1 (3x3, s1, p1) as one big-K im2col matmul -----------
    # patch[p, h, q, (3*dy+dx)*Cin + c] = xpad[h+dy, (2q+p)+dx, c]
    for p in range(2):
        for dy in range(3):
            for dx in range(3):
                t = dy * 3 + dx
                q0 = (p + dx) // 2
                pp = (p + dx) % 2
                patch[p, :, :, t * Cin:(t + 1) * Cin] = \
                    xpf[dy:dy + H, q0:q0 + Wf, pp * Cin:(pp + 1) * Cin]
    y1 = jnp.dot(patch[...].reshape(2 * H * Wf, K), w1_ref[...],
                 preferred_element_type=f32)
    y1 = _leaky_scale(y1 + b1_ref[...])
    y_even = y1[0:H * Wf, :].reshape(H, Wf, Cin)            # conv1 out, even cols
    y_odd = y1[H * Wf:2 * H * Wf, :].reshape(H, Wf, Cin)    # conv1 out, odd cols

    # ---- stage 2: blur input = conv1 output zero-padded by 2, folded -------
    y1pf[...] = jnp.zeros_like(y1pf)
    # conv1 col 2q+p -> padded col 2q+p+2 -> block q+1, half p
    y1pf[2:H + 2, 1:Wf + 1, 0:Cin] = y_even
    y1pf[2:H + 2, 1:Wf + 1, Cin:C2] = y_odd

    # ---- stage 3: separable 4-tap blur (horizontal, then vertical) ---------
    hbf[...] = jnp.zeros_like(hbf)
    # horizontal: hout[s, w] = sum_kx kn[kx] * ypad[s, w+kx]
    for p in range(2):
        L = Wf + 1 if p == 0 else Wf      # valid output column-pairs for parity p
        acc = jnp.zeros((H + 4, L, Cin), f32)
        for kx in range(4):
            off = (p + kx) // 2
            hh = (p + kx) % 2
            acc = acc + BLUR_TAPS[kx] * \
                y1pf[0:H + 4, off:off + L, hh * Cin:(hh + 1) * Cin]
        hbf[0:H + 4, 0:L, p * Cin:(p + 1) * Cin] = acc
    # vertical: z[r, w] = sum_ky kn[ky] * hout[r+ky, w]; computed for H+2 rows so
    # rows fold evenly (the extra last row is never read downstream).
    z = jnp.zeros((H + 2, Wf + 1, C2), f32)
    for ky in range(4):
        z = z + BLUR_TAPS[ky] * hbf[ky:ky + H + 2, :, :]
    z4 = z.reshape(Ho + 1, 2, Wf + 1, C2)   # leading-dim split: row -> (pair, parity)

    # ---- stage 4: conv2 (3x3, stride 2, pad 0) as one big-K matmul ---------
    # patch2[i, j, (3*dy+dx)*Cin + c] = blur[2i+dy, 2j+dx, c]  (reuses `patch`)
    for dy in range(3):
        for dx in range(3):
            t = dy * 3 + dx
            tap = z4[dy // 2:dy // 2 + Ho, dy % 2,
                     dx // 2:dx // 2 + Wo, (dx % 2) * Cin:(dx % 2 + 1) * Cin]
            patch[0, 0:Ho, :, t * Cin:(t + 1) * Cin] = tap.astype(bf16)
    y2 = jnp.dot(patch[0, 0:Ho, :, :].reshape(Ho * Wo, K), w2_ref[...],
                 preferred_element_type=f32)
    y2 = _leaky_scale(y2 + b2_ref[...])
    # TODO(synk): for tiny Cout (<128) the output store is lane-sparse; a padded /
    # repacked output layout would improve the store path further.
    out_ref[...] = y2.reshape(Ho, Wo, Cout).astype(out_ref.dtype)


def _disc_block_down(xf, w1m, b1m, w2m, b2m, H, W, Cin, Cout):
    N = xf.shape[0]
    Wf, Ho, Wo, C2, K = W // 2, H // 2, W // 2, 2 * Cin, 9 * Cin
    kernel = functools.partial(_disc_block_down_kernel, H=H, W=W, Cin=Cin, Cout=Cout)
    # TODO(synk): for large H / C (v7x 64 MiB VMEM), add a spatial row-tile grid
    # axis with halos instead of whole-image-per-batch blocks, and load the
    # (constant-index) weights once instead of double-buffering them.
    return pl.pallas_call(
        kernel,
        out_shape=jax.ShapeDtypeStruct((N, Ho, Wo, Cout), jnp.float32),
        grid=(N,),
        in_specs=[
            pl.BlockSpec((None, H, Wf, C2), lambda b: (b, 0, 0, 0)),
            pl.BlockSpec((K, Cin), lambda b: (0, 0)),
            pl.BlockSpec((1, Cin), lambda b: (0, 0)),
            pl.BlockSpec((K, Cout), lambda b: (0, 0)),
            pl.BlockSpec((1, Cout), lambda b: (0, 0)),
        ],
        out_specs=pl.BlockSpec((None, Ho, Wo, Cout), lambda b: (b, 0, 0, 0)),
        scratch_shapes=[
            pltpu.VMEM((H + 2, Wf + 1, C2), jnp.bfloat16),   # padded input (folded)
            pltpu.VMEM((2, H, Wf, K), jnp.bfloat16),         # im2col patch (conv1; reused by conv2)
            pltpu.VMEM((H + 4, Wf + 2, C2), jnp.float32),    # conv1 out padded by 2 (folded)
            pltpu.VMEM((H + 5, Wf + 1, C2), jnp.float32),    # horizontal blur (folded)
        ],
        compiler_params=pltpu.CompilerParams(
            dimension_semantics=("parallel",),
            vmem_limit_bytes=48 * 1024 * 1024,
        ),
    )(xf, w1m, b1m, w2m, b2m)


# ----------------------------------------------------------------------------
# Fused kernel, downsample=False path (conv1+act -> conv2(s1,p1)+act, no blur)
# ----------------------------------------------------------------------------
def _disc_block_nodown_kernel(x_ref, w1_ref, b1_ref, w2_ref, b2_ref, out_ref,
                              xp, patch, yp, *, H, W, Cin, Cout):
    K = 9 * Cin
    bf16 = jnp.bfloat16

    xp[...] = jnp.zeros_like(xp)
    xp[1:H + 1, 1:W + 1, :] = x_ref[...].astype(bf16)
    for dy in range(3):
        for dx in range(3):
            t = dy * 3 + dx
            patch[:, :, t * Cin:(t + 1) * Cin] = xp[dy:dy + H, dx:dx + W, :]
    y1 = jnp.dot(patch[...].reshape(H * W, K), w1_ref[...],
                 preferred_element_type=jnp.float32)
    y1 = _leaky_scale(y1 + b1_ref[...])

    yp[...] = jnp.zeros_like(yp)
    yp[1:H + 1, 1:W + 1, :] = y1.reshape(H, W, Cin).astype(bf16)
    for dy in range(3):
        for dx in range(3):
            t = dy * 3 + dx
            patch[:, :, t * Cin:(t + 1) * Cin] = yp[dy:dy + H, dx:dx + W, :]
    y2 = jnp.dot(patch[...].reshape(H * W, K), w2_ref[...],
                 preferred_element_type=jnp.float32)
    y2 = _leaky_scale(y2 + b2_ref[...])
    out_ref[...] = y2.reshape(H, W, Cout).astype(out_ref.dtype)


def _disc_block_nodown(x, w1m, b1m, w2m, b2m, H, W, Cin, Cout):
    N = x.shape[0]
    K = 9 * Cin
    kernel = functools.partial(_disc_block_nodown_kernel, H=H, W=W, Cin=Cin, Cout=Cout)
    return pl.pallas_call(
        kernel,
        out_shape=jax.ShapeDtypeStruct((N, H, W, Cout), jnp.float32),
        grid=(N,),
        in_specs=[
            pl.BlockSpec((None, H, W, Cin), lambda b: (b, 0, 0, 0)),
            pl.BlockSpec((K, Cin), lambda b: (0, 0)),
            pl.BlockSpec((1, Cin), lambda b: (0, 0)),
            pl.BlockSpec((K, Cout), lambda b: (0, 0)),
            pl.BlockSpec((1, Cout), lambda b: (0, 0)),
        ],
        out_specs=pl.BlockSpec((None, H, W, Cout), lambda b: (b, 0, 0, 0)),
        scratch_shapes=[
            pltpu.VMEM((H + 2, W + 2, Cin), jnp.bfloat16),
            pltpu.VMEM((H, W, K), jnp.bfloat16),
            pltpu.VMEM((H + 2, W + 2, Cin), jnp.bfloat16),
        ],
        compiler_params=pltpu.CompilerParams(
            dimension_semantics=("parallel",),
            vmem_limit_bytes=48 * 1024 * 1024,
        ),
    )(x, w1m, b1m, w2m, b2m)


# ----------------------------------------------------------------------------
# Parameters (deterministic, matching the module's __init__ shapes)
# ----------------------------------------------------------------------------
def init_disc_block_params(key, in_c, out_c):
    k1, k2, k3, k4 = jax.random.split(key, 4)
    return dict(
        w1=jax.random.normal(k1, (in_c, in_c, 3, 3), jnp.float32),   # EqualConv2d (O,I,kh,kw)
        w2=jax.random.normal(k2, (out_c, in_c, 3, 3), jnp.float32),  # EqualConv2d (O,I,kh,kw)
        b1=0.1 * jax.random.normal(k3, (in_c,), jnp.float32),        # FusedLeakyReLU bias
        b2=0.1 * jax.random.normal(k4, (out_c,), jnp.float32),       # FusedLeakyReLU bias
    )


# ----------------------------------------------------------------------------
# DiscBlock forward (wrapper / glue)
# ----------------------------------------------------------------------------
def disc_block_forward(x_nchw, params, downsample=True):
    N, Cin, H, W = x_nchw.shape
    w1, b1, w2, b2 = params["w1"], params["b1"], params["w2"], params["b2"]
    Cout = w2.shape[0]
    # EqualConv2d scale; conv2's fan_in is also Cin*9 (same input channel count).
    eq_scale = 1.0 / math.sqrt(Cin * 9)

    # Weights in im2col layout ((dy,dx,cin)-major), pre-scaled, bf16 for the MXU.
    w1m = jnp.transpose(w1 * eq_scale, (2, 3, 1, 0)).reshape(9 * Cin, Cin).astype(jnp.bfloat16)
    w2m = jnp.transpose(w2 * eq_scale, (2, 3, 1, 0)).reshape(9 * Cin, Cout).astype(jnp.bfloat16)
    b1m = b1.reshape(1, Cin).astype(jnp.float32)
    b2m = b2.reshape(1, Cout).astype(jnp.float32)

    x = jnp.transpose(x_nchw, (0, 2, 3, 1)).astype(jnp.float32)      # NCHW -> NHWC

    if downsample:
        assert H % 2 == 0 and W % 2 == 0, "fused downsample kernel needs even H, W"
        # Free flat reshape: fold column pairs into channels so all in-kernel
        # accesses are unit-stride and lane density doubles.
        xf = x.reshape(N, H, W // 2, 2 * Cin)
        out = _disc_block_down(xf, w1m, b1m, w2m, b2m, H, W, Cin, Cout)
    else:
        out = _disc_block_nodown(x, w1m, b1m, w2m, b2m, H, W, Cin, Cout)

    return jnp.transpose(out, (0, 3, 1, 2))  # NHWC -> NCHW


# ----------------------------------------------------------------------------
# Pure-JAX reference (bf16 matmul inputs / f32 accumulation, like the kernel)
# ----------------------------------------------------------------------------
def ref_disc_block(x_nchw, params, downsample=True):
    w1, b1, w2, b2 = params["w1"], params["b1"], params["w2"], params["b2"]
    Cin = w1.shape[1]
    eq_scale = 1.0 / math.sqrt(Cin * 9)
    dn = ("NCHW", "OIHW", "NCHW")
    bf16 = jnp.bfloat16

    def conv(x, w, stride, pad):
        return lax.conv_general_dilated(
            x.astype(bf16), w.astype(bf16), (stride, stride), ((pad, pad), (pad, pad)),
            dimension_numbers=dn, preferred_element_type=jnp.float32)

    y = conv(x_nchw, w1 * eq_scale, 1, 1)
    y = jax.nn.leaky_relu(y + b1[None, :, None, None], NEG_SLOPE) * ACT_SCALE
    if downsample:
        kb = jnp.asarray(make_blur_kernel_2d(), jnp.float32)
        kd = jnp.tile(kb[None, None], (Cin, 1, 1, 1))
        y = lax.conv_general_dilated(y, kd, (1, 1), ((2, 2), (2, 2)),
                                     dimension_numbers=dn, feature_group_count=Cin)
        stride, pad = 2, 0
    else:
        stride, pad = 1, 1
    y = conv(y, w2 * eq_scale, stride, pad)
    y = jax.nn.leaky_relu(y + b2[None, :, None, None], NEG_SLOPE) * ACT_SCALE
    return y


if __name__ == "__main__":
    key = jax.random.PRNGKey(0)
    kx, kp = jax.random.split(key)

    N, in_c, out_c, H = 2, 4, 8, 16
    x = jax.random.normal(kx, (N, in_c, H, H), jnp.float32)      # NCHW, like PyTorch
    params = init_disc_block_params(kp, in_c, out_c)

    fwd = jax.jit(disc_block_forward, static_argnames=("downsample",))

    out = jax.block_until_ready(fwd(x, params, downsample=True))
    assert out.shape == (N, out_c, H // 2, H // 2), out.shape
    ref = ref_disc_block(x, params, downsample=True)
    err = float(jnp.max(jnp.abs(out - ref)))
    assert err < 2e-2, f"downsample=True mismatch vs reference: {err}"

    out2 = jax.block_until_ready(fwd(x, params, downsample=False))
    assert out2.shape == (N, out_c, H, H), out2.shape
    ref2 = ref_disc_block(x, params, downsample=False)
    err2 = float(jnp.max(jnp.abs(out2 - ref2)))
    assert err2 < 2e-2, f"downsample=False mismatch vs reference: {err2}"

    print("KERNEL_OK")
</pallas_src>

<mosaic_0001>
module attributes {stable_mosaic.version = 11 : i64} {
  func.func @_disc_block_down_kernel(%arg0: i32, %arg1: memref<1x16x8x8xf32, #tpu.memory_space<vmem>>, %arg2: memref<36x4xbf16, #tpu.memory_space<vmem>>, %arg3: memref<1x4xf32, #tpu.memory_space<vmem>>, %arg4: memref<36x8xbf16, #tpu.memory_space<vmem>>, %arg5: memref<1x8xf32, #tpu.memory_space<vmem>>, %arg6: memref<1x8x8x8xf32, #tpu.memory_space<vmem>>, %arg7: memref<18x9x8xbf16, #tpu.memory_space<vmem>>, %arg8: memref<2x16x8x36xbf16, #tpu.memory_space<vmem>>, %arg9: memref<20x10x8xf32, #tpu.memory_space<vmem>>, %arg10: memref<21x9x8xf32, #tpu.memory_space<vmem>>) attributes {dimension_semantics = [#tpu.dimension_semantics<parallel>], iteration_bounds = array<i64: 2>, scalar_prefetch = 0 : i64, scratch_operands = 4 : i64, tpu.core_type = #tpu.core_type<tc>, window_params = [{transform_indices = @transform_0, window_bounds = array<i64: 1, 16, 8, 8>}, {pipeline_mode = #tpu.pipeline_mode<synchronous>, transform_indices = @transform_1, window_bounds = array<i64: 36, 4>}, {pipeline_mode = #tpu.pipeline_mode<synchronous>, transform_indices = @transform_2, window_bounds = array<i64: 1, 4>}, {pipeline_mode = #tpu.pipeline_mode<synchronous>, transform_indices = @transform_3, window_bounds = array<i64: 36, 8>}, {pipeline_mode = #tpu.pipeline_mode<synchronous>, transform_indices = @transform_4, window_bounds = array<i64: 1, 8>}, {transform_indices = @transform_5, window_bounds = array<i64: 1, 8, 8, 8>}]} {
    %cst = arith.constant 0.000000e+00 : bf16
    %0 = vector.broadcast %cst : bf16 to vector<18x9x8xbf16>
    %c0 = arith.constant 0 : index
    %c0_0 = arith.constant 0 : index
    %c0_1 = arith.constant 0 : index
    %1 = vector.load %arg7[%c0, %c0_0, %c0_1] : memref<18x9x8xbf16, #tpu.memory_space<vmem>>, vector<18x9x8xbf16>
    tpu.vector_store %arg7[%c0, %c0_0, %c0_1], %0 {strides = array<i32>} : memref<18x9x8xbf16, #tpu.memory_space<vmem>>, vector<18x9x8xbf16>,
    %c0_2 = arith.constant 0 : index
    %c0_3 = arith.constant 0 : index
    %c0_4 = arith.constant 0 : index
    %c0_5 = arith.constant 0 : index
    %2 = vector.load %arg1[%c0_2, %c0_3, %c0_4, %c0_5] : memref<1x16x8x8xf32, #tpu.memory_space<vmem>>, vector<1x16x8x4xf32>
    %3 = vector.shape_cast %2 : vector<1x16x8x4xf32> to vector<16x8x4xf32>
    %4 = arith.truncf %3 : vector<16x8x4xf32> to vector<16x8x4xbf16>
    %c1 = arith.constant 1 : index
    %c0_6 = arith.constant 0 : index
    %c4 = arith.constant 4 : index
    %5 = vector.load %arg7[%c1, %c0_6, %c4] : memref<18x9x8xbf16, #tpu.memory_space<vmem>>, vector<16x8x4xbf16>
    tpu.vector_store %arg7[%c1, %c0_6, %c4], %4 {strides = array<i32>} : memref<18x9x8xbf16, #tpu.memory_space<vmem>>, vector<16x8x4xbf16>,
    %c0_7 = arith.constant 0 : index
    %c0_8 = arith.constant 0 : index
    %c0_9 = arith.constant 0 : index
    %c4_10 = arith.constant 4 : index
    %6 = vector.load %arg1[%c0_7, %c0_8, %c0_9, %c4_10] : memref<1x16x8x8xf32, #tpu.memory_space<vmem>>, vector<1x16x8x4xf32>
    %7 = vector.shape_cast %6 : vector<1x16x8x4xf32> to vector<16x8x4xf32>
    %8 = arith.truncf %7 : vector<16x8x4xf32> to vector<16x8x4xbf16>
    %c1_11 = arith.constant 1 : index
    %c1_12 = arith.constant 1 : index
    %c0_13 = arith.constant 0 : index
    %9 = vector.load %arg7[%c1_11, %c1_12, %c0_13] : memref<18x9x8xbf16, #tpu.memory_space<vmem>>, vector<16x8x4xbf16>
    tpu.vector_store %arg7[%c1_11, %c1_12, %c0_13], %8 {strides = array<i32>} : memref<18x9x8xbf16, #tpu.memory_space<vmem>>, vector<16x8x4xbf16>,
    %c0_14 = arith.constant 0 : index
    %c0_15 = arith.constant 0 : index
    %c0_16 = arith.constant 0 : index
    %10 = vector.load %arg7[%c0_14, %c0_15, %c0_16] : memref<18x9x8xbf16, #tpu.memory_space<vmem>>, vector<16x8x4xbf16>
    %c0_17 = arith.constant 0 : index
    %c0_18 = arith.constant 0 : index
    %c0_19 = arith.constant 0 : index
    %c0_20 = arith.constant 0 : index
    %11 = vector.load %arg8[%c0_17, %c0_18, %c0_19, %c0_20] : memref<2x16x8x36xbf16, #tpu.memory_space<vmem>>, vector<1x16x8x4xbf16>
    %12 = vector.shape_cast %11 : vector<1x16x8x4xbf16> to vector<16x8x4xbf16>
    %13 = vector.shape_cast %10 : vector<16x8x4xbf16> to vector<1x16x8x4xbf16>
    tpu.vector_store %arg8[%c0_17, %c0_18, %c0_19, %c0_20], %13 {strides = array<i32>} : memref<2x16x8x36xbf16, #tpu.memory_space<vmem>>, vector<1x16x8x4xbf16>,
    %c0_21 = arith.constant 0 : index
    %c0_22 = arith.constant 0 : index
    %c4_23 = arith.constant 4 : index
    %14 = vector.load %arg7[%c0_21, %c0_22, %c4_23] : memref<18x9x8xbf16, #tpu.memory_space<vmem>>, vector<16x8x4xbf16>
    %c0_24 = arith.constant 0 : index
    %c0_25 = arith.constant 0 : index
    %c0_26 = arith.constant 0 : index
    %c4_27 = arith.constant 4 : index
    %15 = vector.load %arg8[%c0_24, %c0_25, %c0_26, %c4_27] : memref<2x16x8x36xbf16, #tpu.memory_space<vmem>>, vector<1x16x8x4xbf16>
    %16 = vector.shape_cast %15 : vector<1x16x8x4xbf16> to vector<16x8x4xbf16>
    %17 = vector.shape_cast %14 : vector<16x8x4xbf16> to vector<1x16x8x4xbf16>
    tpu.vector_store %arg8[%c0_24, %c0_25, %c0_26, %c4_27], %17 {strides = array<i32>} : memref<2x16x8x36xbf16, #tpu.memory_space<vmem>>, vector<1x16x8x4xbf16>,
    %c0_28 = arith.constant 0 : index
    %c1_29 = arith.constant 1 : index
    %c0_30 = arith.constant 0 : index
    %18 = vector.load %arg7[%c0_28, %c1_29, %c0_30] : memref<18x9x8xbf16, #tpu.memory_space<vmem>>, vector<16x8x4xbf16>
    %c0_31 = arith.constant 0 : index
    %c0_32 = arith.constant 0 : index
    %c0_33 = arith.constant 0 : index
    %c8 = arith.constant 8 : index
    %19 = vector.load %arg8[%c0_31, %c0_32, %c0_33, %c8] : memref<2x16x8x36xbf16, #tpu.memory_space<vmem>>, vector<1x16x8x4xbf16>
    %20 = vector.shape_cast %19 : vector<1x16x8x4xbf16> to vector<16x8x4xbf16>
    %21 = vector.shape_cast %18 : vector<16x8x4xbf16> to vector<1x16x8x4xbf16>
    tpu.vector_store %arg8[%c0_31, %c0_32, %c0_33, %c8], %21 {strides = array<i32>} : memref<2x16x8x36xbf16, #tpu.memory_space<vmem>>, vector<1x16x8x4xbf16>,
    %c1_34 = arith.constant 1 : index
    %c0_35 = arith.constant 0 : index
    %c0_36 = arith.constant 0 : index
    %22 = vector.load %arg7[%c1_34, %c0_35, %c0_36] : memref<18x9x8xbf16, #tpu.memory_space<vmem>>, vector<16x8x4xbf16>
    %c0_37 = arith.constant 0 : index
    %c0_38 = arith.constant 0 : index
    %c0_39 = arith.constant 0 : index
    %c12 = arith.constant 12 : index
    %23 = vector.load %arg8[%c0_37, %c0_38, %c0_39, %c12] : memref<2x16x8x36xbf16, #tpu.memory_space<vmem>>, vector<1x16x8x4xbf16>
    %24 = vector.shape_cast %23 : vector<1x16x8x4xbf16> to vector<16x8x4xbf16>
    %25 = vector.shape_cast %22 : vector<16x8x4xbf16> to vector<1x16x8x4xbf16>
    tpu.vector_store %arg8[%c0_37, %c0_38, %c0_39, %c12], %25 {strides = array<i32>} : memref<2x16x8x36xbf16, #tpu.memory_space<vmem>>, vector<1x16x8x4xbf16>,
    %c1_40 = arith.constant 1 : index
    %c0_41 = arith.constant 0 : index
    %c4_42 = arith.constant 4 : index
    %26 = vector.load %arg7[%c1_40, %c0_41, %c4_42] : memref<18x9x8xbf16, #tpu.memory_space<vmem>>, vector<16x8x4xbf16>
    %c0_43 = arith.constant 0 : index
    %c0_44 = arith.constant 0 : index
    %c0_45 = arith.constant 0 : index
    %c16 = arith.constant 16 : index
    %27 = vector.load %arg8[%c0_43, %c0_44, %c0_45, %c16] : memref<2x16x8x36xbf16, #tpu.memory_space<vmem>>, vector<1x16x8x4xbf16>
    %28 = vector.shape_cast %27 : vector<1x16x8x4xbf16> to vector<16x8x4xbf16>
    %29 = vector.shape_cast %26 : vector<16x8x4xbf16> to vector<1x16x8x4xbf16>
    tpu.vector_store %arg8[%c0_43, %c0_44, %c0_45, %c16], %29 {strides = array<i32>} : memref<2x16x8x36xbf16, #tpu.memory_space<vmem>>, vector<1x16x8x4xbf16>,
    %c1_46 = arith.constant 1 : index
    %c1_47 = arith.constant 1 : index
    %c0_48 = arith.constant 0 : index
    %30 = vector.load %arg7[%c1_46, %c1_47, %c0_48] : memref<18x9x8xbf16, #tpu.memory_space<vmem>>, vector<16x8x4xbf16>
    %c0_49 = arith.constant 0 : index
    %c0_50 = arith.constant 0 : index
    %c0_51 = arith.constant 0 : index
    %c20 = arith.constant 20 : index
    %31 = vector.load %arg8[%c0_49, %c0_50, %c0_51, %c20] : memref<2x16x8x36xbf16, #tpu.memory_space<vmem>>, vector<1x16x8x4xbf16>
    %32 = vector.shape_cast %31 : vector<1x16x8x4xbf16> to vector<16x8x4xbf16>
    %33 = vector.shape_cast %30 : vector<16x8x4xbf16> to vector<1x16x8x4xbf16>
    tpu.vector_store %arg8[%c0_49, %c0_50, %c0_51, %c20], %33 {strides = array<i32>} : memref<2x16x8x36xbf16, #tpu.memory_space<vmem>>, vector<1x16x8x4xbf16>,
    %c2 = arith.constant 2 : index
    %c0_52 = arith.constant 0 : index
    %c0_53 = arith.constant 0 : index
    %34 = vector.load %arg7[%c2, %c0_52, %c0_53] : memref<18x9x8xbf16, #tpu.memory_space<vmem>>, vector<16x8x4xbf16>
    %c0_54 = arith.constant 0 : index
    %c0_55 = arith.constant 0 : index
    %c0_56 = arith.constant 0 : index
    %c24 = arith.constant 24 : index
    %35 = vector.load %arg8[%c0_54, %c0_55, %c0_56, %c24] : memref<2x16x8x36xbf16, #tpu.memory_space<vmem>>, vector<1x16x8x4xbf16>
    %36 = vector.shape_cast %35 : vector<1x16x8x4xbf16> to vector<16x8x4xbf16>
    %37 = vector.shape_cast %34 : vector<16x8x4xbf16> to vector<1x16x8x4xbf16>
    tpu.vector_store %arg8[%c0_54, %c0_55, %c0_56, %c24], %37 {strides = array<i32>} : memref<2x16x8x36xbf16, #tpu.memory_space<vmem>>, vector<1x16x8x4xbf16>,
    %c2_57 = arith.constant 2 : index
    %c0_58 = arith.constant 0 : index
    %c4_59 = arith.constant 4 : index
    %38 = vector.load %arg7[%c2_57, %c0_58, %c4_59] : memref<18x9x8xbf16, #tpu.memory_space<vmem>>, vector<16x8x4xbf16>
    %c0_60 = arith.constant 0 : index
    %c0_61 = arith.constant 0 : index
    %c0_62 = arith.constant 0 : index
    %c28 = arith.constant 28 : index
    %39 = vector.load %arg8[%c0_60, %c0_61, %c0_62, %c28] : memref<2x16x8x36xbf16, #tpu.memory_space<vmem>>, vector<1x16x8x4xbf16>
    %40 = vector.shape_cast %39 : vector<1x16x8x4xbf16> to vector<16x8x4xbf16>
    %41 = vector.shape_cast %38 : vector<16x8x4xbf16> to vector<1x16x8x4xbf16>
    tpu.vector_store %arg8[%c0_60, %c0_61, %c0_62, %c28], %41 {strides = array<i32>} : memref<2x16x8x36xbf16, #tpu.memory_space<vmem>>, vector<1x16x8x4xbf16>,
    %c2_63 = arith.constant 2 : index
    %c1_64 = arith.constant 1 : index
    %c0_65 = arith.constant 0 : index
    %42 = vector.load %arg7[%c2_63, %c1_64, %c0_65] : memref<18x9x8xbf16, #tpu.memory_space<vmem>>, vector<16x8x4xbf16>
    %c0_66 = arith.constant 0 : index
    %c0_67 = arith.constant 0 : index
    %c0_68 = arith.constant 0 : index
    %c32 = arith.constant 32 : index
    %43 = vector.load %arg8[%c0_66, %c0_67, %c0_68, %c32] : memref<2x16x8x36xbf16, #tpu.memory_space<vmem>>, vector<1x16x8x4xbf16>
    %44 = vector.shape_cast %43 : vector<1x16x8x4xbf16> to vector<16x8x4xbf16>
    %45 = vector.shape_cast %42 : vector<16x8x4xbf16> to vector<1x16x8x4xbf16>
    tpu.vector_store %arg8[%c0_66, %c0_67, %c0_68, %c32], %45 {strides = array<i32>} : memref<2x16x8x36xbf16, #tpu.memory_space<vmem>>, vector<1x16x8x4xbf16>,
    %c0_69 = arith.constant 0 : index
    %c0_70 = arith.constant 0 : index
    %c4_71 = arith.constant 4 : index
    %46 = vector.load %arg7[%c0_69, %c0_70, %c4_71] : memref<18x9x8xbf16, #tpu.memory_space<vmem>>, vector<16x8x4xbf16>
    %c1_72 = arith.constant 1 : index
    %c0_73 = arith.constant 0 : index
    %c0_74 = arith.constant 0 : index
    %c0_75 = arith.constant 0 : index
    %47 = vector.load %arg8[%c1_72, %c0_73, %c0_74, %c0_75] : memref<2x16x8x36xbf16, #tpu.memory_space<vmem>>, vector<1x16x8x4xbf16>
    %48 = vector.shape_cast %47 : vector<1x16x8x4xbf16> to vector<16x8x4xbf16>
    %49 = vector.shape_cast %46 : vector<16x8x4xbf16> to vector<1x16x8x4xbf16>
    tpu.vector_store %arg8[%c1_72, %c0_73, %c0_74, %c0_75], %49 {strides = array<i32>} : memref<2x16x8x36xbf16, #tpu.memory_space<vmem>>, vector<1x16x8x4xbf16>,
    %c0_76 = arith.constant 0 : index
    %c1_77 = arith.constant 1 : index
    %c0_78 = arith.constant 0 : index
    %50 = vector.load %arg7[%c0_76, %c1_77, %c0_78] : memref<18x9x8xbf16, #tpu.memory_space<vmem>>, vector<16x8x4xbf16>
    %c1_79 = arith.constant 1 : index
    %c0_80 = arith.constant 0 : index
    %c0_81 = arith.constant 0 : index
    %c4_82 = arith.constant 4 : index
    %51 = vector.load %arg8[%c1_79, %c0_80, %c0_81, %c4_82] : memref<2x16x8x36xbf16, #tpu.memory_space<vmem>>, vector<1x16x8x4xbf16>
    %52 = vector.shape_cast %51 : vector<1x16x8x4xbf16> to vector<16x8x4xbf16>
    %53 = vector.shape_cast %50 : vector<16x8x4xbf16> to vector<1x16x8x4xbf16>
    tpu.vector_store %arg8[%c1_79, %c0_80, %c0_81, %c4_82], %53 {strides = array<i32>} : memref<2x16x8x36xbf16, #tpu.memory_space<vmem>>, vector<1x16x8x4xbf16>,
    %c0_83 = arith.constant 0 : index
    %c1_84 = arith.constant 1 : index
    %c4_85 = arith.constant 4 : index
    %54 = vector.load %arg7[%c0_83, %c1_84, %c4_85] : memref<18x9x8xbf16, #tpu.memory_space<vmem>>, vector<16x8x4xbf16>
    %c1_86 = arith.constant 1 : index
    %c0_87 = arith.constant 0 : index
    %c0_88 = arith.constant 0 : index
    %c8_89 = arith.constant 8 : index
    %55 = vector.load %arg8[%c1_86, %c0_87, %c0_88, %c8_89] : memref<2x16x8x36xbf16, #tpu.memory_space<vmem>>, vector<1x16x8x4xbf16>
    %56 = vector.shape_cast %55 : vector<1x16x8x4xbf16> to vector<16x8x4xbf16>
    %57 = vector.shape_cast %54 : vector<16x8x4xbf16> to vector<1x16x8x4xbf16>
    tpu.vector_store %arg8[%c1_86, %c0_87, %c0_88, %c8_89], %57 {strides = array<i32>} : memref<2x16x8x36xbf16, #tpu.memory_space<vmem>>, vector<1x16x8x4xbf16>,
    %c1_90 = arith.constant 1 : index
    %c0_91 = arith.constant 0 : index
    %c4_92 = arith.constant 4 : index
    %58 = vector.load %arg7[%c1_90, %c0_91, %c4_92] : memref<18x9x8xbf16, #tpu.memory_space<vmem>>, vector<16x8x4xbf16>
    %c1_93 = arith.constant 1 : index
    %c0_94 = arith.constant 0 : index
    %c0_95 = arith.constant 0 : index
    %c12_96 = arith.constant 12 : index
    %59 = vector.load %arg8[%c1_93, %c0_94, %c0_95, %c12_96] : memref<2x16x8x36xbf16, #tpu.memory_space<vmem>>, vector<1x16x8x4xbf16>
    %60 = vector.shape_cast %59 : vector<1x16x8x4xbf16> to vector<16x8x4xbf16>
    %61 = vector.shape_cast %58 : vector<16x8x4xbf16> to vector<1x16x8x4xbf16>
    tpu.vector_store %arg8[%c1_93, %c0_94, %c0_95, %c12_96], %61 {strides = array<i32>} : memref<2x16x8x36xbf16, #tpu.memory_space<vmem>>, vector<1x16x8x4xbf16>,
    %c1_97 = arith.constant 1 : index
    %c1_98 = arith.constant 1 : index
    %c0_99 = arith.constant 0 : index
    %62 = vector.load %arg7[%c1_97, %c1_98, %c0_99] : memref<18x9x8xbf16, #tpu.memory_space<vmem>>, vector<16x8x4xbf16>
    %c1_100 = arith.constant 1 : index
    %c0_101 = arith.constant 0 : index
    %c0_102 = arith.constant 0 : index
    %c16_103 = arith.constant 16 : index
    %63 = vector.load %arg8[%c1_100, %c0_101, %c0_102, %c16_103] : memref<2x16x8x36xbf16, #tpu.memory_space<vmem>>, vector<1x16x8x4xbf16>
    %64 = vector.shape_cast %63 : vector<1x16x8x4xbf16> to vector<16x8x4xbf16>
    %65 = vector.shape_cast %62 : vector<16x8x4xbf16> to vector<1x16x8x4xbf16>
    tpu.vector_store %arg8[%c1_100, %c0_101, %c0_102, %c16_103], %65 {strides = array<i32>} : memref<2x16x8x36xbf16, #tpu.memory_space<vmem>>, vector<1x16x8x4xbf16>,
    %c1_104 = arith.constant 1 : index
    %c1_105 = arith.constant 1 : index
    %c4_106 = arith.constant 4 : index
    %66 = vector.load %arg7[%c1_104, %c1_105, %c4_106] : memref<18x9x8xbf16, #tpu.memory_space<vmem>>, vector<16x8x4xbf16>
    %c1_107 = arith.constant 1 : index
    %c0_108 = arith.constant 0 : index
    %c0_109 = arith.constant 0 : index
    %c20_110 = arith.constant 20 : index
    %67 = vector.load %arg8[%c1_107, %c0_108, %c0_109, %c20_110] : memref<2x16x8x36xbf16, #tpu.memory_space<vmem>>, vector<1x16x8x4xbf16>
    %68 = vector.shape_cast %67 : vector<1x16x8x4xbf16> to vector<16x8x4xbf16>
    %69 = vector.shape_cast %66 : vector<16x8x4xbf16> to vector<1x16x8x4xbf16>
    tpu.vector_store %arg8[%c1_107, %c0_108, %c0_109, %c20_110], %69 {strides = array<i32>} : memref<2x16x8x36xbf16, #tpu.memory_space<vmem>>, vector<1x16x8x4xbf16>,
    %c2_111 = arith.constant 2 : index
    %c0_112 = arith.constant 0 : index
    %c4_113 = arith.constant 4 : index
    %70 = vector.load %arg7[%c2_111, %c0_112, %c4_113] : memref<18x9x8xbf16, #tpu.memory_space<vmem>>, vector<16x8x4xbf16>
    %c1_114 = arith.constant 1 : index
    %c0_115 = arith.constant 0 : index
    %c0_116 = arith.constant 0 : index
    %c24_117 = arith.constant 24 : index
    %71 = vector.load %arg8[%c1_114, %c0_115, %c0_116, %c24_117] : memref<2x16x8x36xbf16, #tpu.memory_space<vmem>>, vector<1x16x8x4xbf16>
    %72 = vector.shape_cast %71 : vector<1x16x8x4xbf16> to vector<16x8x4xbf16>
    %73 = vector.shape_cast %70 : vector<16x8x4xbf16> to vector<1x16x8x4xbf16>
    tpu.vector_store %arg8[%c1_114, %c0_115, %c0_116, %c24_117], %73 {strides = array<i32>} : memref<2x16x8x36xbf16, #tpu.memory_space<vmem>>, vector<1x16x8x4xbf16>,
    %c2_118 = arith.constant 2 : index
    %c1_119 = arith.constant 1 : index
    %c0_120 = arith.constant 0 : index
    %74 = vector.load %arg7[%c2_118, %c1_119, %c0_120] : memref<18x9x8xbf16, #tpu.memory_space<vmem>>, vector<16x8x4xbf16>
    %c1_121 = arith.constant 1 : index
    %c0_122 = arith.constant 0 : index
    %c0_123 = arith.constant 0 : index
    %c28_124 = arith.constant 28 : index
    %75 = vector.load %arg8[%c1_121, %c0_122, %c0_123, %c28_124] : memref<2x16x8x36xbf16, #tpu.memory_space<vmem>>, vector<1x16x8x4xbf16>
    %76 = vector.shape_cast %75 : vector<1x16x8x4xbf16> to vector<16x8x4xbf16>
    %77 = vector.shape_cast %74 : vector<16x8x4xbf16> to vector<1x16x8x4xbf16>
    tpu.vector_store %arg8[%c1_121, %c0_122, %c0_123, %c28_124], %77 {strides = array<i32>} : memref<2x16x8x36xbf16, #tpu.memory_space<vmem>>, vector<1x16x8x4xbf16>,
    %c2_125 = arith.constant 2 : index
    %c1_126 = arith.constant 1 : index
    %c4_127 = arith.constant 4 : index
    %78 = vector.load %arg7[%c2_125, %c1_126, %c4_127] : memref<18x9x8xbf16, #tpu.memory_space<vmem>>, vector<16x8x4xbf16>
    %c1_128 = arith.constant 1 : index
    %c0_129 = arith.constant 0 : index
    %c0_130 = arith.constant 0 : index
    %c32_131 = arith.constant 32 : index
    %79 = vector.load %arg8[%c1_128, %c0_129, %c0_130, %c32_131] : memref<2x16x8x36xbf16, #tpu.memory_space<vmem>>, vector<1x16x8x4xbf16>
    %80 = vector.shape_cast %79 : vector<1x16x8x4xbf16> to vector<16x8x4xbf16>
    %81 = vector.shape_cast %78 : vector<16x8x4xbf16> to vector<1x16x8x4xbf16>
    tpu.vector_store %arg8[%c1_128, %c0_129, %c0_130, %c32_131], %81 {strides = array<i32>} : memref<2x16x8x36xbf16, #tpu.memory_space<vmem>>, vector<1x16x8x4xbf16>,
    %c0_132 = arith.constant 0 : index
    %c0_133 = arith.constant 0 : index
    %c0_134 = arith.constant 0 : index
    %c0_135 = arith.constant 0 : index
    %82 = vector.load %arg8[%c0_132, %c0_133, %c0_134, %c0_135] : memref<2x16x8x36xbf16, #tpu.memory_space<vmem>>, vector<2x16x8x36xbf16>
    %83 = vector.shape_cast %82 : vector<2x16x8x36xbf16> to vector<256x36xbf16>
    %c0_136 = arith.constant 0 : index
    %c0_137 = arith.constant 0 : index
    %84 = vector.load %arg2[%c0_136, %c0_137] : memref<36x4xbf16, #tpu.memory_space<vmem>>, vector<36x4xbf16>
    %cst_138 = arith.constant dense<0.000000e+00> : vector<256x4xf32>
    %85 = tpu.matmul %83, %84, %cst_138 {dimension_numbers = #tpu.dot_dimension_numbers<[1], [0], [0], [1], [0, 0, 1, 1], [], []>} : vector<256x36xbf16>, vector<36x4xbf16>, vector<256x4xf32> -> vector<256x4xf32>
    %c0_139 = arith.constant 0 : index
    %c0_140 = arith.constant 0 : index
    %86 = vector.load %arg3[%c0_139, %c0_140] : memref<1x4xf32, #tpu.memory_space<vmem>>, vector<1x4xf32>
    %87 = vector.broadcast %86 : vector<1x4xf32> to vector<256x4xf32>
    %88 = arith.addf %85, %87 : vector<256x4xf32>
    %cst_141 = arith.constant 0.000000e+00 : f32
    %89 = vector.broadcast %cst_141 : f32 to vector<256x4xf32>
    %90 = arith.cmpf oge, %88, %89 : vector<256x4xf32>
    %cst_142 = arith.constant 1.41421354 : f32
    %cst_143 = arith.constant 0.282842726 : f32
    %91 = vector.broadcast %cst_142 : f32 to vector<256x4xf32>
    %92 = vector.broadcast %cst_143 : f32 to vector<256x4xf32>
    %93 = arith.select %90, %91, %92 : vector<256x4xi1>, vector<256x4xf32>
    %94 = arith.mulf %88, %93 : vector<256x4xf32>
    %95 = vector.extract_strided_slice %94 {offsets = [0, 0], sizes = [128, 4], strides = [1, 1]} : vector<256x4xf32> to vector<128x4xf32>
    %96 = vector.shape_cast %95 : vector<128x4xf32> to vector<16x8x4xf32>
    %97 = vector.extract_strided_slice %94 {offsets = [128, 0], sizes = [128, 4], strides = [1, 1]} : vector<256x4xf32> to vector<128x4xf32>
    %98 = vector.shape_cast %97 : vector<128x4xf32> to vector<16x8x4xf32>
    %cst_144 = arith.constant 0.000000e+00 : f32
    %99 = vector.broadcast %cst_144 : f32 to vector<20x10x8xf32>
    %c0_145 = arith.constant 0 : index
    %c0_146 = arith.constant 0 : index
    %c0_147 = arith.constant 0 : index
    %100 = vector.load %arg9[%c0_145, %c0_146, %c0_147] : memref<20x10x8xf32, #tpu.memory_space<vmem>>, vector<20x10x8xf32>
    tpu.vector_store %arg9[%c0_145, %c0_146, %c0_147], %99 {strides = array<i32>} : memref<20x10x8xf32, #tpu.memory_space<vmem>>, vector<20x10x8xf32>,
    %c2_148 = arith.constant 2 : index
    %c1_149 = arith.constant 1 : index
    %c0_150 = arith.constant 0 : index
    %101 = vector.load %arg9[%c2_148, %c1_149, %c0_150] : memref<20x10x8xf32, #tpu.memory_space<vmem>>, vector<16x8x4xf32>
    tpu.vector_store %arg9[%c2_148, %c1_149, %c0_150], %96 {strides = array<i32>} : memref<20x10x8xf32, #tpu.memory_space<vmem>>, vector<16x8x4xf32>,
    %c2_151 = arith.constant 2 : index
    %c1_152 = arith.constant 1 : index
    %c4_153 = arith.constant 4 : index
    %102 = vector.load %arg9[%c2_151, %c1_152, %c4_153] : memref<20x10x8xf32, #tpu.memory_space<vmem>>, vector<16x8x4xf32>
    tpu.vector_store %arg9[%c2_151, %c1_152, %c4_153], %98 {strides = array<i32>} : memref<20x10x8xf32, #tpu.memory_space<vmem>>, vector<16x8x4xf32>,
    %cst_154 = arith.constant 0.000000e+00 : f32
    %103 = vector.broadcast %cst_154 : f32 to vector<21x9x8xf32>
    %c0_155 = arith.constant 0 : index
    %c0_156 = arith.constant 0 : index
    %c0_157 = arith.constant 0 : index
    %104 = vector.load %arg10[%c0_155, %c0_156, %c0_157] : memref<21x9x8xf32, #tpu.memory_space<vmem>>, vector<21x9x8xf32>
    tpu.vector_store %arg10[%c0_155, %c0_156, %c0_157], %103 {strides = array<i32>} : memref<21x9x8xf32, #tpu.memory_space<vmem>>, vector<21x9x8xf32>,
    %cst_158 = arith.constant 0.000000e+00 : f32
    %105 = vector.broadcast %cst_158 : f32 to vector<20x9x4xf32>
    %c0_159 = arith.constant 0 : index
    %c0_160 = arith.constant 0 : index
    %c0_161 = arith.constant 0 : index
    %106 = vector.load %arg9[%c0_159, %c0_160, %c0_161] : memref<20x10x8xf32, #tpu.memory_space<vmem>>, vector<20x9x4xf32>
    %cst_162 = arith.constant 1.250000e-01 : f32
    %107 = vector.broadcast %cst_162 : f32 to vector<20x9x4xf32>
    %108 = arith.mulf %107, %106 : vector<20x9x4xf32>
    %109 = arith.addf %105, %108 : vector<20x9x4xf32>
    %c0_163 = arith.constant 0 : index
    %c0_164 = arith.constant 0 : index
    %c4_165 = arith.constant 4 : index
    %110 = vector.load %arg9[%c0_163, %c0_164, %c4_165] : memref<20x10x8xf32, #tpu.memory_space<vmem>>, vector<20x9x4xf32>
    %cst_166 = arith.constant 3.750000e-01 : f32
    %111 = vector.broadcast %cst_166 : f32 to vector<20x9x4xf32>
    %112 = arith.mulf %111, %110 : vector<20x9x4xf32>
    %113 = arith.addf %109, %112 : vector<20x9x4xf32>
    %c0_167 = arith.constant 0 : index
    %c1_168 = arith.constant 1 : index
    %c0_169 = arith.constant 0 : index
    %114 = vector.load %arg9[%c0_167, %c1_168, %c0_169] : memref<20x10x8xf32, #tpu.memory_space<vmem>>, vector<20x9x4xf32>
    %cst_170 = arith.constant 3.750000e-01 : f32
    %115 = vector.broadcast %cst_170 : f32 to vector<20x9x4xf32>
    %116 = arith.mulf %115, %114 : vector<20x9x4xf32>
    %117 = arith.addf %113, %116 : vector<20x9x4xf32>
    %c0_171 = arith.constant 0 : index
    %c1_172 = arith.constant 1 : index
    %c4_173 = arith.constant 4 : index
    %118 = vector.load %arg9[%c0_171, %c1_172, %c4_173] : memref<20x10x8xf32, #tpu.memory_space<vmem>>, vector<20x9x4xf32>
    %cst_174 = arith.constant 1.250000e-01 : f32
    %119 = vector.broadcast %cst_174 : f32 to vector<20x9x4xf32>
    %120 = arith.mulf %119, %118 : vector<20x9x4xf32>
    %121 = arith.addf %117, %120 : vector<20x9x4xf32>
    %c0_175 = arith.constant 0 : index
    %c0_176 = arith.constant 0 : index
    %c0_177 = arith.constant 0 : index
    %122 = vector.load %arg10[%c0_175, %c0_176, %c0_177] : memref<21x9x8xf32, #tpu.memory_space<vmem>>, vector<20x9x4xf32>
    tpu.vector_store %arg10[%c0_175, %c0_176, %c0_177], %121 {strides = array<i32>} : memref<21x9x8xf32, #tpu.memory_space<vmem>>, vector<20x9x4xf32>,
    %cst_178 = arith.constant 0.000000e+00 : f32
    %123 = vector.broadcast %cst_178 : f32 to vector<20x8x4xf32>
    %c0_179 = arith.constant 0 : index
    %c0_180 = arith.constant 0 : index
    %c4_181 = arith.constant 4 : index
    %124 = vector.load %arg9[%c0_179, %c0_180, %c4_181] : memref<20x10x8xf32, #tpu.memory_space<vmem>>, vector<20x8x4xf32>
    %cst_182 = arith.constant 1.250000e-01 : f32
    %125 = vector.broadcast %cst_182 : f32 to vector<20x8x4xf32>
    %126 = arith.mulf %125, %124 : vector<20x8x4xf32>
    %127 = arith.addf %123, %126 : vector<20x8x4xf32>
    %c0_183 = arith.constant 0 : index
    %c1_184 = arith.constant 1 : index
    %c0_185 = arith.constant 0 : index
    %128 = vector.load %arg9[%c0_183, %c1_184, %c0_185] : memref<20x10x8xf32, #tpu.memory_space<vmem>>, vector<20x8x4xf32>
    %cst_186 = arith.constant 3.750000e-01 : f32
    %129 = vector.broadcast %cst_186 : f32 to vector<20x8x4xf32>
    %130 = arith.mulf %129, %128 : vector<20x8x4xf32>
    %131 = arith.addf %127, %130 : vector<20x8x4xf32>
    %c0_187 = arith.constant 0 : index
    %c1_188 = arith.constant 1 : index
    %c4_189 = arith.constant 4 : index
    %132 = vector.load %arg9[%c0_187, %c1_188, %c4_189] : memref<20x10x8xf32, #tpu.memory_space<vmem>>, vector<20x8x4xf32>
    %cst_190 = arith.constant 3.750000e-01 : f32
    %133 = vector.broadcast %cst_190 : f32 to vector<20x8x4xf32>
    %134 = arith.mulf %133, %132 : vector<20x8x4xf32>
    %135 = arith.addf %131, %134 : vector<20x8x4xf32>
    %c0_191 = arith.constant 0 : index
    %c2_192 = arith.constant 2 : index
    %c0_193 = arith.constant 0 : index
    %136 = vector.load %arg9[%c0_191, %c2_192, %c0_193] : memref<20x10x8xf32, #tpu.memory_space<vmem>>, vector<20x8x4xf32>
    %cst_194 = arith.constant 1.250000e-01 : f32
    %137 = vector.broadcast %cst_194 : f32 to vector<20x8x4xf32>
    %138 = arith.mulf %137, %136 : vector<20x8x4xf32>
    %139 = arith.addf %135, %138 : vector<20x8x4xf32>
    %c0_195 = arith.constant 0 : index
    %c0_196 = arith.constant 0 : index
    %c4_197 = arith.constant 4 : index
    %140 = vector.load %arg10[%c0_195, %c0_196, %c4_197] : memref<21x9x8xf32, #tpu.memory_space<vmem>>, vector<20x8x4xf32>
    tpu.vector_store %arg10[%c0_195, %c0_196, %c4_197], %139 {strides = array<i32>} : memref<21x9x8xf32, #tpu.memory_space<vmem>>, vector<20x8x4xf32>,
    %cst_198 = arith.constant 0.000000e+00 : f32
    %141 = vector.broadcast %cst_198 : f32 to vector<18x9x8xf32>
    %c0_199 = arith.constant 0 : index
    %c0_200 = arith.constant 0 : index
    %c0_201 = arith.constant 0 : index
    %142 = vector.load %arg10[%c0_199, %c0_200, %c0_201] : memref<21x9x8xf32, #tpu.memory_space<vmem>>, vector<18x9x8xf32>
    %cst_202 = arith.constant 1.250000e-01 : f32
    %143 = vector.broadcast %cst_202 : f32 to vector<18x9x8xf32>
    %144 = arith.mulf %143, %142 : vector<18x9x8xf32>
    %145 = arith.addf %141, %144 : vector<18x9x8xf32>
    %c1_203 = arith.constant 1 : index
    %c0_204 = arith.constant 0 : index
    %c0_205 = arith.constant 0 : index
    %146 = vector.load %arg10[%c1_203, %c0_204, %c0_205] : memref<21x9x8xf32, #tpu.memory_space<vmem>>, vector<18x9x8xf32>
    %cst_206 = arith.constant 3.750000e-01 : f32
    %147 = vector.broadcast %cst_206 : f32 to vector<18x9x8xf32>
    %148 = arith.mulf %147, %146 : vector<18x9x8xf32>
    %149 = arith.addf %145, %148 : vector<18x9x8xf32>
    %c2_207 = arith.constant 2 : index
    %c0_208 = arith.constant 0 : index
    %c0_209 = arith.constant 0 : index
    %150 = vector.load %arg10[%c2_207, %c0_208, %c0_209] : memref<21x9x8xf32, #tpu.memory_space<vmem>>, vector<18x9x8xf32>
    %cst_210 = arith.constant 3.750000e-01 : f32
    %151 = vector.broadcast %cst_210 : f32 to vector<18x9x8xf32>
    %152 = arith.mulf %151, %150 : vector<18x9x8xf32>
    %153 = arith.addf %149, %152 : vector<18x9x8xf32>
    %c3 = arith.constant 3 : index
    %c0_211 = arith.constant 0 : index
    %c0_212 = arith.constant 0 : index
    %154 = vector.load %arg10[%c3, %c0_211, %c0_212] : memref<21x9x8xf32, #tpu.memory_space<vmem>>, vector<18x9x8xf32>
    %cst_213 = arith.constant 1.250000e-01 : f32
    %155 = vector.broadcast %cst_213 : f32 to vector<18x9x8xf32>
    %156 = arith.mulf %155, %154 : vector<18x9x8xf32>
    %157 = arith.addf %153, %156 : vector<18x9x8xf32>
    %158 = vector.shape_cast %157 : vector<18x9x8xf32> to vector<9x2x9x8xf32>
    %159 = vector.extract_strided_slice %158 {offsets = [0, 0, 0, 0], sizes = [8, 1, 8, 4], strides = [1, 1, 1, 1]} : vector<9x2x9x8xf32> to vector<8x1x8x4xf32>
    %160 = vector.shape_cast %159 : vector<8x1x8x4xf32> to vector<8x8x4xf32>
    %161 = arith.truncf %160 : vector<8x8x4xf32> to vector<8x8x4xbf16>
    %c0_214 = arith.constant 0 : index
    %c0_215 = arith.constant 0 : index
    %c0_216 = arith.constant 0 : index
    %c0_217 = arith.constant 0 : index
    %162 = vector.load %arg8[%c0_214, %c0_215, %c0_216, %c0_217] : memref<2x16x8x36xbf16, #tpu.memory_space<vmem>>, vector<1x8x8x4xbf16>
    %163 = vector.shape_cast %162 : vector<1x8x8x4xbf16> to vector<8x8x4xbf16>
    %164 = vector.shape_cast %161 : vector<8x8x4xbf16> to vector<1x8x8x4xbf16>
    tpu.vector_store %arg8[%c0_214, %c0_215, %c0_216, %c0_217], %164 {strides = array<i32>} : memref<2x16x8x36xbf16, #tpu.memory_space<vmem>>, vector<1x8x8x4xbf16>,
    %165 = vector.extract_strided_slice %158 {offsets = [0, 0, 0, 4], sizes = [8, 1, 8, 4], strides = [1, 1, 1, 1]} : vector<9x2x9x8xf32> to vector<8x1x8x4xf32>
    %166 = vector.shape_cast %165 : vector<8x1x8x4xf32> to vector<8x8x4xf32>
    %167 = arith.truncf %166 : vector<8x8x4xf32> to vector<8x8x4xbf16>
    %c0_218 = arith.constant 0 : index
    %c0_219 = arith.constant 0 : index
    %c0_220 = arith.constant 0 : index
    %c4_221 = arith.constant 4 : index
    %168 = vector.load %arg8[%c0_218, %c0_219, %c0_220, %c4_221] : memref<2x16x8x36xbf16, #tpu.memory_space<vmem>>, vector<1x8x8x4xbf16>
    %169 = vector.shape_cast %168 : vector<1x8x8x4xbf16> to vector<8x8x4xbf16>
    %170 = vector.shape_cast %167 : vector<8x8x4xbf16> to vector<1x8x8x4xbf16>
    tpu.vector_store %arg8[%c0_218, %c0_219, %c0_220, %c4_221], %170 {strides = array<i32>} : memref<2x16x8x36xbf16, #tpu.memory_space<vmem>>, vector<1x8x8x4xbf16>,
    %171 = vector.extract_strided_slice %158 {offsets = [0, 0, 1, 0], sizes = [8, 1, 8, 4], strides = [1, 1, 1, 1]} : vector<9x2x9x8xf32> to vector<8x1x8x4xf32>
    %172 = vector.shape_cast %171 : vector<8x1x8x4xf32> to vector<8x8x4xf32>
    %173 = arith.truncf %172 : vector<8x8x4xf32> to vector<8x8x4xbf16>
    %c0_222 = arith.constant 0 : index
    %c0_223 = arith.constant 0 : index
    %c0_224 = arith.constant 0 : index
    %c8_225 = arith.constant 8 : index
    %174 = vector.load %arg8[%c0_222, %c0_223, %c0_224, %c8_225] : memref<2x16x8x36xbf16, #tpu.memory_space<vmem>>, vector<1x8x8x4xbf16>
    %175 = vector.shape_cast %174 : vector<1x8x8x4xbf16> to vector<8x8x4xbf16>
    %176 = vector.shape_cast %173 : vector<8x8x4xbf16> to vector<1x8x8x4xbf16>
    tpu.vector_store %arg8[%c0_222, %c0_223, %c0_224, %c8_225], %176 {strides = array<i32>} : memref<2x16x8x36xbf16, #tpu.memory_space<vmem>>, vector<1x8x8x4xbf16>,
    %177 = vector.extract_strided_slice %158 {offsets = [0, 1, 0, 0], sizes = [8, 1, 8, 4], strides = [1, 1, 1, 1]} : vector<9x2x9x8xf32> to vector<8x1x8x4xf32>
    %178 = vector.shape_cast %177 : vector<8x1x8x4xf32> to vector<8x8x4xf32>
    %179 = arith.truncf %178 : vector<8x8x4xf32> to vector<8x8x4xbf16>
    %c0_226 = arith.constant 0 : index
    %c0_227 = arith.constant 0 : index
    %c0_228 = arith.constant 0 : index
    %c12_229 = arith.constant 12 : index
    %180 = vector.load %arg8[%c0_226, %c0_227, %c0_228, %c12_229] : memref<2x16x8x36xbf16, #tpu.memory_space<vmem>>, vector<1x8x8x4xbf16>
    %181 = vector.shape_cast %180 : vector<1x8x8x4xbf16> to vector<8x8x4xbf16>
    %182 = vector.shape_cast %179 : vector<8x8x4xbf16> to vector<1x8x8x4xbf16>
    tpu.vector_store %arg8[%c0_226, %c0_227, %c0_228, %c12_229], %182 {strides = array<i32>} : memref<2x16x8x36xbf16, #tpu.memory_space<vmem>>, vector<1x8x8x4xbf16>,
    %183 = vector.extract_strided_slice %158 {offsets = [0, 1, 0, 4], sizes = [8, 1, 8, 4], strides = [1, 1, 1, 1]} : vector<9x2x9x8xf32> to vector<8x1x8x4xf32>
    %184 = vector.shape_cast %183 : vector<8x1x8x4xf32> to vector<8x8x4xf32>
    %185 = arith.truncf %184 : vector<8x8x4xf32> to vector<8x8x4xbf16>
    %c0_230 = arith.constant 0 : index
    %c0_231 = arith.constant 0 : index
    %c0_232 = arith.constant 0 : index
    %c16_233 = arith.constant 16 : index
    %186 = vector.load %arg8[%c0_230, %c0_231, %c0_232, %c16_233] : memref<2x16x8x36xbf16, #tpu.memory_space<vmem>>, vector<1x8x8x4xbf16>
    %187 = vector.shape_cast %186 : vector<1x8x8x4xbf16> to vector<8x8x4xbf16>
    %188 = vector.shape_cast %185 : vector<8x8x4xbf16> to vector<1x8x8x4xbf16>
    tpu.vector_store %arg8[%c0_230, %c0_231, %c0_232, %c16_233], %188 {strides = array<i32>} : memref<2x16x8x36xbf16, #tpu.memory_space<vmem>>, vector<1x8x8x4xbf16>,
    %189 = vector.extract_strided_slice %158 {offsets = [0, 1, 1, 0], sizes = [8, 1, 8, 4], strides = [1, 1, 1, 1]} : vector<9x2x9x8xf32> to vector<8x1x8x4xf32>
    %190 = vector.shape_cast %189 : vector<8x1x8x4xf32> to vector<8x8x4xf32>
    %191 = arith.truncf %190 : vector<8x8x4xf32> to vector<8x8x4xbf16>
    %c0_234 = arith.constant 0 : index
    %c0_235 = arith.constant 0 : index
    %c0_236 = arith.constant 0 : index
    %c20_237 = arith.constant 20 : index
    %192 = vector.load %arg8[%c0_234, %c0_235, %c0_236, %c20_237] : memref<2x16x8x36xbf16, #tpu.memory_space<vmem>>, vector<1x8x8x4xbf16>
    %193 = vector.shape_cast %192 : vector<1x8x8x4xbf16> to vector<8x8x4xbf16>
    %194 = vector.shape_cast %191 : vector<8x8x4xbf16> to vector<1x8x8x4xbf16>
    tpu.vector_store %arg8[%c0_234, %c0_235, %c0_236, %c20_237], %194 {strides = array<i32>} : memref<2x16x8x36xbf16, #tpu.memory_space<vmem>>, vector<1x8x8x4xbf16>,
    %195 = vector.extract_strided_slice %158 {offsets = [1, 0, 0, 0], sizes = [8, 1, 8, 4], strides = [1, 1, 1, 1]} : vector<9x2x9x8xf32> to vector<8x1x8x4xf32>
    %196 = vector.shape_cast %195 : vector<8x1x8x4xf32> to vector<8x8x4xf32>
    %197 = arith.truncf %196 : vector<8x8x4xf32> to vector<8x8x4xbf16>
    %c0_238 = arith.constant 0 : index
    %c0_239 = arith.constant 0 : index
    %c0_240 = arith.constant 0 : index
    %c24_241 = arith.constant 24 : index
    %198 = vector.load %arg8[%c0_238, %c0_239, %c0_240, %c24_241] : memref<2x16x8x36xbf16, #tpu.memory_space<vmem>>, vector<1x8x8x4xbf16>
    %199 = vector.shape_cast %198 : vector<1x8x8x4xbf16> to vector<8x8x4xbf16>
    %200 = vector.shape_cast %197 : vector<8x8x4xbf16> to vector<1x8x8x4xbf16>
    tpu.vector_store %arg8[%c0_238, %c0_239, %c0_240, %c24_241], %200 {strides = array<i32>} : memref<2x16x8x36xbf16, #tpu.memory_space<vmem>>, vector<1x8x8x4xbf16>,
    %201 = vector.extract_strided_slice %158 {offsets = [1, 0, 0, 4], sizes = [8, 1, 8, 4], strides = [1, 1, 1, 1]} : vector<9x2x9x8xf32> to vector<8x1x8x4xf32>
    %202 = vector.shape_cast %201 : vector<8x1x8x4xf32> to vector<8x8x4xf32>
    %203 = arith.truncf %202 : vector<8x8x4xf32> to vector<8x8x4xbf16>
    %c0_242 = arith.constant 0 : index
    %c0_243 = arith.constant 0 : index
    %c0_244 = arith.constant 0 : index
    %c28_245 = arith.constant 28 : index
    %204 = vector.load %arg8[%c0_242, %c0_243, %c0_244, %c28_245] : memref<2x16x8x36xbf16, #tpu.memory_space<vmem>>, vector<1x8x8x4xbf16>
    %205 = vector.shape_cast %204 : vector<1x8x8x4xbf16> to vector<8x8x4xbf16>
    %206 = vector.shape_cast %203 : vector<8x8x4xbf16> to vector<1x8x8x4xbf16>
    tpu.vector_store %arg8[%c0_242, %c0_243, %c0_244, %c28_245], %206 {strides = array<i32>} : memref<2x16x8x36xbf16, #tpu.memory_space<vmem>>, vector<1x8x8x4xbf16>,
    %207 = vector.extract_strided_slice %158 {offsets = [1, 0, 1, 0], sizes = [8, 1, 8, 4], strides = [1, 1, 1, 1]} : vector<9x2x9x8xf32> to vector<8x1x8x4xf32>
    %208 = vector.shape_cast %207 : vector<8x1x8x4xf32> to vector<8x8x4xf32>
    %209 = arith.truncf %208 : vector<8x8x4xf32> to vector<8x8x4xbf16>
    %c0_246 = arith.constant 0 : index
    %c0_247 = arith.constant 0 : index
    %c0_248 = arith.constant 0 : index
    %c32_249 = arith.constant 32 : index
    %210 = vector.load %arg8[%c0_246, %c0_247, %c0_248, %c32_249] : memref<2x16x8x36xbf16, #tpu.memory_space<vmem>>, vector<1x8x8x4xbf16>
    %211 = vector.shape_cast %210 : vector<1x8x8x4xbf16> to vector<8x8x4xbf16>
    %212 = vector.shape_cast %209 : vector<8x8x4xbf16> to vector<1x8x8x4xbf16>
    tpu.vector_store %arg8[%c0_246, %c0_247, %c0_248, %c32_249], %212 {strides = array<i32>} : memref<2x16x8x36xbf16, #tpu.memory_space<vmem>>, vector<1x8x8x4xbf16>,
    %c0_250 = arith.constant 0 : index
    %c0_251 = arith.constant 0 : index
    %c0_252 = arith.constant 0 : index
    %c0_253 = arith.constant 0 : index
    %213 = vector.load %arg8[%c0_250, %c0_251, %c0_252, %c0_253] : memref<2x16x8x36xbf16, #tpu.memory_space<vmem>>, vector<1x8x8x36xbf16>
    %214 = vector.shape_cast %213 : vector<1x8x8x36xbf16> to vector<8x8x36xbf16>
    %215 = vector.shape_cast %214 : vector<8x8x36xbf16> to vector<64x36xbf16>
    %c0_254 = arith.constant 0 : index
    %c0_255 = arith.constant 0 : index
    %216 = vector.load %arg4[%c0_254, %c0_255] : memref<36x8xbf16, #tpu.memory_space<vmem>>, vector<36x8xbf16>
    %cst_256 = arith.constant dense<0.000000e+00> : vector<64x8xf32>
    %217 = tpu.matmul %215, %216, %cst_256 {dimension_numbers = #tpu.dot_dimension_numbers<[1], [0], [0], [1], [0, 0, 1, 1], [], []>} : vector<64x36xbf16>, vector<36x8xbf16>, vector<64x8xf32> -> vector<64x8xf32>
    %c0_257 = arith.constant 0 : index
    %c0_258 = arith.constant 0 : index
    %218 = vector.load %arg5[%c0_257, %c0_258] : memref<1x8xf32, #tpu.memory_space<vmem>>, vector<1x8xf32>
    %219 = vector.broadcast %218 : vector<1x8xf32> to vector<64x8xf32>
    %220 = arith.addf %217, %219 : vector<64x8xf32>
    %cst_259 = arith.constant 0.000000e+00 : f32
    %221 = vector.broadcast %cst_259 : f32 to vector<64x8xf32>
    %222 = arith.cmpf oge, %220, %221 : vector<64x8xf32>
    %cst_260 = arith.constant 1.41421354 : f32
    %cst_261 = arith.constant 0.282842726 : f32
    %223 = vector.broadcast %cst_260 : f32 to vector<64x8xf32>
    %224 = vector.broadcast %cst_261 : f32 to vector<64x8xf32>
    %225 = arith.select %222, %223, %224 : vector<64x8xi1>, vector<64x8xf32>
    %226 = arith.mulf %220, %225 : vector<64x8xf32>
    %227 = vector.shape_cast %226 : vector<64x8xf32> to vector<8x8x8xf32>
    %c0_262 = arith.constant 0 : index
    %c0_263 = arith.constant 0 : index
    %c0_264 = arith.constant 0 : index
    %c0_265 = arith.constant 0 : index
    %228 = vector.load %arg6[%c0_262, %c0_263, %c0_264, %c0_265] : memref<1x8x8x8xf32, #tpu.memory_space<vmem>>, vector<1x8x8x8xf32>
    %229 = vector.shape_cast %228 : vector<1x8x8x8xf32> to vector<8x8x8xf32>
    %230 = vector.shape_cast %227 : vector<8x8x8xf32> to vector<1x8x8x8xf32>
    tpu.vector_store %arg6[%c0_262, %c0_263, %c0_264, %c0_265], %230 {strides = array<i32>} : memref<1x8x8x8xf32, #tpu.memory_space<vmem>>, vector<1x8x8x8xf32>,
    return
  }
  func.func @transform_0(%arg0: i32) -> (i32, i32, i32, i32) {
    %c0_i32 = arith.constant 0 : i32
    %c0_i32_0 = arith.constant 0 : i32
    %c0_i32_1 = arith.constant 0 : i32
    %c0_i32_2 = arith.constant 0 : i32
    return %arg0, %c0_i32, %c0_i32_0, %c0_i32_1 : i32, i32, i32, i32
  }
  func.func @transform_1(%arg0: i32) -> (i32, i32) {
    %c0_i32 = arith.constant 0 : i32
    %c0_i32_0 = arith.constant 0 : i32
    %c0_i32_1 = arith.constant 0 : i32
    return %c0_i32, %c0_i32_0 : i32, i32
  }
  func.func @transform_2(%arg0: i32) -> (i32, i32) {
    %c0_i32 = arith.constant 0 : i32
    %c0_i32_0 = arith.constant 0 : i32
    %c0_i32_1 = arith.constant 0 : i32
    return %c0_i32, %c0_i32_0 : i32, i32
  }
  func.func @transform_3(%arg0: i32) -> (i32, i32) {
    %c0_i32 = arith.constant 0 : i32
    %c0_i32_0 = arith.constant 0 : i32
    %c0_i32_1 = arith.constant 0 : i32
    return %c0_i32, %c0_i32_0 : i32, i32
  }
  func.func @transform_4(%arg0: i32) -> (i32, i32) {
    %c0_i32 = arith.constant 0 : i32
    %c0_i32_0 = arith.constant 0 : i32
    %c0_i32_1 = arith.constant 0 : i32
    return %c0_i32, %c0_i32_0 : i32, i32
  }
  func.func @transform_5(%arg0: i32) -> (i32, i32, i32, i32) {
    %c0_i32 = arith.constant 0 : i32
    %c0_i32_0 = arith.constant 0 : i32
    %c0_i32_1 = arith.constant 0 : i32
    %c0_i32_2 = arith.constant 0 : i32
    return %arg0, %c0_i32, %c0_i32_0, %c0_i32_1 : i32, i32, i32, i32
  }
}

</mosaic_0001>

<llo_original>
// kernel: disc_block_forward.1
$region0: #{disc_block_forward.1}
  #allocation0 [shape = 'u32[]', space=smem, size = 0x4, offset = 0x4, fixed_abs, tag = 'smem constant byte address 0x4 - core index']
  #allocation1 [shape = 'u32[144,128]{1,0:T(1,128)}', space=vmem, size = 0x12000, scoped, tag = 'internal scratch']
  #allocation2 [shape = 'bf16[18,9,8]{2,1,0:T(8,128)(2,1)}', space=vmem, size = 0x12000, scoped, tag = 'scratch operand']
  #allocation3 [shape = 'bf16[2,16,8,36]{3,2,1,0:T(8,128)(2,1)}', space=vmem, size = 0x10000, scoped, tag = 'scratch operand']
  #allocation4 [shape = 'f32[20,10,8]{2,1,0:T(8,128)}', space=vmem, size = 0x28000, scoped, tag = 'scratch operand']
  #allocation5 [shape = 'f32[21,9,8]{2,1,0:T(8,128)}', space=vmem, size = 0x2a000, scoped, tag = 'scratch operand']
  %s0 = inlined_call_operand.vmem [shape: f32[2,16,8,8], index: 0, kind: input, shape index: {}]
  %s1 = inlined_call_operand.vmem [shape: bf16[36,4], index: 1, kind: input, shape index: {}]
  %s2 = inlined_call_operand.vmem [shape: f32[1,4], index: 2, kind: input, shape index: {}]
  %s3 = inlined_call_operand.vmem [shape: bf16[36,8], index: 3, kind: input, shape index: {}]
  %s4 = inlined_call_operand.vmem [shape: f32[1,8], index: 4, kind: input, shape index: {}]
  %s5 = inlined_call_operand.vmem [shape: f32[2,8,8,8], index: 5, kind: output, shape index: {}]
  %s6 = sld [smem:[#allocation0]]
  $region53: #{disc_block_forward.1} parent=0
    _
  %s8 = ssub.s32 1, %s6
  %s9 = scalar_select 0, %s8, %s6
  loop: start=0, step=1, limit=4
  $region2: #{disc_block_forward.1} parent=0 // loop_pre_header
    _
  $region3: #{disc_block_forward.1} parent=0 // loop_header
    %s11 = sphi 0, %s15
    %p12 = scmp.ge.s32.totalorder %s11, 4
    %s21 = sphi 0, %s23
    %s24 = sphi 0, %s21
    %s25 = sphi 0, %s24
    %s41 = sphi 0, %s25
    %s45 = sphi 0, %s45
    %s47 = sphi 0, %s45
    %s48 = sphi 0, %s47
    %s62 = sphi 0, %s48
    %s66 = sphi 0, %s66
    %s68 = sphi 0, %s66
    %s69 = sphi 0, %s68
    %s83 = sphi 0, %s69
    %s87 = sphi 0, %s87
    %s89 = sphi 0, %s87
    %s90 = sphi 0, %s89
    %s104 = sphi 0, %s90
    %s108 = sphi 0, %s108
    %s110 = sphi 0, %s108
    %s111 = sphi 0, %s110
    %s125 = sphi 0, %s111
    %s131 = sphi 0, %s133
    %s134 = sphi 0, %s131
    %s135 = sphi 0, %s134
    %s151 = sphi 0, %s135
  $region4: #{disc_block_forward.1} parent=0 // loop_header_branch
    %14 = sbr.rel (%p12) target = $region8
  $region5: #{disc_block_forward.1} parent=0 // loop_body
    %s16 = ssub.s32 %s11, 1
    %s17 = ssub.s32 %s11, 2
    %s18 = sadd.s32 %s11, 1
    %s19 = ssub.s32 %s11, %s18
    %p20 = scmp.eq.s32.totalorder %s19, 0
    %s22 = sadd.s32 %s21, 1
    %s23 = scalar_select %p20, %s21, %s22
    %p26 = pneg %p20
    %p27 = scmp.eq.s32.totalorder %s11, 1
    %p28 = por %p26, %p27
    %p29 = scmp.ne.s32.totalorder %s21, %s24
    %p30 = scmp.eq.s32.totalorder %s11, 0
    %p31 = por %p29, %p30
    %p32 = scmp.ne.s32.totalorder %s21, %s24
    %p33 = scmp.eq.s32.totalorder %s16, 1
    %p34 = por %p32, %p33
    %p35 = scmp.ne.s32.totalorder %s24, %s25
    %p36 = scmp.eq.s32.totalorder %s16, 0
    %p37 = por %p35, %p36
    %p38 = scmp.ne.s32.totalorder %s24, %s25
    %p39 = scmp.eq.s32.totalorder %s17, 1
    %p40 = por %p38, %p39
    %p42 = scmp.ne.s32.totalorder %s25, %s41
    %p43 = scmp.eq.s32.totalorder %s17, 0
    %p44 = por %p42, %p43
    %s46 = sadd.s32 %s45, 1
    %p49 = scmp.eq.s32.totalorder %s11, 1
    %p50 = scmp.ne.s32.totalorder %s45, %s47
    %p51 = scmp.eq.s32.totalorder %s11, 0
    %p52 = por %p50, %p51
    %p53 = scmp.ne.s32.totalorder %s45, %s47
    %p54 = scmp.eq.s32.totalorder %s16, 1
    %p55 = por %p53, %p54
    %p56 = scmp.ne.s32.totalorder %s47, %s48
    %p57 = scmp.eq.s32.totalorder %s16, 0
    %p58 = por %p56, %p57
    %p59 = scmp.ne.s32.totalorder %s47, %s48
    %p60 = scmp.eq.s32.totalorder %s17, 1
    %p61 = por %p59, %p60
    %p63 = scmp.ne.s32.totalorder %s48, %s62
    %p64 = scmp.eq.s32.totalorder %s17, 0
    %p65 = por %p63, %p64
    %s67 = sadd.s32 %s66, 1
    %p70 = scmp.eq.s32.totalorder %s11, 1
    %p71 = scmp.ne.s32.totalorder %s66, %s68
    %p72 = scmp.eq.s32.totalorder %s11, 0
    %p73 = por %p71, %p72
    %p74 = scmp.ne.s32.totalorder %s66, %s68
    %p75 = scmp.eq.s32.totalorder %s16, 1
    %p76 = por %p74, %p75
    %p77 = scmp.ne.s32.totalorder %s68, %s69
    %p78 = scmp.eq.s32.totalorder %s16, 0
    %p79 = por %p77, %p78
    %p80 = scmp.ne.s32.totalorder %s68, %s69
    %p81 = scmp.eq.s32.totalorder %s17, 1
    %p82 = por %p80, %p81
    %p84 = scmp.ne.s32.totalorder %s69, %s83
    %p85 = scmp.eq.s32.totalorder %s17, 0
    %p86 = por %p84, %p85
    %s88 = sadd.s32 %s87, 1
    %p91 = scmp.eq.s32.totalorder %s11, 1
    %p92 = scmp.ne.s32.totalorder %s87, %s89
    %p93 = scmp.eq.s32.totalorder %s11, 0
    %p94 = por %p92, %p93
    %p95 = scmp.ne.s32.totalorder %s87, %s89
    %p96 = scmp.eq.s32.totalorder %s16, 1
    %p97 = por %p95, %p96
    %p98 = scmp.ne.s32.totalorder %s89, %s90
    %p99 = scmp.eq.s32.totalorder %s16, 0
    %p100 = por %p98, %p99
    %p101 = scmp.ne.s32.totalorder %s89, %s90
    %p102 = scmp.eq.s32.totalorder %s17, 1
    %p103 = por %p101, %p102
    %p105 = scmp.ne.s32.totalorder %s90, %s104
    %p106 = scmp.eq.s32.totalorder %s17, 0
    %p107 = por %p105, %p106
    %s109 = sadd.s32 %s108, 1
    %p112 = scmp.eq.s32.totalorder %s11, 1
    %p113 = scmp.ne.s32.totalorder %s108, %s110
    %p114 = scmp.eq.s32.totalorder %s11, 0
    %p115 = por %p113, %p114
    %p116 = scmp.ne.s32.totalorder %s108, %s110
    %p117 = scmp.eq.s32.totalorder %s16, 1
    %p118 = por %p116, %p117
    %p119 = scmp.ne.s32.totalorder %s110, %s111
    %p120 = scmp.eq.s32.totalorder %s16, 0
    %p121 = por %p119, %p120
    %p122 = scmp.ne.s32.totalorder %s110, %s111
    %p123 = scmp.eq.s32.totalorder %s17, 1
    %p124 = por %p122, %p123
    %p126 = scmp.ne.s32.totalorder %s111, %s125
    %p127 = scmp.eq.s32.totalorder %s17, 0
    %p128 = por %p126, %p127
    %s129 = ssub.s32 %s11, %s18
    %p130 = scmp.eq.s32.totalorder %s129, 0
    %s132 = sadd.s32 %s131, 1
    %s133 = scalar_select %p130, %s131, %s132
    %p136 = pneg %p130
    %p137 = scmp.eq.s32.totalorder %s11, 1
    %p138 = por %p136, %p137
    %p139 = scmp.ne.s32.totalorder %s131, %s134
    %p140 = scmp.eq.s32.totalorder %s11, 0
    %p141 = por %p139, %p140
    %p142 = scmp.ne.s32.totalorder %s131, %s134
    %p143 = scmp.eq.s32.totalorder %s16, 1
    %p144 = por %p142, %p143
    %p145 = scmp.ne.s32.totalorder %s134, %s135
    %p146 = scmp.eq.s32.totalorder %s16, 0
    %p147 = por %p145, %p146
    %p148 = scmp.ne.s32.totalorder %s134, %s135
    %p149 = scmp.eq.s32.totalorder %s17, 1
    %p150 = por %p148, %p149
    %p152 = scmp.ne.s32.totalorder %s135, %s151
    %p153 = scmp.eq.s32.totalorder %s17, 0
    %p154 = por %p152, %p153
    %p155 = scmp.le.s32.totalorder 1, %s11
    %p156 = scmp.lt.s32.totalorder %s11, 3
    %p157 = pnand %p155, %p156
    %p158 = pneg %p157
    // Predicated region
    $region9: #{disc_block_forward.1} parent=5 // pred_check
      _
    $region10: #{disc_block_forward.1} parent=5 // pred_check_branch
      %160 = sbr.rel (%p157) target = $region12
    $region11: #{disc_block_forward.1} parent=5 // pred_region
      %s161 = ssub.s32 %s11, 1
      // Predicated region
      $region13: #{disc_block_forward.1} parent=11 // pred_check
        %p162 = pneg %p58
      $region14: #{disc_block_forward.1} parent=11 // pred_check_branch
        %164 = sbr.rel (%p162) target = $region16
      $region15: #{disc_block_forward.1} parent=11 // pred_region
        _
      $region16: #{disc_block_forward.1} parent=11 // pred_fallthru
        _
      // Predicated region
      $region17: #{disc_block_forward.1} parent=11 // pred_check
        %p165 = pneg %p79
      $region18: #{disc_block_forward.1} parent=11 // pred_check_branch
        %167 = sbr.rel (%p165) target = $region20
      $region19: #{disc_block_forward.1} parent=11 // pred_region
        _
      $region20: #{disc_block_forward.1} parent=11 // pred_fallthru
        _
      // Predicated region
      $region21: #{disc_block_forward.1} parent=11 // pred_check
        %p168 = pneg %p100
      $region22: #{disc_block_forward.1} parent=11 // pred_check_branch
        %170 = sbr.rel (%p168) target = $region24
      $region23: #{disc_block_forward.1} parent=11 // pred_region
        _
      $region24: #{disc_block_forward.1} parent=11 // pred_fallthru
        _
      // Predicated region
      $region25: #{disc_block_forward.1} parent=11 // pred_check
        %p171 = pneg %p121
      $region26: #{disc_block_forward.1} parent=11 // pred_check_branch
        %173 = sbr.rel (%p171) target = $region28
      $region27: #{disc_block_forward.1} parent=11 // pred_region
        _
      $region28: #{disc_block_forward.1} parent=11 // pred_fallthru
        _
    $region12: #{disc_block_forward.1} parent=5 // pred_fallthru
      _
    %p174 = scmp.lt.s32.totalorder %s11, 2
    // Predicated region
    $region29: #{disc_block_forward.1} parent=5 // pred_check
      %p175 = pneg %p174
    $region30: #{disc_block_forward.1} parent=5 // pred_check_branch
      %177 = sbr.rel (%p175) target = $region32
    $region31: #{disc_block_forward.1} parent=5 // pred_region
      // Predicated region
      $region33: #{disc_block_forward.1} parent=31 // pred_check
        %p178 = pneg %p31
      $region34: #{disc_block_forward.1} parent=31 // pred_check_branch
        %180 = sbr.rel (%p178) target = $region36
      $region35: #{disc_block_forward.1} parent=31 // pred_region
        %p181 = scmp.lt.s32.totalorder %s11, 1
        %s182 = scalar_select %p181, %s11, 1
        %s183 = smul.addr %s182, 16
        %s184 = smul.addr %s183, 8
        %s185 = scalar_lea.vmem %s0, %s184
      $region36: #{disc_block_forward.1} parent=31 // pred_fallthru
        _
    $region32: #{disc_block_forward.1} parent=5 // pred_fallthru
      _
    %p186 = scmp.le.s32.totalorder 1, %s11
    %p187 = scmp.lt.s32.totalorder %s11, 3
    %p188 = pnand %p186, %p187
    %p189 = pneg %p188
    // Predicated region
    $region37: #{disc_block_forward.1} parent=5 // pred_check
      _
    $region38: #{disc_block_forward.1} parent=5 // pred_check_branch
      %191 = sbr.rel (%p188) target = $region40
    $region39: #{disc_block_forward.1} parent=5 // pred_region
      %s192 = ssub.s32 %s11, 1
      %p193 = scmp.lt.s32.totalorder %s16, 1
      %s194 = scalar_select %p193, %s16, 1
      %s195 = smul.addr %s194, 16
      %s196 = smul.addr %s195, 8
      %s197 = scalar_lea.vmem %s0, %s196
      %p198 = pneg %p37
      %p199 = pneg %p34
      %p200 = pneg %p58
      %p201 = pneg %p55
      %p202 = pneg %p79
      %p203 = pneg %p76
      %p204 = pneg %p100
      %p205 = pneg %p97
      %p206 = pneg %p121
      %p207 = pneg %p118
      %p208 = pneg %p147
      %p209 = pneg %p144
      %p210 = scmp.lt.s32.totalorder %s16, 1
      %s211 = scalar_select %p210, %s16, 1
      %s212 = smul.addr %s211, 8
      %s213 = smul.addr %s212, 8
      %s214 = scalar_lea.vmem %s5, %s213
      %p215 = scmp.lt.s32.totalorder %s16, 1
      %s216 = scalar_select %p215, %s16, 1
      %s217 = smul.addr %s216, 16
      %s218 = smul.addr %s217, 8
      %s219 = scalar_lea.vmem %s0, %s218
      %p220 = scmp.lt.s32.totalorder %s16, 1
      %s221 = scalar_select %p220, %s16, 1
      %s222 = smul.addr %s221, 8
      %s223 = smul.addr %s222, 8
      %s224 = scalar_lea.vmem %s5, %s223
      %vm226 = vcmask 60416
      %227 = vst.msk [vmem:[#allocation2] sm:$0xf] %vm226, 0
      %vm228 = vcmask 57344
      %vm229 = vsmask.f32 256
      %vm230 = vmand %vm228, %vm229
      %v231 = vld [vmem:[#allocation2 + $0x4] sm:$0x1]
      %v232 = vsel %vm230, 0, %v231
      %233 = vst [vmem:[#allocation2 + $0x4] sm:$0x1] %v232
      %234 = vst.msk [vmem:[#allocation2 + $0x8] sm:$0xf] %vm226, 0
      %v235 = vld [vmem:[#allocation2 + $0xc] sm:$0x1]
      %v236 = vsel %vm230, 0, %v235
      %237 = vst [vmem:[#allocation2 + $0xc] sm:$0x1] %v236
      %238 = vst.msk [vmem:[#allocation2 + $0x10] sm:$0xf] %vm226, 0
      %v239 = vld [vmem:[#allocation2 + $0x14] sm:$0x1]
      %v240 = vsel %vm230, 0, %v239
      %241 = vst [vmem:[#allocation2 + $0x14] sm:$0x1] %v240
      %242 = vst.msk [vmem:[#allocation2 + $0x18] sm:$0xf] %vm226, 0
      %v243 = vld [vmem:[#allocation2 + $0x1c] sm:$0x1]
      %v244 = vsel %vm230, 0, %v243
      %245 = vst [vmem:[#allocation2 + $0x1c] sm:$0x1] %v244
      %246 = vst.msk [vmem:[#allocation2 + $0x20] sm:$0xf] %vm226, 0
      %v247 = vld [vmem:[#allocation2 + $0x24] sm:$0x1]
      %v248 = vsel %vm230, 0, %v247
      %249 = vst [vmem:[#allocation2 + $0x24] sm:$0x1] %v248
      %250 = vst.msk [vmem:[#allocation2 + $0x28] sm:$0xf] %vm226, 0
      %v251 = vld [vmem:[#allocation2 + $0x2c] sm:$0x1]
      %v252 = vsel %vm230, 0, %v251
      %253 = vst [vmem:[#allocation2 + $0x2c] sm:$0x1] %v252
      %254 = vst.msk [vmem:[#allocation2 + $0x30] sm:$0xf] %vm226, 0
      %v255 = vld [vmem:[#allocation2 + $0x34] sm:$0x1]
      %v256 = vsel %vm230, 0, %v255
      %257 = vst [vmem:[#allocation2 + $0x34] sm:$0x1] %v256
      %258 = vst.msk [vmem:[#allocation2 + $0x38] sm:$0xf] %vm226, 0
      %v259 = vld [vmem:[#allocation2 + $0x3c] sm:$0x1]
      %v260 = vsel %vm230, 0, %v259
      %261 = vst [vmem:[#allocation2 + $0x3c] sm:$0x1] %v260
      %262 = vst.msk [vmem:[#allocation2 + $0x40] sm:$0xf] %vm226, 0
      %v263 = vld [vmem:[#allocation2 + $0x44] sm:$0x1]
      %v264 = vsel %vm230, 0, %v263
      %265 = vst [vmem:[#allocation2 + $0x44] sm:$0x1] %v264
      %266 = vst.msk [vmem:[#allocation2 + $0x48] sm:$0xf] %vm226, 0
      %v267 = vld [vmem:[#allocation2 + $0x4c] sm:$0x1]
      %v268 = vsel %vm230, 0, %v267
      %269 = vst [vmem:[#allocation2 + $0x4c] sm:$0x1] %v268
      %270 = vst.msk [vmem:[#allocation2 + $0x50] sm:$0xf] %vm226, 0
      %v271 = vld [vmem:[#allocation2 + $0x54] sm:$0x1]
      %v272 = vsel %vm230, 0, %v271
      %273 = vst [vmem:[#allocation2 + $0x54] sm:$0x1] %v272
      %274 = vst.msk [vmem:[#allocation2 + $0x58] sm:$0xf] %vm226, 0
      %v275 = vld [vmem:[#allocation2 + $0x5c] sm:$0x1]
      %v276 = vsel %vm230, 0, %v275
      %277 = vst [vmem:[#allocation2 + $0x5c] sm:$0x1] %v276
      %278 = vst.msk [vmem:[#allocation2 + $0x60] sm:$0xf] %vm226, 0
      %v279 = vld [vmem:[#allocation2 + $0x64] sm:$0x1]
      %v280 = vsel %vm230, 0, %v279
      %281 = vst [vmem:[#allocation2 + $0x64] sm:$0x1] %v280
      %282 = vst.msk [vmem:[#allocation2 + $0x68] sm:$0xf] %vm226, 0
      %v283 = vld [vmem:[#allocation2 + $0x6c] sm:$0x1]
      %v284 = vsel %vm230, 0, %v283
      %285 = vst [vmem:[#allocation2 + $0x6c] sm:$0x1] %v284
      %286 = vst.msk [vmem:[#allocation2 + $0x70] sm:$0xf] %vm226, 0
      %v287 = vld [vmem:[#allocation2 + $0x74] sm:$0x1]
      %v288 = vsel %vm230, 0, %v287
      %289 = vst [vmem:[#allocation2 + $0x74] sm:$0x1] %v288
      %290 = vst.msk [vmem:[#allocation2 + $0x78] sm:$0xf] %vm226, 0
      %v291 = vld [vmem:[#allocation2 + $0x7c] sm:$0x1]
      %v292 = vsel %vm230, 0, %v291
      %293 = vst [vmem:[#allocation2 + $0x7c] sm:$0x1] %v292
      %294 = vst.msk [vmem:[#allocation2 + $0x80] sm:$0xf] %vm226, 0
      %v295 = vld [vmem:[#allocation2 + $0x84] sm:$0x1]
      %v296 = vsel %vm230, 0, %v295
      %297 = vst [vmem:[#allocation2 + $0x84] sm:$0x1] %v296
      %298 = vst.msk [vmem:[#allocation2 + $0x88] sm:$0xf] %vm226, 0
      %v299 = vld [vmem:[#allocation2 + $0x8c] sm:$0x1]
      %v300 = vsel %vm230, 0, %v299
      %301 = vst [vmem:[#allocation2 + $0x8c] sm:$0x1] %v300
      %v302 = vld [vmem:[%s219] sm:$0xff]
      %v303 = vld [vmem:[%s219 + $0x8] sm:$0xff]
      %v304 = vld [vmem:[%s219 + $0x10] sm:$0xff]
      %v305 = vld [vmem:[%s219 + $0x18] sm:$0xff]
      %v306 = vld [vmem:[%s219 + $0x20] sm:$0xff]
      %v307 = vld [vmem:[%s219 + $0x28] sm:$0xff]
      %v308 = vld [vmem:[%s219 + $0x30] sm:$0xff]
      %v309 = vld [vmem:[%s219 + $0x38] sm:$0xff]
      %v310 = vld [vmem:[%s219 + $0x40] sm:$0xff]
      %v311 = vld [vmem:[%s219 + $0x48] sm:$0xff]
      %v312 = vld [vmem:[%s219 + $0x50] sm:$0xff]
      %v313 = vld [vmem:[%s219 + $0x58] sm:$0xff]
      %v314 = vld [vmem:[%s219 + $0x60] sm:$0xff]
      %v315 = vld [vmem:[%s219 + $0x68] sm:$0xff]
      %v316 = vld [vmem:[%s219 + $0x70] sm:$0xff]
      %v317 = vld [vmem:[%s219 + $0x78] sm:$0xff]
      %v318 = vpack.c.bf16 %v302, %v302
      %v319 = vpack.c.bf16 %v303, %v303
      %v320 = vpack.c.bf16 %v304, %v304
      %v321 = vpack.c.bf16 %v305, %v305
      %v322 = vpack.c.bf16 %v306, %v306
      %v323 = vpack.c.bf16 %v307, %v307
      %v324 = vpack.c.bf16 %v308, %v308
      %v325 = vpack.c.bf16 %v309, %v309
      %v326 = vpack.c.bf16 %v310, %v310
      %v327 = vpack.c.bf16 %v311, %v311
      %v328 = vpack.c.bf16 %v312, %v312
      %v329 = vpack.c.bf16 %v313, %v313
      %v330 = vpack.c.bf16 %v314, %v314
      %v331 = vpack.c.bf16 %v315, %v315
      %v332 = vpack.c.bf16 %v316, %v316
      %v333 = vpack.c.bf16 %v317, %v317
      %v350 = vunpack.c.l.b16 %v318
      %v351 = vunpack.c.l.b16 %v319
      %v352 = vunpack.c.l.b16 %v320
      %v353 = vunpack.c.l.b16 %v321
      %v354 = vunpack.c.l.b16 %v322
      %v355 = vunpack.c.l.b16 %v323
      %v356 = vunpack.c.l.b16 %v324
      %v357 = vunpack.c.l.b16 %v325
      %v358 = vunpack.c.l.b16 %v326
      %v359 = vunpack.c.l.b16 %v327
      %v360 = vunpack.c.l.b16 %v328
      %v361 = vunpack.c.l.b16 %v329
      %v362 = vunpack.c.l.b16 %v330
      %v363 = vunpack.c.l.b16 %v331
      %v364 = vunpack.c.l.b16 %v332
      %v365 = vunpack.c.l.b16 %v333
      %v366 = vpack.c.b16 %v350, %v350
      %v367 = vpack.c.b16 %v351, %v351
      %v368 = vpack.c.b16 %v352, %v352
      %v369 = vpack.c.b16 %v353, %v353
      %v370 = vpack.c.b16 %v354, %v354
      %v371 = vpack.c.b16 %v355, %v355
      %v372 = vpack.c.b16 %v356, %v356
      %v373 = vpack.c.b16 %v357, %v357
      %v374 = vpack.c.b16 %v358, %v358
      %v375 = vpack.c.b16 %v359, %v359
      %v376 = vpack.c.b16 %v360, %v360
      %v377 = vpack.c.b16 %v361, %v361
      %v378 = vpack.c.b16 %v362, %v362
      %v379 = vpack.c.b16 %v363, %v363
      %v380 = vpack.c.b16 %v364, %v364
      %v381 = vpack.c.b16 %v365, %v365
      %382 = vrot.lane.b32.xlu0 %v366, 4
      %v383 = vpop.permute.xlu0 %382
      %384 = vrot.lane.b32.xlu0 %v367, 4
      %v385 = vpop.permute.xlu0 %384
      %386 = vrot.lane.b32.xlu0 %v368, 4
      %v387 = vpop.permute.xlu0 %386
      %388 = vrot.lane.b32.xlu0 %v369, 4
      %v389 = vpop.permute.xlu0 %388
      %390 = vrot.lane.b32.xlu0 %v370, 4
      %v391 = vpop.permute.xlu0 %390
      %392 = vrot.lane.b32.xlu0 %v371, 4
      %v393 = vpop.permute.xlu0 %392
      %394 = vrot.lane.b32.xlu0 %v372, 4
      %v395 = vpop.permute.xlu0 %394
      %396 = vrot.lane.b32.xlu0 %v373, 4
      %v397 = vpop.permute.xlu0 %396
      %398 = vrot.lane.b32.xlu0 %v374, 4
      %v399 = vpop.permute.xlu0 %398
      %400 = vrot.lane.b32.xlu0 %v375, 4
      %v401 = vpop.permute.xlu0 %400
      %402 = vrot.lane.b32.xlu0 %v376, 4
      %v403 = vpop.permute.xlu0 %402
      %404 = vrot.lane.b32.xlu0 %v377, 4
      %v405 = vpop.permute.xlu0 %404
      %406 = vrot.lane.b32.xlu0 %v378, 4
      %v407 = vpop.permute.xlu0 %406
      %408 = vrot.lane.b32.xlu0 %v379, 4
      %v409 = vpop.permute.xlu0 %408
      %410 = vrot.lane.b32.xlu0 %v380, 4
      %v411 = vpop.permute.xlu0 %410
      %412 = vrot.lane.b32.xlu0 %v381, 4
      %v413 = vpop.permute.xlu0 %412
      %s430 = scalar_lea.vmem [#allocation2], 8
      %vm431 = vcmask 60448
      %432 = vst.msk [vmem:[%s430] sm:$0xf] %vm431, %v383
      %433 = vst.msk [vmem:[%s430 + $0x8] sm:$0xf] %vm431, %v385
      %434 = vst.msk [vmem:[%s430 + $0x10] sm:$0xf] %vm431, %v387
      %435 = vst.msk [vmem:[%s430 + $0x18] sm:$0xf] %vm431, %v389
      %436 = vst.msk [vmem:[%s430 + $0x20] sm:$0xf] %vm431, %v391
      %437 = vst.msk [vmem:[%s430 + $0x28] sm:$0xf] %vm431, %v393
      %438 = vst.msk [vmem:[%s430 + $0x30] sm:$0xf] %vm431, %v395
      %439 = vst.msk [vmem:[%s430 + $0x38] sm:$0xf] %vm431, %v397
      %440 = vst.msk [vmem:[%s430 + $0x40] sm:$0xf] %vm431, %v399
      %441 = vst.msk [vmem:[%s430 + $0x48] sm:$0xf] %vm431, %v401
      %442 = vst.msk [vmem:[%s430 + $0x50] sm:$0xf] %vm431, %v403
      %443 = vst.msk [vmem:[%s430 + $0x58] sm:$0xf] %vm431, %v405
      %444 = vst.msk [vmem:[%s430 + $0x60] sm:$0xf] %vm431, %v407
      %445 = vst.msk [vmem:[%s430 + $0x68] sm:$0xf] %vm431, %v409
      %446 = vst.msk [vmem:[%s430 + $0x70] sm:$0xf] %vm431, %v411
      %447 = vst.msk [vmem:[%s430 + $0x78] sm:$0xf] %vm431, %v413
      %v448 = vld [vmem:[%s219] sm:$0xff]
      %v449 = vld [vmem:[%s219 + $0x8] sm:$0xff]
      %v450 = vld [vmem:[%s219 + $0x10] sm:$0xff]
      %v451 = vld [vmem:[%s219 + $0x18] sm:$0xff]
      %v452 = vld [vmem:[%s219 + $0x20] sm:$0xff]
      %v453 = vld [vmem:[%s219 + $0x28] sm:$0xff]
      %v454 = vld [vmem:[%s219 + $0x30] sm:$0xff]
      %v455 = vld [vmem:[%s219 + $0x38] sm:$0xff]
      %v456 = vld [vmem:[%s219 + $0x40] sm:$0xff]
      %v457 = vld [vmem:[%s219 + $0x48] sm:$0xff]
      %v458 = vld [vmem:[%s219 + $0x50] sm:$0xff]
      %v459 = vld [vmem:[%s219 + $0x58] sm:$0xff]
      %v460 = vld [vmem:[%s219 + $0x60] sm:$0xff]
      %v461 = vld [vmem:[%s219 + $0x68] sm:$0xff]
      %v462 = vld [vmem:[%s219 + $0x70] sm:$0xff]
      %v463 = vld [vmem:[%s219 + $0x78] sm:$0xff]
      %v464 = vpack.c.bf16 %v448, %v448
      %v465 = vpack.c.bf16 %v449, %v449
      %v466 = vpack.c.bf16 %v450, %v450
      %v467 = vpack.c.bf16 %v451, %v451
      %v468 = vpack.c.bf16 %v452, %v452
      %v469 = vpack.c.bf16 %v453, %v453
      %v470 = vpack.c.bf16 %v454, %v454
      %v471 = vpack.c.bf16 %v455, %v455
      %v472 = vpack.c.bf16 %v456, %v456
      %v473 = vpack.c.bf16 %v457, %v457
      %v474 = vpack.c.bf16 %v458, %v458
      %v475 = vpack.c.bf16 %v459, %v459
      %v476 = vpack.c.bf16 %v460, %v460
      %v477 = vpack.c.bf16 %v461, %v461
      %v478 = vpack.c.bf16 %v462, %v462
      %v479 = vpack.c.bf16 %v463, %v463
      %v496 = vunpack.c.l.b16 %v464
      %v497 = vunpack.c.l.b16 %v465
      %v498 = vunpack.c.l.b16 %v466
      %v499 = vunpack.c.l.b16 %v467
      %v500 = vunpack.c.l.b16 %v468
      %v501 = vunpack.c.l.b16 %v469
      %v502 = vunpack.c.l.b16 %v470
      %v503 = vunpack.c.l.b16 %v471
      %v504 = vunpack.c.l.b16 %v472
      %v505 = vunpack.c.l.b16 %v473
      %v506 = vunpack.c.l.b16 %v474
      %v507 = vunpack.c.l.b16 %v475
      %v508 = vunpack.c.l.b16 %v476
      %v509 = vunpack.c.l.b16 %v477
      %v510 = vunpack.c.l.b16 %v478
      %v511 = vunpack.c.l.b16 %v479
      %v512 = vpack.c.b16 %v496, %v496
      %v513 = vpack.c.b16 %v497, %v497
      %v514 = vpack.c.b16 %v498, %v498
      %v515 = vpack.c.b16 %v499, %v499
      %v516 = vpack.c.b16 %v500, %v500
      %v517 = vpack.c.b16 %v501, %v501
      %v518 = vpack.c.b16 %v502, %v502
      %v519 = vpack.c.b16 %v503, %v503
      %v520 = vpack.c.b16 %v504, %v504
      %v521 = vpack.c.b16 %v505, %v505
      %v522 = vpack.c.b16 %v506, %v506
      %v523 = vpack.c.b16 %v507, %v507
      %v524 = vpack.c.b16 %v508, %v508
      %v525 = vpack.c.b16 %v509, %v509
      %v526 = vpack.c.b16 %v510, %v510
      %v527 = vpack.c.b16 %v511, %v511
      %v529 = vshrl.u32 %v512, 16
      %v531 = vrot.slane %v529, 7
      %v532 = vshll.u32 %v512, 16
      %v534 = vor.u32 %v531, %v532
      %v535 = vrot.slane %v531, 4
      %v537 = vshrl.u32 %v513, 16
      %v539 = vrot.slane %v537, 7
      %v540 = vshll.u32 %v513, 16
      %v542 = vor.u32 %v539, %v540
      %v543 = vrot.slane %v539, 4
      %v545 = vshrl.u32 %v514, 16
      %v547 = vrot.slane %v545, 7
      %v548 = vshll.u32 %v514, 16
      %v550 = vor.u32 %v547, %v548
      %v551 = vrot.slane %v547, 4
      %v553 = vshrl.u32 %v515, 16
      %v555 = vrot.slane %v553, 7
      %v556 = vshll.u32 %v515, 16
      %v558 = vor.u32 %v555, %v556
      %v559 = vrot.slane %v555, 4
      %v561 = vshrl.u32 %v516, 16
      %v563 = vrot.slane %v561, 7
      %v564 = vshll.u32 %v516, 16
      %v566 = vor.u32 %v563, %v564
      %v567 = vrot.slane %v563, 4
      %v569 = vshrl.u32 %v517, 16
      %v571 = vrot.slane %v569, 7
      %v572 = vshll.u32 %v517, 16
      %v574 = vor.u32 %v571, %v572
      %v575 = vrot.slane %v571, 4
      %v577 = vshrl.u32 %v518, 16
      %v579 = vrot.slane %v577, 7
      %v580 = vshll.u32 %v518, 16
      %v582 = vor.u32 %v579, %v580
      %v583 = vrot.slane %v579, 4
      %v585 = vshrl.u32 %v519, 16
      %v587 = vrot.slane %v585, 7
      %v588 = vshll.u32 %v519, 16
      %v590 = vor.u32 %v587, %v588
      %v591 = vrot.slane %v587, 4
      %v593 = vshrl.u32 %v520, 16
      %v595 = vrot.slane %v593, 7
      %v596 = vshll.u32 %v520, 16
      %v598 = vor.u32 %v595, %v596
      %v599 = vrot.slane %v595, 4
      %v601 = vshrl.u32 %v521, 16
      %v603 = vrot.slane %v601, 7
      %v604 = vshll.u32 %v521, 16
      %v606 = vor.u32 %v603, %v604
      %v607 = vrot.slane %v603, 4
      %v609 = vshrl.u32 %v522, 16
      %v611 = vrot.slane %v609, 7
      %v612 = vshll.u32 %v522, 16
      %v614 = vor.u32 %v611, %v612
      %v615 = vrot.slane %v611, 4
      %v617 = vshrl.u32 %v523, 16
      %v619 = vrot.slane %v617, 7
      %v620 = vshll.u32 %v523, 16
      %v622 = vor.u32 %v619, %v620
      %v623 = vrot.slane %v619, 4
      %v625 = vshrl.u32 %v524, 16
      %v627 = vrot.slane %v625, 7
      %v628 = vshll.u32 %v524, 16
      %v630 = vor.u32 %v627, %v628
      %v631 = vrot.slane %v627, 4
      %v633 = vshrl.u32 %v525, 16
      %v635 = vrot.slane %v633, 7
      %v636 = vshll.u32 %v525, 16
      %v638 = vor.u32 %v635, %v636
      %v639 = vrot.slane %v635, 4
      %v641 = vshrl.u32 %v526, 16
      %v643 = vrot.slane %v641, 7
      %v644 = vshll.u32 %v526, 16
      %v646 = vor.u32 %v643, %v644
      %v647 = vrot.slane %v643, 4
      %v649 = vshrl.u32 %v527, 16
      %v651 = vrot.slane %v649, 7
      %v652 = vshll.u32 %v527, 16
      %v654 = vor.u32 %v651, %v652
      %v655 = vrot.slane %v651, 4
      %656 = vrot.lane.b32.xlu0 %v534, 124
      %v657 = vpop.permute.xlu0 %656
      %658 = vrot.lane.b32.xlu0 %v535, 124
      %v659 = vpop.permute.xlu0 %658
      %660 = vrot.lane.b32.xlu0 %v542, 124
      %v661 = vpop.permute.xlu0 %660
      %662 = vrot.lane.b32.xlu0 %v543, 124
      %v663 = vpop.permute.xlu0 %662
      %664 = vrot.lane.b32.xlu0 %v550, 124
      %v665 = vpop.permute.xlu0 %664
      %666 = vrot.lane.b32.xlu0 %v551, 124
      %v667 = vpop.permute.xlu0 %666
      %668 = vrot.lane.b32.xlu0 %v558, 124
      %v669 = vpop.permute.xlu0 %668
      %670 = vrot.lane.b32.xlu0 %v559, 124
      %v671 = vpop.permute.xlu0 %670
      %672 = vrot.lane.b32.xlu0 %v566, 124
      %v673 = vpop.permute.xlu0 %672
      %674 = vrot.lane.b32.xlu0 %v567, 124
      %v675 = vpop.permute.xlu0 %674
      %676 = vrot.lane.b32.xlu0 %v574, 124
      %v677 = vpop.permute.xlu0 %676
      %678 = vrot.lane.b32.xlu0 %v575, 124
      %v679 = vpop.permute.xlu0 %678
      %680 = vrot.lane.b32.xlu0 %v582, 124
      %v681 = vpop.permute.xlu0 %680
      %682 = vrot.lane.b32.xlu0 %v583, 124
      %v683 = vpop.permute.xlu0 %682
      %684 = vrot.lane.b32.xlu0 %v590, 124
      %v685 = vpop.permute.xlu0 %684
      %686 = vrot.lane.b32.xlu0 %v591, 124
      %v687 = vpop.permute.xlu0 %686
      %688 = vrot.lane.b32.xlu0 %v598, 124
      %v689 = vpop.permute.xlu0 %688
      %690 = vrot.lane.b32.xlu0 %v599, 124
      %v691 = vpop.permute.xlu0 %690
      %692 = vrot.lane.b32.xlu0 %v606, 124
      %v693 = vpop.permute.xlu0 %692
      %694 = vrot.lane.b32.xlu0 %v607, 124
      %v695 = vpop.permute.xlu0 %694
      %696 = vrot.lane.b32.xlu0 %v614, 124
      %v697 = vpop.permute.xlu0 %696
      %698 = vrot.lane.b32.xlu0 %v615, 124
      %v699 = vpop.permute.xlu0 %698
      %700 = vrot.lane.b32.xlu0 %v622, 124
      %v701 = vpop.permute.xlu0 %700
      %702 = vrot.lane.b32.xlu0 %v623, 124
      %v703 = vpop.permute.xlu0 %702
      %704 = vrot.lane.b32.xlu0 %v630, 124
      %v705 = vpop.permute.xlu0 %704
      %706 = vrot.lane.b32.xlu0 %v631, 124
      %v707 = vpop.permute.xlu0 %706
      %708 = vrot.lane.b32.xlu0 %v638, 124
      %v709 = vpop.permute.xlu0 %708
      %710 = vrot.lane.b32.xlu0 %v639, 124
      %v711 = vpop.permute.xlu0 %710
      %712 = vrot.lane.b32.xlu0 %v646, 124
      %v713 = vpop.permute.xlu0 %712
      %714 = vrot.lane.b32.xlu0 %v647, 124
      %v715 = vpop.permute.xlu0 %714
      %716 = vrot.lane.b32.xlu0 %v654, 124
      %v717 = vpop.permute.xlu0 %716
      %718 = vrot.lane.b32.xlu0 %v655, 124
      %v719 = vpop.permute.xlu0 %718
      %vm752 = vcmask 27648
      %vm753 = vsmask.f32 7938
      %vm754 = vmand %vm752, %vm753
      %v755 = vld [vmem:[%s430] sm:$0xf]
      %v756 = vsel %vm754, %v657, %v755
      %757 = vst [vmem:[%s430] sm:$0xf] %v756
      %vm758 = vcmask 24576
      %vm759 = vmand %vm758, %vm229
      %v760 = vld [vmem:[%s430 + $0x4] sm:$0x1]
      %v761 = vsel %vm759, %v659, %v760
      %762 = vst [vmem:[%s430 + $0x4] sm:$0x1] %v761
      %v763 = vld [vmem:[%s430 + $0x8] sm:$0xf]
      %v764 = vsel %vm754, %v661, %v763
      %765 = vst [vmem:[%s430 + $0x8] sm:$0xf] %v764
      %v766 = vld [vmem:[%s430 + $0xc] sm:$0x1]
      %v767 = vsel %vm759, %v663, %v766
      %768 = vst [vmem:[%s430 + $0xc] sm:$0x1] %v767
      %v769 = vld [vmem:[%s430 + $0x10] sm:$0xf]
      %v770 = vsel %vm754, %v665, %v769
      %771 = vst [vmem:[%s430 + $0x10] sm:$0xf] %v770
      %v772 = vld [vmem:[%s430 + $0x14] sm:$0x1]
      %v773 = vsel %vm759, %v667, %v772
      %774 = vst [vmem:[%s430 + $0x14] sm:$0x1] %v773
      %v775 = vld [vmem:[%s430 + $0x18] sm:$0xf]
      %v776 = vsel %vm754, %v669, %v775
      %777 = vst [vmem:[%s430 + $0x18] sm:$0xf] %v776
      %v778 = vld [vmem:[%s430 + $0x1c] sm:$0x1]
      %v779 = vsel %vm759, %v671, %v778
      %780 = vst [vmem:[%s430 + $0x1c] sm:$0x1] %v779
      %v781 = vld [vmem:[%s430 + $0x20] sm:$0xf]
      %v782 = vsel %vm754, %v673, %v781
      %783 = vst [vmem:[%s430 + $0x20] sm:$0xf] %v782
      %v784 = vld [vmem:[%s430 + $0x24] sm:$0x1]
      %v785 = vsel %vm759, %v675, %v784
      %786 = vst [vmem:[%s430 + $0x24] sm:$0x1] %v785
      %v787 = vld [vmem:[%s430 + $0x28] sm:$0xf]
      %v788 = vsel %vm754, %v677, %v787
      %789 = vst [vmem:[%s430 + $0x28] sm:$0xf] %v788
      %v790 = vld [vmem:[%s430 + $0x2c] sm:$0x1]
      %v791 = vsel %vm759, %v679, %v790
      %792 = vst [vmem:[%s430 + $0x2c] sm:$0x1] %v791
      %v793 = vld [vmem:[%s430 + $0x30] sm:$0xf]
      %v794 = vsel %vm754, %v681, %v793
      %795 = vst [vmem:[%s430 + $0x30] sm:$0xf] %v794
      %v796 = vld [vmem:[%s430 + $0x34] sm:$0x1]
      %v797 = vsel %vm759, %v683, %v796
      %798 = vst [vmem:[%s430 + $0x34] sm:$0x1] %v797
      %v799 = vld [vmem:[%s430 + $0x38] sm:$0xf]
      %v800 = vsel %vm754, %v685, %v799
      %801 = vst [vmem:[%s430 + $0x38] sm:$0xf] %v800
      %v802 = vld [vmem:[%s430 + $0x3c] sm:$0x1]
      %v803 = vsel %vm759, %v687, %v802
      %804 = vst [vmem:[%s430 + $0x3c] sm:$0x1] %v803
      %v805 = vld [vmem:[%s430 + $0x40] sm:$0xf]
      %v806 = vsel %vm754, %v689, %v805
      %807 = vst [vmem:[%s430 + $0x40] sm:$0xf] %v806
      %v808 = vld [vmem:[%s430 + $0x44] sm:$0x1]
      %v809 = vsel %vm759, %v691, %v808
      %810 = vst [vmem:[%s430 + $0x44] sm:$0x1] %v809
      %v811 = vld [vmem:[%s430 + $0x48] sm:$0xf]
      %v812 = vsel %vm754, %v693, %v811
      %813 = vst [vmem:[%s430 + $0x48] sm:$0xf] %v812
      %v814 = vld [vmem:[%s430 + $0x4c] sm:$0x1]
      %v815 = vsel %vm759, %v695, %v814
      %816 = vst [vmem:[%s430 + $0x4c] sm:$0x1] %v815
      %v817 = vld [vmem:[%s430 + $0x50] sm:$0xf]
      %v818 = vsel %vm754, %v697, %v817
      %819 = vst [vmem:[%s430 + $0x50] sm:$0xf] %v818
      %v820 = vld [vmem:[%s430 + $0x54] sm:$0x1]
      %v821 = vsel %vm759, %v699, %v820
      %822 = vst [vmem:[%s430 + $0x54] sm:$0x1] %v821
      %v823 = vld [vmem:[%s430 + $0x58] sm:$0xf]
      %v824 = vsel %vm754, %v701, %v823
      %825 = vst [vmem:[%s430 + $0x58] sm:$0xf] %v824
      %v826 = vld [vmem:[%s430 + $0x5c] sm:$0x1]
      %v827 = vsel %vm759, %v703, %v826
      %828 = vst [vmem:[%s430 + $0x5c] sm:$0x1] %v827
      %v829 = vld [vmem:[%s430 + $0x60] sm:$0xf]
      %v830 = vsel %vm754, %v705, %v829
      %831 = vst [vmem:[%s430 + $0x60] sm:$0xf] %v830
      %v832 = vld [vmem:[%s430 + $0x64] sm:$0x1]
      %v833 = vsel %vm759, %v707, %v832
      %834 = vst [vmem:[%s430 + $0x64] sm:$0x1] %v833
      %v835 = vld [vmem:[%s430 + $0x68] sm:$0xf]
      %v836 = vsel %vm754, %v709, %v835
      %837 = vst [vmem:[%s430 + $0x68] sm:$0xf] %v836
      %v838 = vld [vmem:[%s430 + $0x6c] sm:$0x1]
      %v839 = vsel %vm759, %v711, %v838
      %840 = vst [vmem:[%s430 + $0x6c] sm:$0x1] %v839
      %v841 = vld [vmem:[%s430 + $0x70] sm:$0xf]
      %v842 = vsel %vm754, %v713, %v841
      %843 = vst [vmem:[%s430 + $0x70] sm:$0xf] %v842
      %v844 = vld [vmem:[%s430 + $0x74] sm:$0x1]
      %v845 = vsel %vm759, %v715, %v844
      %846 = vst [vmem:[%s430 + $0x74] sm:$0x1] %v845
      %v847 = vld [vmem:[%s430 + $0x78] sm:$0xf]
      %v848 = vsel %vm754, %v717, %v847
      %849 = vst [vmem:[%s430 + $0x78] sm:$0xf] %v848
      %v850 = vld [vmem:[%s430 + $0x7c] sm:$0x1]
      %v851 = vsel %vm759, %v719, %v850
      %852 = vst [vmem:[%s430 + $0x7c] sm:$0x1] %v851
      %v853 = vld [vmem:[#allocation2] sm:$0xf]
      %v854 = vld [vmem:[#allocation2 + $0x8] sm:$0xf]
      %v855 = vld [vmem:[#allocation2 + $0x10] sm:$0xf]
      %v856 = vld [vmem:[#allocation2 + $0x18] sm:$0xf]
      %v857 = vld [vmem:[#allocation2 + $0x20] sm:$0xf]
      %v858 = vld [vmem:[#allocation2 + $0x28] sm:$0xf]
      %v859 = vld [vmem:[#allocation2 + $0x30] sm:$0xf]
      %v860 = vld [vmem:[#allocation2 + $0x38] sm:$0xf]
      %v861 = vld [vmem:[#allocation2 + $0x40] sm:$0xf]
      %v862 = vld [vmem:[#allocation2 + $0x48] sm:$0xf]
      %v863 = vld [vmem:[#allocation2 + $0x50] sm:$0xf]
      %v864 = vld [vmem:[#allocation2 + $0x58] sm:$0xf]
      %v865 = vld [vmem:[#allocation2 + $0x60] sm:$0xf]
      %v866 = vld [vmem:[#allocation2 + $0x68] sm:$0xf]
      %v867 = vld [vmem:[#allocation2 + $0x70] sm:$0xf]
      %v868 = vld [vmem:[#allocation2 + $0x78] sm:$0xf]
      %vm869 = vcmask 27648
      %870 = vst.msk [vmem:[#allocation3] sm:$0xf] %vm869, %v853
      %871 = vst.msk [vmem:[#allocation3 + $0x4] sm:$0xf] %vm869, %v854
      %872 = vst.msk [vmem:[#allocation3 + $0x8] sm:$0xf] %vm869, %v855
      %873 = vst.msk [vmem:[#allocation3 + $0xc] sm:$0xf] %vm869, %v856
      %874 = vst.msk [vmem:[#allocation3 + $0x10] sm:$0xf] %vm869, %v857
      %875 = vst.msk [vmem:[#allocation3 + $0x14] sm:$0xf] %vm869, %v858
      %876 = vst.msk [vmem:[#allocation3 + $0x18] sm:$0xf] %vm869, %v859
      %877 = vst.msk [vmem:[#allocation3 + $0x1c] sm:$0xf] %vm869, %v860
      %878 = vst.msk [vmem:[#allocation3 + $0x20] sm:$0xf] %vm869, %v861
      %879 = vst.msk [vmem:[#allocation3 + $0x24] sm:$0xf] %vm869, %v862
      %880 = vst.msk [vmem:[#allocation3 + $0x28] sm:$0xf] %vm869, %v863
      %881 = vst.msk [vmem:[#allocation3 + $0x2c] sm:$0xf] %vm869, %v864
      %882 = vst.msk [vmem:[#allocation3 + $0x30] sm:$0xf] %vm869, %v865
      %883 = vst.msk [vmem:[#allocation3 + $0x34] sm:$0xf] %vm869, %v866
      %884 = vst.msk [vmem:[#allocation3 + $0x38] sm:$0xf] %vm869, %v867
      %885 = vst.msk [vmem:[#allocation3 + $0x3c] sm:$0xf] %vm869, %v868
      %v886 = vld [vmem:[#allocation2] sm:$0xf]
      %v887 = vld [vmem:[#allocation2 + $0x8] sm:$0xf]
      %v888 = vld [vmem:[#allocation2 + $0x10] sm:$0xf]
      %v889 = vld [vmem:[#allocation2 + $0x18] sm:$0xf]
      %v890 = vld [vmem:[#allocation2 + $0x20] sm:$0xf]
      %v891 = vld [vmem:[#allocation2 + $0x28] sm:$0xf]
      %v892 = vld [vmem:[#allocation2 + $0x30] sm:$0xf]
      %v893 = vld [vmem:[#allocation2 + $0x38] sm:$0xf]
      %v894 = vld [vmem:[#allocation2 + $0x40] sm:$0xf]
      %v895 = vld [vmem:[#allocation2 + $0x48] sm:$0xf]
      %v896 = vld [vmem:[#allocation2 + $0x50] sm:$0xf]
      %v897 = vld [vmem:[#allocation2 + $0x58] sm:$0xf]
      %v898 = vld [vmem:[#allocation2 + $0x60] sm:$0xf]
      %v899 = vld [vmem:[#allocation2 + $0x68] sm:$0xf]
      %v900 = vld [vmem:[#allocation2 + $0x70] sm:$0xf]
      %v901 = vld [vmem:[#allocation2 + $0x78] sm:$0xf]
      %902 = vst.msk [vmem:[#allocation3] sm:$0xf] %vm431, %v886
      %903 = vst.msk [vmem:[#allocation3 + $0x4] sm:$0xf] %vm431, %v887
      %904 = vst.msk [vmem:[#allocation3 + $0x8] sm:$0xf] %vm431, %v888
      %905 = vst.msk [vmem:[#allocation3 + $0xc] sm:$0xf] %vm431, %v889
      %906 = vst.msk [vmem:[#allocation3 + $0x10] sm:$0xf] %vm431, %v890
      %907 = vst.msk [vmem:[#allocation3 + $0x14] sm:$0xf] %vm431, %v891
      %908 = vst.msk [vmem:[#allocation3 + $0x18] sm:$0xf] %vm431, %v892
      %909 = vst.msk [vmem:[#allocation3 + $0x1c] sm:$0xf] %vm431, %v893
      %910 = vst.msk [vmem:[#allocation3 + $0x20] sm:$0xf] %vm431, %v894
      %911 = vst.msk [vmem:[#allocation3 + $0x24] sm:$0xf] %vm431, %v895
      %912 = vst.msk [vmem:[#allocation3 + $0x28] sm:$0xf] %vm431, %v896
      %913 = vst.msk [vmem:[#allocation3 + $0x2c] sm:$0xf] %vm431, %v897
      %914 = vst.msk [vmem:[#allocation3 + $0x30] sm:$0xf] %vm431, %v898
      %915 = vst.msk [vmem:[#allocation3 + $0x34] sm:$0xf] %vm431, %v899
      %916 = vst.msk [vmem:[#allocation3 + $0x38] sm:$0xf] %vm431, %v900
      %917 = vst.msk [vmem:[#allocation3 + $0x3c] sm:$0xf] %vm431, %v901
      %v918 = vld [vmem:[#allocation2] sm:$0xf]
      %v919 = vld [vmem:[#allocation2 + $0x4] sm:$0x1]
      %v920 = vld [vmem:[#allocation2 + $0x8] sm:$0xf]
      %v921 = vld [vmem:[#allocation2 + $0xc] sm:$0x1]
      %v922 = vld [vmem:[#allocation2 + $0x10] sm:$0xf]
      %v923 = vld [vmem:[#allocation2 + $0x14] sm:$0x1]
      %v924 = vld [vmem:[#allocation2 + $0x18] sm:$0xf]
      %v925 = vld [vmem:[#allocation2 + $0x1c] sm:$0x1]
      %v926 = vld [vmem:[#allocation2 + $0x20] sm:$0xf]
      %v927 = vld [vmem:[#allocation2 + $0x24] sm:$0x1]
      %v928 = vld [vmem:[#allocation2 + $0x28] sm:$0xf]
      %v929 = vld [vmem:[#allocation2 + $0x2c] sm:$0x1]
      %v930 = vld [vmem:[#allocation2 + $0x30] sm:$0xf]
      %v931 = vld [vmem:[#allocation2 + $0x34] sm:$0x1]
      %v932 = vld [vmem:[#allocation2 + $0x38] sm:$0xf]
      %v933 = vld [vmem:[#allocation2 + $0x3c] sm:$0x1]
      %v934 = vld [vmem:[#allocation2 + $0x40] sm:$0xf]
      %v935 = vld [vmem:[#allocation2 + $0x44] sm:$0x1]
      %v936 = vld [vmem:[#allocation2 + $0x48] sm:$0xf]
      %v937 = vld [vmem:[#allocation2 + $0x4c] sm:$0x1]
      %v938 = vld [vmem:[#allocation2 + $0x50] sm:$0xf]
      %v939 = vld [vmem:[#allocation2 + $0x54] sm:$0x1]
      %v940 = vld [vmem:[#allocation2 + $0x58] sm:$0xf]
      %v941 = vld [vmem:[#allocation2 + $0x5c] sm:$0x1]
      %v942 = vld [vmem:[#allocation2 + $0x60] sm:$0xf]
      %v943 = vld [vmem:[#allocation2 + $0x64] sm:$0x1]
      %v944 = vld [vmem:[#allocation2 + $0x68] sm:$0xf]
      %v945 = vld [vmem:[#allocation2 + $0x6c] sm:$0x1]
      %v946 = vld [vmem:[#allocation2 + $0x70] sm:$0xf]
      %v947 = vld [vmem:[#allocation2 + $0x74] sm:$0x1]
      %v948 = vld [vmem:[#allocation2 + $0x78] sm:$0xf]
      %v949 = vld [vmem:[#allocation2 + $0x7c] sm:$0x1]
      %vm950 = vsmask.f32 3328
      %vm951 = vsmask.f32 7440
      %vm952 = vmor %vm950, %vm951
      %v954 = vshrl.u32 %v918, 16
      %v956 = vrot.slane %v954, 4
      %v957 = vshll.u32 %v918, 16
      %v959 = vrot.slane %v957, 5
      %v960 = vor.u32 %v956, %v959
      %v961 = vrot.slane %v960, 4
      %v963 = vshll.u32 %v919, 16
      %v965 = vrot.slane %v963, 5
      %v966 = vsel %vm952, %v961, %v965
      %v968 = vshrl.u32 %v920, 16
      %v970 = vrot.slane %v968, 4
      %v971 = vshll.u32 %v920, 16
      %v973 = vrot.slane %v971, 5
      %v974 = vor.u32 %v970, %v973
      %v975 = vrot.slane %v974, 4
      %v977 = vshll.u32 %v921, 16
      %v979 = vrot.slane %v977, 5
      %v980 = vsel %vm952, %v975, %v979
      %v982 = vshrl.u32 %v922, 16
      %v984 = vrot.slane %v982, 4
      %v985 = vshll.u32 %v922, 16
      %v987 = vrot.slane %v985, 5
      %v988 = vor.u32 %v984, %v987
      %v989 = vrot.slane %v988, 4
      %v991 = vshll.u32 %v923, 16
      %v993 = vrot.slane %v991, 5
      %v994 = vsel %vm952, %v989, %v993
      %v996 = vshrl.u32 %v924, 16
      %v998 = vrot.slane %v996, 4
      %v999 = vshll.u32 %v924, 16
      %v1001 = vrot.slane %v999, 5
      %v1002 = vor.u32 %v998, %v1001
      %v1003 = vrot.slane %v1002, 4
      %v1005 = vshll.u32 %v925, 16
      %v1007 = vrot.slane %v1005, 5
      %v1008 = vsel %vm952, %v1003, %v1007
      %v1010 = vshrl.u32 %v926, 16
      %v1012 = vrot.slane %v1010, 4
      %v1013 = vshll.u32 %v926, 16
      %v1015 = vrot.slane %v1013, 5
      %v1016 = vor.u32 %v1012, %v1015
      %v1017 = vrot.slane %v1016, 4
      %v1019 = vshll.u32 %v927, 16
      %v1021 = vrot.slane %v1019, 5
      %v1022 = vsel %vm952, %v1017, %v1021
      %v1024 = vshrl.u32 %v928, 16
      %v1026 = vrot.slane %v1024, 4
      %v1027 = vshll.u32 %v928, 16
      %v1029 = vrot.slane %v1027, 5
      %v1030 = vor.u32 %v1026, %v1029
      %v1031 = vrot.slane %v1030, 4
      %v1033 = vshll.u32 %v929, 16
      %v1035 = vrot.slane %v1033, 5
      %v1036 = vsel %vm952, %v1031, %v1035
      %v1038 = vshrl.u32 %v930, 16
      %v1040 = vrot.slane %v1038, 4
      %v1041 = vshll.u32 %v930, 16
      %v1043 = vrot.slane %v1041, 5
      %v1044 = vor.u32 %v1040, %v1043
      %v1045 = vrot.slane %v1044, 4
      %v1047 = vshll.u32 %v931, 16
      %v1049 = vrot.slane %v1047, 5
      %v1050 = vsel %vm952, %v1045, %v1049
      %v1052 = vshrl.u32 %v932, 16
      %v1054 = vrot.slane %v1052, 4
      %v1055 = vshll.u32 %v932, 16
      %v1057 = vrot.slane %v1055, 5
      %v1058 = vor.u32 %v1054, %v1057
      %v1059 = vrot.slane %v1058, 4
      %v1061 = vshll.u32 %v933, 16
      %v1063 = vrot.slane %v1061, 5
      %v1064 = vsel %vm952, %v1059, %v1063
      %v1066 = vshrl.u32 %v934, 16
      %v1068 = vrot.slane %v1066, 4
      %v1069 = vshll.u32 %v934, 16
      %v1071 = vrot.slane %v1069, 5
      %v1072 = vor.u32 %v1068, %v1071
      %v1073 = vrot.slane %v1072, 4
      %v1075 = vshll.u32 %v935, 16
      %v1077 = vrot.slane %v1075, 5
      %v1078 = vsel %vm952, %v1073, %v1077
      %v1080 = vshrl.u32 %v936, 16
      %v1082 = vrot.slane %v1080, 4
      %v1083 = vshll.u32 %v936, 16
      %v1085 = vrot.slane %v1083, 5
      %v1086 = vor.u32 %v1082, %v1085
      %v1087 = vrot.slane %v1086, 4
      %v1089 = vshll.u32 %v937, 16
      %v1091 = vrot.slane %v1089, 5
      %v1092 = vsel %vm952, %v1087, %v1091
      %v1094 = vshrl.u32 %v938, 16
      %v1096 = vrot.slane %v1094, 4
      %v1097 = vshll.u32 %v938, 16
      %v1099 = vrot.slane %v1097, 5
      %v1100 = vor.u32 %v1096, %v1099
      %v1101 = vrot.slane %v1100, 4
      %v1103 = vshll.u32 %v939, 16
      %v1105 = vrot.slane %v1103, 5
      %v1106 = vsel %vm952, %v1101, %v1105
      %v1108 = vshrl.u32 %v940, 16
      %v1110 = vrot.slane %v1108, 4
      %v1111 = vshll.u32 %v940, 16
      %v1113 = vrot.slane %v1111, 5
      %v1114 = vor.u32 %v1110, %v1113
      %v1115 = vrot.slane %v1114, 4
      %v1117 = vshll.u32 %v941, 16
      %v1119 = vrot.slane %v1117, 5
      %v1120 = vsel %vm952, %v1115, %v1119
      %v1122 = vshrl.u32 %v942, 16
      %v1124 = vrot.slane %v1122, 4
      %v1125 = vshll.u32 %v942, 16
      %v1127 = vrot.slane %v1125, 5
      %v1128 = vor.u32 %v1124, %v1127
      %v1129 = vrot.slane %v1128, 4
      %v1131 = vshll.u32 %v943, 16
      %v1133 = vrot.slane %v1131, 5
      %v1134 = vsel %vm952, %v1129, %v1133
      %v1136 = vshrl.u32 %v944, 16
      %v1138 = vrot.slane %v1136, 4
      %v1139 = vshll.u32 %v944, 16
      %v1141 = vrot.slane %v1139, 5
      %v1142 = vor.u32 %v1138, %v1141
      %v1143 = vrot.slane %v1142, 4
      %v1145 = vshll.u32 %v945, 16
      %v1147 = vrot.slane %v1145, 5
      %v1148 = vsel %vm952, %v1143, %v1147
      %v1150 = vshrl.u32 %v946, 16
      %v1152 = vrot.slane %v1150, 4
      %v1153 = vshll.u32 %v946, 16
      %v1155 = vrot.slane %v1153, 5
      %v1156 = vor.u32 %v1152, %v1155
      %v1157 = vrot.slane %v1156, 4
      %v1159 = vshll.u32 %v947, 16
      %v1161 = vrot.slane %v1159, 5
      %v1162 = vsel %vm952, %v1157, %v1161
      %v1164 = vshrl.u32 %v948, 16
      %v1166 = vrot.slane %v1164, 4
      %v1167 = vshll.u32 %v948, 16
      %v1169 = vrot.slane %v1167, 5
      %v1170 = vor.u32 %v1166, %v1169
      %v1171 = vrot.slane %v1170, 4
      %v1173 = vshll.u32 %v949, 16
      %v1175 = vrot.slane %v1173, 5
      %v1176 = vsel %vm952, %v1171, %v1175
      %1177 = vrot.lane.b32.xlu0 %v966, 8
      %v1178 = vpop.permute.xlu0 %1177
      %1179 = vrot.lane.b32.xlu0 %v980, 8
      %v1180 = vpop.permute.xlu0 %1179
      %1181 = vrot.lane.b32.xlu0 %v994, 8
      %v1182 = vpop.permute.xlu0 %1181
      %1183 = vrot.lane.b32.xlu0 %v1008, 8
      %v1184 = vpop.permute.xlu0 %1183
      %1185 = vrot.lane.b32.xlu0 %v1022, 8
      %v1186 = vpop.permute.xlu0 %1185
      %1187 = vrot.lane.b32.xlu0 %v1036, 8
      %v1188 = vpop.permute.xlu0 %1187
      %1189 = vrot.lane.b32.xlu0 %v1050, 8
      %v1190 = vpop.permute.xlu0 %1189
      %1191 = vrot.lane.b32.xlu0 %v1064, 8
      %v1192 = vpop.permute.xlu0 %1191
      %1193 = vrot.lane.b32.xlu0 %v1078, 8
      %v1194 = vpop.permute.xlu0 %1193
      %1195 = vrot.lane.b32.xlu0 %v1092, 8
      %v1196 = vpop.permute.xlu0 %1195
      %1197 = vrot.lane.b32.xlu0 %v1106, 8
      %v1198 = vpop.permute.xlu0 %1197
      %1199 = vrot.lane.b32.xlu0 %v1120, 8
      %v1200 = vpop.permute.xlu0 %1199
      %1201 = vrot.lane.b32.xlu0 %v1134, 8
      %v1202 = vpop.permute.xlu0 %1201
      %1203 = vrot.lane.b32.xlu0 %v1148, 8
      %v1204 = vpop.permute.xlu0 %1203
      %1205 = vrot.lane.b32.xlu0 %v1162, 8
      %v1206 = vpop.permute.xlu0 %1205
      %1207 = vrot.lane.b32.xlu0 %v1176, 8
      %v1208 = vpop.permute.xlu0 %1207
      %vm1225 = vcmask 93248
      %1226 = vst.msk [vmem:[#allocation3] sm:$0xf] %vm1225, %v1178
      %1227 = vst.msk [vmem:[#allocation3 + $0x4] sm:$0xf] %vm1225, %v1180
      %1228 = vst.msk [vmem:[#allocation3 + $0x8] sm:$0xf] %vm1225, %v1182
      %1229 = vst.msk [vmem:[#allocation3 + $0xc] sm:$0xf] %vm1225, %v1184
      %1230 = vst.msk [vmem:[#allocation3 + $0x10] sm:$0xf] %vm1225, %v1186
      %1231 = vst.msk [vmem:[#allocation3 + $0x14] sm:$0xf] %vm1225, %v1188
      %1232 = vst.msk [vmem:[#allocation3 + $0x18] sm:$0xf] %vm1225, %v1190
      %1233 = vst.msk [vmem:[#allocation3 + $0x1c] sm:$0xf] %vm1225, %v1192
      %1234 = vst.msk [vmem:[#allocation3 + $0x20] sm:$0xf] %vm1225, %v1194
      %1235 = vst.msk [vmem:[#allocation3 + $0x24] sm:$0xf] %vm1225, %v1196
      %1236 = vst.msk [vmem:[#allocation3 + $0x28] sm:$0xf] %vm1225, %v1198
      %1237 = vst.msk [vmem:[#allocation3 + $0x2c] sm:$0xf] %vm1225, %v1200
      %1238 = vst.msk [vmem:[#allocation3 + $0x30] sm:$0xf] %vm1225, %v1202
      %1239 = vst.msk [vmem:[#allocation3 + $0x34] sm:$0xf] %vm1225, %v1204
      %1240 = vst.msk [vmem:[#allocation3 + $0x38] sm:$0xf] %vm1225, %v1206
      %1241 = vst.msk [vmem:[#allocation3 + $0x3c] sm:$0xf] %vm1225, %v1208
      %v1242 = vld [vmem:[%s430] sm:$0xf]
      %v1243 = vld [vmem:[%s430 + $0x8] sm:$0xf]
      %v1244 = vld [vmem:[%s430 + $0x10] sm:$0xf]
      %v1245 = vld [vmem:[%s430 + $0x18] sm:$0xf]
      %v1246 = vld [vmem:[%s430 + $0x20] sm:$0xf]
      %v1247 = vld [vmem:[%s430 + $0x28] sm:$0xf]
      %v1248 = vld [vmem:[%s430 + $0x30] sm:$0xf]
      %v1249 = vld [vmem:[%s430 + $0x38] sm:$0xf]
      %v1250 = vld [vmem:[%s430 + $0x40] sm:$0xf]
      %v1251 = vld [vmem:[%s430 + $0x48] sm:$0xf]
      %v1252 = vld [vmem:[%s430 + $0x50] sm:$0xf]
      %v1253 = vld [vmem:[%s430 + $0x58] sm:$0xf]
      %v1254 = vld [vmem:[%s430 + $0x60] sm:$0xf]
      %v1255 = vld [vmem:[%s430 + $0x68] sm:$0xf]
      %v1256 = vld [vmem:[%s430 + $0x70] sm:$0xf]
      %v1257 = vld [vmem:[%s430 + $0x78] sm:$0xf]
      %1274 = vrot.lane.b32.xlu0 %v1242, 12
      %v1275 = vpop.permute.xlu0 %1274
      %1276 = vrot.lane.b32.xlu0 %v1243, 12
      %v1277 = vpop.permute.xlu0 %1276
      %1278 = vrot.lane.b32.xlu0 %v1244, 12
      %v1279 = vpop.permute.xlu0 %1278
      %1280 = vrot.lane.b32.xlu0 %v1245, 12
      %v1281 = vpop.permute.xlu0 %1280
      %1282 = vrot.lane.b32.xlu0 %v1246, 12
      %v1283 = vpop.permute.xlu0 %1282
      %1284 = vrot.lane.b32.xlu0 %v1247, 12
      %v1285 = vpop.permute.xlu0 %1284
      %1286 = vrot.lane.b32.xlu0 %v1248, 12
      %v1287 = vpop.permute.xlu0 %1286
      %1288 = vrot.lane.b32.xlu0 %v1249, 12
      %v1289 = vpop.permute.xlu0 %1288
      %1290 = vrot.lane.b32.xlu0 %v1250, 12
      %v1291 = vpop.permute.xlu0 %1290
      %1292 = vrot.lane.b32.xlu0 %v1251, 12
      %v1293 = vpop.permute.xlu0 %1292
      %1294 = vrot.lane.b32.xlu0 %v1252, 12
      %v1295 = vpop.permute.xlu0 %1294
      %1296 = vrot.lane.b32.xlu0 %v1253, 12
      %v1297 = vpop.permute.xlu0 %1296
      %1298 = vrot.lane.b32.xlu0 %v1254, 12
      %v1299 = vpop.permute.xlu0 %1298
      %1300 = vrot.lane.b32.xlu0 %v1255, 12
      %v1301 = vpop.permute.xlu0 %1300
      %1302 = vrot.lane.b32.xlu0 %v1256, 12
      %v1303 = vpop.permute.xlu0 %1302
      %1304 = vrot.lane.b32.xlu0 %v1257, 12
      %v1305 = vpop.permute.xlu0 %1304
      %vm1322 = vcmask 126048
      %1323 = vst.msk [vmem:[#allocation3] sm:$0xf] %vm1322, %v1275
      %1324 = vst.msk [vmem:[#allocation3 + $0x4] sm:$0xf] %vm1322, %v1277
      %1325 = vst.msk [vmem:[#allocation3 + $0x8] sm:$0xf] %vm1322, %v1279
      %1326 = vst.msk [vmem:[#allocation3 + $0xc] sm:$0xf] %vm1322, %v1281
      %1327 = vst.msk [vmem:[#allocation3 + $0x10] sm:$0xf] %vm1322, %v1283
      %1328 = vst.msk [vmem:[#allocation3 + $0x14] sm:$0xf] %vm1322, %v1285
      %1329 = vst.msk [vmem:[#allocation3 + $0x18] sm:$0xf] %vm1322, %v1287
      %1330 = vst.msk [vmem:[#allocation3 + $0x1c] sm:$0xf] %vm1322, %v1289
      %1331 = vst.msk [vmem:[#allocation3 + $0x20] sm:$0xf] %vm1322, %v1291
      %1332 = vst.msk [vmem:[#allocation3 + $0x24] sm:$0xf] %vm1322, %v1293
      %1333 = vst.msk [vmem:[#allocation3 + $0x28] sm:$0xf] %vm1322, %v1295
      %1334 = vst.msk [vmem:[#allocation3 + $0x2c] sm:$0xf] %vm1322, %v1297
      %1335 = vst.msk [vmem:[#allocation3 + $0x30] sm:$0xf] %vm1322, %v1299
      %1336 = vst.msk [vmem:[#allocation3 + $0x34] sm:$0xf] %vm1322, %v1301
      %1337 = vst.msk [vmem:[#allocation3 + $0x38] sm:$0xf] %vm1322, %v1303
      %1338 = vst.msk [vmem:[#allocation3 + $0x3c] sm:$0xf] %vm1322, %v1305
      %v1339 = vld [vmem:[%s430] sm:$0xf]
      %v1340 = vld [vmem:[%s430 + $0x8] sm:$0xf]
      %v1341 = vld [vmem:[%s430 + $0x10] sm:$0xf]
      %v1342 = vld [vmem:[%s430 + $0x18] sm:$0xf]
      %v1343 = vld [vmem:[%s430 + $0x20] sm:$0xf]
      %v1344 = vld [vmem:[%s430 + $0x28] sm:$0xf]
      %v1345 = vld [vmem:[%s430 + $0x30] sm:$0xf]
      %v1346 = vld [vmem:[%s430 + $0x38] sm:$0xf]
      %v1347 = vld [vmem:[%s430 + $0x40] sm:$0xf]
      %v1348 = vld [vmem:[%s430 + $0x48] sm:$0xf]
      %v1349 = vld [vmem:[%s430 + $0x50] sm:$0xf]
      %v1350 = vld [vmem:[%s430 + $0x58] sm:$0xf]
      %v1351 = vld [vmem:[%s430 + $0x60] sm:$0xf]
      %v1352 = vld [vmem:[%s430 + $0x68] sm:$0xf]
      %v1353 = vld [vmem:[%s430 + $0x70] sm:$0xf]
      %v1354 = vld [vmem:[%s430 + $0x78] sm:$0xf]
      %1371 = vrot.lane.b32.xlu0 %v1339, 12
      %v1372 = vpop.permute.xlu0 %1371
      %1373 = vrot.lane.b32.xlu0 %v1340, 12
      %v1374 = vpop.permute.xlu0 %1373
      %1375 = vrot.lane.b32.xlu0 %v1341, 12
      %v1376 = vpop.permute.xlu0 %1375
      %1377 = vrot.lane.b32.xlu0 %v1342, 12
      %v1378 = vpop.permute.xlu0 %1377
      %1379 = vrot.lane.b32.xlu0 %v1343, 12
      %v1380 = vpop.permute.xlu0 %1379
      %1381 = vrot.lane.b32.xlu0 %v1344, 12
      %v1382 = vpop.permute.xlu0 %1381
      %1383 = vrot.lane.b32.xlu0 %v1345, 12
      %v1384 = vpop.permute.xlu0 %1383
      %1385 = vrot.lane.b32.xlu0 %v1346, 12
      %v1386 = vpop.permute.xlu0 %1385
      %1387 = vrot.lane.b32.xlu0 %v1347, 12
      %v1388 = vpop.permute.xlu0 %1387
      %1389 = vrot.lane.b32.xlu0 %v1348, 12
      %v1390 = vpop.permute.xlu0 %1389
      %1391 = vrot.lane.b32.xlu0 %v1349, 12
      %v1392 = vpop.permute.xlu0 %1391
      %1393 = vrot.lane.b32.xlu0 %v1350, 12
      %v1394 = vpop.permute.xlu0 %1393
      %1395 = vrot.lane.b32.xlu0 %v1351, 12
      %v1396 = vpop.permute.xlu0 %1395
      %1397 = vrot.lane.b32.xlu0 %v1352, 12
      %v1398 = vpop.permute.xlu0 %1397
      %1399 = vrot.lane.b32.xlu0 %v1353, 12
      %v1400 = vpop.permute.xlu0 %1399
      %1401 = vrot.lane.b32.xlu0 %v1354, 12
      %v1402 = vpop.permute.xlu0 %1401
      %vm1419 = vcmask 158848
      %1420 = vst.msk [vmem:[#allocation3] sm:$0xf] %vm1419, %v1372
      %1421 = vst.msk [vmem:[#allocation3 + $0x4] sm:$0xf] %vm1419, %v1374
      %1422 = vst.msk [vmem:[#allocation3 + $0x8] sm:$0xf] %vm1419, %v1376
      %1423 = vst.msk [vmem:[#allocation3 + $0xc] sm:$0xf] %vm1419, %v1378
      %1424 = vst.msk [vmem:[#allocation3 + $0x10] sm:$0xf] %vm1419, %v1380
      %1425 = vst.msk [vmem:[#allocation3 + $0x14] sm:$0xf] %vm1419, %v1382
      %1426 = vst.msk [vmem:[#allocation3 + $0x18] sm:$0xf] %vm1419, %v1384
      %1427 = vst.msk [vmem:[#allocation3 + $0x1c] sm:$0xf] %vm1419, %v1386
      %1428 = vst.msk [vmem:[#allocation3 + $0x20] sm:$0xf] %vm1419, %v1388
      %1429 = vst.msk [vmem:[#allocation3 + $0x24] sm:$0xf] %vm1419, %v1390
      %1430 = vst.msk [vmem:[#allocation3 + $0x28] sm:$0xf] %vm1419, %v1392
      %1431 = vst.msk [vmem:[#allocation3 + $0x2c] sm:$0xf] %vm1419, %v1394
      %1432 = vst.msk [vmem:[#allocation3 + $0x30] sm:$0xf] %vm1419, %v1396
      %1433 = vst.msk [vmem:[#allocation3 + $0x34] sm:$0xf] %vm1419, %v1398
      %1434 = vst.msk [vmem:[#allocation3 + $0x38] sm:$0xf] %vm1419, %v1400
      %1435 = vst.msk [vmem:[#allocation3 + $0x3c] sm:$0xf] %vm1419, %v1402
      %v1436 = vld [vmem:[%s430] sm:$0xf]
      %v1437 = vld [vmem:[%s430 + $0x4] sm:$0x1]
      %v1438 = vld [vmem:[%s430 + $0x8] sm:$0xf]
      %v1439 = vld [vmem:[%s430 + $0xc] sm:$0x1]
      %v1440 = vld [vmem:[%s430 + $0x10] sm:$0xf]
      %v1441 = vld [vmem:[%s430 + $0x14] sm:$0x1]
      %v1442 = vld [vmem:[%s430 + $0x18] sm:$0xf]
      %v1443 = vld [vmem:[%s430 + $0x1c] sm:$0x1]
      %v1444 = vld [vmem:[%s430 + $0x20] sm:$0xf]
      %v1445 = vld [vmem:[%s430 + $0x24] sm:$0x1]
      %v1446 = vld [vmem:[%s430 + $0x28] sm:$0xf]
      %v1447 = vld [vmem:[%s430 + $0x2c] sm:$0x1]
      %v1448 = vld [vmem:[%s430 + $0x30] sm:$0xf]
      %v1449 = vld [vmem:[%s430 + $0x34] sm:$0x1]
      %v1450 = vld [vmem:[%s430 + $0x38] sm:$0xf]
      %v1451 = vld [vmem:[%s430 + $0x3c] sm:$0x1]
      %v1452 = vld [vmem:[%s430 + $0x40] sm:$0xf]
      %v1453 = vld [vmem:[%s430 + $0x44] sm:$0x1]
      %v1454 = vld [vmem:[%s430 + $0x48] sm:$0xf]
      %v1455 = vld [vmem:[%s430 + $0x4c] sm:$0x1]
      %v1456 = vld [vmem:[%s430 + $0x50] sm:$0xf]
      %v1457 = vld [vmem:[%s430 + $0x54] sm:$0x1]
      %v1458 = vld [vmem:[%s430 + $0x58] sm:$0xf]
      %v1459 = vld [vmem:[%s430 + $0x5c] sm:$0x1]
      %v1460 = vld [vmem:[%s430 + $0x60] sm:$0xf]
      %v1461 = vld [vmem:[%s430 + $0x64] sm:$0x1]
      %v1462 = vld [vmem:[%s430 + $0x68] sm:$0xf]
      %v1463 = vld [vmem:[%s430 + $0x6c] sm:$0x1]
      %v1464 = vld [vmem:[%s430 + $0x70] sm:$0xf]
      %v1465 = vld [vmem:[%s430 + $0x74] sm:$0x1]
      %v1466 = vld [vmem:[%s430 + $0x78] sm:$0xf]
      %v1467 = vld [vmem:[%s430 + $0x7c] sm:$0x1]
      %v1469 = vshrl.u32 %v1436, 16
      %v1471 = vrot.slane %v1469, 4
      %v1472 = vshll.u32 %v1436, 16
      %v1474 = vrot.slane %v1472, 5
      %v1475 = vor.u32 %v1471, %v1474
      %v1476 = vrot.slane %v1475, 4
      %v1478 = vshll.u32 %v1437, 16
      %v1480 = vrot.slane %v1478, 5
      %v1481 = vsel %vm952, %v1476, %v1480
      %v1483 = vshrl.u32 %v1438, 16
      %v1485 = vrot.slane %v1483, 4
      %v1486 = vshll.u32 %v1438, 16
      %v1488 = vrot.slane %v1486, 5
      %v1489 = vor.u32 %v1485, %v1488
      %v1490 = vrot.slane %v1489, 4
      %v1492 = vshll.u32 %v1439, 16
      %v1494 = vrot.slane %v1492, 5
      %v1495 = vsel %vm952, %v1490, %v1494
      %v1497 = vshrl.u32 %v1440, 16
      %v1499 = vrot.slane %v1497, 4
      %v1500 = vshll.u32 %v1440, 16
      %v1502 = vrot.slane %v1500, 5
      %v1503 = vor.u32 %v1499, %v1502
      %v1504 = vrot.slane %v1503, 4
      %v1506 = vshll.u32 %v1441, 16
      %v1508 = vrot.slane %v1506, 5
      %v1509 = vsel %vm952, %v1504, %v1508
      %v1511 = vshrl.u32 %v1442, 16
      %v1513 = vrot.slane %v1511, 4
      %v1514 = vshll.u32 %v1442, 16
      %v1516 = vrot.slane %v1514, 5
      %v1517 = vor.u32 %v1513, %v1516
      %v1518 = vrot.slane %v1517, 4
      %v1520 = vshll.u32 %v1443, 16
      %v1522 = vrot.slane %v1520, 5
      %v1523 = vsel %vm952, %v1518, %v1522
      %v1525 = vshrl.u32 %v1444, 16
      %v1527 = vrot.slane %v1525, 4
      %v1528 = vshll.u32 %v1444, 16
      %v1530 = vrot.slane %v1528, 5
      %v1531 = vor.u32 %v1527, %v1530
      %v1532 = vrot.slane %v1531, 4
      %v1534 = vshll.u32 %v1445, 16
      %v1536 = vrot.slane %v1534, 5
      %v1537 = vsel %vm952, %v1532, %v1536
      %v1539 = vshrl.u32 %v1446, 16
      %v1541 = vrot.slane %v1539, 4
      %v1542 = vshll.u32 %v1446, 16
      %v1544 = vrot.slane %v1542, 5
      %v1545 = vor.u32 %v1541, %v1544
      %v1546 = vrot.slane %v1545, 4
      %v1548 = vshll.u32 %v1447, 16
      %v1550 = vrot.slane %v1548, 5
      %v1551 = vsel %vm952, %v1546, %v1550
      %v1553 = vshrl.u32 %v1448, 16
      %v1555 = vrot.slane %v1553, 4
      %v1556 = vshll.u32 %v1448, 16
      %v1558 = vrot.slane %v1556, 5
      %v1559 = vor.u32 %v1555, %v1558
      %v1560 = vrot.slane %v1559, 4
      %v1562 = vshll.u32 %v1449, 16
      %v1564 = vrot.slane %v1562, 5
      %v1565 = vsel %vm952, %v1560, %v1564
      %v1567 = vshrl.u32 %v1450, 16
      %v1569 = vrot.slane %v1567, 4
      %v1570 = vshll.u32 %v1450, 16
      %v1572 = vrot.slane %v1570, 5
      %v1573 = vor.u32 %v1569, %v1572
      %v1574 = vrot.slane %v1573, 4
      %v1576 = vshll.u32 %v1451, 16
      %v1578 = vrot.slane %v1576, 5
      %v1579 = vsel %vm952, %v1574, %v1578
      %v1581 = vshrl.u32 %v1452, 16
      %v1583 = vrot.slane %v1581, 4
      %v1584 = vshll.u32 %v1452, 16
      %v1586 = vrot.slane %v1584, 5
      %v1587 = vor.u32 %v1583, %v1586
      %v1588 = vrot.slane %v1587, 4
      %v1590 = vshll.u32 %v1453, 16
      %v1592 = vrot.slane %v1590, 5
      %v1593 = vsel %vm952, %v1588, %v1592
      %v1595 = vshrl.u32 %v1454, 16
      %v1597 = vrot.slane %v1595, 4
      %v1598 = vshll.u32 %v1454, 16
      %v1600 = vrot.slane %v1598, 5
      %v1601 = vor.u32 %v1597, %v1600
      %v1602 = vrot.slane %v1601, 4
      %v1604 = vshll.u32 %v1455, 16
      %v1606 = vrot.slane %v1604, 5
      %v1607 = vsel %vm952, %v1602, %v1606
      %v1609 = vshrl.u32 %v1456, 16
      %v1611 = vrot.slane %v1609, 4
      %v1612 = vshll.u32 %v1456, 16
      %v1614 = vrot.slane %v1612, 5
      %v1615 = vor.u32 %v1611, %v1614
      %v1616 = vrot.slane %v1615, 4
      %v1618 = vshll.u32 %v1457, 16
      %v1620 = vrot.slane %v1618, 5
      %v1621 = vsel %vm952, %v1616, %v1620
      %v1623 = vshrl.u32 %v1458, 16
      %v1625 = vrot.slane %v1623, 4
      %v1626 = vshll.u32 %v1458, 16
      %v1628 = vrot.slane %v1626, 5
      %v1629 = vor.u32 %v1625, %v1628
      %v1630 = vrot.slane %v1629, 4
      %v1632 = vshll.u32 %v1459, 16
      %v1634 = vrot.slane %v1632, 5
      %v1635 = vsel %vm952, %v1630, %v1634
      %v1637 = vshrl.u32 %v1460, 16
      %v1639 = vrot.slane %v1637, 4
      %v1640 = vshll.u32 %v1460, 16
      %v1642 = vrot.slane %v1640, 5
      %v1643 = vor.u32 %v1639, %v1642
      %v1644 = vrot.slane %v1643, 4
      %v1646 = vshll.u32 %v1461, 16
      %v1648 = vrot.slane %v1646, 5
      %v1649 = vsel %vm952, %v1644, %v1648
      %v1651 = vshrl.u32 %v1462, 16
      %v1653 = vrot.slane %v1651, 4
      %v1654 = vshll.u32 %v1462, 16
      %v1656 = vrot.slane %v1654, 5
      %v1657 = vor.u32 %v1653, %v1656
      %v1658 = vrot.slane %v1657, 4
      %v1660 = vshll.u32 %v1463, 16
      %v1662 = vrot.slane %v1660, 5
      %v1663 = vsel %vm952, %v1658, %v1662
      %v1665 = vshrl.u32 %v1464, 16
      %v1667 = vrot.slane %v1665, 4
      %v1668 = vshll.u32 %v1464, 16
      %v1670 = vrot.slane %v1668, 5
      %v1671 = vor.u32 %v1667, %v1670
      %v1672 = vrot.slane %v1671, 4
      %v1674 = vshll.u32 %v1465, 16
      %v1676 = vrot.slane %v1674, 5
      %v1677 = vsel %vm952, %v1672, %v1676
      %v1679 = vshrl.u32 %v1466, 16
      %v1681 = vrot.slane %v1679, 4
      %v1682 = vshll.u32 %v1466, 16
      %v1684 = vrot.slane %v1682, 5
      %v1685 = vor.u32 %v1681, %v1684
      %v1686 = vrot.slane %v1685, 4
      %v1688 = vshll.u32 %v1467, 16
      %v1690 = vrot.slane %v1688, 5
      %v1691 = vsel %vm952, %v1686, %v1690
      %1692 = vrot.lane.b32.xlu0 %v1481, 20
      %v1693 = vpop.permute.xlu0 %1692
      %1694 = vrot.lane.b32.xlu0 %v1495, 20
      %v1695 = vpop.permute.xlu0 %1694
      %1696 = vrot.lane.b32.xlu0 %v1509, 20
      %v1697 = vpop.permute.xlu0 %1696
      %1698 = vrot.lane.b32.xlu0 %v1523, 20
      %v1699 = vpop.permute.xlu0 %1698
      %1700 = vrot.lane.b32.xlu0 %v1537, 20
      %v1701 = vpop.permute.xlu0 %1700
      %1702 = vrot.lane.b32.xlu0 %v1551, 20
      %v1703 = vpop.permute.xlu0 %1702
      %1704 = vrot.lane.b32.xlu0 %v1565, 20
      %v1705 = vpop.permute.xlu0 %1704
      %1706 = vrot.lane.b32.xlu0 %v1579, 20
      %v1707 = vpop.permute.xlu0 %1706
      %1708 = vrot.lane.b32.xlu0 %v1593, 20
      %v1709 = vpop.permute.xlu0 %1708
      %1710 = vrot.lane.b32.xlu0 %v1607, 20
      %v1711 = vpop.permute.xlu0 %1710
      %1712 = vrot.lane.b32.xlu0 %v1621, 20
      %v1713 = vpop.permute.xlu0 %1712
      %1714 = vrot.lane.b32.xlu0 %v1635, 20
      %v1715 = vpop.permute.xlu0 %1714
      %1716 = vrot.lane.b32.xlu0 %v1649, 20
      %v1717 = vpop.permute.xlu0 %1716
      %1718 = vrot.lane.b32.xlu0 %v1663, 20
      %v1719 = vpop.permute.xlu0 %1718
      %1720 = vrot.lane.b32.xlu0 %v1677, 20
      %v1721 = vpop.permute.xlu0 %1720
      %1722 = vrot.lane.b32.xlu0 %v1691, 20
      %v1723 = vpop.permute.xlu0 %1722
      %vm1740 = vcmask 191648
      %1741 = vst.msk [vmem:[#allocation3] sm:$0xf] %vm1740, %v1693
      %1742 = vst.msk [vmem:[#allocation3 + $0x4] sm:$0xf] %vm1740, %v1695
      %1743 = vst.msk [vmem:[#allocation3 + $0x8] sm:$0xf] %vm1740, %v1697
      %1744 = vst.msk [vmem:[#allocation3 + $0xc] sm:$0xf] %vm1740, %v1699
      %1745 = vst.msk [vmem:[#allocation3 + $0x10] sm:$0xf] %vm1740, %v1701
      %1746 = vst.msk [vmem:[#allocation3 + $0x14] sm:$0xf] %vm1740, %v1703
      %1747 = vst.msk [vmem:[#allocation3 + $0x18] sm:$0xf] %vm1740, %v1705
      %1748 = vst.msk [vmem:[#allocation3 + $0x1c] sm:$0xf] %vm1740, %v1707
      %1749 = vst.msk [vmem:[#allocation3 + $0x20] sm:$0xf] %vm1740, %v1709
      %1750 = vst.msk [vmem:[#allocation3 + $0x24] sm:$0xf] %vm1740, %v1711
      %1751 = vst.msk [vmem:[#allocation3 + $0x28] sm:$0xf] %vm1740, %v1713
      %1752 = vst.msk [vmem:[#allocation3 + $0x2c] sm:$0xf] %vm1740, %v1715
      %1753 = vst.msk [vmem:[#allocation3 + $0x30] sm:$0xf] %vm1740, %v1717
      %1754 = vst.msk [vmem:[#allocation3 + $0x34] sm:$0xf] %vm1740, %v1719
      %1755 = vst.msk [vmem:[#allocation3 + $0x38] sm:$0xf] %vm1740, %v1721
      %1756 = vst.msk [vmem:[#allocation3 + $0x3c] sm:$0xf] %vm1740, %v1723
      %s1757 = scalar_lea.vmem [#allocation2], 16
      %v1758 = vld [vmem:[%s1757] sm:$0xf]
      %v1759 = vld [vmem:[%s1757 + $0x8] sm:$0xf]
      %v1760 = vld [vmem:[%s1757 + $0x10] sm:$0xf]
      %v1761 = vld [vmem:[%s1757 + $0x18] sm:$0xf]
      %v1762 = vld [vmem:[%s1757 + $0x20] sm:$0xf]
      %v1763 = vld [vmem:[%s1757 + $0x28] sm:$0xf]
      %v1764 = vld [vmem:[%s1757 + $0x30] sm:$0xf]
      %v1765 = vld [vmem:[%s1757 + $0x38] sm:$0xf]
      %v1766 = vld [vmem:[%s1757 + $0x40] sm:$0xf]
      %v1767 = vld [vmem:[%s1757 + $0x48] sm:$0xf]
      %v1768 = vld [vmem:[%s1757 + $0x50] sm:$0xf]
      %v1769 = vld [vmem:[%s1757 + $0x58] sm:$0xf]
      %v1770 = vld [vmem:[%s1757 + $0x60] sm:$0xf]
      %v1771 = vld [vmem:[%s1757 + $0x68] sm:$0xf]
      %v1772 = vld [vmem:[%s1757 + $0x70] sm:$0xf]
      %v1773 = vld [vmem:[%s1757 + $0x78] sm:$0xf]
      %1790 = vrot.lane.b32.xlu0 %v1758, 24
      %v1791 = vpop.permute.xlu0 %1790
      %1792 = vrot.lane.b32.xlu0 %v1759, 24
      %v1793 = vpop.permute.xlu0 %1792
      %1794 = vrot.lane.b32.xlu0 %v1760, 24
      %v1795 = vpop.permute.xlu0 %1794
      %1796 = vrot.lane.b32.xlu0 %v1761, 24
      %v1797 = vpop.permute.xlu0 %1796
      %1798 = vrot.lane.b32.xlu0 %v1762, 24
      %v1799 = vpop.permute.xlu0 %1798
      %1800 = vrot.lane.b32.xlu0 %v1763, 24
      %v1801 = vpop.permute.xlu0 %1800
      %1802 = vrot.lane.b32.xlu0 %v1764, 24
      %v1803 = vpop.permute.xlu0 %1802
      %1804 = vrot.lane.b32.xlu0 %v1765, 24
      %v1805 = vpop.permute.xlu0 %1804
      %1806 = vrot.lane.b32.xlu0 %v1766, 24
      %v1807 = vpop.permute.xlu0 %1806
      %1808 = vrot.lane.b32.xlu0 %v1767, 24
      %v1809 = vpop.permute.xlu0 %1808
      %1810 = vrot.lane.b32.xlu0 %v1768, 24
      %v1811 = vpop.permute.xlu0 %1810
      %1812 = vrot.lane.b32.xlu0 %v1769, 24
      %v1813 = vpop.permute.xlu0 %1812
      %1814 = vrot.lane.b32.xlu0 %v1770, 24
      %v1815 = vpop.permute.xlu0 %1814
      %1816 = vrot.lane.b32.xlu0 %v1771, 24
      %v1817 = vpop.permute.xlu0 %1816
      %1818 = vrot.lane.b32.xlu0 %v1772, 24
      %v1819 = vpop.permute.xlu0 %1818
      %1820 = vrot.lane.b32.xlu0 %v1773, 24
      %v1821 = vpop.permute.xlu0 %1820
      %vm1838 = vcmask 224448
      %1839 = vst.msk [vmem:[#allocation3] sm:$0xf] %vm1838, %v1791
      %1840 = vst.msk [vmem:[#allocation3 + $0x4] sm:$0xf] %vm1838, %v1793
      %1841 = vst.msk [vmem:[#allocation3 + $0x8] sm:$0xf] %vm1838, %v1795
      %1842 = vst.msk [vmem:[#allocation3 + $0xc] sm:$0xf] %vm1838, %v1797
      %1843 = vst.msk [vmem:[#allocation3 + $0x10] sm:$0xf] %vm1838, %v1799
      %1844 = vst.msk [vmem:[#allocation3 + $0x14] sm:$0xf] %vm1838, %v1801
      %1845 = vst.msk [vmem:[#allocation3 + $0x18] sm:$0xf] %vm1838, %v1803
      %1846 = vst.msk [vmem:[#allocation3 + $0x1c] sm:$0xf] %vm1838, %v1805
      %1847 = vst.msk [vmem:[#allocation3 + $0x20] sm:$0xf] %vm1838, %v1807
      %1848 = vst.msk [vmem:[#allocation3 + $0x24] sm:$0xf] %vm1838, %v1809
      %1849 = vst.msk [vmem:[#allocation3 + $0x28] sm:$0xf] %vm1838, %v1811
      %1850 = vst.msk [vmem:[#allocation3 + $0x2c] sm:$0xf] %vm1838, %v1813
      %1851 = vst.msk [vmem:[#allocation3 + $0x30] sm:$0xf] %vm1838, %v1815
      %1852 = vst.msk [vmem:[#allocation3 + $0x34] sm:$0xf] %vm1838, %v1817
      %1853 = vst.msk [vmem:[#allocation3 + $0x38] sm:$0xf] %vm1838, %v1819
      %1854 = vst.msk [vmem:[#allocation3 + $0x3c] sm:$0xf] %vm1838, %v1821
      %v1855 = vld [vmem:[%s1757] sm:$0xf]
      %v1856 = vld [vmem:[%s1757 + $0x8] sm:$0xf]
      %v1857 = vld [vmem:[%s1757 + $0x10] sm:$0xf]
      %v1858 = vld [vmem:[%s1757 + $0x18] sm:$0xf]
      %v1859 = vld [vmem:[%s1757 + $0x20] sm:$0xf]
      %v1860 = vld [vmem:[%s1757 + $0x28] sm:$0xf]
      %v1861 = vld [vmem:[%s1757 + $0x30] sm:$0xf]
      %v1862 = vld [vmem:[%s1757 + $0x38] sm:$0xf]
      %v1863 = vld [vmem:[%s1757 + $0x40] sm:$0xf]
      %v1864 = vld [vmem:[%s1757 + $0x48] sm:$0xf]
      %v1865 = vld [vmem:[%s1757 + $0x50] sm:$0xf]
      %v1866 = vld [vmem:[%s1757 + $0x58] sm:$0xf]
      %v1867 = vld [vmem:[%s1757 + $0x60] sm:$0xf]
      %v1868 = vld [vmem:[%s1757 + $0x68] sm:$0xf]
      %v1869 = vld [vmem:[%s1757 + $0x70] sm:$0xf]
      %v1870 = vld [vmem:[%s1757 + $0x78] sm:$0xf]
      %1887 = vrot.lane.b32.xlu0 %v1855, 24
      %v1888 = vpop.permute.xlu0 %1887
      %1889 = vrot.lane.b32.xlu0 %v1856, 24
      %v1890 = vpop.permute.xlu0 %1889
      %1891 = vrot.lane.b32.xlu0 %v1857, 24
      %v1892 = vpop.permute.xlu0 %1891
      %1893 = vrot.lane.b32.xlu0 %v1858, 24
      %v1894 = vpop.permute.xlu0 %1893
      %1895 = vrot.lane.b32.xlu0 %v1859, 24
      %v1896 = vpop.permute.xlu0 %1895
      %1897 = vrot.lane.b32.xlu0 %v1860, 24
      %v1898 = vpop.permute.xlu0 %1897
      %1899 = vrot.lane.b32.xlu0 %v1861, 24
      %v1900 = vpop.permute.xlu0 %1899
      %1901 = vrot.lane.b32.xlu0 %v1862, 24
      %v1902 = vpop.permute.xlu0 %1901
      %1903 = vrot.lane.b32.xlu0 %v1863, 24
      %v1904 = vpop.permute.xlu0 %1903
      %1905 = vrot.lane.b32.xlu0 %v1864, 24
      %v1906 = vpop.permute.xlu0 %1905
      %1907 = vrot.lane.b32.xlu0 %v1865, 24
      %v1908 = vpop.permute.xlu0 %1907
      %1909 = vrot.lane.b32.xlu0 %v1866, 24
      %v1910 = vpop.permute.xlu0 %1909
      %1911 = vrot.lane.b32.xlu0 %v1867, 24
      %v1912 = vpop.permute.xlu0 %1911
      %1913 = vrot.lane.b32.xlu0 %v1868, 24
      %v1914 = vpop.permute.xlu0 %1913
      %1915 = vrot.lane.b32.xlu0 %v1869, 24
      %v1916 = vpop.permute.xlu0 %1915
      %1917 = vrot.lane.b32.xlu0 %v1870, 24
      %v1918 = vpop.permute.xlu0 %1917
      %vm1935 = vcmask 257248
      %1936 = vst.msk [vmem:[#allocation3] sm:$0xf] %vm1935, %v1888
      %1937 = vst.msk [vmem:[#allocation3 + $0x4] sm:$0xf] %vm1935, %v1890
      %1938 = vst.msk [vmem:[#allocation3 + $0x8] sm:$0xf] %vm1935, %v1892
      %1939 = vst.msk [vmem:[#allocation3 + $0xc] sm:$0xf] %vm1935, %v1894
      %1940 = vst.msk [vmem:[#allocation3 + $0x10] sm:$0xf] %vm1935, %v1896
      %1941 = vst.msk [vmem:[#allocation3 + $0x14] sm:$0xf] %vm1935, %v1898
      %1942 = vst.msk [vmem:[#allocation3 + $0x18] sm:$0xf] %vm1935, %v1900
      %1943 = vst.msk [vmem:[#allocation3 + $0x1c] sm:$0xf] %vm1935, %v1902
      %1944 = vst.msk [vmem:[#allocation3 + $0x20] sm:$0xf] %vm1935, %v1904
      %1945 = vst.msk [vmem:[#allocation3 + $0x24] sm:$0xf] %vm1935, %v1906
      %1946 = vst.msk [vmem:[#allocation3 + $0x28] sm:$0xf] %vm1935, %v1908
      %1947 = vst.msk [vmem:[#allocation3 + $0x2c] sm:$0xf] %vm1935, %v1910
      %1948 = vst.msk [vmem:[#allocation3 + $0x30] sm:$0xf] %vm1935, %v1912
      %1949 = vst.msk [vmem:[#allocation3 + $0x34] sm:$0xf] %vm1935, %v1914
      %1950 = vst.msk [vmem:[#allocation3 + $0x38] sm:$0xf] %vm1935, %v1916
      %1951 = vst.msk [vmem:[#allocation3 + $0x3c] sm:$0xf] %vm1935, %v1918
      %v1952 = vld [vmem:[%s1757] sm:$0xf]
      %v1953 = vld [vmem:[%s1757 + $0x4] sm:$0x1]
      %v1954 = vld [vmem:[%s1757 + $0x8] sm:$0xf]
      %v1955 = vld [vmem:[%s1757 + $0xc] sm:$0x1]
      %v1956 = vld [vmem:[%s1757 + $0x10] sm:$0xf]
      %v1957 = vld [vmem:[%s1757 + $0x14] sm:$0x1]
      %v1958 = vld [vmem:[%s1757 + $0x18] sm:$0xf]
      %v1959 = vld [vmem:[%s1757 + $0x1c] sm:$0x1]
      %v1960 = vld [vmem:[%s1757 + $0x20] sm:$0xf]
      %v1961 = vld [vmem:[%s1757 + $0x24] sm:$0x1]
      %v1962 = vld [vmem:[%s1757 + $0x28] sm:$0xf]
      %v1963 = vld [vmem:[%s1757 + $0x2c] sm:$0x1]
      %v1964 = vld [vmem:[%s1757 + $0x30] sm:$0xf]
      %v1965 = vld [vmem:[%s1757 + $0x34] sm:$0x1]
      %v1966 = vld [vmem:[%s1757 + $0x38] sm:$0xf]
      %v1967 = vld [vmem:[%s1757 + $0x3c] sm:$0x1]
      %v1968 = vld [vmem:[%s1757 + $0x40] sm:$0xf]
      %v1969 = vld [vmem:[%s1757 + $0x44] sm:$0x1]
      %v1970 = vld [vmem:[%s1757 + $0x48] sm:$0xf]
      %v1971 = vld [vmem:[%s1757 + $0x4c] sm:$0x1]
      %v1972 = vld [vmem:[%s1757 + $0x50] sm:$0xf]
      %v1973 = vld [vmem:[%s1757 + $0x54] sm:$0x1]
      %v1974 = vld [vmem:[%s1757 + $0x58] sm:$0xf]
      %v1975 = vld [vmem:[%s1757 + $0x5c] sm:$0x1]
      %v1976 = vld [vmem:[%s1757 + $0x60] sm:$0xf]
      %v1977 = vld [vmem:[%s1757 + $0x64] sm:$0x1]
      %v1978 = vld [vmem:[%s1757 + $0x68] sm:$0xf]
      %v1979 = vld [vmem:[%s1757 + $0x6c] sm:$0x1]
      %v1980 = vld [vmem:[%s1757 + $0x70] sm:$0xf]
      %v1981 = vld [vmem:[%s1757 + $0x74] sm:$0x1]
      %v1982 = vld [vmem:[%s1757 + $0x78] sm:$0xf]
      %v1983 = vld [vmem:[%s1757 + $0x7c] sm:$0x1]
      %v1985 = vshrl.u32 %v1952, 16
      %v1987 = vrot.slane %v1985, 4
      %v1988 = vshll.u32 %v1952, 16
      %v1990 = vrot.slane %v1988, 5
      %v1991 = vor.u32 %v1987, %v1990
      %v1992 = vrot.slane %v1991, 4
      %v1994 = vshll.u32 %v1953, 16
      %v1996 = vrot.slane %v1994, 5
      %v1997 = vsel %vm952, %v1992, %v1996
      %v1999 = vshrl.u32 %v1954, 16
      %v2001 = vrot.slane %v1999, 4
      %v2002 = vshll.u32 %v1954, 16
      %v2004 = vrot.slane %v2002, 5
      %v2005 = vor.u32 %v2001, %v2004
      %v2006 = vrot.slane %v2005, 4
      %v2008 = vshll.u32 %v1955, 16
      %v2010 = vrot.slane %v2008, 5
      %v2011 = vsel %vm952, %v2006, %v2010
      %v2013 = vshrl.u32 %v1956, 16
      %v2015 = vrot.slane %v2013, 4
      %v2016 = vshll.u32 %v1956, 16
      %v2018 = vrot.slane %v2016, 5
      %v2019 = vor.u32 %v2015, %v2018
      %v2020 = vrot.slane %v2019, 4
      %v2022 = vshll.u32 %v1957, 16
      %v2024 = vrot.slane %v2022, 5
      %v2025 = vsel %vm952, %v2020, %v2024
      %v2027 = vshrl.u32 %v1958, 16
      %v2029 = vrot.slane %v2027, 4
      %v2030 = vshll.u32 %v1958, 16
      %v2032 = vrot.slane %v2030, 5
      %v2033 = vor.u32 %v2029, %v2032
      %v2034 = vrot.slane %v2033, 4
      %v2036 = vshll.u32 %v1959, 16
      %v2038 = vrot.slane %v2036, 5
      %v2039 = vsel %vm952, %v2034, %v2038
      %v2041 = vshrl.u32 %v1960, 16
      %v2043 = vrot.slane %v2041, 4
      %v2044 = vshll.u32 %v1960, 16
      %v2046 = vrot.slane %v2044, 5
      %v2047 = vor.u32 %v2043, %v2046
      %v2048 = vrot.slane %v2047, 4
      %v2050 = vshll.u32 %v1961, 16
      %v2052 = vrot.slane %v2050, 5
      %v2053 = vsel %vm952, %v2048, %v2052
      %v2055 = vshrl.u32 %v1962, 16
      %v2057 = vrot.slane %v2055, 4
      %v2058 = vshll.u32 %v1962, 16
      %v2060 = vrot.slane %v2058, 5
      %v2061 = vor.u32 %v2057, %v2060
      %v2062 = vrot.slane %v2061, 4
      %v2064 = vshll.u32 %v1963, 16
      %v2066 = vrot.slane %v2064, 5
      %v2067 = vsel %vm952, %v2062, %v2066
      %v2069 = vshrl.u32 %v1964, 16
      %v2071 = vrot.slane %v2069, 4
      %v2072 = vshll.u32 %v1964, 16
      %v2074 = vrot.slane %v2072, 5
      %v2075 = vor.u32 %v2071, %v2074
      %v2076 = vrot.slane %v2075, 4
      %v2078 = vshll.u32 %v1965, 16
      %v2080 = vrot.slane %v2078, 5
      %v2081 = vsel %vm952, %v2076, %v2080
      %v2083 = vshrl.u32 %v1966, 16
      %v2085 = vrot.slane %v2083, 4
      %v2086 = vshll.u32 %v1966, 16
      %v2088 = vrot.slane %v2086, 5
      %v2089 = vor.u32 %v2085, %v2088
      %v2090 = vrot.slane %v2089, 4
      %v2092 = vshll.u32 %v1967, 16
      %v2094 = vrot.slane %v2092, 5
      %v2095 = vsel %vm952, %v2090, %v2094
      %v2097 = vshrl.u32 %v1968, 16
      %v2099 = vrot.slane %v2097, 4
      %v2100 = vshll.u32 %v1968, 16
      %v2102 = vrot.slane %v2100, 5
      %v2103 = vor.u32 %v2099, %v2102
      %v2104 = vrot.slane %v2103, 4
      %v2106 = vshll.u32 %v1969, 16
      %v2108 = vrot.slane %v2106, 5
      %v2109 = vsel %vm952, %v2104, %v2108
      %v2111 = vshrl.u32 %v1970, 16
      %v2113 = vrot.slane %v2111, 4
      %v2114 = vshll.u32 %v1970, 16
      %v2116 = vrot.slane %v2114, 5
      %v2117 = vor.u32 %v2113, %v2116
      %v2118 = vrot.slane %v2117, 4
      %v2120 = vshll.u32 %v1971, 16
      %v2122 = vrot.slane %v2120, 5
      %v2123 = vsel %vm952, %v2118, %v2122
      %v2125 = vshrl.u32 %v1972, 16
      %v2127 = vrot.slane %v2125, 4
      %v2128 = vshll.u32 %v1972, 16
      %v2130 = vrot.slane %v2128, 5
      %v2131 = vor.u32 %v2127, %v2130
      %v2132 = vrot.slane %v2131, 4
      %v2134 = vshll.u32 %v1973, 16
      %v2136 = vrot.slane %v2134, 5
      %v2137 = vsel %vm952, %v2132, %v2136
      %v2139 = vshrl.u32 %v1974, 16
      %v2141 = vrot.slane %v2139, 4
      %v2142 = vshll.u32 %v1974, 16
      %v2144 = vrot.slane %v2142, 5
      %v2145 = vor.u32 %v2141, %v2144
      %v2146 = vrot.slane %v2145, 4
      %v2148 = vshll.u32 %v1975, 16
      %v2150 = vrot.slane %v2148, 5
      %v2151 = vsel %vm952, %v2146, %v2150
      %v2153 = vshrl.u32 %v1976, 16
      %v2155 = vrot.slane %v2153, 4
      %v2156 = vshll.u32 %v1976, 16
      %v2158 = vrot.slane %v2156, 5
      %v2159 = vor.u32 %v2155, %v2158
      %v2160 = vrot.slane %v2159, 4
      %v2162 = vshll.u32 %v1977, 16
      %v2164 = vrot.slane %v2162, 5
      %v2165 = vsel %vm952, %v2160, %v2164
      %v2167 = vshrl.u32 %v1978, 16
      %v2169 = vrot.slane %v2167, 4
      %v2170 = vshll.u32 %v1978, 16
      %v2172 = vrot.slane %v2170, 5
      %v2173 = vor.u32 %v2169, %v2172
      %v2174 = vrot.slane %v2173, 4
      %v2176 = vshll.u32 %v1979, 16
      %v2178 = vrot.slane %v2176, 5
      %v2179 = vsel %vm952, %v2174, %v2178
      %v2181 = vshrl.u32 %v1980, 16
      %v2183 = vrot.slane %v2181, 4
      %v2184 = vshll.u32 %v1980, 16
      %v2186 = vrot.slane %v2184, 5
      %v2187 = vor.u32 %v2183, %v2186
      %v2188 = vrot.slane %v2187, 4
      %v2190 = vshll.u32 %v1981, 16
      %v2192 = vrot.slane %v2190, 5
      %v2193 = vsel %vm952, %v2188, %v2192
      %v2195 = vshrl.u32 %v1982, 16
      %v2197 = vrot.slane %v2195, 4
      %v2198 = vshll.u32 %v1982, 16
      %v2200 = vrot.slane %v2198, 5
      %v2201 = vor.u32 %v2197, %v2200
      %v2202 = vrot.slane %v2201, 4
      %v2204 = vshll.u32 %v1983, 16
      %v2206 = vrot.slane %v2204, 5
      %v2207 = vsel %vm952, %v2202, %v2206
      %2208 = vrot.lane.b32.xlu0 %v1997, 32
      %v2209 = vpop.permute.xlu0 %2208
      %2210 = vrot.lane.b32.xlu0 %v2011, 32
      %v2211 = vpop.permute.xlu0 %2210
      %2212 = vrot.lane.b32.xlu0 %v2025, 32
      %v2213 = vpop.permute.xlu0 %2212
      %2214 = vrot.lane.b32.xlu0 %v2039, 32
      %v2215 = vpop.permute.xlu0 %2214
      %2216 = vrot.lane.b32.xlu0 %v2053, 32
      %v2217 = vpop.permute.xlu0 %2216
      %2218 = vrot.lane.b32.xlu0 %v2067, 32
      %v2219 = vpop.permute.xlu0 %2218
      %2220 = vrot.lane.b32.xlu0 %v2081, 32
      %v2221 = vpop.permute.xlu0 %2220
      %2222 = vrot.lane.b32.xlu0 %v2095, 32
      %v2223 = vpop.permute.xlu0 %2222
      %2224 = vrot.lane.b32.xlu0 %v2109, 32
      %v2225 = vpop.permute.xlu0 %2224
      %2226 = vrot.lane.b32.xlu0 %v2123, 32
      %v2227 = vpop.permute.xlu0 %2226
      %2228 = vrot.lane.b32.xlu0 %v2137, 32
      %v2229 = vpop.permute.xlu0 %2228
      %2230 = vrot.lane.b32.xlu0 %v2151, 32
      %v2231 = vpop.permute.xlu0 %2230
      %2232 = vrot.lane.b32.xlu0 %v2165, 32
      %v2233 = vpop.permute.xlu0 %2232
      %2234 = vrot.lane.b32.xlu0 %v2179, 32
      %v2235 = vpop.permute.xlu0 %2234
      %2236 = vrot.lane.b32.xlu0 %v2193, 32
      %v2237 = vpop.permute.xlu0 %2236
      %2238 = vrot.lane.b32.xlu0 %v2207, 32
      %v2239 = vpop.permute.xlu0 %2238
      %vm2256 = vcmask 290048
      %2257 = vst.msk [vmem:[#allocation3] sm:$0xf] %vm2256, %v2209
      %2258 = vst.msk [vmem:[#allocation3 + $0x4] sm:$0xf] %vm2256, %v2211
      %2259 = vst.msk [vmem:[#allocation3 + $0x8] sm:$0xf] %vm2256, %v2213
      %2260 = vst.msk [vmem:[#allocation3 + $0xc] sm:$0xf] %vm2256, %v2215
      %2261 = vst.msk [vmem:[#allocation3 + $0x10] sm:$0xf] %vm2256, %v2217
      %2262 = vst.msk [vmem:[#allocation3 + $0x14] sm:$0xf] %vm2256, %v2219
      %2263 = vst.msk [vmem:[#allocation3 + $0x18] sm:$0xf] %vm2256, %v2221
      %2264 = vst.msk [vmem:[#allocation3 + $0x1c] sm:$0xf] %vm2256, %v2223
      %2265 = vst.msk [vmem:[#allocation3 + $0x20] sm:$0xf] %vm2256, %v2225
      %2266 = vst.msk [vmem:[#allocation3 + $0x24] sm:$0xf] %vm2256, %v2227
      %2267 = vst.msk [vmem:[#allocation3 + $0x28] sm:$0xf] %vm2256, %v2229
      %2268 = vst.msk [vmem:[#allocation3 + $0x2c] sm:$0xf] %vm2256, %v2231
      %2269 = vst.msk [vmem:[#allocation3 + $0x30] sm:$0xf] %vm2256, %v2233
      %2270 = vst.msk [vmem:[#allocation3 + $0x34] sm:$0xf] %vm2256, %v2235
      %2271 = vst.msk [vmem:[#allocation3 + $0x38] sm:$0xf] %vm2256, %v2237
      %2272 = vst.msk [vmem:[#allocation3 + $0x3c] sm:$0xf] %vm2256, %v2239
      %v2273 = vld [vmem:[#allocation2] sm:$0xf]
      %v2274 = vld [vmem:[#allocation2 + $0x8] sm:$0xf]
      %v2275 = vld [vmem:[#allocation2 + $0x10] sm:$0xf]
      %v2276 = vld [vmem:[#allocation2 + $0x18] sm:$0xf]
      %v2277 = vld [vmem:[#allocation2 + $0x20] sm:$0xf]
      %v2278 = vld [vmem:[#allocation2 + $0x28] sm:$0xf]
      %v2279 = vld [vmem:[#allocation2 + $0x30] sm:$0xf]
      %v2280 = vld [vmem:[#allocation2 + $0x38] sm:$0xf]
      %v2281 = vld [vmem:[#allocation2 + $0x40] sm:$0xf]
      %v2282 = vld [vmem:[#allocation2 + $0x48] sm:$0xf]
      %v2283 = vld [vmem:[#allocation2 + $0x50] sm:$0xf]
      %v2284 = vld [vmem:[#allocation2 + $0x58] sm:$0xf]
      %v2285 = vld [vmem:[#allocation2 + $0x60] sm:$0xf]
      %v2286 = vld [vmem:[#allocation2 + $0x68] sm:$0xf]
      %v2287 = vld [vmem:[#allocation2 + $0x70] sm:$0xf]
      %v2288 = vld [vmem:[#allocation2 + $0x78] sm:$0xf]
      %2305 = vrot.lane.b32.xlu0 %v2273, 124
      %v2306 = vpop.permute.xlu0 %2305
      %2307 = vrot.lane.b32.xlu0 %v2274, 124
      %v2308 = vpop.permute.xlu0 %2307
      %2309 = vrot.lane.b32.xlu0 %v2275, 124
      %v2310 = vpop.permute.xlu0 %2309
      %2311 = vrot.lane.b32.xlu0 %v2276, 124
      %v2312 = vpop.permute.xlu0 %2311
      %2313 = vrot.lane.b32.xlu0 %v2277, 124
      %v2314 = vpop.permute.xlu0 %2313
      %2315 = vrot.lane.b32.xlu0 %v2278, 124
      %v2316 = vpop.permute.xlu0 %2315
      %2317 = vrot.lane.b32.xlu0 %v2279, 124
      %v2318 = vpop.permute.xlu0 %2317
      %2319 = vrot.lane.b32.xlu0 %v2280, 124
      %v2320 = vpop.permute.xlu0 %2319
      %2321 = vrot.lane.b32.xlu0 %v2281, 124
      %v2322 = vpop.permute.xlu0 %2321
      %2323 = vrot.lane.b32.xlu0 %v2282, 124
      %v2324 = vpop.permute.xlu0 %2323
      %2325 = vrot.lane.b32.xlu0 %v2283, 124
      %v2326 = vpop.permute.xlu0 %2325
      %2327 = vrot.lane.b32.xlu0 %v2284, 124
      %v2328 = vpop.permute.xlu0 %2327
      %2329 = vrot.lane.b32.xlu0 %v2285, 124
      %v2330 = vpop.permute.xlu0 %2329
      %2331 = vrot.lane.b32.xlu0 %v2286, 124
      %v2332 = vpop.permute.xlu0 %2331
      %2333 = vrot.lane.b32.xlu0 %v2287, 124
      %v2334 = vpop.permute.xlu0 %2333
      %2335 = vrot.lane.b32.xlu0 %v2288, 124
      %v2336 = vpop.permute.xlu0 %2335
      %s2353 = scalar_lea.vmem [#allocation3], 64
      %2354 = vst.msk [vmem:[%s2353] sm:$0xf] %vm869, %v2306
      %2355 = vst.msk [vmem:[%s2353 + $0x4] sm:$0xf] %vm869, %v2308
      %2356 = vst.msk [vmem:[%s2353 + $0x8] sm:$0xf] %vm869, %v2310
      %2357 = vst.msk [vmem:[%s2353 + $0xc] sm:$0xf] %vm869, %v2312
      %2358 = vst.msk [vmem:[%s2353 + $0x10] sm:$0xf] %vm869, %v2314
      %2359 = vst.msk [vmem:[%s2353 + $0x14] sm:$0xf] %vm869, %v2316
      %2360 = vst.msk [vmem:[%s2353 + $0x18] sm:$0xf] %vm869, %v2318
      %2361 = vst.msk [vmem:[%s2353 + $0x1c] sm:$0xf] %vm869, %v2320
      %2362 = vst.msk [vmem:[%s2353 + $0x20] sm:$0xf] %vm869, %v2322
      %2363 = vst.msk [vmem:[%s2353 + $0x24] sm:$0xf] %vm869, %v2324
      %2364 = vst.msk [vmem:[%s2353 + $0x28] sm:$0xf] %vm869, %v2326
      %2365 = vst.msk [vmem:[%s2353 + $0x2c] sm:$0xf] %vm869, %v2328
      %2366 = vst.msk [vmem:[%s2353 + $0x30] sm:$0xf] %vm869, %v2330
      %2367 = vst.msk [vmem:[%s2353 + $0x34] sm:$0xf] %vm869, %v2332
      %2368 = vst.msk [vmem:[%s2353 + $0x38] sm:$0xf] %vm869, %v2334
      %2369 = vst.msk [vmem:[%s2353 + $0x3c] sm:$0xf] %vm869, %v2336
      %v2370 = vld [vmem:[#allocation2] sm:$0xf]
      %v2371 = vld [vmem:[#allocation2 + $0x4] sm:$0x1]
      %v2372 = vld [vmem:[#allocation2 + $0x8] sm:$0xf]
      %v2373 = vld [vmem:[#allocation2 + $0xc] sm:$0x1]
      %v2374 = vld [vmem:[#allocation2 + $0x10] sm:$0xf]
      %v2375 = vld [vmem:[#allocation2 + $0x14] sm:$0x1]
      %v2376 = vld [vmem:[#allocation2 + $0x18] sm:$0xf]
      %v2377 = vld [vmem:[#allocation2 + $0x1c] sm:$0x1]
      %v2378 = vld [vmem:[#allocation2 + $0x20] sm:$0xf]
      %v2379 = vld [vmem:[#allocation2 + $0x24] sm:$0x1]
      %v2380 = vld [vmem:[#allocation2 + $0x28] sm:$0xf]
      %v2381 = vld [vmem:[#allocation2 + $0x2c] sm:$0x1]
      %v2382 = vld [vmem:[#allocation2 + $0x30] sm:$0xf]
      %v2383 = vld [vmem:[#allocation2 + $0x34] sm:$0x1]
      %v2384 = vld [vmem:[#allocation2 + $0x38] sm:$0xf]
      %v2385 = vld [vmem:[#allocation2 + $0x3c] sm:$0x1]
      %v2386 = vld [vmem:[#allocation2 + $0x40] sm:$0xf]
      %v2387 = vld [vmem:[#allocation2 + $0x44] sm:$0x1]
      %v2388 = vld [vmem:[#allocation2 + $0x48] sm:$0xf]
      %v2389 = vld [vmem:[#allocation2 + $0x4c] sm:$0x1]
      %v2390 = vld [vmem:[#allocation2 + $0x50] sm:$0xf]
      %v2391 = vld [vmem:[#allocation2 + $0x54] sm:$0x1]
      %v2392 = vld [vmem:[#allocation2 + $0x58] sm:$0xf]
      %v2393 = vld [vmem:[#allocation2 + $0x5c] sm:$0x1]
      %v2394 = vld [vmem:[#allocation2 + $0x60] sm:$0xf]
      %v2395 = vld [vmem:[#allocation2 + $0x64] sm:$0x1]
      %v2396 = vld [vmem:[#allocation2 + $0x68] sm:$0xf]
      %v2397 = vld [vmem:[#allocation2 + $0x6c] sm:$0x1]
      %v2398 = vld [vmem:[#allocation2 + $0x70] sm:$0xf]
      %v2399 = vld [vmem:[#allocation2 + $0x74] sm:$0x1]
      %v2400 = vld [vmem:[#allocation2 + $0x78] sm:$0xf]
      %v2401 = vld [vmem:[#allocation2 + $0x7c] sm:$0x1]
      %v2403 = vshrl.u32 %v2370, 16
      %v2405 = vrot.slane %v2403, 4
      %v2406 = vshll.u32 %v2370, 16
      %v2408 = vrot.slane %v2406, 5
      %v2409 = vor.u32 %v2405, %v2408
      %v2410 = vrot.slane %v2409, 4
      %v2412 = vshll.u32 %v2371, 16
      %v2414 = vrot.slane %v2412, 5
      %v2415 = vsel %vm952, %v2410, %v2414
      %v2417 = vshrl.u32 %v2372, 16
      %v2419 = vrot.slane %v2417, 4
      %v2420 = vshll.u32 %v2372, 16
      %v2422 = vrot.slane %v2420, 5
      %v2423 = vor.u32 %v2419, %v2422
      %v2424 = vrot.slane %v2423, 4
      %v2426 = vshll.u32 %v2373, 16
      %v2428 = vrot.slane %v2426, 5
      %v2429 = vsel %vm952, %v2424, %v2428
      %v2431 = vshrl.u32 %v2374, 16
      %v2433 = vrot.slane %v2431, 4
      %v2434 = vshll.u32 %v2374, 16
      %v2436 = vrot.slane %v2434, 5
      %v2437 = vor.u32 %v2433, %v2436
      %v2438 = vrot.slane %v2437, 4
      %v2440 = vshll.u32 %v2375, 16
      %v2442 = vrot.slane %v2440, 5
      %v2443 = vsel %vm952, %v2438, %v2442
      %v2445 = vshrl.u32 %v2376, 16
      %v2447 = vrot.slane %v2445, 4
      %v2448 = vshll.u32 %v2376, 16
      %v2450 = vrot.slane %v2448, 5
      %v2451 = vor.u32 %v2447, %v2450
      %v2452 = vrot.slane %v2451, 4
      %v2454 = vshll.u32 %v2377, 16
      %v2456 = vrot.slane %v2454, 5
      %v2457 = vsel %vm952, %v2452, %v2456
      %v2459 = vshrl.u32 %v2378, 16
      %v2461 = vrot.slane %v2459, 4
      %v2462 = vshll.u32 %v2378, 16
      %v2464 = vrot.slane %v2462, 5
      %v2465 = vor.u32 %v2461, %v2464
      %v2466 = vrot.slane %v2465, 4
      %v2468 = vshll.u32 %v2379, 16
      %v2470 = vrot.slane %v2468, 5
      %v2471 = vsel %vm952, %v2466, %v2470
      %v2473 = vshrl.u32 %v2380, 16
      %v2475 = vrot.slane %v2473, 4
      %v2476 = vshll.u32 %v2380, 16
      %v2478 = vrot.slane %v2476, 5
      %v2479 = vor.u32 %v2475, %v2478
      %v2480 = vrot.slane %v2479, 4
      %v2482 = vshll.u32 %v2381, 16
      %v2484 = vrot.slane %v2482, 5
      %v2485 = vsel %vm952, %v2480, %v2484
      %v2487 = vshrl.u32 %v2382, 16
      %v2489 = vrot.slane %v2487, 4
      %v2490 = vshll.u32 %v2382, 16
      %v2492 = vrot.slane %v2490, 5
      %v2493 = vor.u32 %v2489, %v2492
      %v2494 = vrot.slane %v2493, 4
      %v2496 = vshll.u32 %v2383, 16
      %v2498 = vrot.slane %v2496, 5
      %v2499 = vsel %vm952, %v2494, %v2498
      %v2501 = vshrl.u32 %v2384, 16
      %v2503 = vrot.slane %v2501, 4
      %v2504 = vshll.u32 %v2384, 16
      %v2506 = vrot.slane %v2504, 5
      %v2507 = vor.u32 %v2503, %v2506
      %v2508 = vrot.slane %v2507, 4
      %v2510 = vshll.u32 %v2385, 16
      %v2512 = vrot.slane %v2510, 5
      %v2513 = vsel %vm952, %v2508, %v2512
      %v2515 = vshrl.u32 %v2386, 16
      %v2517 = vrot.slane %v2515, 4
      %v2518 = vshll.u32 %v2386, 16
      %v2520 = vrot.slane %v2518, 5
      %v2521 = vor.u32 %v2517, %v2520
      %v2522 = vrot.slane %v2521, 4
      %v2524 = vshll.u32 %v2387, 16
      %v2526 = vrot.slane %v2524, 5
      %v2527 = vsel %vm952, %v2522, %v2526
      %v2529 = vshrl.u32 %v2388, 16
      %v2531 = vrot.slane %v2529, 4
      %v2532 = vshll.u32 %v2388, 16
      %v2534 = vrot.slane %v2532, 5
      %v2535 = vor.u32 %v2531, %v2534
      %v2536 = vrot.slane %v2535, 4
      %v2538 = vshll.u32 %v2389, 16
      %v2540 = vrot.slane %v2538, 5
      %v2541 = vsel %vm952, %v2536, %v2540
      %v2543 = vshrl.u32 %v2390, 16
      %v2545 = vrot.slane %v2543, 4
      %v2546 = vshll.u32 %v2390, 16
      %v2548 = vrot.slane %v2546, 5
      %v2549 = vor.u32 %v2545, %v2548
      %v2550 = vrot.slane %v2549, 4
      %v2552 = vshll.u32 %v2391, 16
      %v2554 = vrot.slane %v2552, 5
      %v2555 = vsel %vm952, %v2550, %v2554
      %v2557 = vshrl.u32 %v2392, 16
      %v2559 = vrot.slane %v2557, 4
      %v2560 = vshll.u32 %v2392, 16
      %v2562 = vrot.slane %v2560, 5
      %v2563 = vor.u32 %v2559, %v2562
      %v2564 = vrot.slane %v2563, 4
      %v2566 = vshll.u32 %v2393, 16
      %v2568 = vrot.slane %v2566, 5
      %v2569 = vsel %vm952, %v2564, %v2568
      %v2571 = vshrl.u32 %v2394, 16
      %v2573 = vrot.slane %v2571, 4
      %v2574 = vshll.u32 %v2394, 16
      %v2576 = vrot.slane %v2574, 5
      %v2577 = vor.u32 %v2573, %v2576
      %v2578 = vrot.slane %v2577, 4
      %v2580 = vshll.u32 %v2395, 16
      %v2582 = vrot.slane %v2580, 5
      %v2583 = vsel %vm952, %v2578, %v2582
      %v2585 = vshrl.u32 %v2396, 16
      %v2587 = vrot.slane %v2585, 4
      %v2588 = vshll.u32 %v2396, 16
      %v2590 = vrot.slane %v2588, 5
      %v2591 = vor.u32 %v2587, %v2590
      %v2592 = vrot.slane %v2591, 4
      %v2594 = vshll.u32 %v2397, 16
      %v2596 = vrot.slane %v2594, 5
      %v2597 = vsel %vm952, %v2592, %v2596
      %v2599 = vshrl.u32 %v2398, 16
      %v2601 = vrot.slane %v2599, 4
      %v2602 = vshll.u32 %v2398, 16
      %v2604 = vrot.slane %v2602, 5
      %v2605 = vor.u32 %v2601, %v2604
      %v2606 = vrot.slane %v2605, 4
      %v2608 = vshll.u32 %v2399, 16
      %v2610 = vrot.slane %v2608, 5
      %v2611 = vsel %vm952, %v2606, %v2610
      %v2613 = vshrl.u32 %v2400, 16
      %v2615 = vrot.slane %v2613, 4
      %v2616 = vshll.u32 %v2400, 16
      %v2618 = vrot.slane %v2616, 5
      %v2619 = vor.u32 %v2615, %v2618
      %v2620 = vrot.slane %v2619, 4
      %v2622 = vshll.u32 %v2401, 16
      %v2624 = vrot.slane %v2622, 5
      %v2625 = vsel %vm952, %v2620, %v2624
      %2626 = vrot.lane.b32.xlu0 %v2415, 4
      %v2627 = vpop.permute.xlu0 %2626
      %2628 = vrot.lane.b32.xlu0 %v2429, 4
      %v2629 = vpop.permute.xlu0 %2628
      %2630 = vrot.lane.b32.xlu0 %v2443, 4
      %v2631 = vpop.permute.xlu0 %2630
      %2632 = vrot.lane.b32.xlu0 %v2457, 4
      %v2633 = vpop.permute.xlu0 %2632
      %2634 = vrot.lane.b32.xlu0 %v2471, 4
      %v2635 = vpop.permute.xlu0 %2634
      %2636 = vrot.lane.b32.xlu0 %v2485, 4
      %v2637 = vpop.permute.xlu0 %2636
      %2638 = vrot.lane.b32.xlu0 %v2499, 4
      %v2639 = vpop.permute.xlu0 %2638
      %2640 = vrot.lane.b32.xlu0 %v2513, 4
      %v2641 = vpop.permute.xlu0 %2640
      %2642 = vrot.lane.b32.xlu0 %v2527, 4
      %v2643 = vpop.permute.xlu0 %2642
      %2644 = vrot.lane.b32.xlu0 %v2541, 4
      %v2645 = vpop.permute.xlu0 %2644
      %2646 = vrot.lane.b32.xlu0 %v2555, 4
      %v2647 = vpop.permute.xlu0 %2646
      %2648 = vrot.lane.b32.xlu0 %v2569, 4
      %v2649 = vpop.permute.xlu0 %2648
      %2650 = vrot.lane.b32.xlu0 %v2583, 4
      %v2651 = vpop.permute.xlu0 %2650
      %2652 = vrot.lane.b32.xlu0 %v2597, 4
      %v2653 = vpop.permute.xlu0 %2652
      %2654 = vrot.lane.b32.xlu0 %v2611, 4
      %v2655 = vpop.permute.xlu0 %2654
      %2656 = vrot.lane.b32.xlu0 %v2625, 4
      %v2657 = vpop.permute.xlu0 %2656
      %2674 = vst.msk [vmem:[%s2353] sm:$0xf] %vm431, %v2627
      %2675 = vst.msk [vmem:[%s2353 + $0x4] sm:$0xf] %vm431, %v2629
      %2676 = vst.msk [vmem:[%s2353 + $0x8] sm:$0xf] %vm431, %v2631
      %2677 = vst.msk [vmem:[%s2353 + $0xc] sm:$0xf] %vm431, %v2633
      %2678 = vst.msk [vmem:[%s2353 + $0x10] sm:$0xf] %vm431, %v2635
      %2679 = vst.msk [vmem:[%s2353 + $0x14] sm:$0xf] %vm431, %v2637
      %2680 = vst.msk [vmem:[%s2353 + $0x18] sm:$0xf] %vm431, %v2639
      %2681 = vst.msk [vmem:[%s2353 + $0x1c] sm:$0xf] %vm431, %v2641
      %2682 = vst.msk [vmem:[%s2353 + $0x20] sm:$0xf] %vm431, %v2643
      %2683 = vst.msk [vmem:[%s2353 + $0x24] sm:$0xf] %vm431, %v2645
      %2684 = vst.msk [vmem:[%s2353 + $0x28] sm:$0xf] %vm431, %v2647
      %2685 = vst.msk [vmem:[%s2353 + $0x2c] sm:$0xf] %vm431, %v2649
      %2686 = vst.msk [vmem:[%s2353 + $0x30] sm:$0xf] %vm431, %v2651
      %2687 = vst.msk [vmem:[%s2353 + $0x34] sm:$0xf] %vm431, %v2653
      %2688 = vst.msk [vmem:[%s2353 + $0x38] sm:$0xf] %vm431, %v2655
      %2689 = vst.msk [vmem:[%s2353 + $0x3c] sm:$0xf] %vm431, %v2657
      %v2690 = vld [vmem:[#allocation2] sm:$0xf]
      %v2691 = vld [vmem:[#allocation2 + $0x4] sm:$0x1]
      %v2692 = vld [vmem:[#allocation2 + $0x8] sm:$0xf]
      %v2693 = vld [vmem:[#allocation2 + $0xc] sm:$0x1]
      %v2694 = vld [vmem:[#allocation2 + $0x10] sm:$0xf]
      %v2695 = vld [vmem:[#allocation2 + $0x14] sm:$0x1]
      %v2696 = vld [vmem:[#allocation2 + $0x18] sm:$0xf]
      %v2697 = vld [vmem:[#allocation2 + $0x1c] sm:$0x1]
      %v2698 = vld [vmem:[#allocation2 + $0x20] sm:$0xf]
      %v2699 = vld [vmem:[#allocation2 + $0x24] sm:$0x1]
      %v2700 = vld [vmem:[#allocation2 + $0x28] sm:$0xf]
      %v2701 = vld [vmem:[#allocation2 + $0x2c] sm:$0x1]
      %v2702 = vld [vmem:[#allocation2 + $0x30] sm:$0xf]
      %v2703 = vld [vmem:[#allocation2 + $0x34] sm:$0x1]
      %v2704 = vld [vmem:[#allocation2 + $0x38] sm:$0xf]
      %v2705 = vld [vmem:[#allocation2 + $0x3c] sm:$0x1]
      %v2706 = vld [vmem:[#allocation2 + $0x40] sm:$0xf]
      %v2707 = vld [vmem:[#allocation2 + $0x44] sm:$0x1]
      %v2708 = vld [vmem:[#allocation2 + $0x48] sm:$0xf]
      %v2709 = vld [vmem:[#allocation2 + $0x4c] sm:$0x1]
      %v2710 = vld [vmem:[#allocation2 + $0x50] sm:$0xf]
      %v2711 = vld [vmem:[#allocation2 + $0x54] sm:$0x1]
      %v2712 = vld [vmem:[#allocation2 + $0x58] sm:$0xf]
      %v2713 = vld [vmem:[#allocation2 + $0x5c] sm:$0x1]
      %v2714 = vld [vmem:[#allocation2 + $0x60] sm:$0xf]
      %v2715 = vld [vmem:[#allocation2 + $0x64] sm:$0x1]
      %v2716 = vld [vmem:[#allocation2 + $0x68] sm:$0xf]
      %v2717 = vld [vmem:[#allocation2 + $0x6c] sm:$0x1]
      %v2718 = vld [vmem:[#allocation2 + $0x70] sm:$0xf]
      %v2719 = vld [vmem:[#allocation2 + $0x74] sm:$0x1]
      %v2720 = vld [vmem:[#allocation2 + $0x78] sm:$0xf]
      %v2721 = vld [vmem:[#allocation2 + $0x7c] sm:$0x1]
      %v2723 = vshrl.u32 %v2690, 16
      %v2725 = vrot.slane %v2723, 4
      %v2726 = vshll.u32 %v2690, 16
      %v2728 = vrot.slane %v2726, 5
      %v2729 = vor.u32 %v2725, %v2728
      %v2730 = vrot.slane %v2729, 4
      %v2732 = vshll.u32 %v2691, 16
      %v2734 = vrot.slane %v2732, 5
      %v2735 = vsel %vm952, %v2730, %v2734
      %v2737 = vshrl.u32 %v2692, 16
      %v2739 = vrot.slane %v2737, 4
      %v2740 = vshll.u32 %v2692, 16
      %v2742 = vrot.slane %v2740, 5
      %v2743 = vor.u32 %v2739, %v2742
      %v2744 = vrot.slane %v2743, 4
      %v2746 = vshll.u32 %v2693, 16
      %v2748 = vrot.slane %v2746, 5
      %v2749 = vsel %vm952, %v2744, %v2748
      %v2751 = vshrl.u32 %v2694, 16
      %v2753 = vrot.slane %v2751, 4
      %v2754 = vshll.u32 %v2694, 16
      %v2756 = vrot.slane %v2754, 5
      %v2757 = vor.u32 %v2753, %v2756
      %v2758 = vrot.slane %v2757, 4
      %v2760 = vshll.u32 %v2695, 16
      %v2762 = vrot.slane %v2760, 5
      %v2763 = vsel %vm952, %v2758, %v2762
      %v2765 = vshrl.u32 %v2696, 16
      %v2767 = vrot.slane %v2765, 4
      %v2768 = vshll.u32 %v2696, 16
      %v2770 = vrot.slane %v2768, 5
      %v2771 = vor.u32 %v2767, %v2770
      %v2772 = vrot.slane %v2771, 4
      %v2774 = vshll.u32 %v2697, 16
      %v2776 = vrot.slane %v2774, 5
      %v2777 = vsel %vm952, %v2772, %v2776
      %v2779 = vshrl.u32 %v2698, 16
      %v2781 = vrot.slane %v2779, 4
      %v2782 = vshll.u32 %v2698, 16
      %v2784 = vrot.slane %v2782, 5
      %v2785 = vor.u32 %v2781, %v2784
      %v2786 = vrot.slane %v2785, 4
      %v2788 = vshll.u32 %v2699, 16
      %v2790 = vrot.slane %v2788, 5
      %v2791 = vsel %vm952, %v2786, %v2790
      %v2793 = vshrl.u32 %v2700, 16
      %v2795 = vrot.slane %v2793, 4
      %v2796 = vshll.u32 %v2700, 16
      %v2798 = vrot.slane %v2796, 5
      %v2799 = vor.u32 %v2795, %v2798
      %v2800 = vrot.slane %v2799, 4
      %v2802 = vshll.u32 %v2701, 16
      %v2804 = vrot.slane %v2802, 5
      %v2805 = vsel %vm952, %v2800, %v2804
      %v2807 = vshrl.u32 %v2702, 16
      %v2809 = vrot.slane %v2807, 4
      %v2810 = vshll.u32 %v2702, 16
      %v2812 = vrot.slane %v2810, 5
      %v2813 = vor.u32 %v2809, %v2812
      %v2814 = vrot.slane %v2813, 4
      %v2816 = vshll.u32 %v2703, 16
      %v2818 = vrot.slane %v2816, 5
      %v2819 = vsel %vm952, %v2814, %v2818
      %v2821 = vshrl.u32 %v2704, 16
      %v2823 = vrot.slane %v2821, 4
      %v2824 = vshll.u32 %v2704, 16
      %v2826 = vrot.slane %v2824, 5
      %v2827 = vor.u32 %v2823, %v2826
      %v2828 = vrot.slane %v2827, 4
      %v2830 = vshll.u32 %v2705, 16
      %v2832 = vrot.slane %v2830, 5
      %v2833 = vsel %vm952, %v2828, %v2832
      %v2835 = vshrl.u32 %v2706, 16
      %v2837 = vrot.slane %v2835, 4
      %v2838 = vshll.u32 %v2706, 16
      %v2840 = vrot.slane %v2838, 5
      %v2841 = vor.u32 %v2837, %v2840
      %v2842 = vrot.slane %v2841, 4
      %v2844 = vshll.u32 %v2707, 16
      %v2846 = vrot.slane %v2844, 5
      %v2847 = vsel %vm952, %v2842, %v2846
      %v2849 = vshrl.u32 %v2708, 16
      %v2851 = vrot.slane %v2849, 4
      %v2852 = vshll.u32 %v2708, 16
      %v2854 = vrot.slane %v2852, 5
      %v2855 = vor.u32 %v2851, %v2854
      %v2856 = vrot.slane %v2855, 4
      %v2858 = vshll.u32 %v2709, 16
      %v2860 = vrot.slane %v2858, 5
      %v2861 = vsel %vm952, %v2856, %v2860
      %v2863 = vshrl.u32 %v2710, 16
      %v2865 = vrot.slane %v2863, 4
      %v2866 = vshll.u32 %v2710, 16
      %v2868 = vrot.slane %v2866, 5
      %v2869 = vor.u32 %v2865, %v2868
      %v2870 = vrot.slane %v2869, 4
      %v2872 = vshll.u32 %v2711, 16
      %v2874 = vrot.slane %v2872, 5
      %v2875 = vsel %vm952, %v2870, %v2874
      %v2877 = vshrl.u32 %v2712, 16
      %v2879 = vrot.slane %v2877, 4
      %v2880 = vshll.u32 %v2712, 16
      %v2882 = vrot.slane %v2880, 5
      %v2883 = vor.u32 %v2879, %v2882
      %v2884 = vrot.slane %v2883, 4
      %v2886 = vshll.u32 %v2713, 16
      %v2888 = vrot.slane %v2886, 5
      %v2889 = vsel %vm952, %v2884, %v2888
      %v2891 = vshrl.u32 %v2714, 16
      %v2893 = vrot.slane %v2891, 4
      %v2894 = vshll.u32 %v2714, 16
      %v2896 = vrot.slane %v2894, 5
      %v2897 = vor.u32 %v2893, %v2896
      %v2898 = vrot.slane %v2897, 4
      %v2900 = vshll.u32 %v2715, 16
      %v2902 = vrot.slane %v2900, 5
      %v2903 = vsel %vm952, %v2898, %v2902
      %v2905 = vshrl.u32 %v2716, 16
      %v2907 = vrot.slane %v2905, 4
      %v2908 = vshll.u32 %v2716, 16
      %v2910 = vrot.slane %v2908, 5
      %v2911 = vor.u32 %v2907, %v2910
      %v2912 = vrot.slane %v2911, 4
      %v2914 = vshll.u32 %v2717, 16
      %v2916 = vrot.slane %v2914, 5
      %v2917 = vsel %vm952, %v2912, %v2916
      %v2919 = vshrl.u32 %v2718, 16
      %v2921 = vrot.slane %v2919, 4
      %v2922 = vshll.u32 %v2718, 16
      %v2924 = vrot.slane %v2922, 5
      %v2925 = vor.u32 %v2921, %v2924
      %v2926 = vrot.slane %v2925, 4
      %v2928 = vshll.u32 %v2719, 16
      %v2930 = vrot.slane %v2928, 5
      %v2931 = vsel %vm952, %v2926, %v2930
      %v2933 = vshrl.u32 %v2720, 16
      %v2935 = vrot.slane %v2933, 4
      %v2936 = vshll.u32 %v2720, 16
      %v2938 = vrot.slane %v2936, 5
      %v2939 = vor.u32 %v2935, %v2938
      %v2940 = vrot.slane %v2939, 4
      %v2942 = vshll.u32 %v2721, 16
      %v2944 = vrot.slane %v2942, 5
      %v2945 = vsel %vm952, %v2940, %v2944
      %2946 = vrot.lane.b32.xlu0 %v2735, 4
      %v2947 = vpop.permute.xlu0 %2946
      %2948 = vrot.lane.b32.xlu0 %v2749, 4
      %v2949 = vpop.permute.xlu0 %2948
      %2950 = vrot.lane.b32.xlu0 %v2763, 4
      %v2951 = vpop.permute.xlu0 %2950
      %2952 = vrot.lane.b32.xlu0 %v2777, 4
      %v2953 = vpop.permute.xlu0 %2952
      %2954 = vrot.lane.b32.xlu0 %v2791, 4
      %v2955 = vpop.permute.xlu0 %2954
      %2956 = vrot.lane.b32.xlu0 %v2805, 4
      %v2957 = vpop.permute.xlu0 %2956
      %2958 = vrot.lane.b32.xlu0 %v2819, 4
      %v2959 = vpop.permute.xlu0 %2958
      %2960 = vrot.lane.b32.xlu0 %v2833, 4
      %v2961 = vpop.permute.xlu0 %2960
      %2962 = vrot.lane.b32.xlu0 %v2847, 4
      %v2963 = vpop.permute.xlu0 %2962
      %2964 = vrot.lane.b32.xlu0 %v2861, 4
      %v2965 = vpop.permute.xlu0 %2964
      %2966 = vrot.lane.b32.xlu0 %v2875, 4
      %v2967 = vpop.permute.xlu0 %2966
      %2968 = vrot.lane.b32.xlu0 %v2889, 4
      %v2969 = vpop.permute.xlu0 %2968
      %2970 = vrot.lane.b32.xlu0 %v2903, 4
      %v2971 = vpop.permute.xlu0 %2970
      %2972 = vrot.lane.b32.xlu0 %v2917, 4
      %v2973 = vpop.permute.xlu0 %2972
      %2974 = vrot.lane.b32.xlu0 %v2931, 4
      %v2975 = vpop.permute.xlu0 %2974
      %2976 = vrot.lane.b32.xlu0 %v2945, 4
      %v2977 = vpop.permute.xlu0 %2976
      %2994 = vst.msk [vmem:[%s2353] sm:$0xf] %vm1225, %v2947
      %2995 = vst.msk [vmem:[%s2353 + $0x4] sm:$0xf] %vm1225, %v2949
      %2996 = vst.msk [vmem:[%s2353 + $0x8] sm:$0xf] %vm1225, %v2951
      %2997 = vst.msk [vmem:[%s2353 + $0xc] sm:$0xf] %vm1225, %v2953
      %2998 = vst.msk [vmem:[%s2353 + $0x10] sm:$0xf] %vm1225, %v2955
      %2999 = vst.msk [vmem:[%s2353 + $0x14] sm:$0xf] %vm1225, %v2957
      %3000 = vst.msk [vmem:[%s2353 + $0x18] sm:$0xf] %vm1225, %v2959
      %3001 = vst.msk [vmem:[%s2353 + $0x1c] sm:$0xf] %vm1225, %v2961
      %3002 = vst.msk [vmem:[%s2353 + $0x20] sm:$0xf] %vm1225, %v2963
      %3003 = vst.msk [vmem:[%s2353 + $0x24] sm:$0xf] %vm1225, %v2965
      %3004 = vst.msk [vmem:[%s2353 + $0x28] sm:$0xf] %vm1225, %v2967
      %3005 = vst.msk [vmem:[%s2353 + $0x2c] sm:$0xf] %vm1225, %v2969
      %3006 = vst.msk [vmem:[%s2353 + $0x30] sm:$0xf] %vm1225, %v2971
      %3007 = vst.msk [vmem:[%s2353 + $0x34] sm:$0xf] %vm1225, %v2973
      %3008 = vst.msk [vmem:[%s2353 + $0x38] sm:$0xf] %vm1225, %v2975
      %3009 = vst.msk [vmem:[%s2353 + $0x3c] sm:$0xf] %vm1225, %v2977
      %v3010 = vld [vmem:[%s430] sm:$0xf]
      %v3011 = vld [vmem:[%s430 + $0x8] sm:$0xf]
      %v3012 = vld [vmem:[%s430 + $0x10] sm:$0xf]
      %v3013 = vld [vmem:[%s430 + $0x18] sm:$0xf]
      %v3014 = vld [vmem:[%s430 + $0x20] sm:$0xf]
      %v3015 = vld [vmem:[%s430 + $0x28] sm:$0xf]
      %v3016 = vld [vmem:[%s430 + $0x30] sm:$0xf]
      %v3017 = vld [vmem:[%s430 + $0x38] sm:$0xf]
      %v3018 = vld [vmem:[%s430 + $0x40] sm:$0xf]
      %v3019 = vld [vmem:[%s430 + $0x48] sm:$0xf]
      %v3020 = vld [vmem:[%s430 + $0x50] sm:$0xf]
      %v3021 = vld [vmem:[%s430 + $0x58] sm:$0xf]
      %v3022 = vld [vmem:[%s430 + $0x60] sm:$0xf]
      %v3023 = vld [vmem:[%s430 + $0x68] sm:$0xf]
      %v3024 = vld [vmem:[%s430 + $0x70] sm:$0xf]
      %v3025 = vld [vmem:[%s430 + $0x78] sm:$0xf]
      %3042 = vrot.lane.b32.xlu0 %v3010, 8
      %v3043 = vpop.permute.xlu0 %3042
      %3044 = vrot.lane.b32.xlu0 %v3011, 8
      %v3045 = vpop.permute.xlu0 %3044
      %3046 = vrot.lane.b32.xlu0 %v3012, 8
      %v3047 = vpop.permute.xlu0 %3046
      %3048 = vrot.lane.b32.xlu0 %v3013, 8
      %v3049 = vpop.permute.xlu0 %3048
      %3050 = vrot.lane.b32.xlu0 %v3014, 8
      %v3051 = vpop.permute.xlu0 %3050
      %3052 = vrot.lane.b32.xlu0 %v3015, 8
      %v3053 = vpop.permute.xlu0 %3052
      %3054 = vrot.lane.b32.xlu0 %v3016, 8
      %v3055 = vpop.permute.xlu0 %3054
      %3056 = vrot.lane.b32.xlu0 %v3017, 8
      %v3057 = vpop.permute.xlu0 %3056
      %3058 = vrot.lane.b32.xlu0 %v3018, 8
      %v3059 = vpop.permute.xlu0 %3058
      %3060 = vrot.lane.b32.xlu0 %v3019, 8
      %v3061 = vpop.permute.xlu0 %3060
      %3062 = vrot.lane.b32.xlu0 %v3020, 8
      %v3063 = vpop.permute.xlu0 %3062
      %3064 = vrot.lane.b32.xlu0 %v3021, 8
      %v3065 = vpop.permute.xlu0 %3064
      %3066 = vrot.lane.b32.xlu0 %v3022, 8
      %v3067 = vpop.permute.xlu0 %3066
      %3068 = vrot.lane.b32.xlu0 %v3023, 8
      %v3069 = vpop.permute.xlu0 %3068
      %3070 = vrot.lane.b32.xlu0 %v3024, 8
      %v3071 = vpop.permute.xlu0 %3070
      %3072 = vrot.lane.b32.xlu0 %v3025, 8
      %v3073 = vpop.permute.xlu0 %3072
      %3090 = vst.msk [vmem:[%s2353] sm:$0xf] %vm1322, %v3043
      %3091 = vst.msk [vmem:[%s2353 + $0x4] sm:$0xf] %vm1322, %v3045
      %3092 = vst.msk [vmem:[%s2353 + $0x8] sm:$0xf] %vm1322, %v3047
      %3093 = vst.msk [vmem:[%s2353 + $0xc] sm:$0xf] %vm1322, %v3049
      %3094 = vst.msk [vmem:[%s2353 + $0x10] sm:$0xf] %vm1322, %v3051
      %3095 = vst.msk [vmem:[%s2353 + $0x14] sm:$0xf] %vm1322, %v3053
      %3096 = vst.msk [vmem:[%s2353 + $0x18] sm:$0xf] %vm1322, %v3055
      %3097 = vst.msk [vmem:[%s2353 + $0x1c] sm:$0xf] %vm1322, %v3057
      %3098 = vst.msk [vmem:[%s2353 + $0x20] sm:$0xf] %vm1322, %v3059
      %3099 = vst.msk [vmem:[%s2353 + $0x24] sm:$0xf] %vm1322, %v3061
      %3100 = vst.msk [vmem:[%s2353 + $0x28] sm:$0xf] %vm1322, %v3063
      %3101 = vst.msk [vmem:[%s2353 + $0x2c] sm:$0xf] %vm1322, %v3065
      %3102 = vst.msk [vmem:[%s2353 + $0x30] sm:$0xf] %vm1322, %v3067
      %3103 = vst.msk [vmem:[%s2353 + $0x34] sm:$0xf] %vm1322, %v3069
      %3104 = vst.msk [vmem:[%s2353 + $0x38] sm:$0xf] %vm1322, %v3071
      %3105 = vst.msk [vmem:[%s2353 + $0x3c] sm:$0xf] %vm1322, %v3073
      %v3106 = vld [vmem:[%s430] sm:$0xf]
      %v3107 = vld [vmem:[%s430 + $0x4] sm:$0x1]
      %v3108 = vld [vmem:[%s430 + $0x8] sm:$0xf]
      %v3109 = vld [vmem:[%s430 + $0xc] sm:$0x1]
      %v3110 = vld [vmem:[%s430 + $0x10] sm:$0xf]
      %v3111 = vld [vmem:[%s430 + $0x14] sm:$0x1]
      %v3112 = vld [vmem:[%s430 + $0x18] sm:$0xf]
      %v3113 = vld [vmem:[%s430 + $0x1c] sm:$0x1]
      %v3114 = vld [vmem:[%s430 + $0x20] sm:$0xf]
      %v3115 = vld [vmem:[%s430 + $0x24] sm:$0x1]
      %v3116 = vld [vmem:[%s430 + $0x28] sm:$0xf]
      %v3117 = vld [vmem:[%s430 + $0x2c] sm:$0x1]
      %v3118 = vld [vmem:[%s430 + $0x30] sm:$0xf]
      %v3119 = vld [vmem:[%s430 + $0x34] sm:$0x1]
      %v3120 = vld [vmem:[%s430 + $0x38] sm:$0xf]
      %v3121 = vld [vmem:[%s430 + $0x3c] sm:$0x1]
      %v3122 = vld [vmem:[%s430 + $0x40] sm:$0xf]
      %v3123 = vld [vmem:[%s430 + $0x44] sm:$0x1]
      %v3124 = vld [vmem:[%s430 + $0x48] sm:$0xf]
      %v3125 = vld [vmem:[%s430 + $0x4c] sm:$0x1]
      %v3126 = vld [vmem:[%s430 + $0x50] sm:$0xf]
      %v3127 = vld [vmem:[%s430 + $0x54] sm:$0x1]
      %v3128 = vld [vmem:[%s430 + $0x58] sm:$0xf]
      %v3129 = vld [vmem:[%s430 + $0x5c] sm:$0x1]
      %v3130 = vld [vmem:[%s430 + $0x60] sm:$0xf]
      %v3131 = vld [vmem:[%s430 + $0x64] sm:$0x1]
      %v3132 = vld [vmem:[%s430 + $0x68] sm:$0xf]
      %v3133 = vld [vmem:[%s430 + $0x6c] sm:$0x1]
      %v3134 = vld [vmem:[%s430 + $0x70] sm:$0xf]
      %v3135 = vld [vmem:[%s430 + $0x74] sm:$0x1]
      %v3136 = vld [vmem:[%s430 + $0x78] sm:$0xf]
      %v3137 = vld [vmem:[%s430 + $0x7c] sm:$0x1]
      %v3139 = vshrl.u32 %v3106, 16
      %v3141 = vrot.slane %v3139, 4
      %v3142 = vshll.u32 %v3106, 16
      %v3144 = vrot.slane %v3142, 5
      %v3145 = vor.u32 %v3141, %v3144
      %v3146 = vrot.slane %v3145, 4
      %v3148 = vshll.u32 %v3107, 16
      %v3150 = vrot.slane %v3148, 5
      %v3151 = vsel %vm952, %v3146, %v3150
      %v3153 = vshrl.u32 %v3108, 16
      %v3155 = vrot.slane %v3153, 4
      %v3156 = vshll.u32 %v3108, 16
      %v3158 = vrot.slane %v3156, 5
      %v3159 = vor.u32 %v3155, %v3158
      %v3160 = vrot.slane %v3159, 4
      %v3162 = vshll.u32 %v3109, 16
      %v3164 = vrot.slane %v3162, 5
      %v3165 = vsel %vm952, %v3160, %v3164
      %v3167 = vshrl.u32 %v3110, 16
      %v3169 = vrot.slane %v3167, 4
      %v3170 = vshll.u32 %v3110, 16
      %v3172 = vrot.slane %v3170, 5
      %v3173 = vor.u32 %v3169, %v3172
      %v3174 = vrot.slane %v3173, 4
      %v3176 = vshll.u32 %v3111, 16
      %v3178 = vrot.slane %v3176, 5
      %v3179 = vsel %vm952, %v3174, %v3178
      %v3181 = vshrl.u32 %v3112, 16
      %v3183 = vrot.slane %v3181, 4
      %v3184 = vshll.u32 %v3112, 16
      %v3186 = vrot.slane %v3184, 5
      %v3187 = vor.u32 %v3183, %v3186
      %v3188 = vrot.slane %v3187, 4
      %v3190 = vshll.u32 %v3113, 16
      %v3192 = vrot.slane %v3190, 5
      %v3193 = vsel %vm952, %v3188, %v3192
      %v3195 = vshrl.u32 %v3114, 16
      %v3197 = vrot.slane %v3195, 4
      %v3198 = vshll.u32 %v3114, 16
      %v3200 = vrot.slane %v3198, 5
      %v3201 = vor.u32 %v3197, %v3200
      %v3202 = vrot.slane %v3201, 4
      %v3204 = vshll.u32 %v3115, 16
      %v3206 = vrot.slane %v3204, 5
      %v3207 = vsel %vm952, %v3202, %v3206
      %v3209 = vshrl.u32 %v3116, 16
      %v3211 = vrot.slane %v3209, 4
      %v3212 = vshll.u32 %v3116, 16
      %v3214 = vrot.slane %v3212, 5
      %v3215 = vor.u32 %v3211, %v3214
      %v3216 = vrot.slane %v3215, 4
      %v3218 = vshll.u32 %v3117, 16
      %v3220 = vrot.slane %v3218, 5
      %v3221 = vsel %vm952, %v3216, %v3220
      %v3223 = vshrl.u32 %v3118, 16
      %v3225 = vrot.slane %v3223, 4
      %v3226 = vshll.u32 %v3118, 16
      %v3228 = vrot.slane %v3226, 5
      %v3229 = vor.u32 %v3225, %v3228
      %v3230 = vrot.slane %v3229, 4
      %v3232 = vshll.u32 %v3119, 16
      %v3234 = vrot.slane %v3232, 5
      %v3235 = vsel %vm952, %v3230, %v3234
      %v3237 = vshrl.u32 %v3120, 16
      %v3239 = vrot.slane %v3237, 4
      %v3240 = vshll.u32 %v3120, 16
      %v3242 = vrot.slane %v3240, 5
      %v3243 = vor.u32 %v3239, %v3242
      %v3244 = vrot.slane %v3243, 4
      %v3246 = vshll.u32 %v3121, 16
      %v3248 = vrot.slane %v3246, 5
      %v3249 = vsel %vm952, %v3244, %v3248
      %v3251 = vshrl.u32 %v3122, 16
      %v3253 = vrot.slane %v3251, 4
      %v3254 = vshll.u32 %v3122, 16
      %v3256 = vrot.slane %v3254, 5
      %v3257 = vor.u32 %v3253, %v3256
      %v3258 = vrot.slane %v3257, 4
      %v3260 = vshll.u32 %v3123, 16
      %v3262 = vrot.slane %v3260, 5
      %v3263 = vsel %vm952, %v3258, %v3262
      %v3265 = vshrl.u32 %v3124, 16
      %v3267 = vrot.slane %v3265, 4
      %v3268 = vshll.u32 %v3124, 16
      %v3270 = vrot.slane %v3268, 5
      %v3271 = vor.u32 %v3267, %v3270
      %v3272 = vrot.slane %v3271, 4
      %v3274 = vshll.u32 %v3125, 16
      %v3276 = vrot.slane %v3274, 5
      %v3277 = vsel %vm952, %v3272, %v3276
      %v3279 = vshrl.u32 %v3126, 16
      %v3281 = vrot.slane %v3279, 4
      %v3282 = vshll.u32 %v3126, 16
      %v3284 = vrot.slane %v3282, 5
      %v3285 = vor.u32 %v3281, %v3284
      %v3286 = vrot.slane %v3285, 4
      %v3288 = vshll.u32 %v3127, 16
      %v3290 = vrot.slane %v3288, 5
      %v3291 = vsel %vm952, %v3286, %v3290
      %v3293 = vshrl.u32 %v3128, 16
      %v3295 = vrot.slane %v3293, 4
      %v3296 = vshll.u32 %v3128, 16
      %v3298 = vrot.slane %v3296, 5
      %v3299 = vor.u32 %v3295, %v3298
      %v3300 = vrot.slane %v3299, 4
      %v3302 = vshll.u32 %v3129, 16
      %v3304 = vrot.slane %v3302, 5
      %v3305 = vsel %vm952, %v3300, %v3304
      %v3307 = vshrl.u32 %v3130, 16
      %v3309 = vrot.slane %v3307, 4
      %v3310 = vshll.u32 %v3130, 16
      %v3312 = vrot.slane %v3310, 5
      %v3313 = vor.u32 %v3309, %v3312
      %v3314 = vrot.slane %v3313, 4
      %v3316 = vshll.u32 %v3131, 16
      %v3318 = vrot.slane %v3316, 5
      %v3319 = vsel %vm952, %v3314, %v3318
      %v3321 = vshrl.u32 %v3132, 16
      %v3323 = vrot.slane %v3321, 4
      %v3324 = vshll.u32 %v3132, 16
      %v3326 = vrot.slane %v3324, 5
      %v3327 = vor.u32 %v3323, %v3326
      %v3328 = vrot.slane %v3327, 4
      %v3330 = vshll.u32 %v3133, 16
      %v3332 = vrot.slane %v3330, 5
      %v3333 = vsel %vm952, %v3328, %v3332
      %v3335 = vshrl.u32 %v3134, 16
      %v3337 = vrot.slane %v3335, 4
      %v3338 = vshll.u32 %v3134, 16
      %v3340 = vrot.slane %v3338, 5
      %v3341 = vor.u32 %v3337, %v3340
      %v3342 = vrot.slane %v3341, 4
      %v3344 = vshll.u32 %v3135, 16
      %v3346 = vrot.slane %v3344, 5
      %v3347 = vsel %vm952, %v3342, %v3346
      %v3349 = vshrl.u32 %v3136, 16
      %v3351 = vrot.slane %v3349, 4
      %v3352 = vshll.u32 %v3136, 16
      %v3354 = vrot.slane %v3352, 5
      %v3355 = vor.u32 %v3351, %v3354
      %v3356 = vrot.slane %v3355, 4
      %v3358 = vshll.u32 %v3137, 16
      %v3360 = vrot.slane %v3358, 5
      %v3361 = vsel %vm952, %v3356, %v3360
      %3362 = vrot.lane.b32.xlu0 %v3151, 16
      %v3363 = vpop.permute.xlu0 %3362
      %3364 = vrot.lane.b32.xlu0 %v3165, 16
      %v3365 = vpop.permute.xlu0 %3364
      %3366 = vrot.lane.b32.xlu0 %v3179, 16
      %v3367 = vpop.permute.xlu0 %3366
      %3368 = vrot.lane.b32.xlu0 %v3193, 16
      %v3369 = vpop.permute.xlu0 %3368
      %3370 = vrot.lane.b32.xlu0 %v3207, 16
      %v3371 = vpop.permute.xlu0 %3370
      %3372 = vrot.lane.b32.xlu0 %v3221, 16
      %v3373 = vpop.permute.xlu0 %3372
      %3374 = vrot.lane.b32.xlu0 %v3235, 16
      %v3375 = vpop.permute.xlu0 %3374
      %3376 = vrot.lane.b32.xlu0 %v3249, 16
      %v3377 = vpop.permute.xlu0 %3376
      %3378 = vrot.lane.b32.xlu0 %v3263, 16
      %v3379 = vpop.permute.xlu0 %3378
      %3380 = vrot.lane.b32.xlu0 %v3277, 16
      %v3381 = vpop.permute.xlu0 %3380
      %3382 = vrot.lane.b32.xlu0 %v3291, 16
      %v3383 = vpop.permute.xlu0 %3382
      %3384 = vrot.lane.b32.xlu0 %v3305, 16
      %v3385 = vpop.permute.xlu0 %3384
      %3386 = vrot.lane.b32.xlu0 %v3319, 16
      %v3387 = vpop.permute.xlu0 %3386
      %3388 = vrot.lane.b32.xlu0 %v3333, 16
      %v3389 = vpop.permute.xlu0 %3388
      %3390 = vrot.lane.b32.xlu0 %v3347, 16
      %v3391 = vpop.permute.xlu0 %3390
      %3392 = vrot.lane.b32.xlu0 %v3361, 16
      %v3393 = vpop.permute.xlu0 %3392
      %3410 = vst.msk [vmem:[%s2353] sm:$0xf] %vm1419, %v3363
      %3411 = vst.msk [vmem:[%s2353 + $0x4] sm:$0xf] %vm1419, %v3365
      %3412 = vst.msk [vmem:[%s2353 + $0x8] sm:$0xf] %vm1419, %v3367
      %3413 = vst.msk [vmem:[%s2353 + $0xc] sm:$0xf] %vm1419, %v3369
      %3414 = vst.msk [vmem:[%s2353 + $0x10] sm:$0xf] %vm1419, %v3371
      %3415 = vst.msk [vmem:[%s2353 + $0x14] sm:$0xf] %vm1419, %v3373
      %3416 = vst.msk [vmem:[%s2353 + $0x18] sm:$0xf] %vm1419, %v3375
      %3417 = vst.msk [vmem:[%s2353 + $0x1c] sm:$0xf] %vm1419, %v3377
      %3418 = vst.msk [vmem:[%s2353 + $0x20] sm:$0xf] %vm1419, %v3379
      %3419 = vst.msk [vmem:[%s2353 + $0x24] sm:$0xf] %vm1419, %v3381
      %3420 = vst.msk [vmem:[%s2353 + $0x28] sm:$0xf] %vm1419, %v3383
      %3421 = vst.msk [vmem:[%s2353 + $0x2c] sm:$0xf] %vm1419, %v3385
      %3422 = vst.msk [vmem:[%s2353 + $0x30] sm:$0xf] %vm1419, %v3387
      %3423 = vst.msk [vmem:[%s2353 + $0x34] sm:$0xf] %vm1419, %v3389
      %3424 = vst.msk [vmem:[%s2353 + $0x38] sm:$0xf] %vm1419, %v3391
      %3425 = vst.msk [vmem:[%s2353 + $0x3c] sm:$0xf] %vm1419, %v3393
      %v3426 = vld [vmem:[%s430] sm:$0xf]
      %v3427 = vld [vmem:[%s430 + $0x4] sm:$0x1]
      %v3428 = vld [vmem:[%s430 + $0x8] sm:$0xf]
      %v3429 = vld [vmem:[%s430 + $0xc] sm:$0x1]
      %v3430 = vld [vmem:[%s430 + $0x10] sm:$0xf]
      %v3431 = vld [vmem:[%s430 + $0x14] sm:$0x1]
      %v3432 = vld [vmem:[%s430 + $0x18] sm:$0xf]
      %v3433 = vld [vmem:[%s430 + $0x1c] sm:$0x1]
      %v3434 = vld [vmem:[%s430 + $0x20] sm:$0xf]
      %v3435 = vld [vmem:[%s430 + $0x24] sm:$0x1]
      %v3436 = vld [vmem:[%s430 + $0x28] sm:$0xf]
      %v3437 = vld [vmem:[%s430 + $0x2c] sm:$0x1]
      %v3438 = vld [vmem:[%s430 + $0x30] sm:$0xf]
      %v3439 = vld [vmem:[%s430 + $0x34] sm:$0x1]
      %v3440 = vld [vmem:[%s430 + $0x38] sm:$0xf]
      %v3441 = vld [vmem:[%s430 + $0x3c] sm:$0x1]
      %v3442 = vld [vmem:[%s430 + $0x40] sm:$0xf]
      %v3443 = vld [vmem:[%s430 + $0x44] sm:$0x1]
      %v3444 = vld [vmem:[%s430 + $0x48] sm:$0xf]
      %v3445 = vld [vmem:[%s430 + $0x4c] sm:$0x1]
      %v3446 = vld [vmem:[%s430 + $0x50] sm:$0xf]
      %v3447 = vld [vmem:[%s430 + $0x54] sm:$0x1]
      %v3448 = vld [vmem:[%s430 + $0x58] sm:$0xf]
      %v3449 = vld [vmem:[%s430 + $0x5c] sm:$0x1]
      %v3450 = vld [vmem:[%s430 + $0x60] sm:$0xf]
      %v3451 = vld [vmem:[%s430 + $0x64] sm:$0x1]
      %v3452 = vld [vmem:[%s430 + $0x68] sm:$0xf]
      %v3453 = vld [vmem:[%s430 + $0x6c] sm:$0x1]
      %v3454 = vld [vmem:[%s430 + $0x70] sm:$0xf]
      %v3455 = vld [vmem:[%s430 + $0x74] sm:$0x1]
      %v3456 = vld [vmem:[%s430 + $0x78] sm:$0xf]
      %v3457 = vld [vmem:[%s430 + $0x7c] sm:$0x1]
      %v3459 = vshrl.u32 %v3426, 16
      %v3461 = vrot.slane %v3459, 4
      %v3462 = vshll.u32 %v3426, 16
      %v3464 = vrot.slane %v3462, 5
      %v3465 = vor.u32 %v3461, %v3464
      %v3466 = vrot.slane %v3465, 4
      %v3468 = vshll.u32 %v3427, 16
      %v3470 = vrot.slane %v3468, 5
      %v3471 = vsel %vm952, %v3466, %v3470
      %v3473 = vshrl.u32 %v3428, 16
      %v3475 = vrot.slane %v3473, 4
      %v3476 = vshll.u32 %v3428, 16
      %v3478 = vrot.slane %v3476, 5
      %v3479 = vor.u32 %v3475, %v3478
      %v3480 = vrot.slane %v3479, 4
      %v3482 = vshll.u32 %v3429, 16
      %v3484 = vrot.slane %v3482, 5
      %v3485 = vsel %vm952, %v3480, %v3484
      %v3487 = vshrl.u32 %v3430, 16
      %v3489 = vrot.slane %v3487, 4
      %v3490 = vshll.u32 %v3430, 16
      %v3492 = vrot.slane %v3490, 5
      %v3493 = vor.u32 %v3489, %v3492
      %v3494 = vrot.slane %v3493, 4
      %v3496 = vshll.u32 %v3431, 16
      %v3498 = vrot.slane %v3496, 5
      %v3499 = vsel %vm952, %v3494, %v3498
      %v3501 = vshrl.u32 %v3432, 16
      %v3503 = vrot.slane %v3501, 4
      %v3504 = vshll.u32 %v3432, 16
      %v3506 = vrot.slane %v3504, 5
      %v3507 = vor.u32 %v3503, %v3506
      %v3508 = vrot.slane %v3507, 4
      %v3510 = vshll.u32 %v3433, 16
      %v3512 = vrot.slane %v3510, 5
      %v3513 = vsel %vm952, %v3508, %v3512
      %v3515 = vshrl.u32 %v3434, 16
      %v3517 = vrot.slane %v3515, 4
      %v3518 = vshll.u32 %v3434, 16
      %v3520 = vrot.slane %v3518, 5
      %v3521 = vor.u32 %v3517, %v3520
      %v3522 = vrot.slane %v3521, 4
      %v3524 = vshll.u32 %v3435, 16
      %v3526 = vrot.slane %v3524, 5
      %v3527 = vsel %vm952, %v3522, %v3526
      %v3529 = vshrl.u32 %v3436, 16
      %v3531 = vrot.slane %v3529, 4
      %v3532 = vshll.u32 %v3436, 16
      %v3534 = vrot.slane %v3532, 5
      %v3535 = vor.u32 %v3531, %v3534
      %v3536 = vrot.slane %v3535, 4
      %v3538 = vshll.u32 %v3437, 16
      %v3540 = vrot.slane %v3538, 5
      %v3541 = vsel %vm952, %v3536, %v3540
      %v3543 = vshrl.u32 %v3438, 16
      %v3545 = vrot.slane %v3543, 4
      %v3546 = vshll.u32 %v3438, 16
      %v3548 = vrot.slane %v3546, 5
      %v3549 = vor.u32 %v3545, %v3548
      %v3550 = vrot.slane %v3549, 4
      %v3552 = vshll.u32 %v3439, 16
      %v3554 = vrot.slane %v3552, 5
      %v3555 = vsel %vm952, %v3550, %v3554
      %v3557 = vshrl.u32 %v3440, 16
      %v3559 = vrot.slane %v3557, 4
      %v3560 = vshll.u32 %v3440, 16
      %v3562 = vrot.slane %v3560, 5
      %v3563 = vor.u32 %v3559, %v3562
      %v3564 = vrot.slane %v3563, 4
      %v3566 = vshll.u32 %v3441, 16
      %v3568 = vrot.slane %v3566, 5
      %v3569 = vsel %vm952, %v3564, %v3568
      %v3571 = vshrl.u32 %v3442, 16
      %v3573 = vrot.slane %v3571, 4
      %v3574 = vshll.u32 %v3442, 16
      %v3576 = vrot.slane %v3574, 5
      %v3577 = vor.u32 %v3573, %v3576
      %v3578 = vrot.slane %v3577, 4
      %v3580 = vshll.u32 %v3443, 16
      %v3582 = vrot.slane %v3580, 5
      %v3583 = vsel %vm952, %v3578, %v3582
      %v3585 = vshrl.u32 %v3444, 16
      %v3587 = vrot.slane %v3585, 4
      %v3588 = vshll.u32 %v3444, 16
      %v3590 = vrot.slane %v3588, 5
      %v3591 = vor.u32 %v3587, %v3590
      %v3592 = vrot.slane %v3591, 4
      %v3594 = vshll.u32 %v3445, 16
      %v3596 = vrot.slane %v3594, 5
      %v3597 = vsel %vm952, %v3592, %v3596
      %v3599 = vshrl.u32 %v3446, 16
      %v3601 = vrot.slane %v3599, 4
      %v3602 = vshll.u32 %v3446, 16
      %v3604 = vrot.slane %v3602, 5
      %v3605 = vor.u32 %v3601, %v3604
      %v3606 = vrot.slane %v3605, 4
      %v3608 = vshll.u32 %v3447, 16
      %v3610 = vrot.slane %v3608, 5
      %v3611 = vsel %vm952, %v3606, %v3610
      %v3613 = vshrl.u32 %v3448, 16
      %v3615 = vrot.slane %v3613, 4
      %v3616 = vshll.u32 %v3448, 16
      %v3618 = vrot.slane %v3616, 5
      %v3619 = vor.u32 %v3615, %v3618
      %v3620 = vrot.slane %v3619, 4
      %v3622 = vshll.u32 %v3449, 16
      %v3624 = vrot.slane %v3622, 5
      %v3625 = vsel %vm952, %v3620, %v3624
      %v3627 = vshrl.u32 %v3450, 16
      %v3629 = vrot.slane %v3627, 4
      %v3630 = vshll.u32 %v3450, 16
      %v3632 = vrot.slane %v3630, 5
      %v3633 = vor.u32 %v3629, %v3632
      %v3634 = vrot.slane %v3633, 4
      %v3636 = vshll.u32 %v3451, 16
      %v3638 = vrot.slane %v3636, 5
      %v3639 = vsel %vm952, %v3634, %v3638
      %v3641 = vshrl.u32 %v3452, 16
      %v3643 = vrot.slane %v3641, 4
      %v3644 = vshll.u32 %v3452, 16
      %v3646 = vrot.slane %v3644, 5
      %v3647 = vor.u32 %v3643, %v3646
      %v3648 = vrot.slane %v3647, 4
      %v3650 = vshll.u32 %v3453, 16
      %v3652 = vrot.slane %v3650, 5
      %v3653 = vsel %vm952, %v3648, %v3652
      %v3655 = vshrl.u32 %v3454, 16
      %v3657 = vrot.slane %v3655, 4
      %v3658 = vshll.u32 %v3454, 16
      %v3660 = vrot.slane %v3658, 5
      %v3661 = vor.u32 %v3657, %v3660
      %v3662 = vrot.slane %v3661, 4
      %v3664 = vshll.u32 %v3455, 16
      %v3666 = vrot.slane %v3664, 5
      %v3667 = vsel %vm952, %v3662, %v3666
      %v3669 = vshrl.u32 %v3456, 16
      %v3671 = vrot.slane %v3669, 4
      %v3672 = vshll.u32 %v3456, 16
      %v3674 = vrot.slane %v3672, 5
      %v3675 = vor.u32 %v3671, %v3674
      %v3676 = vrot.slane %v3675, 4
      %v3678 = vshll.u32 %v3457, 16
      %v3680 = vrot.slane %v3678, 5
      %v3681 = vsel %vm952, %v3676, %v3680
      %3682 = vrot.lane.b32.xlu0 %v3471, 16
      %v3683 = vpop.permute.xlu0 %3682
      %3684 = vrot.lane.b32.xlu0 %v3485, 16
      %v3685 = vpop.permute.xlu0 %3684
      %3686 = vrot.lane.b32.xlu0 %v3499, 16
      %v3687 = vpop.permute.xlu0 %3686
      %3688 = vrot.lane.b32.xlu0 %v3513, 16
      %v3689 = vpop.permute.xlu0 %3688
      %3690 = vrot.lane.b32.xlu0 %v3527, 16
      %v3691 = vpop.permute.xlu0 %3690
      %3692 = vrot.lane.b32.xlu0 %v3541, 16
      %v3693 = vpop.permute.xlu0 %3692
      %3694 = vrot.lane.b32.xlu0 %v3555, 16
      %v3695 = vpop.permute.xlu0 %3694
      %3696 = vrot.lane.b32.xlu0 %v3569, 16
      %v3697 = vpop.permute.xlu0 %3696
      %3698 = vrot.lane.b32.xlu0 %v3583, 16
      %v3699 = vpop.permute.xlu0 %3698
      %3700 = vrot.lane.b32.xlu0 %v3597, 16
      %v3701 = vpop.permute.xlu0 %3700
      %3702 = vrot.lane.b32.xlu0 %v3611, 16
      %v3703 = vpop.permute.xlu0 %3702
      %3704 = vrot.lane.b32.xlu0 %v3625, 16
      %v3705 = vpop.permute.xlu0 %3704
      %3706 = vrot.lane.b32.xlu0 %v3639, 16
      %v3707 = vpop.permute.xlu0 %3706
      %3708 = vrot.lane.b32.xlu0 %v3653, 16
      %v3709 = vpop.permute.xlu0 %3708
      %3710 = vrot.lane.b32.xlu0 %v3667, 16
      %v3711 = vpop.permute.xlu0 %3710
      %3712 = vrot.lane.b32.xlu0 %v3681, 16
      %v3713 = vpop.permute.xlu0 %3712
      %3730 = vst.msk [vmem:[%s2353] sm:$0xf] %vm1740, %v3683
      %3731 = vst.msk [vmem:[%s2353 + $0x4] sm:$0xf] %vm1740, %v3685
      %3732 = vst.msk [vmem:[%s2353 + $0x8] sm:$0xf] %vm1740, %v3687
      %3733 = vst.msk [vmem:[%s2353 + $0xc] sm:$0xf] %vm1740, %v3689
      %3734 = vst.msk [vmem:[%s2353 + $0x10] sm:$0xf] %vm1740, %v3691
      %3735 = vst.msk [vmem:[%s2353 + $0x14] sm:$0xf] %vm1740, %v3693
      %3736 = vst.msk [vmem:[%s2353 + $0x18] sm:$0xf] %vm1740, %v3695
      %3737 = vst.msk [vmem:[%s2353 + $0x1c] sm:$0xf] %vm1740, %v3697
      %3738 = vst.msk [vmem:[%s2353 + $0x20] sm:$0xf] %vm1740, %v3699
      %3739 = vst.msk [vmem:[%s2353 + $0x24] sm:$0xf] %vm1740, %v3701
      %3740 = vst.msk [vmem:[%s2353 + $0x28] sm:$0xf] %vm1740, %v3703
      %3741 = vst.msk [vmem:[%s2353 + $0x2c] sm:$0xf] %vm1740, %v3705
      %3742 = vst.msk [vmem:[%s2353 + $0x30] sm:$0xf] %vm1740, %v3707
      %3743 = vst.msk [vmem:[%s2353 + $0x34] sm:$0xf] %vm1740, %v3709
      %3744 = vst.msk [vmem:[%s2353 + $0x38] sm:$0xf] %vm1740, %v3711
      %3745 = vst.msk [vmem:[%s2353 + $0x3c] sm:$0xf] %vm1740, %v3713
      %v3746 = vld [vmem:[%s1757] sm:$0xf]
      %v3747 = vld [vmem:[%s1757 + $0x8] sm:$0xf]
      %v3748 = vld [vmem:[%s1757 + $0x10] sm:$0xf]
      %v3749 = vld [vmem:[%s1757 + $0x18] sm:$0xf]
      %v3750 = vld [vmem:[%s1757 + $0x20] sm:$0xf]
      %v3751 = vld [vmem:[%s1757 + $0x28] sm:$0xf]
      %v3752 = vld [vmem:[%s1757 + $0x30] sm:$0xf]
      %v3753 = vld [vmem:[%s1757 + $0x38] sm:$0xf]
      %v3754 = vld [vmem:[%s1757 + $0x40] sm:$0xf]
      %v3755 = vld [vmem:[%s1757 + $0x48] sm:$0xf]
      %v3756 = vld [vmem:[%s1757 + $0x50] sm:$0xf]
      %v3757 = vld [vmem:[%s1757 + $0x58] sm:$0xf]
      %v3758 = vld [vmem:[%s1757 + $0x60] sm:$0xf]
      %v3759 = vld [vmem:[%s1757 + $0x68] sm:$0xf]
      %v3760 = vld [vmem:[%s1757 + $0x70] sm:$0xf]
      %v3761 = vld [vmem:[%s1757 + $0x78] sm:$0xf]
      %3778 = vrot.lane.b32.xlu0 %v3746, 20
      %v3779 = vpop.permute.xlu0 %3778
      %3780 = vrot.lane.b32.xlu0 %v3747, 20
      %v3781 = vpop.permute.xlu0 %3780
      %3782 = vrot.lane.b32.xlu0 %v3748, 20
      %v3783 = vpop.permute.xlu0 %3782
      %3784 = vrot.lane.b32.xlu0 %v3749, 20
      %v3785 = vpop.permute.xlu0 %3784
      %3786 = vrot.lane.b32.xlu0 %v3750, 20
      %v3787 = vpop.permute.xlu0 %3786
      %3788 = vrot.lane.b32.xlu0 %v3751, 20
      %v3789 = vpop.permute.xlu0 %3788
      %3790 = vrot.lane.b32.xlu0 %v3752, 20
      %v3791 = vpop.permute.xlu0 %3790
      %3792 = vrot.lane.b32.xlu0 %v3753, 20
      %v3793 = vpop.permute.xlu0 %3792
      %3794 = vrot.lane.b32.xlu0 %v3754, 20
      %v3795 = vpop.permute.xlu0 %3794
      %3796 = vrot.lane.b32.xlu0 %v3755, 20
      %v3797 = vpop.permute.xlu0 %3796
      %3798 = vrot.lane.b32.xlu0 %v3756, 20
      %v3799 = vpop.permute.xlu0 %3798
      %3800 = vrot.lane.b32.xlu0 %v3757, 20
      %v3801 = vpop.permute.xlu0 %3800
      %3802 = vrot.lane.b32.xlu0 %v3758, 20
      %v3803 = vpop.permute.xlu0 %3802
      %3804 = vrot.lane.b32.xlu0 %v3759, 20
      %v3805 = vpop.permute.xlu0 %3804
      %3806 = vrot.lane.b32.xlu0 %v3760, 20
      %v3807 = vpop.permute.xlu0 %3806
      %3808 = vrot.lane.b32.xlu0 %v3761, 20
      %v3809 = vpop.permute.xlu0 %3808
      %3826 = vst.msk [vmem:[%s2353] sm:$0xf] %vm1838, %v3779
      %3827 = vst.msk [vmem:[%s2353 + $0x4] sm:$0xf] %vm1838, %v3781
      %3828 = vst.msk [vmem:[%s2353 + $0x8] sm:$0xf] %vm1838, %v3783
      %3829 = vst.msk [vmem:[%s2353 + $0xc] sm:$0xf] %vm1838, %v3785
      %3830 = vst.msk [vmem:[%s2353 + $0x10] sm:$0xf] %vm1838, %v3787
      %3831 = vst.msk [vmem:[%s2353 + $0x14] sm:$0xf] %vm1838, %v3789
      %3832 = vst.msk [vmem:[%s2353 + $0x18] sm:$0xf] %vm1838, %v3791
      %3833 = vst.msk [vmem:[%s2353 + $0x1c] sm:$0xf] %vm1838, %v3793
      %3834 = vst.msk [vmem:[%s2353 + $0x20] sm:$0xf] %vm1838, %v3795
      %3835 = vst.msk [vmem:[%s2353 + $0x24] sm:$0xf] %vm1838, %v3797
      %3836 = vst.msk [vmem:[%s2353 + $0x28] sm:$0xf] %vm1838, %v3799
      %3837 = vst.msk [vmem:[%s2353 + $0x2c] sm:$0xf] %vm1838, %v3801
      %3838 = vst.msk [vmem:[%s2353 + $0x30] sm:$0xf] %vm1838, %v3803
      %3839 = vst.msk [vmem:[%s2353 + $0x34] sm:$0xf] %vm1838, %v3805
      %3840 = vst.msk [vmem:[%s2353 + $0x38] sm:$0xf] %vm1838, %v3807
      %3841 = vst.msk [vmem:[%s2353 + $0x3c] sm:$0xf] %vm1838, %v3809
      %v3842 = vld [vmem:[%s1757] sm:$0xf]
      %v3843 = vld [vmem:[%s1757 + $0x4] sm:$0x1]
      %v3844 = vld [vmem:[%s1757 + $0x8] sm:$0xf]
      %v3845 = vld [vmem:[%s1757 + $0xc] sm:$0x1]
      %v3846 = vld [vmem:[%s1757 + $0x10] sm:$0xf]
      %v3847 = vld [vmem:[%s1757 + $0x14] sm:$0x1]
      %v3848 = vld [vmem:[%s1757 + $0x18] sm:$0xf]
      %v3849 = vld [vmem:[%s1757 + $0x1c] sm:$0x1]
      %v3850 = vld [vmem:[%s1757 + $0x20] sm:$0xf]
      %v3851 = vld [vmem:[%s1757 + $0x24] sm:$0x1]
      %v3852 = vld [vmem:[%s1757 + $0x28] sm:$0xf]
      %v3853 = vld [vmem:[%s1757 + $0x2c] sm:$0x1]
      %v3854 = vld [vmem:[%s1757 + $0x30] sm:$0xf]
      %v3855 = vld [vmem:[%s1757 + $0x34] sm:$0x1]
      %v3856 = vld [vmem:[%s1757 + $0x38] sm:$0xf]
      %v3857 = vld [vmem:[%s1757 + $0x3c] sm:$0x1]
      %v3858 = vld [vmem:[%s1757 + $0x40] sm:$0xf]
      %v3859 = vld [vmem:[%s1757 + $0x44] sm:$0x1]
      %v3860 = vld [vmem:[%s1757 + $0x48] sm:$0xf]
      %v3861 = vld [vmem:[%s1757 + $0x4c] sm:$0x1]
      %v3862 = vld [vmem:[%s1757 + $0x50] sm:$0xf]
      %v3863 = vld [vmem:[%s1757 + $0x54] sm:$0x1]
      %v3864 = vld [vmem:[%s1757 + $0x58] sm:$0xf]
      %v3865 = vld [vmem:[%s1757 + $0x5c] sm:$0x1]
      %v3866 = vld [vmem:[%s1757 + $0x60] sm:$0xf]
      %v3867 = vld [vmem:[%s1757 + $0x64] sm:$0x1]
      %v3868 = vld [vmem:[%s1757 + $0x68] sm:$0xf]
      %v3869 = vld [vmem:[%s1757 + $0x6c] sm:$0x1]
      %v3870 = vld [vmem:[%s1757 + $0x70] sm:$0xf]
      %v3871 = vld [vmem:[%s1757 + $0x74] sm:$0x1]
      %v3872 = vld [vmem:[%s1757 + $0x78] sm:$0xf]
      %v3873 = vld [vmem:[%s1757 + $0x7c] sm:$0x1]
      %v3875 = vshrl.u32 %v3842, 16
      %v3877 = vrot.slane %v3875, 4
      %v3878 = vshll.u32 %v3842, 16
      %v3880 = vrot.slane %v3878, 5
      %v3881 = vor.u32 %v3877, %v3880
      %v3882 = vrot.slane %v3881, 4
      %v3884 = vshll.u32 %v3843, 16
      %v3886 = vrot.slane %v3884, 5
      %v3887 = vsel %vm952, %v3882, %v3886
      %v3889 = vshrl.u32 %v3844, 16
      %v3891 = vrot.slane %v3889, 4
      %v3892 = vshll.u32 %v3844, 16
      %v3894 = vrot.slane %v3892, 5
      %v3895 = vor.u32 %v3891, %v3894
      %v3896 = vrot.slane %v3895, 4
      %v3898 = vshll.u32 %v3845, 16
      %v3900 = vrot.slane %v3898, 5
      %v3901 = vsel %vm952, %v3896, %v3900
      %v3903 = vshrl.u32 %v3846, 16
      %v3905 = vrot.slane %v3903, 4
      %v3906 = vshll.u32 %v3846, 16
      %v3908 = vrot.slane %v3906, 5
      %v3909 = vor.u32 %v3905, %v3908
      %v3910 = vrot.slane %v3909, 4
      %v3912 = vshll.u32 %v3847, 16
      %v3914 = vrot.slane %v3912, 5
      %v3915 = vsel %vm952, %v3910, %v3914
      %v3917 = vshrl.u32 %v3848, 16
      %v3919 = vrot.slane %v3917, 4
      %v3920 = vshll.u32 %v3848, 16
      %v3922 = vrot.slane %v3920, 5
      %v3923 = vor.u32 %v3919, %v3922
      %v3924 = vrot.slane %v3923, 4
      %v3926 = vshll.u32 %v3849, 16
      %v3928 = vrot.slane %v3926, 5
      %v3929 = vsel %vm952, %v3924, %v3928
      %v3931 = vshrl.u32 %v3850, 16
      %v3933 = vrot.slane %v3931, 4
      %v3934 = vshll.u32 %v3850, 16
      %v3936 = vrot.slane %v3934, 5
      %v3937 = vor.u32 %v3933, %v3936
      %v3938 = vrot.slane %v3937, 4
      %v3940 = vshll.u32 %v3851, 16
      %v3942 = vrot.slane %v3940, 5
      %v3943 = vsel %vm952, %v3938, %v3942
      %v3945 = vshrl.u32 %v3852, 16
      %v3947 = vrot.slane %v3945, 4
      %v3948 = vshll.u32 %v3852, 16
      %v3950 = vrot.slane %v3948, 5
      %v3951 = vor.u32 %v3947, %v3950
      %v3952 = vrot.slane %v3951, 4
      %v3954 = vshll.u32 %v3853, 16
      %v3956 = vrot.slane %v3954, 5
      %v3957 = vsel %vm952, %v3952, %v3956
      %v3959 = vshrl.u32 %v3854, 16
      %v3961 = vrot.slane %v3959, 4
      %v3962 = vshll.u32 %v3854, 16
      %v3964 = vrot.slane %v3962, 5
      %v3965 = vor.u32 %v3961, %v3964
      %v3966 = vrot.slane %v3965, 4
      %v3968 = vshll.u32 %v3855, 16
      %v3970 = vrot.slane %v3968, 5
      %v3971 = vsel %vm952, %v3966, %v3970
      %v3973 = vshrl.u32 %v3856, 16
      %v3975 = vrot.slane %v3973, 4
      %v3976 = vshll.u32 %v3856, 16
      %v3978 = vrot.slane %v3976, 5
      %v3979 = vor.u32 %v3975, %v3978
      %v3980 = vrot.slane %v3979, 4
      %v3982 = vshll.u32 %v3857, 16
      %v3984 = vrot.slane %v3982, 5
      %v3985 = vsel %vm952, %v3980, %v3984
      %v3987 = vshrl.u32 %v3858, 16
      %v3989 = vrot.slane %v3987, 4
      %v3990 = vshll.u32 %v3858, 16
      %v3992 = vrot.slane %v3990, 5
      %v3993 = vor.u32 %v3989, %v3992
      %v3994 = vrot.slane %v3993, 4
      %v3996 = vshll.u32 %v3859, 16
      %v3998 = vrot.slane %v3996, 5
      %v3999 = vsel %vm952, %v3994, %v3998
      %v4001 = vshrl.u32 %v3860, 16
      %v4003 = vrot.slane %v4001, 4
      %v4004 = vshll.u32 %v3860, 16
      %v4006 = vrot.slane %v4004, 5
      %v4007 = vor.u32 %v4003, %v4006
      %v4008 = vrot.slane %v4007, 4
      %v4010 = vshll.u32 %v3861, 16
      %v4012 = vrot.slane %v4010, 5
      %v4013 = vsel %vm952, %v4008, %v4012
      %v4015 = vshrl.u32 %v3862, 16
      %v4017 = vrot.slane %v4015, 4
      %v4018 = vshll.u32 %v3862, 16
      %v4020 = vrot.slane %v4018, 5
      %v4021 = vor.u32 %v4017, %v4020
      %v4022 = vrot.slane %v4021, 4
      %v4024 = vshll.u32 %v3863, 16
      %v4026 = vrot.slane %v4024, 5
      %v4027 = vsel %vm952, %v4022, %v4026
      %v4029 = vshrl.u32 %v3864, 16
      %v4031 = vrot.slane %v4029, 4
      %v4032 = vshll.u32 %v3864, 16
      %v4034 = vrot.slane %v4032, 5
      %v4035 = vor.u32 %v4031, %v4034
      %v4036 = vrot.slane %v4035, 4
      %v4038 = vshll.u32 %v3865, 16
      %v4040 = vrot.slane %v4038, 5
      %v4041 = vsel %vm952, %v4036, %v4040
      %v4043 = vshrl.u32 %v3866, 16
      %v4045 = vrot.slane %v4043, 4
      %v4046 = vshll.u32 %v3866, 16
      %v4048 = vrot.slane %v4046, 5
      %v4049 = vor.u32 %v4045, %v4048
      %v4050 = vrot.slane %v4049, 4
      %v4052 = vshll.u32 %v3867, 16
      %v4054 = vrot.slane %v4052, 5
      %v4055 = vsel %vm952, %v4050, %v4054
      %v4057 = vshrl.u32 %v3868, 16
      %v4059 = vrot.slane %v4057, 4
      %v4060 = vshll.u32 %v3868, 16
      %v4062 = vrot.slane %v4060, 5
      %v4063 = vor.u32 %v4059, %v4062
      %v4064 = vrot.slane %v4063, 4
      %v4066 = vshll.u32 %v3869, 16
      %v4068 = vrot.slane %v4066, 5
      %v4069 = vsel %vm952, %v4064, %v4068
      %v4071 = vshrl.u32 %v3870, 16
      %v4073 = vrot.slane %v4071, 4
      %v4074 = vshll.u32 %v3870, 16
      %v4076 = vrot.slane %v4074, 5
      %v4077 = vor.u32 %v4073, %v4076
      %v4078 = vrot.slane %v4077, 4
      %v4080 = vshll.u32 %v3871, 16
      %v4082 = vrot.slane %v4080, 5
      %v4083 = vsel %vm952, %v4078, %v4082
      %v4085 = vshrl.u32 %v3872, 16
      %v4087 = vrot.slane %v4085, 4
      %v4088 = vshll.u32 %v3872, 16
      %v4090 = vrot.slane %v4088, 5
      %v4091 = vor.u32 %v4087, %v4090
      %v4092 = vrot.slane %v4091, 4
      %v4094 = vshll.u32 %v3873, 16
      %v4096 = vrot.slane %v4094, 5
      %v4097 = vsel %vm952, %v4092, %v4096
      %4098 = vrot.lane.b32.xlu0 %v3887, 28
      %v4099 = vpop.permute.xlu0 %4098
      %4100 = vrot.lane.b32.xlu0 %v3901, 28
      %v4101 = vpop.permute.xlu0 %4100
      %4102 = vrot.lane.b32.xlu0 %v3915, 28
      %v4103 = vpop.permute.xlu0 %4102
      %4104 = vrot.lane.b32.xlu0 %v3929, 28
      %v4105 = vpop.permute.xlu0 %4104
      %4106 = vrot.lane.b32.xlu0 %v3943, 28
      %v4107 = vpop.permute.xlu0 %4106
      %4108 = vrot.lane.b32.xlu0 %v3957, 28
      %v4109 = vpop.permute.xlu0 %4108
      %4110 = vrot.lane.b32.xlu0 %v3971, 28
      %v4111 = vpop.permute.xlu0 %4110
      %4112 = vrot.lane.b32.xlu0 %v3985, 28
      %v4113 = vpop.permute.xlu0 %4112
      %4114 = vrot.lane.b32.xlu0 %v3999, 28
      %v4115 = vpop.permute.xlu0 %4114
      %4116 = vrot.lane.b32.xlu0 %v4013, 28
      %v4117 = vpop.permute.xlu0 %4116
      %4118 = vrot.lane.b32.xlu0 %v4027, 28
      %v4119 = vpop.permute.xlu0 %4118
      %4120 = vrot.lane.b32.xlu0 %v4041, 28
      %v4121 = vpop.permute.xlu0 %4120
      %4122 = vrot.lane.b32.xlu0 %v4055, 28
      %v4123 = vpop.permute.xlu0 %4122
      %4124 = vrot.lane.b32.xlu0 %v4069, 28
      %v4125 = vpop.permute.xlu0 %4124
      %4126 = vrot.lane.b32.xlu0 %v4083, 28
      %v4127 = vpop.permute.xlu0 %4126
      %4128 = vrot.lane.b32.xlu0 %v4097, 28
      %v4129 = vpop.permute.xlu0 %4128
      %4146 = vst.msk [vmem:[%s2353] sm:$0xf] %vm1935, %v4099
      %4147 = vst.msk [vmem:[%s2353 + $0x4] sm:$0xf] %vm1935, %v4101
      %4148 = vst.msk [vmem:[%s2353 + $0x8] sm:$0xf] %vm1935, %v4103
      %4149 = vst.msk [vmem:[%s2353 + $0xc] sm:$0xf] %vm1935, %v4105
      %4150 = vst.msk [vmem:[%s2353 + $0x10] sm:$0xf] %vm1935, %v4107
      %4151 = vst.msk [vmem:[%s2353 + $0x14] sm:$0xf] %vm1935, %v4109
      %4152 = vst.msk [vmem:[%s2353 + $0x18] sm:$0xf] %vm1935, %v4111
      %4153 = vst.msk [vmem:[%s2353 + $0x1c] sm:$0xf] %vm1935, %v4113
      %4154 = vst.msk [vmem:[%s2353 + $0x20] sm:$0xf] %vm1935, %v4115
      %4155 = vst.msk [vmem:[%s2353 + $0x24] sm:$0xf] %vm1935, %v4117
      %4156 = vst.msk [vmem:[%s2353 + $0x28] sm:$0xf] %vm1935, %v4119
      %4157 = vst.msk [vmem:[%s2353 + $0x2c] sm:$0xf] %vm1935, %v4121
      %4158 = vst.msk [vmem:[%s2353 + $0x30] sm:$0xf] %vm1935, %v4123
      %4159 = vst.msk [vmem:[%s2353 + $0x34] sm:$0xf] %vm1935, %v4125
      %4160 = vst.msk [vmem:[%s2353 + $0x38] sm:$0xf] %vm1935, %v4127
      %4161 = vst.msk [vmem:[%s2353 + $0x3c] sm:$0xf] %vm1935, %v4129
      %v4162 = vld [vmem:[%s1757] sm:$0xf]
      %v4163 = vld [vmem:[%s1757 + $0x4] sm:$0x1]
      %v4164 = vld [vmem:[%s1757 + $0x8] sm:$0xf]
      %v4165 = vld [vmem:[%s1757 + $0xc] sm:$0x1]
      %v4166 = vld [vmem:[%s1757 + $0x10] sm:$0xf]
      %v4167 = vld [vmem:[%s1757 + $0x14] sm:$0x1]
      %v4168 = vld [vmem:[%s1757 + $0x18] sm:$0xf]
      %v4169 = vld [vmem:[%s1757 + $0x1c] sm:$0x1]
      %v4170 = vld [vmem:[%s1757 + $0x20] sm:$0xf]
      %v4171 = vld [vmem:[%s1757 + $0x24] sm:$0x1]
      %v4172 = vld [vmem:[%s1757 + $0x28] sm:$0xf]
      %v4173 = vld [vmem:[%s1757 + $0x2c] sm:$0x1]
      %v4174 = vld [vmem:[%s1757 + $0x30] sm:$0xf]
      %v4175 = vld [vmem:[%s1757 + $0x34] sm:$0x1]
      %v4176 = vld [vmem:[%s1757 + $0x38] sm:$0xf]
      %v4177 = vld [vmem:[%s1757 + $0x3c] sm:$0x1]
      %v4178 = vld [vmem:[%s1757 + $0x40] sm:$0xf]
      %v4179 = vld [vmem:[%s1757 + $0x44] sm:$0x1]
      %v4180 = vld [vmem:[%s1757 + $0x48] sm:$0xf]
      %v4181 = vld [vmem:[%s1757 + $0x4c] sm:$0x1]
      %v4182 = vld [vmem:[%s1757 + $0x50] sm:$0xf]
      %v4183 = vld [vmem:[%s1757 + $0x54] sm:$0x1]
      %v4184 = vld [vmem:[%s1757 + $0x58] sm:$0xf]
      %v4185 = vld [vmem:[%s1757 + $0x5c] sm:$0x1]
      %v4186 = vld [vmem:[%s1757 + $0x60] sm:$0xf]
      %v4187 = vld [vmem:[%s1757 + $0x64] sm:$0x1]
      %v4188 = vld [vmem:[%s1757 + $0x68] sm:$0xf]
      %v4189 = vld [vmem:[%s1757 + $0x6c] sm:$0x1]
      %v4190 = vld [vmem:[%s1757 + $0x70] sm:$0xf]
      %v4191 = vld [vmem:[%s1757 + $0x74] sm:$0x1]
      %v4192 = vld [vmem:[%s1757 + $0x78] sm:$0xf]
      %v4193 = vld [vmem:[%s1757 + $0x7c] sm:$0x1]
      %v4195 = vshrl.u32 %v4162, 16
      %v4197 = vrot.slane %v4195, 4
      %v4198 = vshll.u32 %v4162, 16
      %v4200 = vrot.slane %v4198, 5
      %v4201 = vor.u32 %v4197, %v4200
      %v4202 = vrot.slane %v4201, 4
      %v4204 = vshll.u32 %v4163, 16
      %v4206 = vrot.slane %v4204, 5
      %v4207 = vsel %vm952, %v4202, %v4206
      %v4209 = vshrl.u32 %v4164, 16
      %v4211 = vrot.slane %v4209, 4
      %v4212 = vshll.u32 %v4164, 16
      %v4214 = vrot.slane %v4212, 5
      %v4215 = vor.u32 %v4211, %v4214
      %v4216 = vrot.slane %v4215, 4
      %v4218 = vshll.u32 %v4165, 16
      %v4220 = vrot.slane %v4218, 5
      %v4221 = vsel %vm952, %v4216, %v4220
      %v4223 = vshrl.u32 %v4166, 16
      %v4225 = vrot.slane %v4223, 4
      %v4226 = vshll.u32 %v4166, 16
      %v4228 = vrot.slane %v4226, 5
      %v4229 = vor.u32 %v4225, %v4228
      %v4230 = vrot.slane %v4229, 4
      %v4232 = vshll.u32 %v4167, 16
      %v4234 = vrot.slane %v4232, 5
      %v4235 = vsel %vm952, %v4230, %v4234
      %v4237 = vshrl.u32 %v4168, 16
      %v4239 = vrot.slane %v4237, 4
      %v4240 = vshll.u32 %v4168, 16
      %v4242 = vrot.slane %v4240, 5
      %v4243 = vor.u32 %v4239, %v4242
      %v4244 = vrot.slane %v4243, 4
      %v4246 = vshll.u32 %v4169, 16
      %v4248 = vrot.slane %v4246, 5
      %v4249 = vsel %vm952, %v4244, %v4248
      %v4251 = vshrl.u32 %v4170, 16
      %v4253 = vrot.slane %v4251, 4
      %v4254 = vshll.u32 %v4170, 16
      %v4256 = vrot.slane %v4254, 5
      %v4257 = vor.u32 %v4253, %v4256
      %v4258 = vrot.slane %v4257, 4
      %v4260 = vshll.u32 %v4171, 16
      %v4262 = vrot.slane %v4260, 5
      %v4263 = vsel %vm952, %v4258, %v4262
      %v4265 = vshrl.u32 %v4172, 16
      %v4267 = vrot.slane %v4265, 4
      %v4268 = vshll.u32 %v4172, 16
      %v4270 = vrot.slane %v4268, 5
      %v4271 = vor.u32 %v4267, %v4270
      %v4272 = vrot.slane %v4271, 4
      %v4274 = vshll.u32 %v4173, 16
      %v4276 = vrot.slane %v4274, 5
      %v4277 = vsel %vm952, %v4272, %v4276
      %v4279 = vshrl.u32 %v4174, 16
      %v4281 = vrot.slane %v4279, 4
      %v4282 = vshll.u32 %v4174, 16
      %v4284 = vrot.slane %v4282, 5
      %v4285 = vor.u32 %v4281, %v4284
      %v4286 = vrot.slane %v4285, 4
      %v4288 = vshll.u32 %v4175, 16
      %v4290 = vrot.slane %v4288, 5
      %v4291 = vsel %vm952, %v4286, %v4290
      %v4293 = vshrl.u32 %v4176, 16
      %v4295 = vrot.slane %v4293, 4
      %v4296 = vshll.u32 %v4176, 16
      %v4298 = vrot.slane %v4296, 5
      %v4299 = vor.u32 %v4295, %v4298
      %v4300 = vrot.slane %v4299, 4
      %v4302 = vshll.u32 %v4177, 16
      %v4304 = vrot.slane %v4302, 5
      %v4305 = vsel %vm952, %v4300, %v4304
      %v4307 = vshrl.u32 %v4178, 16
      %v4309 = vrot.slane %v4307, 4
      %v4310 = vshll.u32 %v4178, 16
      %v4312 = vrot.slane %v4310, 5
      %v4313 = vor.u32 %v4309, %v4312
      %v4314 = vrot.slane %v4313, 4
      %v4316 = vshll.u32 %v4179, 16
      %v4318 = vrot.slane %v4316, 5
      %v4319 = vsel %vm952, %v4314, %v4318
      %v4321 = vshrl.u32 %v4180, 16
      %v4323 = vrot.slane %v4321, 4
      %v4324 = vshll.u32 %v4180, 16
      %v4326 = vrot.slane %v4324, 5
      %v4327 = vor.u32 %v4323, %v4326
      %v4328 = vrot.slane %v4327, 4
      %v4330 = vshll.u32 %v4181, 16
      %v4332 = vrot.slane %v4330, 5
      %v4333 = vsel %vm952, %v4328, %v4332
      %v4335 = vshrl.u32 %v4182, 16
      %v4337 = vrot.slane %v4335, 4
      %v4338 = vshll.u32 %v4182, 16
      %v4340 = vrot.slane %v4338, 5
      %v4341 = vor.u32 %v4337, %v4340
      %v4342 = vrot.slane %v4341, 4
      %v4344 = vshll.u32 %v4183, 16
      %v4346 = vrot.slane %v4344, 5
      %v4347 = vsel %vm952, %v4342, %v4346
      %v4349 = vshrl.u32 %v4184, 16
      %v4351 = vrot.slane %v4349, 4
      %v4352 = vshll.u32 %v4184, 16
      %v4354 = vrot.slane %v4352, 5
      %v4355 = vor.u32 %v4351, %v4354
      %v4356 = vrot.slane %v4355, 4
      %v4358 = vshll.u32 %v4185, 16
      %v4360 = vrot.slane %v4358, 5
      %v4361 = vsel %vm952, %v4356, %v4360
      %v4363 = vshrl.u32 %v4186, 16
      %v4365 = vrot.slane %v4363, 4
      %v4366 = vshll.u32 %v4186, 16
      %v4368 = vrot.slane %v4366, 5
      %v4369 = vor.u32 %v4365, %v4368
      %v4370 = vrot.slane %v4369, 4
      %v4372 = vshll.u32 %v4187, 16
      %v4374 = vrot.slane %v4372, 5
      %v4375 = vsel %vm952, %v4370, %v4374
      %v4377 = vshrl.u32 %v4188, 16
      %v4379 = vrot.slane %v4377, 4
      %v4380 = vshll.u32 %v4188, 16
      %v4382 = vrot.slane %v4380, 5
      %v4383 = vor.u32 %v4379, %v4382
      %v4384 = vrot.slane %v4383, 4
      %v4386 = vshll.u32 %v4189, 16
      %v4388 = vrot.slane %v4386, 5
      %v4389 = vsel %vm952, %v4384, %v4388
      %v4391 = vshrl.u32 %v4190, 16
      %v4393 = vrot.slane %v4391, 4
      %v4394 = vshll.u32 %v4190, 16
      %v4396 = vrot.slane %v4394, 5
      %v4397 = vor.u32 %v4393, %v4396
      %v4398 = vrot.slane %v4397, 4
      %v4400 = vshll.u32 %v4191, 16
      %v4402 = vrot.slane %v4400, 5
      %v4403 = vsel %vm952, %v4398, %v4402
      %v4405 = vshrl.u32 %v4192, 16
      %v4407 = vrot.slane %v4405, 4
      %v4408 = vshll.u32 %v4192, 16
      %v4410 = vrot.slane %v4408, 5
      %v4411 = vor.u32 %v4407, %v4410
      %v4412 = vrot.slane %v4411, 4
      %v4414 = vshll.u32 %v4193, 16
      %v4416 = vrot.slane %v4414, 5
      %v4417 = vsel %vm952, %v4412, %v4416
      %4418 = vrot.lane.b32.xlu0 %v4207, 28
      %v4419 = vpop.permute.xlu0 %4418
      %4420 = vrot.lane.b32.xlu0 %v4221, 28
      %v4421 = vpop.permute.xlu0 %4420
      %4422 = vrot.lane.b32.xlu0 %v4235, 28
      %v4423 = vpop.permute.xlu0 %4422
      %4424 = vrot.lane.b32.xlu0 %v4249, 28
      %v4425 = vpop.permute.xlu0 %4424
      %4426 = vrot.lane.b32.xlu0 %v4263, 28
      %v4427 = vpop.permute.xlu0 %4426
      %4428 = vrot.lane.b32.xlu0 %v4277, 28
      %v4429 = vpop.permute.xlu0 %4428
      %4430 = vrot.lane.b32.xlu0 %v4291, 28
      %v4431 = vpop.permute.xlu0 %4430
      %4432 = vrot.lane.b32.xlu0 %v4305, 28
      %v4433 = vpop.permute.xlu0 %4432
      %4434 = vrot.lane.b32.xlu0 %v4319, 28
      %v4435 = vpop.permute.xlu0 %4434
      %4436 = vrot.lane.b32.xlu0 %v4333, 28
      %v4437 = vpop.permute.xlu0 %4436
      %4438 = vrot.lane.b32.xlu0 %v4347, 28
      %v4439 = vpop.permute.xlu0 %4438
      %4440 = vrot.lane.b32.xlu0 %v4361, 28
      %v4441 = vpop.permute.xlu0 %4440
      %4442 = vrot.lane.b32.xlu0 %v4375, 28
      %v4443 = vpop.permute.xlu0 %4442
      %4444 = vrot.lane.b32.xlu0 %v4389, 28
      %v4445 = vpop.permute.xlu0 %4444
      %4446 = vrot.lane.b32.xlu0 %v4403, 28
      %v4447 = vpop.permute.xlu0 %4446
      %4448 = vrot.lane.b32.xlu0 %v4417, 28
      %v4449 = vpop.permute.xlu0 %4448
      %4466 = vst.msk [vmem:[%s2353] sm:$0xf] %vm2256, %v4419
      %4467 = vst.msk [vmem:[%s2353 + $0x4] sm:$0xf] %vm2256, %v4421
      %4468 = vst.msk [vmem:[%s2353 + $0x8] sm:$0xf] %vm2256, %v4423
      %4469 = vst.msk [vmem:[%s2353 + $0xc] sm:$0xf] %vm2256, %v4425
      %4470 = vst.msk [vmem:[%s2353 + $0x10] sm:$0xf] %vm2256, %v4427
      %4471 = vst.msk [vmem:[%s2353 + $0x14] sm:$0xf] %vm2256, %v4429
      %4472 = vst.msk [vmem:[%s2353 + $0x18] sm:$0xf] %vm2256, %v4431
      %4473 = vst.msk [vmem:[%s2353 + $0x1c] sm:$0xf] %vm2256, %v4433
      %4474 = vst.msk [vmem:[%s2353 + $0x20] sm:$0xf] %vm2256, %v4435
      %4475 = vst.msk [vmem:[%s2353 + $0x24] sm:$0xf] %vm2256, %v4437
      %4476 = vst.msk [vmem:[%s2353 + $0x28] sm:$0xf] %vm2256, %v4439
      %4477 = vst.msk [vmem:[%s2353 + $0x2c] sm:$0xf] %vm2256, %v4441
      %4478 = vst.msk [vmem:[%s2353 + $0x30] sm:$0xf] %vm2256, %v4443
      %4479 = vst.msk [vmem:[%s2353 + $0x34] sm:$0xf] %vm2256, %v4445
      %4480 = vst.msk [vmem:[%s2353 + $0x38] sm:$0xf] %vm2256, %v4447
      %4481 = vst.msk [vmem:[%s2353 + $0x3c] sm:$0xf] %vm2256, %v4449
      %v4482 = vld [vmem:[#allocation3] sm:$0xf]
      %v4483 = vld [vmem:[#allocation3 + $0x4] sm:$0xf]
      %v4484 = vld [vmem:[#allocation3 + $0x8] sm:$0xf]
      %v4485 = vld [vmem:[#allocation3 + $0xc] sm:$0xf]
      %v4486 = vld [vmem:[#allocation3 + $0x10] sm:$0xf]
      %v4487 = vld [vmem:[#allocation3 + $0x14] sm:$0xf]
      %v4488 = vld [vmem:[#allocation3 + $0x18] sm:$0xf]
      %v4489 = vld [vmem:[#allocation3 + $0x1c] sm:$0xf]
      %v4490 = vld [vmem:[#allocation3 + $0x20] sm:$0xf]
      %v4491 = vld [vmem:[#allocation3 + $0x24] sm:$0xf]
      %v4492 = vld [vmem:[#allocation3 + $0x28] sm:$0xf]
      %v4493 = vld [vmem:[#allocation3 + $0x2c] sm:$0xf]
      %v4494 = vld [vmem:[#allocation3 + $0x30] sm:$0xf]
      %v4495 = vld [vmem:[#allocation3 + $0x34] sm:$0xf]
      %v4496 = vld [vmem:[#allocation3 + $0x38] sm:$0xf]
      %v4497 = vld [vmem:[#allocation3 + $0x3c] sm:$0xf]
      %v4498 = vld [vmem:[#allocation3 + $0x40] sm:$0xf]
      %v4499 = vld [vmem:[#allocation3 + $0x44] sm:$0xf]
      %v4500 = vld [vmem:[#allocation3 + $0x48] sm:$0xf]
      %v4501 = vld [vmem:[#allocation3 + $0x4c] sm:$0xf]
      %v4502 = vld [vmem:[#allocation3 + $0x50] sm:$0xf]
      %v4503 = vld [vmem:[#allocation3 + $0x54] sm:$0xf]
      %v4504 = vld [vmem:[#allocation3 + $0x58] sm:$0xf]
      %v4505 = vld [vmem:[#allocation3 + $0x5c] sm:$0xf]
      %v4506 = vld [vmem:[#allocation3 + $0x60] sm:$0xf]
      %v4507 = vld [vmem:[#allocation3 + $0x64] sm:$0xf]
      %v4508 = vld [vmem:[#allocation3 + $0x68] sm:$0xf]
      %v4509 = vld [vmem:[#allocation3 + $0x6c] sm:$0xf]
      %v4510 = vld [vmem:[#allocation3 + $0x70] sm:$0xf]
      %v4511 = vld [vmem:[#allocation3 + $0x74] sm:$0xf]
      %v4512 = vld [vmem:[#allocation3 + $0x78] sm:$0xf]
      %v4513 = vld [vmem:[#allocation3 + $0x7c] sm:$0xf]
      %v4514 = vld [vmem:[%s1] sm:$0xf]
      %v4515 = vld [vmem:[%s1 + $0x4] sm:$0xf]
      %v4516 = vld [vmem:[%s1 + $0x8] sm:$0xf]
      %v4517 = vld [vmem:[%s1 + $0xc] sm:$0xf]
      %v4518 = vld [vmem:[%s1 + $0x10] sm:$0x3]
      %v4519 = vld [vmem:[%s2] sm:$0x1]
      %v4521 = vlaneseq
      %v4522 = vshrl.u32 %v4521, 7
      %v4523 = vsub.s32 0, %v4522
      %v4524 = vrot.slane %v4519, %v4523
      %v4558 = vunpack.c.l.b16 %v4482
      %v4559 = vunpack.c.l.b16 %v4483
      %v4560 = vunpack.c.l.b16 %v4484
      %v4561 = vunpack.c.l.b16 %v4485
      %v4562 = vunpack.c.l.b16 %v4486
      %v4563 = vunpack.c.l.b16 %v4487
      %v4564 = vunpack.c.l.b16 %v4488
      %v4565 = vunpack.c.l.b16 %v4489
      %v4566 = vunpack.c.l.b16 %v4490
      %v4567 = vunpack.c.l.b16 %v4491
      %v4568 = vunpack.c.l.b16 %v4492
      %v4569 = vunpack.c.l.b16 %v4493
      %v4570 = vunpack.c.l.b16 %v4494
      %v4571 = vunpack.c.l.b16 %v4495
      %v4572 = vunpack.c.l.b16 %v4496
      %v4573 = vunpack.c.l.b16 %v4497
      %v4574 = vunpack.c.l.b16 %v4498
      %v4575 = vunpack.c.l.b16 %v4499
      %v4576 = vunpack.c.l.b16 %v4500
      %v4577 = vunpack.c.l.b16 %v4501
      %v4578 = vunpack.c.l.b16 %v4502
      %v4579 = vunpack.c.l.b16 %v4503
      %v4580 = vunpack.c.l.b16 %v4504
      %v4581 = vunpack.c.l.b16 %v4505
      %v4582 = vunpack.c.l.b16 %v4506
      %v4583 = vunpack.c.l.b16 %v4507
      %v4584 = vunpack.c.l.b16 %v4508
      %v4585 = vunpack.c.l.b16 %v4509
      %v4586 = vunpack.c.l.b16 %v4510
      %v4587 = vunpack.c.l.b16 %v4511
      %v4588 = vunpack.c.l.b16 %v4512
      %v4589 = vunpack.c.l.b16 %v4513
      %v4590 = vpack.c.b16 %v4559, %v4558
      %v4591 = vpack.c.b16 %v4561, %v4560
      %v4592 = vpack.c.b16 %v4563, %v4562
      %v4593 = vpack.c.b16 %v4565, %v4564
      %v4594 = vpack.c.b16 %v4567, %v4566
      %v4595 = vpack.c.b16 %v4569, %v4568
      %v4596 = vpack.c.b16 %v4571, %v4570
      %v4597 = vpack.c.b16 %v4573, %v4572
      %v4598 = vpack.c.b16 %v4575, %v4574
      %v4599 = vpack.c.b16 %v4577, %v4576
      %v4600 = vpack.c.b16 %v4579, %v4578
      %v4601 = vpack.c.b16 %v4581, %v4580
      %v4602 = vpack.c.b16 %v4583, %v4582
      %v4603 = vpack.c.b16 %v4585, %v4584
      %v4604 = vpack.c.b16 %v4587, %v4586
      %v4605 = vpack.c.b16 %v4589, %v4588
      %v4611 = vunpack.c.l.b16 %v4514
      %v4612 = vunpack.c.l.b16 %v4515
      %v4613 = vunpack.c.l.b16 %v4516
      %v4614 = vunpack.c.l.b16 %v4517
      %v4615 = vunpack.c.l.b16 %v4518
      %v4616 = vpack.c.b16 %v4612, %v4611
      %v4617 = vpack.c.b16 %v4614, %v4613
      %v4618 = vpack.c.b16 %v4615, %v4615
      %vm4621 = vcmask 293888
      %v4623 = vsel %vm4621, %v4590, 0
      %v4626 = vsel %vm4621, %v4591, 0
      %v4629 = vsel %vm4621, %v4592, 0
      %v4632 = vsel %vm4621, %v4593, 0
      %v4635 = vsel %vm4621, %v4594, 0
      %v4638 = vsel %vm4621, %v4595, 0
      %v4641 = vsel %vm4621, %v4596, 0
      %v4644 = vsel %vm4621, %v4597, 0
      %v4647 = vsel %vm4621, %v4598, 0
      %v4650 = vsel %vm4621, %v4599, 0
      %v4653 = vsel %vm4621, %v4600, 0
      %v4656 = vsel %vm4621, %v4601, 0
      %v4659 = vsel %vm4621, %v4602, 0
      %v4662 = vsel %vm4621, %v4603, 0
      %v4665 = vsel %vm4621, %v4604, 0
      %v4668 = vsel %vm4621, %v4605, 0
      %vm4670 = vcmask 1041408
      %v4672 = vsel %vm4670, %v4618, 0
      %4674 = vmatprep.subr.bf16.mxu0 0
      %4675 = vmatpush1.bf16.msra.mxu0 %v4616
      %4676 = vmatprep.subr.bf16.mxu0 0
      %4677 = vmatpush1.bf16.msra.mxu0 %v4617
      %4678 = vmatprep.subr.bf16.mxu0 0
      %4679 = vmatpush1.bf16.msra.mxu0 %v4672
      %4680 = vmatprep.subr.bf16.mxu0 0
      %4681 = vmatpush1.bf16.msra.mxu0 0
      %4682 = vmatprep.subr.bf16.mxu0 0
      %4683 = vmatpush1.bf16.msra.mxu0 0
      %4684 = vmatprep.subr.bf16.mxu0 0
      %4685 = vmatpush1.bf16.msra.mxu0 0
      %4686 = vmatprep.subr.bf16.mxu0 0
      %4687 = vmatpush1.bf16.msra.mxu0 0
      %4688 = vmatprep.subr.bf16.mxu0 0
      %4689 = vmatpush1.bf16.msra.mxu0 0
      %4690 = vmatprep.subr.bf16.mxu0 0
      %4691 = vmatpush1.bf16.msra.mxu0 0
      %4692 = vmatprep.subr.bf16.mxu0 0
      %4693 = vmatpush1.bf16.msra.mxu0 0
      %4694 = vmatprep.subr.bf16.mxu0 0
      %4695 = vmatpush1.bf16.msra.mxu0 0
      %4696 = vmatprep.subr.bf16.mxu0 0
      %4697 = vmatpush1.bf16.msra.mxu0 0
      %4698 = vmatprep.subr.bf16.mxu0 0
      %4699 = vmatpush1.bf16.msra.mxu0 0
      %4700 = vmatprep.subr.bf16.mxu0 0
      %4701 = vmatpush1.bf16.msra.mxu0 0
      %4702 = vmatprep.subr.bf16.mxu0 0
      %4703 = vmatpush1.bf16.msra.mxu0 0
      %4704 = vmatprep.subr.bf16.mxu0 0
      %4705 = vmatpush1.bf16.msra.mxu0 0
      %4706 = vmatprep.mubr.bf16.mxu0 0
      %4707 = vmatmul.mubr.bf16.gmra.mrb[0].mxu0 %v4623
      %v4708 = vpop.f32.mrb[0].mxu0
      %v4709 = vadd.f32 %v4524, %v4708
      %v4710 = vpop.f32.mrb[0].mxu0
      %v4711 = vpop.f32.mrb[0].mxu0
      %v4712 = vadd.f32 %v4524, %v4711
      %v4713 = vpop.f32.mrb[0].mxu0
      %4714 = vmatprep.mubr.bf16.mxu0 0
      %4715 = vmatmul.mubr.bf16.gmra.mrb[0].mxu0 %v4626
      %v4716 = vpop.f32.mrb[0].mxu0
      %v4717 = vadd.f32 %v4524, %v4716
      %v4718 = vpop.f32.mrb[0].mxu0
      %v4719 = vpop.f32.mrb[0].mxu0
      %v4720 = vadd.f32 %v4524, %v4719
      %v4721 = vpop.f32.mrb[0].mxu0
      %4722 = vmatprep.mubr.bf16.mxu0 0
      %4723 = vmatmul.mubr.bf16.gmra.mrb[0].mxu0 %v4629
      %v4724 = vpop.f32.mrb[0].mxu0
      %v4725 = vadd.f32 %v4524, %v4724
      %v4726 = vpop.f32.mrb[0].mxu0
      %v4727 = vpop.f32.mrb[0].mxu0
      %v4728 = vadd.f32 %v4524, %v4727
      %v4729 = vpop.f32.mrb[0].mxu0
      %4730 = vmatprep.mubr.bf16.mxu0 0
      %4731 = vmatmul.mubr.bf16.gmra.mrb[0].mxu0 %v4632
      %v4732 = vpop.f32.mrb[0].mxu0
      %v4733 = vadd.f32 %v4524, %v4732
      %v4734 = vpop.f32.mrb[0].mxu0
      %v4735 = vpop.f32.mrb[0].mxu0
      %v4736 = vadd.f32 %v4524, %v4735
      %v4737 = vpop.f32.mrb[0].mxu0
      %4738 = vmatprep.mubr.bf16.mxu0 0
      %4739 = vmatmul.mubr.bf16.gmra.mrb[0].mxu0 %v4635
      %v4740 = vpop.f32.mrb[0].mxu0
      %v4741 = vadd.f32 %v4524, %v4740
      %v4742 = vpop.f32.mrb[0].mxu0
      %v4743 = vpop.f32.mrb[0].mxu0
      %v4744 = vadd.f32 %v4524, %v4743
      %v4745 = vpop.f32.mrb[0].mxu0
      %4746 = vmatprep.mubr.bf16.mxu0 0
      %4747 = vmatmul.mubr.bf16.gmra.mrb[0].mxu0 %v4638
      %v4748 = vpop.f32.mrb[0].mxu0
      %v4749 = vadd.f32 %v4524, %v4748
      %v4750 = vpop.f32.mrb[0].mxu0
      %v4751 = vpop.f32.mrb[0].mxu0
      %v4752 = vadd.f32 %v4524, %v4751
      %v4753 = vpop.f32.mrb[0].mxu0
      %4754 = vmatprep.mubr.bf16.mxu0 0
      %4755 = vmatmul.mubr.bf16.gmra.mrb[0].mxu0 %v4641
      %v4756 = vpop.f32.mrb[0].mxu0
      %v4757 = vadd.f32 %v4524, %v4756
      %v4758 = vpop.f32.mrb[0].mxu0
      %v4759 = vpop.f32.mrb[0].mxu0
      %v4760 = vadd.f32 %v4524, %v4759
      %v4761 = vpop.f32.mrb[0].mxu0
      %4762 = vmatprep.mubr.bf16.mxu0 0
      %4763 = vmatmul.mubr.bf16.gmra.mrb[0].mxu0 %v4644
      %v4764 = vpop.f32.mrb[0].mxu0
      %v4765 = vadd.f32 %v4524, %v4764
      %v4766 = vpop.f32.mrb[0].mxu0
      %v4767 = vpop.f32.mrb[0].mxu0
      %v4768 = vadd.f32 %v4524, %v4767
      %v4769 = vpop.f32.mrb[0].mxu0
      %4770 = vmatprep.mubr.bf16.mxu0 0
      %4771 = vmatmul.mubr.bf16.gmra.mrb[0].mxu0 %v4647
      %v4772 = vpop.f32.mrb[0].mxu0
      %v4773 = vadd.f32 %v4524, %v4772
      %v4774 = vpop.f32.mrb[0].mxu0
      %v4775 = vpop.f32.mrb[0].mxu0
      %v4776 = vadd.f32 %v4524, %v4775
      %v4777 = vpop.f32.mrb[0].mxu0
      %4778 = vmatprep.mubr.bf16.mxu0 0
      %4779 = vmatmul.mubr.bf16.gmra.mrb[0].mxu0 %v4650
      %v4780 = vpop.f32.mrb[0].mxu0
      %v4781 = vadd.f32 %v4524, %v4780
      %v4782 = vpop.f32.mrb[0].mxu0
      %v4783 = vpop.f32.mrb[0].mxu0
      %v4784 = vadd.f32 %v4524, %v4783
      %v4785 = vpop.f32.mrb[0].mxu0
      %4786 = vmatprep.mubr.bf16.mxu0 0
      %4787 = vmatmul.mubr.bf16.gmra.mrb[0].mxu0 %v4653
      %v4788 = vpop.f32.mrb[0].mxu0
      %v4789 = vadd.f32 %v4524, %v4788
      %v4790 = vpop.f32.mrb[0].mxu0
      %v4791 = vpop.f32.mrb[0].mxu0
      %v4792 = vadd.f32 %v4524, %v4791
      %v4793 = vpop.f32.mrb[0].mxu0
      %4794 = vmatprep.mubr.bf16.mxu0 0
      %4795 = vmatmul.mubr.bf16.gmra.mrb[0].mxu0 %v4656
      %v4796 = vpop.f32.mrb[0].mxu0
      %v4797 = vadd.f32 %v4524, %v4796
      %v4798 = vpop.f32.mrb[0].mxu0
      %v4799 = vpop.f32.mrb[0].mxu0
      %v4800 = vadd.f32 %v4524, %v4799
      %v4801 = vpop.f32.mrb[0].mxu0
      %4802 = vmatprep.mubr.bf16.mxu0 0
      %4803 = vmatmul.mubr.bf16.gmra.mrb[0].mxu0 %v4659
      %v4804 = vpop.f32.mrb[0].mxu0
      %v4805 = vadd.f32 %v4524, %v4804
      %v4806 = vpop.f32.mrb[0].mxu0
      %v4807 = vpop.f32.mrb[0].mxu0
      %v4808 = vadd.f32 %v4524, %v4807
      %v4809 = vpop.f32.mrb[0].mxu0
      %4810 = vmatprep.mubr.bf16.mxu0 0
      %4811 = vmatmul.mubr.bf16.gmra.mrb[0].mxu0 %v4662
      %v4812 = vpop.f32.mrb[0].mxu0
      %v4813 = vadd.f32 %v4524, %v4812
      %v4814 = vpop.f32.mrb[0].mxu0
      %v4815 = vpop.f32.mrb[0].mxu0
      %v4816 = vadd.f32 %v4524, %v4815
      %v4817 = vpop.f32.mrb[0].mxu0
      %4818 = vmatprep.mubr.bf16.mxu0 0
      %4819 = vmatmul.mubr.bf16.gmra.mrb[0].mxu0 %v4665
      %v4820 = vpop.f32.mrb[0].mxu0
      %v4821 = vadd.f32 %v4524, %v4820
      %v4822 = vpop.f32.mrb[0].mxu0
      %v4823 = vpop.f32.mrb[0].mxu0
      %v4824 = vadd.f32 %v4524, %v4823
      %v4825 = vpop.f32.mrb[0].mxu0
      %4826 = vmatprep.mubr.bf16.mxu0 0
      %4827 = vmatmul.mubr.bf16.gmra.mrb[0].mxu0 %v4668
      %v4828 = vpop.f32.mrb[0].mxu0
      %v4829 = vadd.f32 %v4524, %v4828
      %v4830 = vpop.f32.mrb[0].mxu0
      %v4831 = vpop.f32.mrb[0].mxu0
      %v4832 = vadd.f32 %v4524, %v4831
      %v4833 = vpop.f32.mrb[0].mxu0
      %4834 = vdwg.mxu0
      %vm4835 = vcmp.ge.f32.partialorder %v4709, 0.0
      %vm4836 = vcmp.ge.f32.partialorder %v4712, 0.0
      %vm4837 = vcmp.ge.f32.partialorder %v4717, 0.0
      %vm4838 = vcmp.ge.f32.partialorder %v4720, 0.0
      %vm4839 = vcmp.ge.f32.partialorder %v4725, 0.0
      %vm4840 = vcmp.ge.f32.partialorder %v4728, 0.0
      %vm4841 = vcmp.ge.f32.partialorder %v4733, 0.0
      %vm4842 = vcmp.ge.f32.partialorder %v4736, 0.0
      %vm4843 = vcmp.ge.f32.partialorder %v4741, 0.0
      %vm4844 = vcmp.ge.f32.partialorder %v4744, 0.0
      %vm4845 = vcmp.ge.f32.partialorder %v4749, 0.0
      %vm4846 = vcmp.ge.f32.partialorder %v4752, 0.0
      %vm4847 = vcmp.ge.f32.partialorder %v4757, 0.0
      %vm4848 = vcmp.ge.f32.partialorder %v4760, 0.0
      %vm4849 = vcmp.ge.f32.partialorder %v4765, 0.0
      %vm4850 = vcmp.ge.f32.partialorder %v4768, 0.0
      %vm4851 = vcmp.ge.f32.partialorder %v4773, 0.0
      %vm4852 = vcmp.ge.f32.partialorder %v4776, 0.0
      %vm4853 = vcmp.ge.f32.partialorder %v4781, 0.0
      %vm4854 = vcmp.ge.f32.partialorder %v4784, 0.0
      %vm4855 = vcmp.ge.f32.partialorder %v4789, 0.0
      %vm4856 = vcmp.ge.f32.partialorder %v4792, 0.0
      %vm4857 = vcmp.ge.f32.partialorder %v4797, 0.0
      %vm4858 = vcmp.ge.f32.partialorder %v4800, 0.0
      %vm4859 = vcmp.ge.f32.partialorder %v4805, 0.0
      %vm4860 = vcmp.ge.f32.partialorder %v4808, 0.0
      %vm4861 = vcmp.ge.f32.partialorder %v4813, 0.0
      %vm4862 = vcmp.ge.f32.partialorder %v4816, 0.0
      %vm4863 = vcmp.ge.f32.partialorder %v4821, 0.0
      %vm4864 = vcmp.ge.f32.partialorder %v4824, 0.0
      %vm4865 = vcmp.ge.f32.partialorder %v4829, 0.0
      %vm4866 = vcmp.ge.f32.partialorder %v4832, 0.0
      %v4867 = vsel %vm4835, 1.4142135, 0.28284273
      %v4868 = vsel %vm4836, 1.4142135, 0.28284273
      %v4869 = vsel %vm4837, 1.4142135, 0.28284273
      %v4870 = vsel %vm4838, 1.4142135, 0.28284273
      %v4871 = vsel %vm4839, 1.4142135, 0.28284273
      %v4872 = vsel %vm4840, 1.4142135, 0.28284273
      %v4873 = vsel %vm4841, 1.4142135, 0.28284273
      %v4874 = vsel %vm4842, 1.4142135, 0.28284273
      %v4875 = vsel %vm4843, 1.4142135, 0.28284273
      %v4876 = vsel %vm4844, 1.4142135, 0.28284273
      %v4877 = vsel %vm4845, 1.4142135, 0.28284273
      %v4878 = vsel %vm4846, 1.4142135, 0.28284273
      %v4879 = vsel %vm4847, 1.4142135, 0.28284273
      %v4880 = vsel %vm4848, 1.4142135, 0.28284273
      %v4881 = vsel %vm4849, 1.4142135, 0.28284273
      %v4882 = vsel %vm4850, 1.4142135, 0.28284273
      %v4883 = vsel %vm4851, 1.4142135, 0.28284273
      %v4884 = vsel %vm4852, 1.4142135, 0.28284273
      %v4885 = vsel %vm4853, 1.4142135, 0.28284273
      %v4886 = vsel %vm4854, 1.4142135, 0.28284273
      %v4887 = vsel %vm4855, 1.4142135, 0.28284273
      %v4888 = vsel %vm4856, 1.4142135, 0.28284273
      %v4889 = vsel %vm4857, 1.4142135, 0.28284273
      %v4890 = vsel %vm4858, 1.4142135, 0.28284273
      %v4891 = vsel %vm4859, 1.4142135, 0.28284273
      %v4892 = vsel %vm4860, 1.4142135, 0.28284273
      %v4893 = vsel %vm4861, 1.4142135, 0.28284273
      %v4894 = vsel %vm4862, 1.4142135, 0.28284273
      %v4895 = vsel %vm4863, 1.4142135, 0.28284273
      %v4896 = vsel %vm4864, 1.4142135, 0.28284273
      %v4897 = vsel %vm4865, 1.4142135, 0.28284273
      %v4898 = vsel %vm4866, 1.4142135, 0.28284273
      %v4899 = vmul.f32 %v4709, %v4867
      %v4900 = vmul.f32 %v4712, %v4868
      %v4901 = vmul.f32 %v4717, %v4869
      %v4902 = vmul.f32 %v4720, %v4870
      %v4903 = vmul.f32 %v4725, %v4871
      %v4904 = vmul.f32 %v4728, %v4872
      %v4905 = vmul.f32 %v4733, %v4873
      %v4906 = vmul.f32 %v4736, %v4874
      %v4907 = vmul.f32 %v4741, %v4875
      %v4908 = vmul.f32 %v4744, %v4876
      %v4909 = vmul.f32 %v4749, %v4877
      %v4910 = vmul.f32 %v4752, %v4878
      %v4911 = vmul.f32 %v4757, %v4879
      %v4912 = vmul.f32 %v4760, %v4880
      %v4913 = vmul.f32 %v4765, %v4881
      %v4914 = vmul.f32 %v4768, %v4882
      %v4915 = vmul.f32 %v4773, %v4883
      %v4916 = vmul.f32 %v4776, %v4884
      %v4917 = vmul.f32 %v4781, %v4885
      %v4918 = vmul.f32 %v4784, %v4886
      %v4919 = vmul.f32 %v4789, %v4887
      %v4920 = vmul.f32 %v4792, %v4888
      %v4921 = vmul.f32 %v4797, %v4889
      %v4922 = vmul.f32 %v4800, %v4890
      %v4923 = vmul.f32 %v4805, %v4891
      %v4924 = vmul.f32 %v4808, %v4892
      %v4925 = vmul.f32 %v4813, %v4893
      %v4926 = vmul.f32 %v4816, %v4894
      %v4927 = vmul.f32 %v4821, %v4895
      %v4928 = vmul.f32 %v4824, %v4896
      %v4929 = vmul.f32 %v4829, %v4897
      %v4930 = vmul.f32 %v4832, %v4898
      %vm4931 = vcmask 64512
      %4932 = vst.msk [vmem:[#allocation4] sm:$0xff] %vm4931, 0.0
      %vm4933 = vcmask 58368
      %4934 = vst.msk [vmem:[#allocation4 + $0x8] sm:$0x3] %vm4933, 0.0
      %4935 = vst.msk [vmem:[#allocation4 + $0x10] sm:$0xff] %vm4931, 0.0
      %4936 = vst.msk [vmem:[#allocation4 + $0x18] sm:$0x3] %vm4933, 0.0
      %4937 = vst.msk [vmem:[#allocation4 + $0x20] sm:$0xff] %vm4931, 0.0
      %4938 = vst.msk [vmem:[#allocation4 + $0x28] sm:$0x3] %vm4933, 0.0
      %4939 = vst.msk [vmem:[#allocation4 + $0x30] sm:$0xff] %vm4931, 0.0
      %4940 = vst.msk [vmem:[#allocation4 + $0x38] sm:$0x3] %vm4933, 0.0
      %4941 = vst.msk [vmem:[#allocation4 + $0x40] sm:$0xff] %vm4931, 0.0
      %4942 = vst.msk [vmem:[#allocation4 + $0x48] sm:$0x3] %vm4933, 0.0
      %4943 = vst.msk [vmem:[#allocation4 + $0x50] sm:$0xff] %vm4931, 0.0
      %4944 = vst.msk [vmem:[#allocation4 + $0x58] sm:$0x3] %vm4933, 0.0
      %4945 = vst.msk [vmem:[#allocation4 + $0x60] sm:$0xff] %vm4931, 0.0
      %4946 = vst.msk [vmem:[#allocation4 + $0x68] sm:$0x3] %vm4933, 0.0
      %4947 = vst.msk [vmem:[#allocation4 + $0x70] sm:$0xff] %vm4931, 0.0
      %4948 = vst.msk [vmem:[#allocation4 + $0x78] sm:$0x3] %vm4933, 0.0
      %4949 = vst.msk [vmem:[#allocation4 + $0x80] sm:$0xff] %vm4931, 0.0
      %4950 = vst.msk [vmem:[#allocation4 + $0x88] sm:$0x3] %vm4933, 0.0
      %4951 = vst.msk [vmem:[#allocation4 + $0x90] sm:$0xff] %vm4931, 0.0
      %4952 = vst.msk [vmem:[#allocation4 + $0x98] sm:$0x3] %vm4933, 0.0
      %4953 = vst.msk [vmem:[#allocation4 + $0xa0] sm:$0xff] %vm4931, 0.0
      %4954 = vst.msk [vmem:[#allocation4 + $0xa8] sm:$0x3] %vm4933, 0.0
      %4955 = vst.msk [vmem:[#allocation4 + $0xb0] sm:$0xff] %vm4931, 0.0
      %4956 = vst.msk [vmem:[#allocation4 + $0xb8] sm:$0x3] %vm4933, 0.0
      %4957 = vst.msk [vmem:[#allocation4 + $0xc0] sm:$0xff] %vm4931, 0.0
      %4958 = vst.msk [vmem:[#allocation4 + $0xc8] sm:$0x3] %vm4933, 0.0
      %4959 = vst.msk [vmem:[#allocation4 + $0xd0] sm:$0xff] %vm4931, 0.0
      %4960 = vst.msk [vmem:[#allocation4 + $0xd8] sm:$0x3] %vm4933, 0.0
      %4961 = vst.msk [vmem:[#allocation4 + $0xe0] sm:$0xff] %vm4931, 0.0
      %4962 = vst.msk [vmem:[#allocation4 + $0xe8] sm:$0x3] %vm4933, 0.0
      %4963 = vst.msk [vmem:[#allocation4 + $0xf0] sm:$0xff] %vm4931, 0.0
      %4964 = vst.msk [vmem:[#allocation4 + $0xf8] sm:$0x3] %vm4933, 0.0
      %4965 = vst.msk [vmem:[#allocation4 + $0x100] sm:$0xff] %vm4931, 0.0
      %4966 = vst.msk [vmem:[#allocation4 + $0x108] sm:$0x3] %vm4933, 0.0
      %4967 = vst.msk [vmem:[#allocation4 + $0x110] sm:$0xff] %vm4931, 0.0
      %4968 = vst.msk [vmem:[#allocation4 + $0x118] sm:$0x3] %vm4933, 0.0
      %4969 = vst.msk [vmem:[#allocation4 + $0x120] sm:$0xff] %vm4931, 0.0
      %4970 = vst.msk [vmem:[#allocation4 + $0x128] sm:$0x3] %vm4933, 0.0
      %4971 = vst.msk [vmem:[#allocation4 + $0x130] sm:$0xff] %vm4931, 0.0
      %4972 = vst.msk [vmem:[#allocation4 + $0x138] sm:$0x3] %vm4933, 0.0
      %s4973 = scalar_lea.vmem [#allocation4], 32
      %vm4974 = vcmask 31744
      %4975 = vst.msk [vmem:[%s4973 + $0x1] sm:$0xff] %vm4974, %v4899
      %4976 = vst.msk [vmem:[%s4973 + $0x11] sm:$0xff] %vm4974, %v4900
      %4977 = vst.msk [vmem:[%s4973 + $0x21] sm:$0xff] %vm4974, %v4901
      %4978 = vst.msk [vmem:[%s4973 + $0x31] sm:$0xff] %vm4974, %v4902
      %4979 = vst.msk [vmem:[%s4973 + $0x41] sm:$0xff] %vm4974, %v4903
      %4980 = vst.msk [vmem:[%s4973 + $0x51] sm:$0xff] %vm4974, %v4904
      %4981 = vst.msk [vmem:[%s4973 + $0x61] sm:$0xff] %vm4974, %v4905
      %4982 = vst.msk [vmem:[%s4973 + $0x71] sm:$0xff] %vm4974, %v4906
      %4983 = vst.msk [vmem:[%s4973 + $0x81] sm:$0xff] %vm4974, %v4907
      %4984 = vst.msk [vmem:[%s4973 + $0x91] sm:$0xff] %vm4974, %v4908
      %4985 = vst.msk [vmem:[%s4973 + $0xa1] sm:$0xff] %vm4974, %v4909
      %4986 = vst.msk [vmem:[%s4973 + $0xb1] sm:$0xff] %vm4974, %v4910
      %4987 = vst.msk [vmem:[%s4973 + $0xc1] sm:$0xff] %vm4974, %v4911
      %4988 = vst.msk [vmem:[%s4973 + $0xd1] sm:$0xff] %vm4974, %v4912
      %4989 = vst.msk [vmem:[%s4973 + $0xe1] sm:$0xff] %vm4974, %v4913
      %4990 = vst.msk [vmem:[%s4973 + $0xf1] sm:$0xff] %vm4974, %v4914
      %5007 = vrot.lane.b32.xlu0 %v4915, 4
      %v5008 = vpop.permute.xlu0 %5007
      %5009 = vrot.lane.b32.xlu0 %v4916, 4
      %v5010 = vpop.permute.xlu0 %5009
      %5011 = vrot.lane.b32.xlu0 %v4917, 4
      %v5012 = vpop.permute.xlu0 %5011
      %5013 = vrot.lane.b32.xlu0 %v4918, 4
      %v5014 = vpop.permute.xlu0 %5013
      %5015 = vrot.lane.b32.xlu0 %v4919, 4
      %v5016 = vpop.permute.xlu0 %5015
      %5017 = vrot.lane.b32.xlu0 %v4920, 4
      %v5018 = vpop.permute.xlu0 %5017
      %5019 = vrot.lane.b32.xlu0 %v4921, 4
      %v5020 = vpop.permute.xlu0 %5019
      %5021 = vrot.lane.b32.xlu0 %v4922, 4
      %v5022 = vpop.permute.xlu0 %5021
      %5023 = vrot.lane.b32.xlu0 %v4923, 4
      %v5024 = vpop.permute.xlu0 %5023
      %5025 = vrot.lane.b32.xlu0 %v4924, 4
      %v5026 = vpop.permute.xlu0 %5025
      %5027 = vrot.lane.b32.xlu0 %v4925, 4
      %v5028 = vpop.permute.xlu0 %5027
      %5029 = vrot.lane.b32.xlu0 %v4926, 4
      %v5030 = vpop.permute.xlu0 %5029
      %5031 = vrot.lane.b32.xlu0 %v4927, 4
      %v5032 = vpop.permute.xlu0 %5031
      %5033 = vrot.lane.b32.xlu0 %v4928, 4
      %v5034 = vpop.permute.xlu0 %5033
      %5035 = vrot.lane.b32.xlu0 %v4929, 4
      %v5036 = vpop.permute.xlu0 %5035
      %5037 = vrot.lane.b32.xlu0 %v4930, 4
      %v5038 = vpop.permute.xlu0 %5037
      %vm5055 = vcmask 64544
      %5056 = vst.msk [vmem:[%s4973 + $0x1] sm:$0xff] %vm5055, %v5008
      %5057 = vst.msk [vmem:[%s4973 + $0x11] sm:$0xff] %vm5055, %v5010
      %5058 = vst.msk [vmem:[%s4973 + $0x21] sm:$0xff] %vm5055, %v5012
      %5059 = vst.msk [vmem:[%s4973 + $0x31] sm:$0xff] %vm5055, %v5014
      %5060 = vst.msk [vmem:[%s4973 + $0x41] sm:$0xff] %vm5055, %v5016
      %5061 = vst.msk [vmem:[%s4973 + $0x51] sm:$0xff] %vm5055, %v5018
      %5062 = vst.msk [vmem:[%s4973 + $0x61] sm:$0xff] %vm5055, %v5020
      %5063 = vst.msk [vmem:[%s4973 + $0x71] sm:$0xff] %vm5055, %v5022
      %5064 = vst.msk [vmem:[%s4973 + $0x81] sm:$0xff] %vm5055, %v5024
      %5065 = vst.msk [vmem:[%s4973 + $0x91] sm:$0xff] %vm5055, %v5026
      %5066 = vst.msk [vmem:[%s4973 + $0xa1] sm:$0xff] %vm5055, %v5028
      %5067 = vst.msk [vmem:[%s4973 + $0xb1] sm:$0xff] %vm5055, %v5030
      %5068 = vst.msk [vmem:[%s4973 + $0xc1] sm:$0xff] %vm5055, %v5032
      %5069 = vst.msk [vmem:[%s4973 + $0xd1] sm:$0xff] %vm5055, %v5034
      %5070 = vst.msk [vmem:[%s4973 + $0xe1] sm:$0xff] %vm5055, %v5036
      %5071 = vst.msk [vmem:[%s4973 + $0xf1] sm:$0xff] %vm5055, %v5038
      %5072 = vst.msk [vmem:[#allocation5] sm:$0xff] %vm4931, 0.0
      %vm5073 = vcmask 57344
      %5074 = vst.msk [vmem:[#allocation5 + $0x8] sm:$0x1] %vm5073, 0.0
      %5075 = vst.msk [vmem:[#allocation5 + $0x10] sm:$0xff] %vm4931, 0.0
      %5076 = vst.msk [vmem:[#allocation5 + $0x18] sm:$0x1] %vm5073, 0.0
      %5077 = vst.msk [vmem:[#allocation5 + $0x20] sm:$0xff] %vm4931, 0.0
      %5078 = vst.msk [vmem:[#allocation5 + $0x28] sm:$0x1] %vm5073, 0.0
      %5079 = vst.msk [vmem:[#allocation5 + $0x30] sm:$0xff] %vm4931, 0.0
      %5080 = vst.msk [vmem:[#allocation5 + $0x38] sm:$0x1] %vm5073, 0.0
      %5081 = vst.msk [vmem:[#allocation5 + $0x40] sm:$0xff] %vm4931, 0.0
      %5082 = vst.msk [vmem:[#allocation5 + $0x48] sm:$0x1] %vm5073, 0.0
      %5083 = vst.msk [vmem:[#allocation5 + $0x50] sm:$0xff] %vm4931, 0.0
      %5084 = vst.msk [vmem:[#allocation5 + $0x58] sm:$0x1] %vm5073, 0.0
      %5085 = vst.msk [vmem:[#allocation5 + $0x60] sm:$0xff] %vm4931, 0.0
      %5086 = vst.msk [vmem:[#allocation5 + $0x68] sm:$0x1] %vm5073, 0.0
      %5087 = vst.msk [vmem:[#allocation5 + $0x70] sm:$0xff] %vm4931, 0.0
      %5088 = vst.msk [vmem:[#allocation5 + $0x78] sm:$0x1] %vm5073, 0.0
      %5089 = vst.msk [vmem:[#allocation5 + $0x80] sm:$0xff] %vm4931, 0.0
      %5090 = vst.msk [vmem:[#allocation5 + $0x88] sm:$0x1] %vm5073, 0.0
      %5091 = vst.msk [vmem:[#allocation5 + $0x90] sm:$0xff] %vm4931, 0.0
      %5092 = vst.msk [vmem:[#allocation5 + $0x98] sm:$0x1] %vm5073, 0.0
      %5093 = vst.msk [vmem:[#allocation5 + $0xa0] sm:$0xff] %vm4931, 0.0
      %5094 = vst.msk [vmem:[#allocation5 + $0xa8] sm:$0x1] %vm5073, 0.0
      %5095 = vst.msk [vmem:[#allocation5 + $0xb0] sm:$0xff] %vm4931, 0.0
      %5096 = vst.msk [vmem:[#allocation5 + $0xb8] sm:$0x1] %vm5073, 0.0
      %5097 = vst.msk [vmem:[#allocation5 + $0xc0] sm:$0xff] %vm4931, 0.0
      %5098 = vst.msk [vmem:[#allocation5 + $0xc8] sm:$0x1] %vm5073, 0.0
      %5099 = vst.msk [vmem:[#allocation5 + $0xd0] sm:$0xff] %vm4931, 0.0
      %5100 = vst.msk [vmem:[#allocation5 + $0xd8] sm:$0x1] %vm5073, 0.0
      %5101 = vst.msk [vmem:[#allocation5 + $0xe0] sm:$0xff] %vm4931, 0.0
      %5102 = vst.msk [vmem:[#allocation5 + $0xe8] sm:$0x1] %vm5073, 0.0
      %5103 = vst.msk [vmem:[#allocation5 + $0xf0] sm:$0xff] %vm4931, 0.0
      %5104 = vst.msk [vmem:[#allocation5 + $0xf8] sm:$0x1] %vm5073, 0.0
      %5105 = vst.msk [vmem:[#allocation5 + $0x100] sm:$0xff] %vm4931, 0.0
      %5106 = vst.msk [vmem:[#allocation5 + $0x108] sm:$0x1] %vm5073, 0.0
      %5107 = vst.msk [vmem:[#allocation5 + $0x110] sm:$0xff] %vm4931, 0.0
      %5108 = vst.msk [vmem:[#allocation5 + $0x118] sm:$0x1] %vm5073, 0.0
      %5109 = vst.msk [vmem:[#allocation5 + $0x120] sm:$0xff] %vm4931, 0.0
      %5110 = vst.msk [vmem:[#allocation5 + $0x128] sm:$0x1] %vm5073, 0.0
      %5111 = vst.msk [vmem:[#allocation5 + $0x130] sm:$0xff] %vm4931, 0.0
      %5112 = vst.msk [vmem:[#allocation5 + $0x138] sm:$0x1] %vm5073, 0.0
      %5113 = vst.msk [vmem:[#allocation5 + $0x140] sm:$0xff] %vm4931, 0.0
      %5114 = vst.msk [vmem:[#allocation5 + $0x148] sm:$0x1] %vm5073, 0.0
      %v5115 = vld [vmem:[#allocation4] sm:$0xff]
      %v5116 = vld [vmem:[#allocation4 + $0x8] sm:$0x1]
      %v5117 = vld [vmem:[#allocation4 + $0x10] sm:$0xff]
      %v5118 = vld [vmem:[#allocation4 + $0x18] sm:$0x1]
      %v5119 = vld [vmem:[#allocation4 + $0x20] sm:$0xff]
      %v5120 = vld [vmem:[#allocation4 + $0x28] sm:$0x1]
      %v5121 = vld [vmem:[#allocation4 + $0x30] sm:$0xff]
      %v5122 = vld [vmem:[#allocation4 + $0x38] sm:$0x1]
      %v5123 = vld [vmem:[#allocation4 + $0x40] sm:$0xff]
      %v5124 = vld [vmem:[#allocation4 + $0x48] sm:$0x1]
      %v5125 = vld [vmem:[#allocation4 + $0x50] sm:$0xff]
      %v5126 = vld [vmem:[#allocation4 + $0x58] sm:$0x1]
      %v5127 = vld [vmem:[#allocation4 + $0x60] sm:$0xff]
      %v5128 = vld [vmem:[#allocation4 + $0x68] sm:$0x1]
      %v5129 = vld [vmem:[#allocation4 + $0x70] sm:$0xff]
      %v5130 = vld [vmem:[#allocation4 + $0x78] sm:$0x1]
      %v5131 = vld [vmem:[#allocation4 + $0x80] sm:$0xff]
      %v5132 = vld [vmem:[#allocation4 + $0x88] sm:$0x1]
      %v5133 = vld [vmem:[#allocation4 + $0x90] sm:$0xff]
      %v5134 = vld [vmem:[#allocation4 + $0x98] sm:$0x1]
      %v5135 = vld [vmem:[#allocation4 + $0xa0] sm:$0xff]
      %v5136 = vld [vmem:[#allocation4 + $0xa8] sm:$0x1]
      %v5137 = vld [vmem:[#allocation4 + $0xb0] sm:$0xff]
      %v5138 = vld [vmem:[#allocation4 + $0xb8] sm:$0x1]
      %v5139 = vld [vmem:[#allocation4 + $0xc0] sm:$0xff]
      %v5140 = vld [vmem:[#allocation4 + $0xc8] sm:$0x1]
      %v5141 = vld [vmem:[#allocation4 + $0xd0] sm:$0xff]
      %v5142 = vld [vmem:[#allocation4 + $0xd8] sm:$0x1]
      %v5143 = vld [vmem:[#allocation4 + $0xe0] sm:$0xff]
      %v5144 = vld [vmem:[#allocation4 + $0xe8] sm:$0x1]
      %v5145 = vld [vmem:[#allocation4 + $0xf0] sm:$0xff]
      %v5146 = vld [vmem:[#allocation4 + $0xf8] sm:$0x1]
      %v5147 = vld [vmem:[#allocation4 + $0x100] sm:$0xff]
      %v5148 = vld [vmem:[#allocation4 + $0x108] sm:$0x1]
      %v5149 = vld [vmem:[#allocation4 + $0x110] sm:$0xff]
      %v5150 = vld [vmem:[#allocation4 + $0x118] sm:$0x1]
      %v5151 = vld [vmem:[#allocation4 + $0x120] sm:$0xff]
      %v5152 = vld [vmem:[#allocation4 + $0x128] sm:$0x1]
      %v5153 = vld [vmem:[#allocation4 + $0x130] sm:$0xff]
      %v5154 = vld [vmem:[#allocation4 + $0x138] sm:$0x1]
      %v5155 = vmul.f32 %v5115, 0.125
      %v5156 = vmul.f32 %v5116, 0.125
      %v5157 = vmul.f32 %v5117, 0.125
      %v5158 = vmul.f32 %v5118, 0.125
      %v5159 = vmul.f32 %v5119, 0.125
      %v5160 = vmul.f32 %v5120, 0.125
      %v5161 = vmul.f32 %v5121, 0.125
      %v5162 = vmul.f32 %v5122, 0.125
      %v5163 = vmul.f32 %v5123, 0.125
      %v5164 = vmul.f32 %v5124, 0.125
      %v5165 = vmul.f32 %v5125, 0.125
      %v5166 = vmul.f32 %v5126, 0.125
      %v5167 = vmul.f32 %v5127, 0.125
      %v5168 = vmul.f32 %v5128, 0.125
      %v5169 = vmul.f32 %v5129, 0.125
      %v5170 = vmul.f32 %v5130, 0.125
      %v5171 = vmul.f32 %v5131, 0.125
      %v5172 = vmul.f32 %v5132, 0.125
      %v5173 = vmul.f32 %v5133, 0.125
      %v5174 = vmul.f32 %v5134, 0.125
      %v5175 = vmul.f32 %v5135, 0.125
      %v5176 = vmul.f32 %v5136, 0.125
      %v5177 = vmul.f32 %v5137, 0.125
      %v5178 = vmul.f32 %v5138, 0.125
      %v5179 = vmul.f32 %v5139, 0.125
      %v5180 = vmul.f32 %v5140, 0.125
      %v5181 = vmul.f32 %v5141, 0.125
      %v5182 = vmul.f32 %v5142, 0.125
      %v5183 = vmul.f32 %v5143, 0.125
      %v5184 = vmul.f32 %v5144, 0.125
      %v5185 = vmul.f32 %v5145, 0.125
      %v5186 = vmul.f32 %v5146, 0.125
      %v5187 = vmul.f32 %v5147, 0.125
      %v5188 = vmul.f32 %v5148, 0.125
      %v5189 = vmul.f32 %v5149, 0.125
      %v5190 = vmul.f32 %v5150, 0.125
      %v5191 = vmul.f32 %v5151, 0.125
      %v5192 = vmul.f32 %v5152, 0.125
      %v5193 = vmul.f32 %v5153, 0.125
      %v5194 = vmul.f32 %v5154, 0.125
      %v5195 = vadd.f32 %v5155, 0.0
      %v5196 = vadd.f32 %v5156, 0.0
      %v5197 = vadd.f32 %v5157, 0.0
      %v5198 = vadd.f32 %v5158, 0.0
      %v5199 = vadd.f32 %v5159, 0.0
      %v5200 = vadd.f32 %v5160, 0.0
      %v5201 = vadd.f32 %v5161, 0.0
      %v5202 = vadd.f32 %v5162, 0.0
      %v5203 = vadd.f32 %v5163, 0.0
      %v5204 = vadd.f32 %v5164, 0.0
      %v5205 = vadd.f32 %v5165, 0.0
      %v5206 = vadd.f32 %v5166, 0.0
      %v5207 = vadd.f32 %v5167, 0.0
      %v5208 = vadd.f32 %v5168, 0.0
      %v5209 = vadd.f32 %v5169, 0.0
      %v5210 = vadd.f32 %v5170, 0.0
      %v5211 = vadd.f32 %v5171, 0.0
      %v5212 = vadd.f32 %v5172, 0.0
      %v5213 = vadd.f32 %v5173, 0.0
      %v5214 = vadd.f32 %v5174, 0.0
      %v5215 = vadd.f32 %v5175, 0.0
      %v5216 = vadd.f32 %v5176, 0.0
      %v5217 = vadd.f32 %v5177, 0.0
      %v5218 = vadd.f32 %v5178, 0.0
      %v5219 = vadd.f32 %v5179, 0.0
      %v5220 = vadd.f32 %v5180, 0.0
      %v5221 = vadd.f32 %v5181, 0.0
      %v5222 = vadd.f32 %v5182, 0.0
      %v5223 = vadd.f32 %v5183, 0.0
      %v5224 = vadd.f32 %v5184, 0.0
      %v5225 = vadd.f32 %v5185, 0.0
      %v5226 = vadd.f32 %v5186, 0.0
      %v5227 = vadd.f32 %v5187, 0.0
      %v5228 = vadd.f32 %v5188, 0.0
      %v5229 = vadd.f32 %v5189, 0.0
      %v5230 = vadd.f32 %v5190, 0.0
      %v5231 = vadd.f32 %v5191, 0.0
      %v5232 = vadd.f32 %v5192, 0.0
      %v5233 = vadd.f32 %v5193, 0.0
      %v5234 = vadd.f32 %v5194, 0.0
      %v5235 = vmul.f32 %v5115, 0.375
      %v5236 = vmul.f32 %v5116, 0.375
      %v5237 = vmul.f32 %v5117, 0.375
      %v5238 = vmul.f32 %v5118, 0.375
      %v5239 = vmul.f32 %v5119, 0.375
      %v5240 = vmul.f32 %v5120, 0.375
      %v5241 = vmul.f32 %v5121, 0.375
      %v5242 = vmul.f32 %v5122, 0.375
      %v5243 = vmul.f32 %v5123, 0.375
      %v5244 = vmul.f32 %v5124, 0.375
      %v5245 = vmul.f32 %v5125, 0.375
      %v5246 = vmul.f32 %v5126, 0.375
      %v5247 = vmul.f32 %v5127, 0.375
      %v5248 = vmul.f32 %v5128, 0.375
      %v5249 = vmul.f32 %v5129, 0.375
      %v5250 = vmul.f32 %v5130, 0.375
      %v5251 = vmul.f32 %v5131, 0.375
      %v5252 = vmul.f32 %v5132, 0.375
      %v5253 = vmul.f32 %v5133, 0.375
      %v5254 = vmul.f32 %v5134, 0.375
      %v5255 = vmul.f32 %v5135, 0.375
      %v5256 = vmul.f32 %v5136, 0.375
      %v5257 = vmul.f32 %v5137, 0.375
      %v5258 = vmul.f32 %v5138, 0.375
      %v5259 = vmul.f32 %v5139, 0.375
      %v5260 = vmul.f32 %v5140, 0.375
      %v5261 = vmul.f32 %v5141, 0.375
      %v5262 = vmul.f32 %v5142, 0.375
      %v5263 = vmul.f32 %v5143, 0.375
      %v5264 = vmul.f32 %v5144, 0.375
      %v5265 = vmul.f32 %v5145, 0.375
      %v5266 = vmul.f32 %v5146, 0.375
      %v5267 = vmul.f32 %v5147, 0.375
      %v5268 = vmul.f32 %v5148, 0.375
      %v5269 = vmul.f32 %v5149, 0.375
      %v5270 = vmul.f32 %v5150, 0.375
      %v5271 = vmul.f32 %v5151, 0.375
      %v5272 = vmul.f32 %v5152, 0.375
      %v5273 = vmul.f32 %v5153, 0.375
      %v5274 = vmul.f32 %v5154, 0.375
      %5315 = vrot.lane.b32.xlu0 %v5235, 124
      %v5316 = vpop.permute.xlu0 %5315
      %5317 = vrot.lane.b32.xlu0 %v5236, 124
      %v5318 = vpop.permute.xlu0 %5317
      %5319 = vrot.lane.b32.xlu0 %v5237, 124
      %v5320 = vpop.permute.xlu0 %5319
      %5321 = vrot.lane.b32.xlu0 %v5238, 124
      %v5322 = vpop.permute.xlu0 %5321
      %5323 = vrot.lane.b32.xlu0 %v5239, 124
      %v5324 = vpop.permute.xlu0 %5323
      %5325 = vrot.lane.b32.xlu0 %v5240, 124
      %v5326 = vpop.permute.xlu0 %5325
      %5327 = vrot.lane.b32.xlu0 %v5241, 124
      %v5328 = vpop.permute.xlu0 %5327
      %5329 = vrot.lane.b32.xlu0 %v5242, 124
      %v5330 = vpop.permute.xlu0 %5329
      %5331 = vrot.lane.b32.xlu0 %v5243, 124
      %v5332 = vpop.permute.xlu0 %5331
      %5333 = vrot.lane.b32.xlu0 %v5244, 124
      %v5334 = vpop.permute.xlu0 %5333
      %5335 = vrot.lane.b32.xlu0 %v5245, 124
      %v5336 = vpop.permute.xlu0 %5335
      %5337 = vrot.lane.b32.xlu0 %v5246, 124
      %v5338 = vpop.permute.xlu0 %5337
      %5339 = vrot.lane.b32.xlu0 %v5247, 124
      %v5340 = vpop.permute.xlu0 %5339
      %5341 = vrot.lane.b32.xlu0 %v5248, 124
      %v5342 = vpop.permute.xlu0 %5341
      %5343 = vrot.lane.b32.xlu0 %v5249, 124
      %v5344 = vpop.permute.xlu0 %5343
      %5345 = vrot.lane.b32.xlu0 %v5250, 124
      %v5346 = vpop.permute.xlu0 %5345
      %5347 = vrot.lane.b32.xlu0 %v5251, 124
      %v5348 = vpop.permute.xlu0 %5347
      %5349 = vrot.lane.b32.xlu0 %v5252, 124
      %v5350 = vpop.permute.xlu0 %5349
      %5351 = vrot.lane.b32.xlu0 %v5253, 124
      %v5352 = vpop.permute.xlu0 %5351
      %5353 = vrot.lane.b32.xlu0 %v5254, 124
      %v5354 = vpop.permute.xlu0 %5353
      %5355 = vrot.lane.b32.xlu0 %v5255, 124
      %v5356 = vpop.permute.xlu0 %5355
      %5357 = vrot.lane.b32.xlu0 %v5256, 124
      %v5358 = vpop.permute.xlu0 %5357
      %5359 = vrot.lane.b32.xlu0 %v5257, 124
      %v5360 = vpop.permute.xlu0 %5359
      %5361 = vrot.lane.b32.xlu0 %v5258, 124
      %v5362 = vpop.permute.xlu0 %5361
      %5363 = vrot.lane.b32.xlu0 %v5259, 124
      %v5364 = vpop.permute.xlu0 %5363
      %5365 = vrot.lane.b32.xlu0 %v5260, 124
      %v5366 = vpop.permute.xlu0 %5365
      %5367 = vrot.lane.b32.xlu0 %v5261, 124
      %v5368 = vpop.permute.xlu0 %5367
      %5369 = vrot.lane.b32.xlu0 %v5262, 124
      %v5370 = vpop.permute.xlu0 %5369
      %5371 = vrot.lane.b32.xlu0 %v5263, 124
      %v5372 = vpop.permute.xlu0 %5371
      %5373 = vrot.lane.b32.xlu0 %v5264, 124
      %v5374 = vpop.permute.xlu0 %5373
      %5375 = vrot.lane.b32.xlu0 %v5265, 124
      %v5376 = vpop.permute.xlu0 %5375
      %5377 = vrot.lane.b32.xlu0 %v5266, 124
      %v5378 = vpop.permute.xlu0 %5377
      %5379 = vrot.lane.b32.xlu0 %v5267, 124
      %v5380 = vpop.permute.xlu0 %5379
      %5381 = vrot.lane.b32.xlu0 %v5268, 124
      %v5382 = vpop.permute.xlu0 %5381
      %5383 = vrot.lane.b32.xlu0 %v5269, 124
      %v5384 = vpop.permute.xlu0 %5383
      %5385 = vrot.lane.b32.xlu0 %v5270, 124
      %v5386 = vpop.permute.xlu0 %5385
      %5387 = vrot.lane.b32.xlu0 %v5271, 124
      %v5388 = vpop.permute.xlu0 %5387
      %5389 = vrot.lane.b32.xlu0 %v5272, 124
      %v5390 = vpop.permute.xlu0 %5389
      %5391 = vrot.lane.b32.xlu0 %v5273, 124
      %v5392 = vpop.permute.xlu0 %5391
      %5393 = vrot.lane.b32.xlu0 %v5274, 124
      %v5394 = vpop.permute.xlu0 %5393
      %v5435 = vadd.f32 %v5195, %v5316
      %v5436 = vadd.f32 %v5196, %v5318
      %v5437 = vadd.f32 %v5197, %v5320
      %v5438 = vadd.f32 %v5198, %v5322
      %v5439 = vadd.f32 %v5199, %v5324
      %v5440 = vadd.f32 %v5200, %v5326
      %v5441 = vadd.f32 %v5201, %v5328
      %v5442 = vadd.f32 %v5202, %v5330
      %v5443 = vadd.f32 %v5203, %v5332
      %v5444 = vadd.f32 %v5204, %v5334
      %v5445 = vadd.f32 %v5205, %v5336
      %v5446 = vadd.f32 %v5206, %v5338
      %v5447 = vadd.f32 %v5207, %v5340
      %v5448 = vadd.f32 %v5208, %v5342
      %v5449 = vadd.f32 %v5209, %v5344
      %v5450 = vadd.f32 %v5210, %v5346
      %v5451 = vadd.f32 %v5211, %v5348
      %v5452 = vadd.f32 %v5212, %v5350
      %v5453 = vadd.f32 %v5213, %v5352
      %v5454 = vadd.f32 %v5214, %v5354
      %v5455 = vadd.f32 %v5215, %v5356
      %v5456 = vadd.f32 %v5216, %v5358
      %v5457 = vadd.f32 %v5217, %v5360
      %v5458 = vadd.f32 %v5218, %v5362
      %v5459 = vadd.f32 %v5219, %v5364
      %v5460 = vadd.f32 %v5220, %v5366
      %v5461 = vadd.f32 %v5221, %v5368
      %v5462 = vadd.f32 %v5222, %v5370
      %v5463 = vadd.f32 %v5223, %v5372
      %v5464 = vadd.f32 %v5224, %v5374
      %v5465 = vadd.f32 %v5225, %v5376
      %v5466 = vadd.f32 %v5226, %v5378
      %v5467 = vadd.f32 %v5227, %v5380
      %v5468 = vadd.f32 %v5228, %v5382
      %v5469 = vadd.f32 %v5229, %v5384
      %v5470 = vadd.f32 %v5230, %v5386
      %v5471 = vadd.f32 %v5231, %v5388
      %v5472 = vadd.f32 %v5232, %v5390
      %v5473 = vadd.f32 %v5233, %v5392
      %v5474 = vadd.f32 %v5234, %v5394
      %v5475 = vld [vmem:[#allocation4 + $0x1] sm:$0xff]
      %v5476 = vld [vmem:[#allocation4 + $0x9] sm:$0x1]
      %v5477 = vld [vmem:[#allocation4 + $0x11] sm:$0xff]
      %v5478 = vld [vmem:[#allocation4 + $0x19] sm:$0x1]
      %v5479 = vld [vmem:[#allocation4 + $0x21] sm:$0xff]
      %v5480 = vld [vmem:[#allocation4 + $0x29] sm:$0x1]
      %v5481 = vld [vmem:[#allocation4 + $0x31] sm:$0xff]
      %v5482 = vld [vmem:[#allocation4 + $0x39] sm:$0x1]
      %v5483 = vld [vmem:[#allocation4 + $0x41] sm:$0xff]
      %v5484 = vld [vmem:[#allocation4 + $0x49] sm:$0x1]
      %v5485 = vld [vmem:[#allocation4 + $0x51] sm:$0xff]
      %v5486 = vld [vmem:[#allocation4 + $0x59] sm:$0x1]
      %v5487 = vld [vmem:[#allocation4 + $0x61] sm:$0xff]
      %v5488 = vld [vmem:[#allocation4 + $0x69] sm:$0x1]
      %v5489 = vld [vmem:[#allocation4 + $0x71] sm:$0xff]
      %v5490 = vld [vmem:[#allocation4 + $0x79] sm:$0x1]
      %v5491 = vld [vmem:[#allocation4 + $0x81] sm:$0xff]
      %v5492 = vld [vmem:[#allocation4 + $0x89] sm:$0x1]
      %v5493 = vld [vmem:[#allocation4 + $0x91] sm:$0xff]
      %v5494 = vld [vmem:[#allocation4 + $0x99] sm:$0x1]
      %v5495 = vld [vmem:[#allocation4 + $0xa1] sm:$0xff]
      %v5496 = vld [vmem:[#allocation4 + $0xa9] sm:$0x1]
      %v5497 = vld [vmem:[#allocation4 + $0xb1] sm:$0xff]
      %v5498 = vld [vmem:[#allocation4 + $0xb9] sm:$0x1]
      %v5499 = vld [vmem:[#allocation4 + $0xc1] sm:$0xff]
      %v5500 = vld [vmem:[#allocation4 + $0xc9] sm:$0x1]
      %v5501 = vld [vmem:[#allocation4 + $0xd1] sm:$0xff]
      %v5502 = vld [vmem:[#allocation4 + $0xd9] sm:$0x1]
      %v5503 = vld [vmem:[#allocation4 + $0xe1] sm:$0xff]
      %v5504 = vld [vmem:[#allocation4 + $0xe9] sm:$0x1]
      %v5505 = vld [vmem:[#allocation4 + $0xf1] sm:$0xff]
      %v5506 = vld [vmem:[#allocation4 + $0xf9] sm:$0x1]
      %v5507 = vld [vmem:[#allocation4 + $0x101] sm:$0xff]
      %v5508 = vld [vmem:[#allocation4 + $0x109] sm:$0x1]
      %v5509 = vld [vmem:[#allocation4 + $0x111] sm:$0xff]
      %v5510 = vld [vmem:[#allocation4 + $0x119] sm:$0x1]
      %v5511 = vld [vmem:[#allocation4 + $0x121] sm:$0xff]
      %v5512 = vld [vmem:[#allocation4 + $0x129] sm:$0x1]
      %v5513 = vld [vmem:[#allocation4 + $0x131] sm:$0xff]
      %v5514 = vld [vmem:[#allocation4 + $0x139] sm:$0x1]
      %v5515 = vmul.f32 %v5475, 0.375
      %v5516 = vmul.f32 %v5476, 0.375
      %v5517 = vmul.f32 %v5477, 0.375
      %v5518 = vmul.f32 %v5478, 0.375
      %v5519 = vmul.f32 %v5479, 0.375
      %v5520 = vmul.f32 %v5480, 0.375
      %v5521 = vmul.f32 %v5481, 0.375
      %v5522 = vmul.f32 %v5482, 0.375
      %v5523 = vmul.f32 %v5483, 0.375
      %v5524 = vmul.f32 %v5484, 0.375
      %v5525 = vmul.f32 %v5485, 0.375
      %v5526 = vmul.f32 %v5486, 0.375
      %v5527 = vmul.f32 %v5487, 0.375
      %v5528 = vmul.f32 %v5488, 0.375
      %v5529 = vmul.f32 %v5489, 0.375
      %v5530 = vmul.f32 %v5490, 0.375
      %v5531 = vmul.f32 %v5491, 0.375
      %v5532 = vmul.f32 %v5492, 0.375
      %v5533 = vmul.f32 %v5493, 0.375
      %v5534 = vmul.f32 %v5494, 0.375
      %v5535 = vmul.f32 %v5495, 0.375
      %v5536 = vmul.f32 %v5496, 0.375
      %v5537 = vmul.f32 %v5497, 0.375
      %v5538 = vmul.f32 %v5498, 0.375
      %v5539 = vmul.f32 %v5499, 0.375
      %v5540 = vmul.f32 %v5500, 0.375
      %v5541 = vmul.f32 %v5501, 0.375
      %v5542 = vmul.f32 %v5502, 0.375
      %v5543 = vmul.f32 %v5503, 0.375
      %v5544 = vmul.f32 %v5504, 0.375
      %v5545 = vmul.f32 %v5505, 0.375
      %v5546 = vmul.f32 %v5506, 0.375
      %v5547 = vmul.f32 %v5507, 0.375
      %v5548 = vmul.f32 %v5508, 0.375
      %v5549 = vmul.f32 %v5509, 0.375
      %v5550 = vmul.f32 %v5510, 0.375
      %v5551 = vmul.f32 %v5511, 0.375
      %v5552 = vmul.f32 %v5512, 0.375
      %v5553 = vmul.f32 %v5513, 0.375
      %v5554 = vmul.f32 %v5514, 0.375
      %v5555 = vadd.f32 %v5435, %v5515
      %v5556 = vadd.f32 %v5436, %v5516
      %v5557 = vadd.f32 %v5437, %v5517
      %v5558 = vadd.f32 %v5438, %v5518
      %v5559 = vadd.f32 %v5439, %v5519
      %v5560 = vadd.f32 %v5440, %v5520
      %v5561 = vadd.f32 %v5441, %v5521
      %v5562 = vadd.f32 %v5442, %v5522
      %v5563 = vadd.f32 %v5443, %v5523
      %v5564 = vadd.f32 %v5444, %v5524
      %v5565 = vadd.f32 %v5445, %v5525
      %v5566 = vadd.f32 %v5446, %v5526
      %v5567 = vadd.f32 %v5447, %v5527
      %v5568 = vadd.f32 %v5448, %v5528
      %v5569 = vadd.f32 %v5449, %v5529
      %v5570 = vadd.f32 %v5450, %v5530
      %v5571 = vadd.f32 %v5451, %v5531
      %v5572 = vadd.f32 %v5452, %v5532
      %v5573 = vadd.f32 %v5453, %v5533
      %v5574 = vadd.f32 %v5454, %v5534
      %v5575 = vadd.f32 %v5455, %v5535
      %v5576 = vadd.f32 %v5456, %v5536
      %v5577 = vadd.f32 %v5457, %v5537
      %v5578 = vadd.f32 %v5458, %v5538
      %v5579 = vadd.f32 %v5459, %v5539
      %v5580 = vadd.f32 %v5460, %v5540
      %v5581 = vadd.f32 %v5461, %v5541
      %v5582 = vadd.f32 %v5462, %v5542
      %v5583 = vadd.f32 %v5463, %v5543
      %v5584 = vadd.f32 %v5464, %v5544
      %v5585 = vadd.f32 %v5465, %v5545
      %v5586 = vadd.f32 %v5466, %v5546
      %v5587 = vadd.f32 %v5467, %v5547
      %v5588 = vadd.f32 %v5468, %v5548
      %v5589 = vadd.f32 %v5469, %v5549
      %v5590 = vadd.f32 %v5470, %v5550
      %v5591 = vadd.f32 %v5471, %v5551
      %v5592 = vadd.f32 %v5472, %v5552
      %v5593 = vadd.f32 %v5473, %v5553
      %v5594 = vadd.f32 %v5474, %v5554
      %v5595 = vmul.f32 %v5475, 0.125
      %v5596 = vmul.f32 %v5476, 0.125
      %v5597 = vmul.f32 %v5477, 0.125
      %v5598 = vmul.f32 %v5478, 0.125
      %v5599 = vmul.f32 %v5479, 0.125
      %v5600 = vmul.f32 %v5480, 0.125
      %v5601 = vmul.f32 %v5481, 0.125
      %v5602 = vmul.f32 %v5482, 0.125
      %v5603 = vmul.f32 %v5483, 0.125
      %v5604 = vmul.f32 %v5484, 0.125
      %v5605 = vmul.f32 %v5485, 0.125
      %v5606 = vmul.f32 %v5486, 0.125
      %v5607 = vmul.f32 %v5487, 0.125
      %v5608 = vmul.f32 %v5488, 0.125
      %v5609 = vmul.f32 %v5489, 0.125
      %v5610 = vmul.f32 %v5490, 0.125
      %v5611 = vmul.f32 %v5491, 0.125
      %v5612 = vmul.f32 %v5492, 0.125
      %v5613 = vmul.f32 %v5493, 0.125
      %v5614 = vmul.f32 %v5494, 0.125
      %v5615 = vmul.f32 %v5495, 0.125
      %v5616 = vmul.f32 %v5496, 0.125
      %v5617 = vmul.f32 %v5497, 0.125
      %v5618 = vmul.f32 %v5498, 0.125
      %v5619 = vmul.f32 %v5499, 0.125
      %v5620 = vmul.f32 %v5500, 0.125
      %v5621 = vmul.f32 %v5501, 0.125
      %v5622 = vmul.f32 %v5502, 0.125
      %v5623 = vmul.f32 %v5503, 0.125
      %v5624 = vmul.f32 %v5504, 0.125
      %v5625 = vmul.f32 %v5505, 0.125
      %v5626 = vmul.f32 %v5506, 0.125
      %v5627 = vmul.f32 %v5507, 0.125
      %v5628 = vmul.f32 %v5508, 0.125
      %v5629 = vmul.f32 %v5509, 0.125
      %v5630 = vmul.f32 %v5510, 0.125
      %v5631 = vmul.f32 %v5511, 0.125
      %v5632 = vmul.f32 %v5512, 0.125
      %v5633 = vmul.f32 %v5513, 0.125
      %v5634 = vmul.f32 %v5514, 0.125
      %5675 = vrot.lane.b32.xlu0 %v5595, 124
      %v5676 = vpop.permute.xlu0 %5675
      %5677 = vrot.lane.b32.xlu0 %v5596, 124
      %v5678 = vpop.permute.xlu0 %5677
      %5679 = vrot.lane.b32.xlu0 %v5597, 124
      %v5680 = vpop.permute.xlu0 %5679
      %5681 = vrot.lane.b32.xlu0 %v5598, 124
      %v5682 = vpop.permute.xlu0 %5681
      %5683 = vrot.lane.b32.xlu0 %v5599, 124
      %v5684 = vpop.permute.xlu0 %5683
      %5685 = vrot.lane.b32.xlu0 %v5600, 124
      %v5686 = vpop.permute.xlu0 %5685
      %5687 = vrot.lane.b32.xlu0 %v5601, 124
      %v5688 = vpop.permute.xlu0 %5687
      %5689 = vrot.lane.b32.xlu0 %v5602, 124
      %v5690 = vpop.permute.xlu0 %5689
      %5691 = vrot.lane.b32.xlu0 %v5603, 124
      %v5692 = vpop.permute.xlu0 %5691
      %5693 = vrot.lane.b32.xlu0 %v5604, 124
      %v5694 = vpop.permute.xlu0 %5693
      %5695 = vrot.lane.b32.xlu0 %v5605, 124
      %v5696 = vpop.permute.xlu0 %5695
      %5697 = vrot.lane.b32.xlu0 %v5606, 124
      %v5698 = vpop.permute.xlu0 %5697
      %5699 = vrot.lane.b32.xlu0 %v5607, 124
      %v5700 = vpop.permute.xlu0 %5699
      %5701 = vrot.lane.b32.xlu0 %v5608, 124
      %v5702 = vpop.permute.xlu0 %5701
      %5703 = vrot.lane.b32.xlu0 %v5609, 124
      %v5704 = vpop.permute.xlu0 %5703
      %5705 = vrot.lane.b32.xlu0 %v5610, 124
      %v5706 = vpop.permute.xlu0 %5705
      %5707 = vrot.lane.b32.xlu0 %v5611, 124
      %v5708 = vpop.permute.xlu0 %5707
      %5709 = vrot.lane.b32.xlu0 %v5612, 124
      %v5710 = vpop.permute.xlu0 %5709
      %5711 = vrot.lane.b32.xlu0 %v5613, 124
      %v5712 = vpop.permute.xlu0 %5711
      %5713 = vrot.lane.b32.xlu0 %v5614, 124
      %v5714 = vpop.permute.xlu0 %5713
      %5715 = vrot.lane.b32.xlu0 %v5615, 124
      %v5716 = vpop.permute.xlu0 %5715
      %5717 = vrot.lane.b32.xlu0 %v5616, 124
      %v5718 = vpop.permute.xlu0 %5717
      %5719 = vrot.lane.b32.xlu0 %v5617, 124
      %v5720 = vpop.permute.xlu0 %5719
      %5721 = vrot.lane.b32.xlu0 %v5618, 124
      %v5722 = vpop.permute.xlu0 %5721
      %5723 = vrot.lane.b32.xlu0 %v5619, 124
      %v5724 = vpop.permute.xlu0 %5723
      %5725 = vrot.lane.b32.xlu0 %v5620, 124
      %v5726 = vpop.permute.xlu0 %5725
      %5727 = vrot.lane.b32.xlu0 %v5621, 124
      %v5728 = vpop.permute.xlu0 %5727
      %5729 = vrot.lane.b32.xlu0 %v5622, 124
      %v5730 = vpop.permute.xlu0 %5729
      %5731 = vrot.lane.b32.xlu0 %v5623, 124
      %v5732 = vpop.permute.xlu0 %5731
      %5733 = vrot.lane.b32.xlu0 %v5624, 124
      %v5734 = vpop.permute.xlu0 %5733
      %5735 = vrot.lane.b32.xlu0 %v5625, 124
      %v5736 = vpop.permute.xlu0 %5735
      %5737 = vrot.lane.b32.xlu0 %v5626, 124
      %v5738 = vpop.permute.xlu0 %5737
      %5739 = vrot.lane.b32.xlu0 %v5627, 124
      %v5740 = vpop.permute.xlu0 %5739
      %5741 = vrot.lane.b32.xlu0 %v5628, 124
      %v5742 = vpop.permute.xlu0 %5741
      %5743 = vrot.lane.b32.xlu0 %v5629, 124
      %v5744 = vpop.permute.xlu0 %5743
      %5745 = vrot.lane.b32.xlu0 %v5630, 124
      %v5746 = vpop.permute.xlu0 %5745
      %5747 = vrot.lane.b32.xlu0 %v5631, 124
      %v5748 = vpop.permute.xlu0 %5747
      %5749 = vrot.lane.b32.xlu0 %v5632, 124
      %v5750 = vpop.permute.xlu0 %5749
      %5751 = vrot.lane.b32.xlu0 %v5633, 124
      %v5752 = vpop.permute.xlu0 %5751
      %5753 = vrot.lane.b32.xlu0 %v5634, 124
      %v5754 = vpop.permute.xlu0 %5753
      %v5795 = vadd.f32 %v5555, %v5676
      %v5796 = vadd.f32 %v5556, %v5678
      %v5797 = vadd.f32 %v5557, %v5680
      %v5798 = vadd.f32 %v5558, %v5682
      %v5799 = vadd.f32 %v5559, %v5684
      %v5800 = vadd.f32 %v5560, %v5686
      %v5801 = vadd.f32 %v5561, %v5688
      %v5802 = vadd.f32 %v5562, %v5690
      %v5803 = vadd.f32 %v5563, %v5692
      %v5804 = vadd.f32 %v5564, %v5694
      %v5805 = vadd.f32 %v5565, %v5696
      %v5806 = vadd.f32 %v5566, %v5698
      %v5807 = vadd.f32 %v5567, %v5700
      %v5808 = vadd.f32 %v5568, %v5702
      %v5809 = vadd.f32 %v5569, %v5704
      %v5810 = vadd.f32 %v5570, %v5706
      %v5811 = vadd.f32 %v5571, %v5708
      %v5812 = vadd.f32 %v5572, %v5710
      %v5813 = vadd.f32 %v5573, %v5712
      %v5814 = vadd.f32 %v5574, %v5714
      %v5815 = vadd.f32 %v5575, %v5716
      %v5816 = vadd.f32 %v5576, %v5718
      %v5817 = vadd.f32 %v5577, %v5720
      %v5818 = vadd.f32 %v5578, %v5722
      %v5819 = vadd.f32 %v5579, %v5724
      %v5820 = vadd.f32 %v5580, %v5726
      %v5821 = vadd.f32 %v5581, %v5728
      %v5822 = vadd.f32 %v5582, %v5730
      %v5823 = vadd.f32 %v5583, %v5732
      %v5824 = vadd.f32 %v5584, %v5734
      %v5825 = vadd.f32 %v5585, %v5736
      %v5826 = vadd.f32 %v5586, %v5738
      %v5827 = vadd.f32 %v5587, %v5740
      %v5828 = vadd.f32 %v5588, %v5742
      %v5829 = vadd.f32 %v5589, %v5744
      %v5830 = vadd.f32 %v5590, %v5746
      %v5831 = vadd.f32 %v5591, %v5748
      %v5832 = vadd.f32 %v5592, %v5750
      %v5833 = vadd.f32 %v5593, %v5752
      %v5834 = vadd.f32 %v5594, %v5754
      %5835 = vst.msk [vmem:[#allocation5] sm:$0xff] %vm4974, %v5795
      %vm5836 = vcmask 24576
      %5837 = vst.msk [vmem:[#allocation5 + $0x8] sm:$0x1] %vm5836, %v5796
      %5838 = vst.msk [vmem:[#allocation5 + $0x10] sm:$0xff] %vm4974, %v5797
      %5839 = vst.msk [vmem:[#allocation5 + $0x18] sm:$0x1] %vm5836, %v5798
      %5840 = vst.msk [vmem:[#allocation5 + $0x20] sm:$0xff] %vm4974, %v5799
      %5841 = vst.msk [vmem:[#allocation5 + $0x28] sm:$0x1] %vm5836, %v5800
      %5842 = vst.msk [vmem:[#allocation5 + $0x30] sm:$0xff] %vm4974, %v5801
      %5843 = vst.msk [vmem:[#allocation5 + $0x38] sm:$0x1] %vm5836, %v5802
      %5844 = vst.msk [vmem:[#allocation5 + $0x40] sm:$0xff] %vm4974, %v5803
      %5845 = vst.msk [vmem:[#allocation5 + $0x48] sm:$0x1] %vm5836, %v5804
      %5846 = vst.msk [vmem:[#allocation5 + $0x50] sm:$0xff] %vm4974, %v5805
      %5847 = vst.msk [vmem:[#allocation5 + $0x58] sm:$0x1] %vm5836, %v5806
      %5848 = vst.msk [vmem:[#allocation5 + $0x60] sm:$0xff] %vm4974, %v5807
      %5849 = vst.msk [vmem:[#allocation5 + $0x68] sm:$0x1] %vm5836, %v5808
      %5850 = vst.msk [vmem:[#allocation5 + $0x70] sm:$0xff] %vm4974, %v5809
      %5851 = vst.msk [vmem:[#allocation5 + $0x78] sm:$0x1] %vm5836, %v5810
      %5852 = vst.msk [vmem:[#allocation5 + $0x80] sm:$0xff] %vm4974, %v5811
      %5853 = vst.msk [vmem:[#allocation5 + $0x88] sm:$0x1] %vm5836, %v5812
      %5854 = vst.msk [vmem:[#allocation5 + $0x90] sm:$0xff] %vm4974, %v5813
      %5855 = vst.msk [vmem:[#allocation5 + $0x98] sm:$0x1] %vm5836, %v5814
      %5856 = vst.msk [vmem:[#allocation5 + $0xa0] sm:$0xff] %vm4974, %v5815
      %5857 = vst.msk [vmem:[#allocation5 + $0xa8] sm:$0x1] %vm5836, %v5816
      %5858 = vst.msk [vmem:[#allocation5 + $0xb0] sm:$0xff] %vm4974, %v5817
      %5859 = vst.msk [vmem:[#allocation5 + $0xb8] sm:$0x1] %vm5836, %v5818
      %5860 = vst.msk [vmem:[#allocation5 + $0xc0] sm:$0xff] %vm4974, %v5819
      %5861 = vst.msk [vmem:[#allocation5 + $0xc8] sm:$0x1] %vm5836, %v5820
      %5862 = vst.msk [vmem:[#allocation5 + $0xd0] sm:$0xff] %vm4974, %v5821
      %5863 = vst.msk [vmem:[#allocation5 + $0xd8] sm:$0x1] %vm5836, %v5822
      %5864 = vst.msk [vmem:[#allocation5 + $0xe0] sm:$0xff] %vm4974, %v5823
      %5865 = vst.msk [vmem:[#allocation5 + $0xe8] sm:$0x1] %vm5836, %v5824
      %5866 = vst.msk [vmem:[#allocation5 + $0xf0] sm:$0xff] %vm4974, %v5825
      %5867 = vst.msk [vmem:[#allocation5 + $0xf8] sm:$0x1] %vm5836, %v5826
      %5868 = vst.msk [vmem:[#allocation5 + $0x100] sm:$0xff] %vm4974, %v5827
      %5869 = vst.msk [vmem:[#allocation5 + $0x108] sm:$0x1] %vm5836, %v5828
      %5870 = vst.msk [vmem:[#allocation5 + $0x110] sm:$0xff] %vm4974, %v5829
      %5871 = vst.msk [vmem:[#allocation5 + $0x118] sm:$0x1] %vm5836, %v5830
      %5872 = vst.msk [vmem:[#allocation5 + $0x120] sm:$0xff] %vm4974, %v5831
      %5873 = vst.msk [vmem:[#allocation5 + $0x128] sm:$0x1] %vm5836, %v5832
      %5874 = vst.msk [vmem:[#allocation5 + $0x130] sm:$0xff] %vm4974, %v5833
      %5875 = vst.msk [vmem:[#allocation5 + $0x138] sm:$0x1] %vm5836, %v5834
      %v5876 = vld [vmem:[#allocation4] sm:$0xff]
      %v5877 = vld [vmem:[#allocation4 + $0x10] sm:$0xff]
      %v5878 = vld [vmem:[#allocation4 + $0x20] sm:$0xff]
      %v5879 = vld [vmem:[#allocation4 + $0x30] sm:$0xff]
      %v5880 = vld [vmem:[#allocation4 + $0x40] sm:$0xff]
      %v5881 = vld [vmem:[#allocation4 + $0x50] sm:$0xff]
      %v5882 = vld [vmem:[#allocation4 + $0x60] sm:$0xff]
      %v5883 = vld [vmem:[#allocation4 + $0x70] sm:$0xff]
      %v5884 = vld [vmem:[#allocation4 + $0x80] sm:$0xff]
      %v5885 = vld [vmem:[#allocation4 + $0x90] sm:$0xff]
      %v5886 = vld [vmem:[#allocation4 + $0xa0] sm:$0xff]
      %v5887 = vld [vmem:[#allocation4 + $0xb0] sm:$0xff]
      %v5888 = vld [vmem:[#allocation4 + $0xc0] sm:$0xff]
      %v5889 = vld [vmem:[#allocation4 + $0xd0] sm:$0xff]
      %v5890 = vld [vmem:[#allocation4 + $0xe0] sm:$0xff]
      %v5891 = vld [vmem:[#allocation4 + $0xf0] sm:$0xff]
      %v5892 = vld [vmem:[#allocation4 + $0x100] sm:$0xff]
      %v5893 = vld [vmem:[#allocation4 + $0x110] sm:$0xff]
      %v5894 = vld [vmem:[#allocation4 + $0x120] sm:$0xff]
      %v5895 = vld [vmem:[#allocation4 + $0x130] sm:$0xff]
      %v5896 = vmul.f32 %v5876, 0.125
      %v5897 = vmul.f32 %v5877, 0.125
      %v5898 = vmul.f32 %v5878, 0.125
      %v5899 = vmul.f32 %v5879, 0.125
      %v5900 = vmul.f32 %v5880, 0.125
      %v5901 = vmul.f32 %v5881, 0.125
      %v5902 = vmul.f32 %v5882, 0.125
      %v5903 = vmul.f32 %v5883, 0.125
      %v5904 = vmul.f32 %v5884, 0.125
      %v5905 = vmul.f32 %v5885, 0.125
      %v5906 = vmul.f32 %v5886, 0.125
      %v5907 = vmul.f32 %v5887, 0.125
      %v5908 = vmul.f32 %v5888, 0.125
      %v5909 = vmul.f32 %v5889, 0.125
      %v5910 = vmul.f32 %v5890, 0.125
      %v5911 = vmul.f32 %v5891, 0.125
      %v5912 = vmul.f32 %v5892, 0.125
      %v5913 = vmul.f32 %v5893, 0.125
      %v5914 = vmul.f32 %v5894, 0.125
      %v5915 = vmul.f32 %v5895, 0.125
      %v5916 = vadd.f32 %v5896, 0.0
      %v5917 = vadd.f32 %v5897, 0.0
      %v5918 = vadd.f32 %v5898, 0.0
      %v5919 = vadd.f32 %v5899, 0.0
      %v5920 = vadd.f32 %v5900, 0.0
      %v5921 = vadd.f32 %v5901, 0.0
      %v5922 = vadd.f32 %v5902, 0.0
      %v5923 = vadd.f32 %v5903, 0.0
      %v5924 = vadd.f32 %v5904, 0.0
      %v5925 = vadd.f32 %v5905, 0.0
      %v5926 = vadd.f32 %v5906, 0.0
      %v5927 = vadd.f32 %v5907, 0.0
      %v5928 = vadd.f32 %v5908, 0.0
      %v5929 = vadd.f32 %v5909, 0.0
      %v5930 = vadd.f32 %v5910, 0.0
      %v5931 = vadd.f32 %v5911, 0.0
      %v5932 = vadd.f32 %v5912, 0.0
      %v5933 = vadd.f32 %v5913, 0.0
      %v5934 = vadd.f32 %v5914, 0.0
      %v5935 = vadd.f32 %v5915, 0.0
      %v5936 = vld [vmem:[#allocation4 + $0x1] sm:$0xff]
      %v5937 = vld [vmem:[#allocation4 + $0x11] sm:$0xff]
      %v5938 = vld [vmem:[#allocation4 + $0x21] sm:$0xff]
      %v5939 = vld [vmem:[#allocation4 + $0x31] sm:$0xff]
      %v5940 = vld [vmem:[#allocation4 + $0x41] sm:$0xff]
      %v5941 = vld [vmem:[#allocation4 + $0x51] sm:$0xff]
      %v5942 = vld [vmem:[#allocation4 + $0x61] sm:$0xff]
      %v5943 = vld [vmem:[#allocation4 + $0x71] sm:$0xff]
      %v5944 = vld [vmem:[#allocation4 + $0x81] sm:$0xff]
      %v5945 = vld [vmem:[#allocation4 + $0x91] sm:$0xff]
      %v5946 = vld [vmem:[#allocation4 + $0xa1] sm:$0xff]
      %v5947 = vld [vmem:[#allocation4 + $0xb1] sm:$0xff]
      %v5948 = vld [vmem:[#allocation4 + $0xc1] sm:$0xff]
      %v5949 = vld [vmem:[#allocation4 + $0xd1] sm:$0xff]
      %v5950 = vld [vmem:[#allocation4 + $0xe1] sm:$0xff]
      %v5951 = vld [vmem:[#allocation4 + $0xf1] sm:$0xff]
      %v5952 = vld [vmem:[#allocation4 + $0x101] sm:$0xff]
      %v5953 = vld [vmem:[#allocation4 + $0x111] sm:$0xff]
      %v5954 = vld [vmem:[#allocation4 + $0x121] sm:$0xff]
      %v5955 = vld [vmem:[#allocation4 + $0x131] sm:$0xff]
      %v5956 = vmul.f32 %v5936, 0.375
      %v5957 = vmul.f32 %v5937, 0.375
      %v5958 = vmul.f32 %v5938, 0.375
      %v5959 = vmul.f32 %v5939, 0.375
      %v5960 = vmul.f32 %v5940, 0.375
      %v5961 = vmul.f32 %v5941, 0.375
      %v5962 = vmul.f32 %v5942, 0.375
      %v5963 = vmul.f32 %v5943, 0.375
      %v5964 = vmul.f32 %v5944, 0.375
      %v5965 = vmul.f32 %v5945, 0.375
      %v5966 = vmul.f32 %v5946, 0.375
      %v5967 = vmul.f32 %v5947, 0.375
      %v5968 = vmul.f32 %v5948, 0.375
      %v5969 = vmul.f32 %v5949, 0.375
      %v5970 = vmul.f32 %v5950, 0.375
      %v5971 = vmul.f32 %v5951, 0.375
      %v5972 = vmul.f32 %v5952, 0.375
      %v5973 = vmul.f32 %v5953, 0.375
      %v5974 = vmul.f32 %v5954, 0.375
      %v5975 = vmul.f32 %v5955, 0.375
      %5996 = vrot.lane.b32.xlu0 %v5956, 4
      %v5997 = vpop.permute.xlu0 %5996
      %5998 = vrot.lane.b32.xlu0 %v5957, 4
      %v5999 = vpop.permute.xlu0 %5998
      %6000 = vrot.lane.b32.xlu0 %v5958, 4
      %v6001 = vpop.permute.xlu0 %6000
      %6002 = vrot.lane.b32.xlu0 %v5959, 4
      %v6003 = vpop.permute.xlu0 %6002
      %6004 = vrot.lane.b32.xlu0 %v5960, 4
      %v6005 = vpop.permute.xlu0 %6004
      %6006 = vrot.lane.b32.xlu0 %v5961, 4
      %v6007 = vpop.permute.xlu0 %6006
      %6008 = vrot.lane.b32.xlu0 %v5962, 4
      %v6009 = vpop.permute.xlu0 %6008
      %6010 = vrot.lane.b32.xlu0 %v5963, 4
      %v6011 = vpop.permute.xlu0 %6010
      %6012 = vrot.lane.b32.xlu0 %v5964, 4
      %v6013 = vpop.permute.xlu0 %6012
      %6014 = vrot.lane.b32.xlu0 %v5965, 4
      %v6015 = vpop.permute.xlu0 %6014
      %6016 = vrot.lane.b32.xlu0 %v5966, 4
      %v6017 = vpop.permute.xlu0 %6016
      %6018 = vrot.lane.b32.xlu0 %v5967, 4
      %v6019 = vpop.permute.xlu0 %6018
      %6020 = vrot.lane.b32.xlu0 %v5968, 4
      %v6021 = vpop.permute.xlu0 %6020
      %6022 = vrot.lane.b32.xlu0 %v5969, 4
      %v6023 = vpop.permute.xlu0 %6022
      %6024 = vrot.lane.b32.xlu0 %v5970, 4
      %v6025 = vpop.permute.xlu0 %6024
      %6026 = vrot.lane.b32.xlu0 %v5971, 4
      %v6027 = vpop.permute.xlu0 %6026
      %6028 = vrot.lane.b32.xlu0 %v5972, 4
      %v6029 = vpop.permute.xlu0 %6028
      %6030 = vrot.lane.b32.xlu0 %v5973, 4
      %v6031 = vpop.permute.xlu0 %6030
      %6032 = vrot.lane.b32.xlu0 %v5974, 4
      %v6033 = vpop.permute.xlu0 %6032
      %6034 = vrot.lane.b32.xlu0 %v5975, 4
      %v6035 = vpop.permute.xlu0 %6034
      %v6056 = vadd.f32 %v5916, %v5997
      %v6057 = vadd.f32 %v5917, %v5999
      %v6058 = vadd.f32 %v5918, %v6001
      %v6059 = vadd.f32 %v5919, %v6003
      %v6060 = vadd.f32 %v5920, %v6005
      %v6061 = vadd.f32 %v5921, %v6007
      %v6062 = vadd.f32 %v5922, %v6009
      %v6063 = vadd.f32 %v5923, %v6011
      %v6064 = vadd.f32 %v5924, %v6013
      %v6065 = vadd.f32 %v5925, %v6015
      %v6066 = vadd.f32 %v5926, %v6017
      %v6067 = vadd.f32 %v5927, %v6019
      %v6068 = vadd.f32 %v5928, %v6021
      %v6069 = vadd.f32 %v5929, %v6023
      %v6070 = vadd.f32 %v5930, %v6025
      %v6071 = vadd.f32 %v5931, %v6027
      %v6072 = vadd.f32 %v5932, %v6029
      %v6073 = vadd.f32 %v5933, %v6031
      %v6074 = vadd.f32 %v5934, %v6033
      %v6075 = vadd.f32 %v5935, %v6035
      %v6076 = vadd.f32 %v6056, %v5956
      %v6077 = vadd.f32 %v6057, %v5957
      %v6078 = vadd.f32 %v6058, %v5958
      %v6079 = vadd.f32 %v6059, %v5959
      %v6080 = vadd.f32 %v6060, %v5960
      %v6081 = vadd.f32 %v6061, %v5961
      %v6082 = vadd.f32 %v6062, %v5962
      %v6083 = vadd.f32 %v6063, %v5963
      %v6084 = vadd.f32 %v6064, %v5964
      %v6085 = vadd.f32 %v6065, %v5965
      %v6086 = vadd.f32 %v6066, %v5966
      %v6087 = vadd.f32 %v6067, %v5967
      %v6088 = vadd.f32 %v6068, %v5968
      %v6089 = vadd.f32 %v6069, %v5969
      %v6090 = vadd.f32 %v6070, %v5970
      %v6091 = vadd.f32 %v6071, %v5971
      %v6092 = vadd.f32 %v6072, %v5972
      %v6093 = vadd.f32 %v6073, %v5973
      %v6094 = vadd.f32 %v6074, %v5974
      %v6095 = vadd.f32 %v6075, %v5975
      %v6096 = vld [vmem:[#allocation4 + $0x2] sm:$0xff]
      %v6097 = vld [vmem:[#allocation4 + $0x12] sm:$0xff]
      %v6098 = vld [vmem:[#allocation4 + $0x22] sm:$0xff]
      %v6099 = vld [vmem:[#allocation4 + $0x32] sm:$0xff]
      %v6100 = vld [vmem:[#allocation4 + $0x42] sm:$0xff]
      %v6101 = vld [vmem:[#allocation4 + $0x52] sm:$0xff]
      %v6102 = vld [vmem:[#allocation4 + $0x62] sm:$0xff]
      %v6103 = vld [vmem:[#allocation4 + $0x72] sm:$0xff]
      %v6104 = vld [vmem:[#allocation4 + $0x82] sm:$0xff]
      %v6105 = vld [vmem:[#allocation4 + $0x92] sm:$0xff]
      %v6106 = vld [vmem:[#allocation4 + $0xa2] sm:$0xff]
      %v6107 = vld [vmem:[#allocation4 + $0xb2] sm:$0xff]
      %v6108 = vld [vmem:[#allocation4 + $0xc2] sm:$0xff]
      %v6109 = vld [vmem:[#allocation4 + $0xd2] sm:$0xff]
      %v6110 = vld [vmem:[#allocation4 + $0xe2] sm:$0xff]
      %v6111 = vld [vmem:[#allocation4 + $0xf2] sm:$0xff]
      %v6112 = vld [vmem:[#allocation4 + $0x102] sm:$0xff]
      %v6113 = vld [vmem:[#allocation4 + $0x112] sm:$0xff]
      %v6114 = vld [vmem:[#allocation4 + $0x122] sm:$0xff]
      %v6115 = vld [vmem:[#allocation4 + $0x132] sm:$0xff]
      %v6116 = vmul.f32 %v6096, 0.125
      %v6117 = vmul.f32 %v6097, 0.125
      %v6118 = vmul.f32 %v6098, 0.125
      %v6119 = vmul.f32 %v6099, 0.125
      %v6120 = vmul.f32 %v6100, 0.125
      %v6121 = vmul.f32 %v6101, 0.125
      %v6122 = vmul.f32 %v6102, 0.125
      %v6123 = vmul.f32 %v6103, 0.125
      %v6124 = vmul.f32 %v6104, 0.125
      %v6125 = vmul.f32 %v6105, 0.125
      %v6126 = vmul.f32 %v6106, 0.125
      %v6127 = vmul.f32 %v6107, 0.125
      %v6128 = vmul.f32 %v6108, 0.125
      %v6129 = vmul.f32 %v6109, 0.125
      %v6130 = vmul.f32 %v6110, 0.125
      %v6131 = vmul.f32 %v6111, 0.125
      %v6132 = vmul.f32 %v6112, 0.125
      %v6133 = vmul.f32 %v6113, 0.125
      %v6134 = vmul.f32 %v6114, 0.125
      %v6135 = vmul.f32 %v6115, 0.125
      %6156 = vrot.lane.b32.xlu0 %v6116, 4
      %v6157 = vpop.permute.xlu0 %6156
      %6158 = vrot.lane.b32.xlu0 %v6117, 4
      %v6159 = vpop.permute.xlu0 %6158
      %6160 = vrot.lane.b32.xlu0 %v6118, 4
      %v6161 = vpop.permute.xlu0 %6160
      %6162 = vrot.lane.b32.xlu0 %v6119, 4
      %v6163 = vpop.permute.xlu0 %6162
      %6164 = vrot.lane.b32.xlu0 %v6120, 4
      %v6165 = vpop.permute.xlu0 %6164
      %6166 = vrot.lane.b32.xlu0 %v6121, 4
      %v6167 = vpop.permute.xlu0 %6166
      %6168 = vrot.lane.b32.xlu0 %v6122, 4
      %v6169 = vpop.permute.xlu0 %6168
      %6170 = vrot.lane.b32.xlu0 %v6123, 4
      %v6171 = vpop.permute.xlu0 %6170
      %6172 = vrot.lane.b32.xlu0 %v6124, 4
      %v6173 = vpop.permute.xlu0 %6172
      %6174 = vrot.lane.b32.xlu0 %v6125, 4
      %v6175 = vpop.permute.xlu0 %6174
      %6176 = vrot.lane.b32.xlu0 %v6126, 4
      %v6177 = vpop.permute.xlu0 %6176
      %6178 = vrot.lane.b32.xlu0 %v6127, 4
      %v6179 = vpop.permute.xlu0 %6178
      %6180 = vrot.lane.b32.xlu0 %v6128, 4
      %v6181 = vpop.permute.xlu0 %6180
      %6182 = vrot.lane.b32.xlu0 %v6129, 4
      %v6183 = vpop.permute.xlu0 %6182
      %6184 = vrot.lane.b32.xlu0 %v6130, 4
      %v6185 = vpop.permute.xlu0 %6184
      %6186 = vrot.lane.b32.xlu0 %v6131, 4
      %v6187 = vpop.permute.xlu0 %6186
      %6188 = vrot.lane.b32.xlu0 %v6132, 4
      %v6189 = vpop.permute.xlu0 %6188
      %6190 = vrot.lane.b32.xlu0 %v6133, 4
      %v6191 = vpop.permute.xlu0 %6190
      %6192 = vrot.lane.b32.xlu0 %v6134, 4
      %v6193 = vpop.permute.xlu0 %6192
      %6194 = vrot.lane.b32.xlu0 %v6135, 4
      %v6195 = vpop.permute.xlu0 %6194
      %v6216 = vadd.f32 %v6076, %v6157
      %v6217 = vadd.f32 %v6077, %v6159
      %v6218 = vadd.f32 %v6078, %v6161
      %v6219 = vadd.f32 %v6079, %v6163
      %v6220 = vadd.f32 %v6080, %v6165
      %v6221 = vadd.f32 %v6081, %v6167
      %v6222 = vadd.f32 %v6082, %v6169
      %v6223 = vadd.f32 %v6083, %v6171
      %v6224 = vadd.f32 %v6084, %v6173
      %v6225 = vadd.f32 %v6085, %v6175
      %v6226 = vadd.f32 %v6086, %v6177
      %v6227 = vadd.f32 %v6087, %v6179
      %v6228 = vadd.f32 %v6088, %v6181
      %v6229 = vadd.f32 %v6089, %v6183
      %v6230 = vadd.f32 %v6090, %v6185
      %v6231 = vadd.f32 %v6091, %v6187
      %v6232 = vadd.f32 %v6092, %v6189
      %v6233 = vadd.f32 %v6093, %v6191
      %v6234 = vadd.f32 %v6094, %v6193
      %v6235 = vadd.f32 %v6095, %v6195
      %6236 = vst.msk [vmem:[#allocation5] sm:$0xff] %vm5055, %v6216
      %6237 = vst.msk [vmem:[#allocation5 + $0x10] sm:$0xff] %vm5055, %v6217
      %6238 = vst.msk [vmem:[#allocation5 + $0x20] sm:$0xff] %vm5055, %v6218
      %6239 = vst.msk [vmem:[#allocation5 + $0x30] sm:$0xff] %vm5055, %v6219
      %6240 = vst.msk [vmem:[#allocation5 + $0x40] sm:$0xff] %vm5055, %v6220
      %6241 = vst.msk [vmem:[#allocation5 + $0x50] sm:$0xff] %vm5055, %v6221
      %6242 = vst.msk [vmem:[#allocation5 + $0x60] sm:$0xff] %vm5055, %v6222
      %6243 = vst.msk [vmem:[#allocation5 + $0x70] sm:$0xff] %vm5055, %v6223
      %6244 = vst.msk [vmem:[#allocation5 + $0x80] sm:$0xff] %vm5055, %v6224
      %6245 = vst.msk [vmem:[#allocation5 + $0x90] sm:$0xff] %vm5055, %v6225
      %6246 = vst.msk [vmem:[#allocation5 + $0xa0] sm:$0xff] %vm5055, %v6226
      %6247 = vst.msk [vmem:[#allocation5 + $0xb0] sm:$0xff] %vm5055, %v6227
      %6248 = vst.msk [vmem:[#allocation5 + $0xc0] sm:$0xff] %vm5055, %v6228
      %6249 = vst.msk [vmem:[#allocation5 + $0xd0] sm:$0xff] %vm5055, %v6229
      %6250 = vst.msk [vmem:[#allocation5 + $0xe0] sm:$0xff] %vm5055, %v6230
      %6251 = vst.msk [vmem:[#allocation5 + $0xf0] sm:$0xff] %vm5055, %v6231
      %6252 = vst.msk [vmem:[#allocation5 + $0x100] sm:$0xff] %vm5055, %v6232
      %6253 = vst.msk [vmem:[#allocation5 + $0x110] sm:$0xff] %vm5055, %v6233
      %6254 = vst.msk [vmem:[#allocation5 + $0x120] sm:$0xff] %vm5055, %v6234
      %6255 = vst.msk [vmem:[#allocation5 + $0x130] sm:$0xff] %vm5055, %v6235
      %v6256 = vld [vmem:[#allocation5] sm:$0xff]
      %v6257 = vld [vmem:[#allocation5 + $0x8] sm:$0x1]
      %v6258 = vld [vmem:[#allocation5 + $0x10] sm:$0xff]
      %v6259 = vld [vmem:[#allocation5 + $0x18] sm:$0x1]
      %v6260 = vld [vmem:[#allocation5 + $0x20] sm:$0xff]
      %v6261 = vld [vmem:[#allocation5 + $0x28] sm:$0x1]
      %v6262 = vld [vmem:[#allocation5 + $0x30] sm:$0xff]
      %v6263 = vld [vmem:[#allocation5 + $0x38] sm:$0x1]
      %v6264 = vld [vmem:[#allocation5 + $0x40] sm:$0xff]
      %v6265 = vld [vmem:[#allocation5 + $0x48] sm:$0x1]
      %v6266 = vld [vmem:[#allocation5 + $0x50] sm:$0xff]
      %v6267 = vld [vmem:[#allocation5 + $0x58] sm:$0x1]
      %v6268 = vld [vmem:[#allocation5 + $0x60] sm:$0xff]
      %v6269 = vld [vmem:[#allocation5 + $0x68] sm:$0x1]
      %v6270 = vld [vmem:[#allocation5 + $0x70] sm:$0xff]
      %v6271 = vld [vmem:[#allocation5 + $0x78] sm:$0x1]
      %v6272 = vld [vmem:[#allocation5 + $0x80] sm:$0xff]
      %v6273 = vld [vmem:[#allocation5 + $0x88] sm:$0x1]
      %v6274 = vld [vmem:[#allocation5 + $0x90] sm:$0xff]
      %v6275 = vld [vmem:[#allocation5 + $0x98] sm:$0x1]
      %v6276 = vld [vmem:[#allocation5 + $0xa0] sm:$0xff]
      %v6277 = vld [vmem:[#allocation5 + $0xa8] sm:$0x1]
      %v6278 = vld [vmem:[#allocation5 + $0xb0] sm:$0xff]
      %v6279 = vld [vmem:[#allocation5 + $0xb8] sm:$0x1]
      %v6280 = vld [vmem:[#allocation5 + $0xc0] sm:$0xff]
      %v6281 = vld [vmem:[#allocation5 + $0xc8] sm:$0x1]
      %v6282 = vld [vmem:[#allocation5 + $0xd0] sm:$0xff]
      %v6283 = vld [vmem:[#allocation5 + $0xd8] sm:$0x1]
      %v6284 = vld [vmem:[#allocation5 + $0xe0] sm:$0xff]
      %v6285 = vld [vmem:[#allocation5 + $0xe8] sm:$0x1]
      %v6286 = vld [vmem:[#allocation5 + $0xf0] sm:$0xff]
      %v6287 = vld [vmem:[#allocation5 + $0xf8] sm:$0x1]
      %v6288 = vld [vmem:[#allocation5 + $0x100] sm:$0xff]
      %v6289 = vld [vmem:[#allocation5 + $0x108] sm:$0x1]
      %v6290 = vmul.f32 %v6256, 0.125
      %v6291 = vmul.f32 %v6257, 0.125
      %v6292 = vmul.f32 %v6258, 0.125
      %v6293 = vmul.f32 %v6259, 0.125
      %v6294 = vmul.f32 %v6260, 0.125
      %v6295 = vmul.f32 %v6261, 0.125
      %v6296 = vmul.f32 %v6262, 0.125
      %v6297 = vmul.f32 %v6263, 0.125
      %v6298 = vmul.f32 %v6264, 0.125
      %v6299 = vmul.f32 %v6265, 0.125
      %v6300 = vmul.f32 %v6266, 0.125
      %v6301 = vmul.f32 %v6267, 0.125
      %v6302 = vmul.f32 %v6268, 0.125
      %v6303 = vmul.f32 %v6269, 0.125
      %v6304 = vmul.f32 %v6270, 0.125
      %v6305 = vmul.f32 %v6271, 0.125
      %v6306 = vmul.f32 %v6272, 0.125
      %v6307 = vmul.f32 %v6273, 0.125
      %v6308 = vmul.f32 %v6274, 0.125
      %v6309 = vmul.f32 %v6275, 0.125
      %v6310 = vmul.f32 %v6276, 0.125
      %v6311 = vmul.f32 %v6277, 0.125
      %v6312 = vmul.f32 %v6278, 0.125
      %v6313 = vmul.f32 %v6279, 0.125
      %v6314 = vmul.f32 %v6280, 0.125
      %v6315 = vmul.f32 %v6281, 0.125
      %v6316 = vmul.f32 %v6282, 0.125
      %v6317 = vmul.f32 %v6283, 0.125
      %v6318 = vmul.f32 %v6284, 0.125
      %v6319 = vmul.f32 %v6285, 0.125
      %v6320 = vmul.f32 %v6286, 0.125
      %v6321 = vmul.f32 %v6287, 0.125
      %v6322 = vmul.f32 %v6288, 0.125
      %v6323 = vmul.f32 %v6289, 0.125
      %v6324 = vadd.f32 %v6290, 0.0
      %v6325 = vadd.f32 %v6291, 0.0
      %v6326 = vadd.f32 %v6292, 0.0
      %v6327 = vadd.f32 %v6293, 0.0
      %v6328 = vadd.f32 %v6294, 0.0
      %v6329 = vadd.f32 %v6295, 0.0
      %v6330 = vadd.f32 %v6296, 0.0
      %v6331 = vadd.f32 %v6297, 0.0
      %v6332 = vadd.f32 %v6298, 0.0
      %v6333 = vadd.f32 %v6299, 0.0
      %v6334 = vadd.f32 %v6300, 0.0
      %v6335 = vadd.f32 %v6301, 0.0
      %v6336 = vadd.f32 %v6302, 0.0
      %v6337 = vadd.f32 %v6303, 0.0
      %v6338 = vadd.f32 %v6304, 0.0
      %v6339 = vadd.f32 %v6305, 0.0
      %v6340 = vadd.f32 %v6306, 0.0
      %v6341 = vadd.f32 %v6307, 0.0
      %v6342 = vadd.f32 %v6308, 0.0
      %v6343 = vadd.f32 %v6309, 0.0
      %v6344 = vadd.f32 %v6310, 0.0
      %v6345 = vadd.f32 %v6311, 0.0
      %v6346 = vadd.f32 %v6312, 0.0
      %v6347 = vadd.f32 %v6313, 0.0
      %v6348 = vadd.f32 %v6314, 0.0
      %v6349 = vadd.f32 %v6315, 0.0
      %v6350 = vadd.f32 %v6316, 0.0
      %v6351 = vadd.f32 %v6317, 0.0
      %v6352 = vadd.f32 %v6318, 0.0
      %v6353 = vadd.f32 %v6319, 0.0
      %v6354 = vadd.f32 %v6320, 0.0
      %v6355 = vadd.f32 %v6321, 0.0
      %v6356 = vadd.f32 %v6322, 0.0
      %v6357 = vadd.f32 %v6323, 0.0
      %s6358 = scalar_lea.vmem [#allocation5], 16
      %v6359 = vld [vmem:[%s6358] sm:$0xff]
      %v6360 = vld [vmem:[%s6358 + $0x8] sm:$0x1]
      %v6361 = vld [vmem:[%s6358 + $0x10] sm:$0xff]
      %v6362 = vld [vmem:[%s6358 + $0x18] sm:$0x1]
      %v6363 = vld [vmem:[%s6358 + $0x20] sm:$0xff]
      %v6364 = vld [vmem:[%s6358 + $0x28] sm:$0x1]
      %v6365 = vld [vmem:[%s6358 + $0x30] sm:$0xff]
      %v6366 = vld [vmem:[%s6358 + $0x38] sm:$0x1]
      %v6367 = vld [vmem:[%s6358 + $0x40] sm:$0xff]
      %v6368 = vld [vmem:[%s6358 + $0x48] sm:$0x1]
      %v6369 = vld [vmem:[%s6358 + $0x50] sm:$0xff]
      %v6370 = vld [vmem:[%s6358 + $0x58] sm:$0x1]
      %v6371 = vld [vmem:[%s6358 + $0x60] sm:$0xff]
      %v6372 = vld [vmem:[%s6358 + $0x68] sm:$0x1]
      %v6373 = vld [vmem:[%s6358 + $0x70] sm:$0xff]
      %v6374 = vld [vmem:[%s6358 + $0x78] sm:$0x1]
      %v6375 = vld [vmem:[%s6358 + $0x80] sm:$0xff]
      %v6376 = vld [vmem:[%s6358 + $0x88] sm:$0x1]
      %v6377 = vld [vmem:[%s6358 + $0x90] sm:$0xff]
      %v6378 = vld [vmem:[%s6358 + $0x98] sm:$0x1]
      %v6379 = vld [vmem:[%s6358 + $0xa0] sm:$0xff]
      %v6380 = vld [vmem:[%s6358 + $0xa8] sm:$0x1]
      %v6381 = vld [vmem:[%s6358 + $0xb0] sm:$0xff]
      %v6382 = vld [vmem:[%s6358 + $0xb8] sm:$0x1]
      %v6383 = vld [vmem:[%s6358 + $0xc0] sm:$0xff]
      %v6384 = vld [vmem:[%s6358 + $0xc8] sm:$0x1]
      %v6385 = vld [vmem:[%s6358 + $0xd0] sm:$0xff]
      %v6386 = vld [vmem:[%s6358 + $0xd8] sm:$0x1]
      %v6387 = vld [vmem:[%s6358 + $0xe0] sm:$0xff]
      %v6388 = vld [vmem:[%s6358 + $0xe8] sm:$0x1]
      %v6389 = vld [vmem:[%s6358 + $0xf0] sm:$0xff]
      %v6390 = vld [vmem:[%s6358 + $0xf8] sm:$0x1]
      %v6391 = vld [vmem:[%s6358 + $0x100] sm:$0xff]
      %v6392 = vld [vmem:[%s6358 + $0x108] sm:$0x1]
      %v6393 = vmul.f32 %v6359, 0.375
      %v6394 = vmul.f32 %v6360, 0.375
      %v6395 = vmul.f32 %v6361, 0.375
      %v6396 = vmul.f32 %v6362, 0.375
      %v6397 = vmul.f32 %v6363, 0.375
      %v6398 = vmul.f32 %v6364, 0.375
      %v6399 = vmul.f32 %v6365, 0.375
      %v6400 = vmul.f32 %v6366, 0.375
      %v6401 = vmul.f32 %v6367, 0.375
      %v6402 = vmul.f32 %v6368, 0.375
      %v6403 = vmul.f32 %v6369, 0.375
      %v6404 = vmul.f32 %v6370, 0.375
      %v6405 = vmul.f32 %v6371, 0.375
      %v6406 = vmul.f32 %v6372, 0.375
      %v6407 = vmul.f32 %v6373, 0.375
      %v6408 = vmul.f32 %v6374, 0.375
      %v6409 = vmul.f32 %v6375, 0.375
      %v6410 = vmul.f32 %v6376, 0.375
      %v6411 = vmul.f32 %v6377, 0.375
      %v6412 = vmul.f32 %v6378, 0.375
      %v6413 = vmul.f32 %v6379, 0.375
      %v6414 = vmul.f32 %v6380, 0.375
      %v6415 = vmul.f32 %v6381, 0.375
      %v6416 = vmul.f32 %v6382, 0.375
      %v6417 = vmul.f32 %v6383, 0.375
      %v6418 = vmul.f32 %v6384, 0.375
      %v6419 = vmul.f32 %v6385, 0.375
      %v6420 = vmul.f32 %v6386, 0.375
      %v6421 = vmul.f32 %v6387, 0.375
      %v6422 = vmul.f32 %v6388, 0.375
      %v6423 = vmul.f32 %v6389, 0.375
      %v6424 = vmul.f32 %v6390, 0.375
      %v6425 = vmul.f32 %v6391, 0.375
      %v6426 = vmul.f32 %v6392, 0.375
      %v6427 = vadd.f32 %v6324, %v6393
      %v6428 = vadd.f32 %v6325, %v6394
      %v6429 = vadd.f32 %v6326, %v6395
      %v6430 = vadd.f32 %v6327, %v6396
      %v6431 = vadd.f32 %v6328, %v6397
      %v6432 = vadd.f32 %v6329, %v6398
      %v6433 = vadd.f32 %v6330, %v6399
      %v6434 = vadd.f32 %v6331, %v6400
      %v6435 = vadd.f32 %v6332, %v6401
      %v6436 = vadd.f32 %v6333, %v6402
      %v6437 = vadd.f32 %v6334, %v6403
      %v6438 = vadd.f32 %v6335, %v6404
      %v6439 = vadd.f32 %v6336, %v6405
      %v6440 = vadd.f32 %v6337, %v6406
      %v6441 = vadd.f32 %v6338, %v6407
      %v6442 = vadd.f32 %v6339, %v6408
      %v6443 = vadd.f32 %v6340, %v6409
      %v6444 = vadd.f32 %v6341, %v6410
      %v6445 = vadd.f32 %v6342, %v6411
      %v6446 = vadd.f32 %v6343, %v6412
      %v6447 = vadd.f32 %v6344, %v6413
      %v6448 = vadd.f32 %v6345, %v6414
      %v6449 = vadd.f32 %v6346, %v6415
      %v6450 = vadd.f32 %v6347, %v6416
      %v6451 = vadd.f32 %v6348, %v6417
      %v6452 = vadd.f32 %v6349, %v6418
      %v6453 = vadd.f32 %v6350, %v6419
      %v6454 = vadd.f32 %v6351, %v6420
      %v6455 = vadd.f32 %v6352, %v6421
      %v6456 = vadd.f32 %v6353, %v6422
      %v6457 = vadd.f32 %v6354, %v6423
      %v6458 = vadd.f32 %v6355, %v6424
      %v6459 = vadd.f32 %v6356, %v6425
      %v6460 = vadd.f32 %v6357, %v6426
      %s6461 = scalar_lea.vmem [#allocation5], 32
      %v6462 = vld [vmem:[%s6461] sm:$0xff]
      %v6463 = vld [vmem:[%s6461 + $0x8] sm:$0x1]
      %v6464 = vld [vmem:[%s6461 + $0x10] sm:$0xff]
      %v6465 = vld [vmem:[%s6461 + $0x18] sm:$0x1]
      %v6466 = vld [vmem:[%s6461 + $0x20] sm:$0xff]
      %v6467 = vld [vmem:[%s6461 + $0x28] sm:$0x1]
      %v6468 = vld [vmem:[%s6461 + $0x30] sm:$0xff]
      %v6469 = vld [vmem:[%s6461 + $0x38] sm:$0x1]
      %v6470 = vld [vmem:[%s6461 + $0x40] sm:$0xff]
      %v6471 = vld [vmem:[%s6461 + $0x48] sm:$0x1]
      %v6472 = vld [vmem:[%s6461 + $0x50] sm:$0xff]
      %v6473 = vld [vmem:[%s6461 + $0x58] sm:$0x1]
      %v6474 = vld [vmem:[%s6461 + $0x60] sm:$0xff]
      %v6475 = vld [vmem:[%s6461 + $0x68] sm:$0x1]
      %v6476 = vld [vmem:[%s6461 + $0x70] sm:$0xff]
      %v6477 = vld [vmem:[%s6461 + $0x78] sm:$0x1]
      %v6478 = vld [vmem:[%s6461 + $0x80] sm:$0xff]
      %v6479 = vld [vmem:[%s6461 + $0x88] sm:$0x1]
      %v6480 = vld [vmem:[%s6461 + $0x90] sm:$0xff]
      %v6481 = vld [vmem:[%s6461 + $0x98] sm:$0x1]
      %v6482 = vld [vmem:[%s6461 + $0xa0] sm:$0xff]
      %v6483 = vld [vmem:[%s6461 + $0xa8] sm:$0x1]
      %v6484 = vld [vmem:[%s6461 + $0xb0] sm:$0xff]
      %v6485 = vld [vmem:[%s6461 + $0xb8] sm:$0x1]
      %v6486 = vld [vmem:[%s6461 + $0xc0] sm:$0xff]
      %v6487 = vld [vmem:[%s6461 + $0xc8] sm:$0x1]
      %v6488 = vld [vmem:[%s6461 + $0xd0] sm:$0xff]
      %v6489 = vld [vmem:[%s6461 + $0xd8] sm:$0x1]
      %v6490 = vld [vmem:[%s6461 + $0xe0] sm:$0xff]
      %v6491 = vld [vmem:[%s6461 + $0xe8] sm:$0x1]
      %v6492 = vld [vmem:[%s6461 + $0xf0] sm:$0xff]
      %v6493 = vld [vmem:[%s6461 + $0xf8] sm:$0x1]
      %v6494 = vld [vmem:[%s6461 + $0x100] sm:$0xff]
      %v6495 = vld [vmem:[%s6461 + $0x108] sm:$0x1]
      %v6496 = vmul.f32 %v6462, 0.375
      %v6497 = vmul.f32 %v6463, 0.375
      %v6498 = vmul.f32 %v6464, 0.375
      %v6499 = vmul.f32 %v6465, 0.375
      %v6500 = vmul.f32 %v6466, 0.375
      %v6501 = vmul.f32 %v6467, 0.375
      %v6502 = vmul.f32 %v6468, 0.375
      %v6503 = vmul.f32 %v6469, 0.375
      %v6504 = vmul.f32 %v6470, 0.375
      %v6505 = vmul.f32 %v6471, 0.375
      %v6506 = vmul.f32 %v6472, 0.375
      %v6507 = vmul.f32 %v6473, 0.375
      %v6508 = vmul.f32 %v6474, 0.375
      %v6509 = vmul.f32 %v6475, 0.375
      %v6510 = vmul.f32 %v6476, 0.375
      %v6511 = vmul.f32 %v6477, 0.375
      %v6512 = vmul.f32 %v6478, 0.375
      %v6513 = vmul.f32 %v6479, 0.375
      %v6514 = vmul.f32 %v6480, 0.375
      %v6515 = vmul.f32 %v6481, 0.375
      %v6516 = vmul.f32 %v6482, 0.375
      %v6517 = vmul.f32 %v6483, 0.375
      %v6518 = vmul.f32 %v6484, 0.375
      %v6519 = vmul.f32 %v6485, 0.375
      %v6520 = vmul.f32 %v6486, 0.375
      %v6521 = vmul.f32 %v6487, 0.375
      %v6522 = vmul.f32 %v6488, 0.375
      %v6523 = vmul.f32 %v6489, 0.375
      %v6524 = vmul.f32 %v6490, 0.375
      %v6525 = vmul.f32 %v6491, 0.375
      %v6526 = vmul.f32 %v6492, 0.375
      %v6527 = vmul.f32 %v6493, 0.375
      %v6528 = vmul.f32 %v6494, 0.375
      %v6529 = vmul.f32 %v6495, 0.375
      %v6530 = vadd.f32 %v6427, %v6496
      %v6531 = vadd.f32 %v6428, %v6497
      %v6532 = vadd.f32 %v6429, %v6498
      %v6533 = vadd.f32 %v6430, %v6499
      %v6534 = vadd.f32 %v6431, %v6500
      %v6535 = vadd.f32 %v6432, %v6501
      %v6536 = vadd.f32 %v6433, %v6502
      %v6537 = vadd.f32 %v6434, %v6503
      %v6538 = vadd.f32 %v6435, %v6504
      %v6539 = vadd.f32 %v6436, %v6505
      %v6540 = vadd.f32 %v6437, %v6506
      %v6541 = vadd.f32 %v6438, %v6507
      %v6542 = vadd.f32 %v6439, %v6508
      %v6543 = vadd.f32 %v6440, %v6509
      %v6544 = vadd.f32 %v6441, %v6510
      %v6545 = vadd.f32 %v6442, %v6511
      %v6546 = vadd.f32 %v6443, %v6512
      %v6547 = vadd.f32 %v6444, %v6513
      %v6548 = vadd.f32 %v6445, %v6514
      %v6549 = vadd.f32 %v6446, %v6515
      %v6550 = vadd.f32 %v6447, %v6516
      %v6551 = vadd.f32 %v6448, %v6517
      %v6552 = vadd.f32 %v6449, %v6518
      %v6553 = vadd.f32 %v6450, %v6519
      %v6554 = vadd.f32 %v6451, %v6520
      %v6555 = vadd.f32 %v6452, %v6521
      %v6556 = vadd.f32 %v6453, %v6522
      %v6557 = vadd.f32 %v6454, %v6523
      %v6558 = vadd.f32 %v6455, %v6524
      %v6559 = vadd.f32 %v6456, %v6525
      %v6560 = vadd.f32 %v6457, %v6526
      %v6561 = vadd.f32 %v6458, %v6527
      %v6562 = vadd.f32 %v6459, %v6528
      %v6563 = vadd.f32 %v6460, %v6529
      %s6564 = scalar_lea.vmem [#allocation5], 48
      %v6565 = vld [vmem:[%s6564] sm:$0xff]
      %v6566 = vld [vmem:[%s6564 + $0x8] sm:$0x1]
      %v6567 = vld [vmem:[%s6564 + $0x10] sm:$0xff]
      %v6568 = vld [vmem:[%s6564 + $0x18] sm:$0x1]
      %v6569 = vld [vmem:[%s6564 + $0x20] sm:$0xff]
      %v6570 = vld [vmem:[%s6564 + $0x28] sm:$0x1]
      %v6571 = vld [vmem:[%s6564 + $0x30] sm:$0xff]
      %v6572 = vld [vmem:[%s6564 + $0x38] sm:$0x1]
      %v6573 = vld [vmem:[%s6564 + $0x40] sm:$0xff]
      %v6574 = vld [vmem:[%s6564 + $0x48] sm:$0x1]
      %v6575 = vld [vmem:[%s6564 + $0x50] sm:$0xff]
      %v6576 = vld [vmem:[%s6564 + $0x58] sm:$0x1]
      %v6577 = vld [vmem:[%s6564 + $0x60] sm:$0xff]
      %v6578 = vld [vmem:[%s6564 + $0x68] sm:$0x1]
      %v6579 = vld [vmem:[%s6564 + $0x70] sm:$0xff]
      %v6580 = vld [vmem:[%s6564 + $0x78] sm:$0x1]
      %v6581 = vld [vmem:[%s6564 + $0x80] sm:$0xff]
      %v6582 = vld [vmem:[%s6564 + $0x88] sm:$0x1]
      %v6583 = vld [vmem:[%s6564 + $0x90] sm:$0xff]
      %v6584 = vld [vmem:[%s6564 + $0x98] sm:$0x1]
      %v6585 = vld [vmem:[%s6564 + $0xa0] sm:$0xff]
      %v6586 = vld [vmem:[%s6564 + $0xa8] sm:$0x1]
      %v6587 = vld [vmem:[%s6564 + $0xb0] sm:$0xff]
      %v6588 = vld [vmem:[%s6564 + $0xb8] sm:$0x1]
      %v6589 = vld [vmem:[%s6564 + $0xc0] sm:$0xff]
      %v6590 = vld [vmem:[%s6564 + $0xc8] sm:$0x1]
      %v6591 = vld [vmem:[%s6564 + $0xd0] sm:$0xff]
      %v6592 = vld [vmem:[%s6564 + $0xd8] sm:$0x1]
      %v6593 = vld [vmem:[%s6564 + $0xe0] sm:$0xff]
      %v6594 = vld [vmem:[%s6564 + $0xe8] sm:$0x1]
      %v6595 = vld [vmem:[%s6564 + $0xf0] sm:$0xff]
      %v6596 = vld [vmem:[%s6564 + $0xf8] sm:$0x1]
      %v6597 = vld [vmem:[%s6564 + $0x100] sm:$0xff]
      %v6598 = vld [vmem:[%s6564 + $0x108] sm:$0x1]
      %v6599 = vmul.f32 %v6565, 0.125
      %v6600 = vmul.f32 %v6566, 0.125
      %v6601 = vmul.f32 %v6567, 0.125
      %v6602 = vmul.f32 %v6568, 0.125
      %v6603 = vmul.f32 %v6569, 0.125
      %v6604 = vmul.f32 %v6570, 0.125
      %v6605 = vmul.f32 %v6571, 0.125
      %v6606 = vmul.f32 %v6572, 0.125
      %v6607 = vmul.f32 %v6573, 0.125
      %v6608 = vmul.f32 %v6574, 0.125
      %v6609 = vmul.f32 %v6575, 0.125
      %v6610 = vmul.f32 %v6576, 0.125
      %v6611 = vmul.f32 %v6577, 0.125
      %v6612 = vmul.f32 %v6578, 0.125
      %v6613 = vmul.f32 %v6579, 0.125
      %v6614 = vmul.f32 %v6580, 0.125
      %v6615 = vmul.f32 %v6581, 0.125
      %v6616 = vmul.f32 %v6582, 0.125
      %v6617 = vmul.f32 %v6583, 0.125
      %v6618 = vmul.f32 %v6584, 0.125
      %v6619 = vmul.f32 %v6585, 0.125
      %v6620 = vmul.f32 %v6586, 0.125
      %v6621 = vmul.f32 %v6587, 0.125
      %v6622 = vmul.f32 %v6588, 0.125
      %v6623 = vmul.f32 %v6589, 0.125
      %v6624 = vmul.f32 %v6590, 0.125
      %v6625 = vmul.f32 %v6591, 0.125
      %v6626 = vmul.f32 %v6592, 0.125
      %v6627 = vmul.f32 %v6593, 0.125
      %v6628 = vmul.f32 %v6594, 0.125
      %v6629 = vmul.f32 %v6595, 0.125
      %v6630 = vmul.f32 %v6596, 0.125
      %v6631 = vmul.f32 %v6597, 0.125
      %v6632 = vmul.f32 %v6598, 0.125
      %v6633 = vadd.f32 %v6530, %v6599
      %v6634 = vadd.f32 %v6531, %v6600
      %v6635 = vadd.f32 %v6532, %v6601
      %v6636 = vadd.f32 %v6533, %v6602
      %v6637 = vadd.f32 %v6534, %v6603
      %v6638 = vadd.f32 %v6535, %v6604
      %v6639 = vadd.f32 %v6536, %v6605
      %v6640 = vadd.f32 %v6537, %v6606
      %v6641 = vadd.f32 %v6538, %v6607
      %v6642 = vadd.f32 %v6539, %v6608
      %v6643 = vadd.f32 %v6540, %v6609
      %v6644 = vadd.f32 %v6541, %v6610
      %v6645 = vadd.f32 %v6542, %v6611
      %v6646 = vadd.f32 %v6543, %v6612
      %v6647 = vadd.f32 %v6544, %v6613
      %v6648 = vadd.f32 %v6545, %v6614
      %v6649 = vadd.f32 %v6546, %v6615
      %v6650 = vadd.f32 %v6547, %v6616
      %v6651 = vadd.f32 %v6548, %v6617
      %v6652 = vadd.f32 %v6549, %v6618
      %v6653 = vadd.f32 %v6550, %v6619
      %v6654 = vadd.f32 %v6551, %v6620
      %v6655 = vadd.f32 %v6552, %v6621
      %v6656 = vadd.f32 %v6553, %v6622
      %v6657 = vadd.f32 %v6554, %v6623
      %v6658 = vadd.f32 %v6555, %v6624
      %v6659 = vadd.f32 %v6556, %v6625
      %v6660 = vadd.f32 %v6557, %v6626
      %v6661 = vadd.f32 %v6558, %v6627
      %v6662 = vadd.f32 %v6559, %v6628
      %v6663 = vadd.f32 %v6560, %v6629
      %v6664 = vadd.f32 %v6561, %v6630
      %v6665 = vadd.f32 %v6562, %v6631
      %v6666 = vadd.f32 %v6563, %v6632
      %v6667 = vpack.c.bf16 %v6633, %v6633
      %v6668 = vpack.c.bf16 %v6637, %v6637
      %v6669 = vpack.c.bf16 %v6641, %v6641
      %v6670 = vpack.c.bf16 %v6645, %v6645
      %v6671 = vpack.c.bf16 %v6649, %v6649
      %v6672 = vpack.c.bf16 %v6653, %v6653
      %v6673 = vpack.c.bf16 %v6657, %v6657
      %v6674 = vpack.c.bf16 %v6661, %v6661
      %6675 = vst.msk [vmem:[#allocation3] sm:$0xf] %vm869, %v6667
      %6676 = vst.msk [vmem:[#allocation3 + $0x4] sm:$0xf] %vm869, %v6668
      %6677 = vst.msk [vmem:[#allocation3 + $0x8] sm:$0xf] %vm869, %v6669
      %6678 = vst.msk [vmem:[#allocation3 + $0xc] sm:$0xf] %vm869, %v6670
      %6679 = vst.msk [vmem:[#allocation3 + $0x10] sm:$0xf] %vm869, %v6671
      %6680 = vst.msk [vmem:[#allocation3 + $0x14] sm:$0xf] %vm869, %v6672
      %6681 = vst.msk [vmem:[#allocation3 + $0x18] sm:$0xf] %vm869, %v6673
      %6682 = vst.msk [vmem:[#allocation3 + $0x1c] sm:$0xf] %vm869, %v6674
      %6683 = vst.msk [vmem:[#allocation3] sm:$0xf] %vm431, %v6667
      %6684 = vst.msk [vmem:[#allocation3 + $0x4] sm:$0xf] %vm431, %v6668
      %6685 = vst.msk [vmem:[#allocation3 + $0x8] sm:$0xf] %vm431, %v6669
      %6686 = vst.msk [vmem:[#allocation3 + $0xc] sm:$0xf] %vm431, %v6670
      %6687 = vst.msk [vmem:[#allocation3 + $0x10] sm:$0xf] %vm431, %v6671
      %6688 = vst.msk [vmem:[#allocation3 + $0x14] sm:$0xf] %vm431, %v6672
      %6689 = vst.msk [vmem:[#allocation3 + $0x18] sm:$0xf] %vm431, %v6673
      %6690 = vst.msk [vmem:[#allocation3 + $0x1c] sm:$0xf] %vm431, %v6674
      %v6691 = vpack.c.bf16 %v6634, %v6633
      %v6692 = vpack.c.bf16 %v6638, %v6637
      %v6693 = vpack.c.bf16 %v6642, %v6641
      %v6694 = vpack.c.bf16 %v6646, %v6645
      %v6695 = vpack.c.bf16 %v6650, %v6649
      %v6696 = vpack.c.bf16 %v6654, %v6653
      %v6697 = vpack.c.bf16 %v6658, %v6657
      %v6698 = vpack.c.bf16 %v6662, %v6661
      %v6707 = vunpack.c.l.b16 %v6691
      %v6708 = vunpack.c.h.b16 %v6691
      %v6709 = vunpack.c.l.b16 %v6692
      %v6710 = vunpack.c.h.b16 %v6692
      %v6711 = vunpack.c.l.b16 %v6693
      %v6712 = vunpack.c.h.b16 %v6693
      %v6713 = vunpack.c.l.b16 %v6694
      %v6714 = vunpack.c.h.b16 %v6694
      %v6715 = vunpack.c.l.b16 %v6695
      %v6716 = vunpack.c.h.b16 %v6695
      %v6717 = vunpack.c.l.b16 %v6696
      %v6718 = vunpack.c.h.b16 %v6696
      %v6719 = vunpack.c.l.b16 %v6697
      %v6720 = vunpack.c.h.b16 %v6697
      %v6721 = vunpack.c.l.b16 %v6698
      %v6722 = vunpack.c.h.b16 %v6698
      %v6723 = vpack.c.b16 %v6707, %v6707
      %v6724 = vpack.c.b16 %v6708, %v6708
      %v6725 = vpack.c.b16 %v6709, %v6709
      %v6726 = vpack.c.b16 %v6710, %v6710
      %v6727 = vpack.c.b16 %v6711, %v6711
      %v6728 = vpack.c.b16 %v6712, %v6712
      %v6729 = vpack.c.b16 %v6713, %v6713
      %v6730 = vpack.c.b16 %v6714, %v6714
      %v6731 = vpack.c.b16 %v6715, %v6715
      %v6732 = vpack.c.b16 %v6716, %v6716
      %v6733 = vpack.c.b16 %v6717, %v6717
      %v6734 = vpack.c.b16 %v6718, %v6718
      %v6735 = vpack.c.b16 %v6719, %v6719
      %v6736 = vpack.c.b16 %v6720, %v6720
      %v6737 = vpack.c.b16 %v6721, %v6721
      %v6738 = vpack.c.b16 %v6722, %v6722
      %v6740 = vshrl.u32 %v6723, 16
      %v6742 = vrot.slane %v6740, 4
      %v6743 = vshll.u32 %v6723, 16
      %v6745 = vrot.slane %v6743, 5
      %v6746 = vor.u32 %v6742, %v6745
      %v6747 = vrot.slane %v6746, 4
      %v6749 = vshll.u32 %v6724, 16
      %v6751 = vrot.slane %v6749, 5
      %v6752 = vsel %vm952, %v6747, %v6751
      %v6754 = vshrl.u32 %v6725, 16
      %v6756 = vrot.slane %v6754, 4
      %v6757 = vshll.u32 %v6725, 16
      %v6759 = vrot.slane %v6757, 5
      %v6760 = vor.u32 %v6756, %v6759
      %v6761 = vrot.slane %v6760, 4
      %v6763 = vshll.u32 %v6726, 16
      %v6765 = vrot.slane %v6763, 5
      %v6766 = vsel %vm952, %v6761, %v6765
      %v6768 = vshrl.u32 %v6727, 16
      %v6770 = vrot.slane %v6768, 4
      %v6771 = vshll.u32 %v6727, 16
      %v6773 = vrot.slane %v6771, 5
      %v6774 = vor.u32 %v6770, %v6773
      %v6775 = vrot.slane %v6774, 4
      %v6777 = vshll.u32 %v6728, 16
      %v6779 = vrot.slane %v6777, 5
      %v6780 = vsel %vm952, %v6775, %v6779
      %v6782 = vshrl.u32 %v6729, 16
      %v6784 = vrot.slane %v6782, 4
      %v6785 = vshll.u32 %v6729, 16
      %v6787 = vrot.slane %v6785, 5
      %v6788 = vor.u32 %v6784, %v6787
      %v6789 = vrot.slane %v6788, 4
      %v6791 = vshll.u32 %v6730, 16
      %v6793 = vrot.slane %v6791, 5
      %v6794 = vsel %vm952, %v6789, %v6793
      %v6796 = vshrl.u32 %v6731, 16
      %v6798 = vrot.slane %v6796, 4
      %v6799 = vshll.u32 %v6731, 16
      %v6801 = vrot.slane %v6799, 5
      %v6802 = vor.u32 %v6798, %v6801
      %v6803 = vrot.slane %v6802, 4
      %v6805 = vshll.u32 %v6732, 16
      %v6807 = vrot.slane %v6805, 5
      %v6808 = vsel %vm952, %v6803, %v6807
      %v6810 = vshrl.u32 %v6733, 16
      %v6812 = vrot.slane %v6810, 4
      %v6813 = vshll.u32 %v6733, 16
      %v6815 = vrot.slane %v6813, 5
      %v6816 = vor.u32 %v6812, %v6815
      %v6817 = vrot.slane %v6816, 4
      %v6819 = vshll.u32 %v6734, 16
      %v6821 = vrot.slane %v6819, 5
      %v6822 = vsel %vm952, %v6817, %v6821
      %v6824 = vshrl.u32 %v6735, 16
      %v6826 = vrot.slane %v6824, 4
      %v6827 = vshll.u32 %v6735, 16
      %v6829 = vrot.slane %v6827, 5
      %v6830 = vor.u32 %v6826, %v6829
      %v6831 = vrot.slane %v6830, 4
      %v6833 = vshll.u32 %v6736, 16
      %v6835 = vrot.slane %v6833, 5
      %v6836 = vsel %vm952, %v6831, %v6835
      %v6838 = vshrl.u32 %v6737, 16
      %v6840 = vrot.slane %v6838, 4
      %v6841 = vshll.u32 %v6737, 16
      %v6843 = vrot.slane %v6841, 5
      %v6844 = vor.u32 %v6840, %v6843
      %v6845 = vrot.slane %v6844, 4
      %v6847 = vshll.u32 %v6738, 16
      %v6849 = vrot.slane %v6847, 5
      %v6850 = vsel %vm952, %v6845, %v6849
      %6851 = vrot.lane.b32.xlu0 %v6752, 8
      %v6852 = vpop.permute.xlu0 %6851
      %6853 = vrot.lane.b32.xlu0 %v6766, 8
      %v6854 = vpop.permute.xlu0 %6853
      %6855 = vrot.lane.b32.xlu0 %v6780, 8
      %v6856 = vpop.permute.xlu0 %6855
      %6857 = vrot.lane.b32.xlu0 %v6794, 8
      %v6858 = vpop.permute.xlu0 %6857
      %6859 = vrot.lane.b32.xlu0 %v6808, 8
      %v6860 = vpop.permute.xlu0 %6859
      %6861 = vrot.lane.b32.xlu0 %v6822, 8
      %v6862 = vpop.permute.xlu0 %6861
      %6863 = vrot.lane.b32.xlu0 %v6836, 8
      %v6864 = vpop.permute.xlu0 %6863
      %6865 = vrot.lane.b32.xlu0 %v6850, 8
      %v6866 = vpop.permute.xlu0 %6865
      %6875 = vst.msk [vmem:[#allocation3] sm:$0xf] %vm1225, %v6852
      %6876 = vst.msk [vmem:[#allocation3 + $0x4] sm:$0xf] %vm1225, %v6854
      %6877 = vst.msk [vmem:[#allocation3 + $0x8] sm:$0xf] %vm1225, %v6856
      %6878 = vst.msk [vmem:[#allocation3 + $0xc] sm:$0xf] %vm1225, %v6858
      %6879 = vst.msk [vmem:[#allocation3 + $0x10] sm:$0xf] %vm1225, %v6860
      %6880 = vst.msk [vmem:[#allocation3 + $0x14] sm:$0xf] %vm1225, %v6862
      %6881 = vst.msk [vmem:[#allocation3 + $0x18] sm:$0xf] %vm1225, %v6864
      %6882 = vst.msk [vmem:[#allocation3 + $0x1c] sm:$0xf] %vm1225, %v6866
      %v6883 = vpack.c.bf16 %v6635, %v6635
      %v6884 = vpack.c.bf16 %v6639, %v6639
      %v6885 = vpack.c.bf16 %v6643, %v6643
      %v6886 = vpack.c.bf16 %v6647, %v6647
      %v6887 = vpack.c.bf16 %v6651, %v6651
      %v6888 = vpack.c.bf16 %v6655, %v6655
      %v6889 = vpack.c.bf16 %v6659, %v6659
      %v6890 = vpack.c.bf16 %v6663, %v6663
      %v6899 = vunpack.c.l.b16 %v6883
      %v6900 = vunpack.c.l.b16 %v6884
      %v6901 = vunpack.c.l.b16 %v6885
      %v6902 = vunpack.c.l.b16 %v6886
      %v6903 = vunpack.c.l.b16 %v6887
      %v6904 = vunpack.c.l.b16 %v6888
      %v6905 = vunpack.c.l.b16 %v6889
      %v6906 = vunpack.c.l.b16 %v6890
      %v6907 = vpack.c.b16 %v6899, %v6899
      %v6908 = vpack.c.b16 %v6900, %v6900
      %v6909 = vpack.c.b16 %v6901, %v6901
      %v6910 = vpack.c.b16 %v6902, %v6902
      %v6911 = vpack.c.b16 %v6903, %v6903
      %v6912 = vpack.c.b16 %v6904, %v6904
      %v6913 = vpack.c.b16 %v6905, %v6905
      %v6914 = vpack.c.b16 %v6906, %v6906
      %6915 = vrot.lane.b32.xlu0 %v6907, 12
      %v6916 = vpop.permute.xlu0 %6915
      %6917 = vrot.lane.b32.xlu0 %v6908, 12
      %v6918 = vpop.permute.xlu0 %6917
      %6919 = vrot.lane.b32.xlu0 %v6909, 12
      %v6920 = vpop.permute.xlu0 %6919
      %6921 = vrot.lane.b32.xlu0 %v6910, 12
      %v6922 = vpop.permute.xlu0 %6921
      %6923 = vrot.lane.b32.xlu0 %v6911, 12
      %v6924 = vpop.permute.xlu0 %6923
      %6925 = vrot.lane.b32.xlu0 %v6912, 12
      %v6926 = vpop.permute.xlu0 %6925
      %6927 = vrot.lane.b32.xlu0 %v6913, 12
      %v6928 = vpop.permute.xlu0 %6927
      %6929 = vrot.lane.b32.xlu0 %v6914, 12
      %v6930 = vpop.permute.xlu0 %6929
      %6939 = vst.msk [vmem:[#allocation3] sm:$0xf] %vm1322, %v6916
      %6940 = vst.msk [vmem:[#allocation3 + $0x4] sm:$0xf] %vm1322, %v6918
      %6941 = vst.msk [vmem:[#allocation3 + $0x8] sm:$0xf] %vm1322, %v6920
      %6942 = vst.msk [vmem:[#allocation3 + $0xc] sm:$0xf] %vm1322, %v6922
      %6943 = vst.msk [vmem:[#allocation3 + $0x10] sm:$0xf] %vm1322, %v6924
      %6944 = vst.msk [vmem:[#allocation3 + $0x14] sm:$0xf] %vm1322, %v6926
      %6945 = vst.msk [vmem:[#allocation3 + $0x18] sm:$0xf] %vm1322, %v6928
      %6946 = vst.msk [vmem:[#allocation3 + $0x1c] sm:$0xf] %vm1322, %v6930
      %6947 = vst.msk [vmem:[#allocation3] sm:$0xf] %vm1419, %v6916
      %6948 = vst.msk [vmem:[#allocation3 + $0x4] sm:$0xf] %vm1419, %v6918
      %6949 = vst.msk [vmem:[#allocation3 + $0x8] sm:$0xf] %vm1419, %v6920
      %6950 = vst.msk [vmem:[#allocation3 + $0xc] sm:$0xf] %vm1419, %v6922
      %6951 = vst.msk [vmem:[#allocation3 + $0x10] sm:$0xf] %vm1419, %v6924
      %6952 = vst.msk [vmem:[#allocation3 + $0x14] sm:$0xf] %vm1419, %v6926
      %6953 = vst.msk [vmem:[#allocation3 + $0x18] sm:$0xf] %vm1419, %v6928
      %6954 = vst.msk [vmem:[#allocation3 + $0x1c] sm:$0xf] %vm1419, %v6930
      %v6955 = vpack.c.bf16 %v6636, %v6635
      %v6956 = vpack.c.bf16 %v6640, %v6639
      %v6957 = vpack.c.bf16 %v6644, %v6643
      %v6958 = vpack.c.bf16 %v6648, %v6647
      %v6959 = vpack.c.bf16 %v6652, %v6651
      %v6960 = vpack.c.bf16 %v6656, %v6655
      %v6961 = vpack.c.bf16 %v6660, %v6659
      %v6962 = vpack.c.bf16 %v6664, %v6663
      %v6971 = vunpack.c.l.b16 %v6955
      %v6972 = vunpack.c.h.b16 %v6955
      %v6973 = vunpack.c.l.b16 %v6956
      %v6974 = vunpack.c.h.b16 %v6956
      %v6975 = vunpack.c.l.b16 %v6957
      %v6976 = vunpack.c.h.b16 %v6957
      %v6977 = vunpack.c.l.b16 %v6958
      %v6978 = vunpack.c.h.b16 %v6958
      %v6979 = vunpack.c.l.b16 %v6959
      %v6980 = vunpack.c.h.b16 %v6959
      %v6981 = vunpack.c.l.b16 %v6960
      %v6982 = vunpack.c.h.b16 %v6960
      %v6983 = vunpack.c.l.b16 %v6961
      %v6984 = vunpack.c.h.b16 %v6961
      %v6985 = vunpack.c.l.b16 %v6962
      %v6986 = vunpack.c.h.b16 %v6962
      %v6987 = vpack.c.b16 %v6971, %v6971
      %v6988 = vpack.c.b16 %v6972, %v6972
      %v6989 = vpack.c.b16 %v6973, %v6973
      %v6990 = vpack.c.b16 %v6974, %v6974
      %v6991 = vpack.c.b16 %v6975, %v6975
      %v6992 = vpack.c.b16 %v6976, %v6976
      %v6993 = vpack.c.b16 %v6977, %v6977
      %v6994 = vpack.c.b16 %v6978, %v6978
      %v6995 = vpack.c.b16 %v6979, %v6979
      %v6996 = vpack.c.b16 %v6980, %v6980
      %v6997 = vpack.c.b16 %v6981, %v6981
      %v6998 = vpack.c.b16 %v6982, %v6982
      %v6999 = vpack.c.b16 %v6983, %v6983
      %v7000 = vpack.c.b16 %v6984, %v6984
      %v7001 = vpack.c.b16 %v6985, %v6985
      %v7002 = vpack.c.b16 %v6986, %v6986
      %v7004 = vshrl.u32 %v6987, 16
      %v7006 = vrot.slane %v7004, 4
      %v7007 = vshll.u32 %v6987, 16
      %v7009 = vrot.slane %v7007, 5
      %v7010 = vor.u32 %v7006, %v7009
      %v7011 = vrot.slane %v7010, 4
      %v7013 = vshll.u32 %v6988, 16
      %v7015 = vrot.slane %v7013, 5
      %v7016 = vsel %vm952, %v7011, %v7015
      %v7018 = vshrl.u32 %v6989, 16
      %v7020 = vrot.slane %v7018, 4
      %v7021 = vshll.u32 %v6989, 16
      %v7023 = vrot.slane %v7021, 5
      %v7024 = vor.u32 %v7020, %v7023
      %v7025 = vrot.slane %v7024, 4
      %v7027 = vshll.u32 %v6990, 16
      %v7029 = vrot.slane %v7027, 5
      %v7030 = vsel %vm952, %v7025, %v7029
      %v7032 = vshrl.u32 %v6991, 16
      %v7034 = vrot.slane %v7032, 4
      %v7035 = vshll.u32 %v6991, 16
      %v7037 = vrot.slane %v7035, 5
      %v7038 = vor.u32 %v7034, %v7037
      %v7039 = vrot.slane %v7038, 4
      %v7041 = vshll.u32 %v6992, 16
      %v7043 = vrot.slane %v7041, 5
      %v7044 = vsel %vm952, %v7039, %v7043
      %v7046 = vshrl.u32 %v6993, 16
      %v7048 = vrot.slane %v7046, 4
      %v7049 = vshll.u32 %v6993, 16
      %v7051 = vrot.slane %v7049, 5
      %v7052 = vor.u32 %v7048, %v7051
      %v7053 = vrot.slane %v7052, 4
      %v7055 = vshll.u32 %v6994, 16
      %v7057 = vrot.slane %v7055, 5
      %v7058 = vsel %vm952, %v7053, %v7057
      %v7060 = vshrl.u32 %v6995, 16
      %v7062 = vrot.slane %v7060, 4
      %v7063 = vshll.u32 %v6995, 16
      %v7065 = vrot.slane %v7063, 5
      %v7066 = vor.u32 %v7062, %v7065
      %v7067 = vrot.slane %v7066, 4
      %v7069 = vshll.u32 %v6996, 16
      %v7071 = vrot.slane %v7069, 5
      %v7072 = vsel %vm952, %v7067, %v7071
      %v7074 = vshrl.u32 %v6997, 16
      %v7076 = vrot.slane %v7074, 4
      %v7077 = vshll.u32 %v6997, 16
      %v7079 = vrot.slane %v7077, 5
      %v7080 = vor.u32 %v7076, %v7079
      %v7081 = vrot.slane %v7080, 4
      %v7083 = vshll.u32 %v6998, 16
      %v7085 = vrot.slane %v7083, 5
      %v7086 = vsel %vm952, %v7081, %v7085
      %v7088 = vshrl.u32 %v6999, 16
      %v7090 = vrot.slane %v7088, 4
      %v7091 = vshll.u32 %v6999, 16
      %v7093 = vrot.slane %v7091, 5
      %v7094 = vor.u32 %v7090, %v7093
      %v7095 = vrot.slane %v7094, 4
      %v7097 = vshll.u32 %v7000, 16
      %v7099 = vrot.slane %v7097, 5
      %v7100 = vsel %vm952, %v7095, %v7099
      %v7102 = vshrl.u32 %v7001, 16
      %v7104 = vrot.slane %v7102, 4
      %v7105 = vshll.u32 %v7001, 16
      %v7107 = vrot.slane %v7105, 5
      %v7108 = vor.u32 %v7104, %v7107
      %v7109 = vrot.slane %v7108, 4
      %v7111 = vshll.u32 %v7002, 16
      %v7113 = vrot.slane %v7111, 5
      %v7114 = vsel %vm952, %v7109, %v7113
      %7115 = vrot.lane.b32.xlu0 %v7016, 20
      %v7116 = vpop.permute.xlu0 %7115
      %7117 = vrot.lane.b32.xlu0 %v7030, 20
      %v7118 = vpop.permute.xlu0 %7117
      %7119 = vrot.lane.b32.xlu0 %v7044, 20
      %v7120 = vpop.permute.xlu0 %7119
      %7121 = vrot.lane.b32.xlu0 %v7058, 20
      %v7122 = vpop.permute.xlu0 %7121
      %7123 = vrot.lane.b32.xlu0 %v7072, 20
      %v7124 = vpop.permute.xlu0 %7123
      %7125 = vrot.lane.b32.xlu0 %v7086, 20
      %v7126 = vpop.permute.xlu0 %7125
      %7127 = vrot.lane.b32.xlu0 %v7100, 20
      %v7128 = vpop.permute.xlu0 %7127
      %7129 = vrot.lane.b32.xlu0 %v7114, 20
      %v7130 = vpop.permute.xlu0 %7129
      %7139 = vst.msk [vmem:[#allocation3] sm:$0xf] %vm1740, %v7116
      %7140 = vst.msk [vmem:[#allocation3 + $0x4] sm:$0xf] %vm1740, %v7118
      %7141 = vst.msk [vmem:[#allocation3 + $0x8] sm:$0xf] %vm1740, %v7120
      %7142 = vst.msk [vmem:[#allocation3 + $0xc] sm:$0xf] %vm1740, %v7122
      %7143 = vst.msk [vmem:[#allocation3 + $0x10] sm:$0xf] %vm1740, %v7124
      %7144 = vst.msk [vmem:[#allocation3 + $0x14] sm:$0xf] %vm1740, %v7126
      %7145 = vst.msk [vmem:[#allocation3 + $0x18] sm:$0xf] %vm1740, %v7128
      %7146 = vst.msk [vmem:[#allocation3 + $0x1c] sm:$0xf] %vm1740, %v7130
      %v7147 = vpack.c.bf16 %v6665, %v6665
      %v7156 = vunpack.c.l.b16 %v6668
      %v7157 = vunpack.c.l.b16 %v6669
      %v7158 = vunpack.c.l.b16 %v6670
      %v7159 = vunpack.c.l.b16 %v6671
      %v7160 = vunpack.c.l.b16 %v6672
      %v7161 = vunpack.c.l.b16 %v6673
      %v7162 = vunpack.c.l.b16 %v6674
      %v7163 = vunpack.c.l.b16 %v7147
      %v7164 = vpack.c.b16 %v7156, %v7156
      %v7165 = vpack.c.b16 %v7157, %v7157
      %v7166 = vpack.c.b16 %v7158, %v7158
      %v7167 = vpack.c.b16 %v7159, %v7159
      %v7168 = vpack.c.b16 %v7160, %v7160
      %v7169 = vpack.c.b16 %v7161, %v7161
      %v7170 = vpack.c.b16 %v7162, %v7162
      %v7171 = vpack.c.b16 %v7163, %v7163
      %7172 = vrot.lane.b32.xlu0 %v7164, 24
      %v7173 = vpop.permute.xlu0 %7172
      %7174 = vrot.lane.b32.xlu0 %v7165, 24
      %v7175 = vpop.permute.xlu0 %7174
      %7176 = vrot.lane.b32.xlu0 %v7166, 24
      %v7177 = vpop.permute.xlu0 %7176
      %7178 = vrot.lane.b32.xlu0 %v7167, 24
      %v7179 = vpop.permute.xlu0 %7178
      %7180 = vrot.lane.b32.xlu0 %v7168, 24
      %v7181 = vpop.permute.xlu0 %7180
      %7182 = vrot.lane.b32.xlu0 %v7169, 24
      %v7183 = vpop.permute.xlu0 %7182
      %7184 = vrot.lane.b32.xlu0 %v7170, 24
      %v7185 = vpop.permute.xlu0 %7184
      %7186 = vrot.lane.b32.xlu0 %v7171, 24
      %v7187 = vpop.permute.xlu0 %7186
      %7196 = vst.msk [vmem:[#allocation3] sm:$0xf] %vm1838, %v7173
      %7197 = vst.msk [vmem:[#allocation3 + $0x4] sm:$0xf] %vm1838, %v7175
      %7198 = vst.msk [vmem:[#allocation3 + $0x8] sm:$0xf] %vm1838, %v7177
      %7199 = vst.msk [vmem:[#allocation3 + $0xc] sm:$0xf] %vm1838, %v7179
      %7200 = vst.msk [vmem:[#allocation3 + $0x10] sm:$0xf] %vm1838, %v7181
      %7201 = vst.msk [vmem:[#allocation3 + $0x14] sm:$0xf] %vm1838, %v7183
      %7202 = vst.msk [vmem:[#allocation3 + $0x18] sm:$0xf] %vm1838, %v7185
      %7203 = vst.msk [vmem:[#allocation3 + $0x1c] sm:$0xf] %vm1838, %v7187
      %7204 = vst.msk [vmem:[#allocation3] sm:$0xf] %vm1935, %v7173
      %7205 = vst.msk [vmem:[#allocation3 + $0x4] sm:$0xf] %vm1935, %v7175
      %7206 = vst.msk [vmem:[#allocation3 + $0x8] sm:$0xf] %vm1935, %v7177
      %7207 = vst.msk [vmem:[#allocation3 + $0xc] sm:$0xf] %vm1935, %v7179
      %7208 = vst.msk [vmem:[#allocation3 + $0x10] sm:$0xf] %vm1935, %v7181
      %7209 = vst.msk [vmem:[#allocation3 + $0x14] sm:$0xf] %vm1935, %v7183
      %7210 = vst.msk [vmem:[#allocation3 + $0x18] sm:$0xf] %vm1935, %v7185
      %7211 = vst.msk [vmem:[#allocation3 + $0x1c] sm:$0xf] %vm1935, %v7187
      %v7212 = vpack.c.bf16 %v6666, %v6665
      %v7214 = vunpack.c.l.b16 %v7212
      %v7215 = vunpack.c.h.b16 %v7212
      %v7216 = vpack.c.b16 %v7214, %v7214
      %v7217 = vpack.c.b16 %v7215, %v7215
      %v7219 = vshrl.u32 %v7216, 16
      %v7221 = vrot.slane %v7219, 4
      %v7222 = vshll.u32 %v7216, 16
      %v7224 = vrot.slane %v7222, 5
      %v7225 = vor.u32 %v7221, %v7224
      %v7226 = vrot.slane %v7225, 4
      %v7228 = vshll.u32 %v7217, 16
      %v7230 = vrot.slane %v7228, 5
      %v7231 = vsel %vm952, %v7226, %v7230
      %7232 = vrot.lane.b32.xlu0 %v6766, 32
      %v7233 = vpop.permute.xlu0 %7232
      %7234 = vrot.lane.b32.xlu0 %v6780, 32
      %v7235 = vpop.permute.xlu0 %7234
      %7236 = vrot.lane.b32.xlu0 %v6794, 32
      %v7237 = vpop.permute.xlu0 %7236
      %7238 = vrot.lane.b32.xlu0 %v6808, 32
      %v7239 = vpop.permute.xlu0 %7238
      %7240 = vrot.lane.b32.xlu0 %v6822, 32
      %v7241 = vpop.permute.xlu0 %7240
      %7242 = vrot.lane.b32.xlu0 %v6836, 32
      %v7243 = vpop.permute.xlu0 %7242
      %7244 = vrot.lane.b32.xlu0 %v6850, 32
      %v7245 = vpop.permute.xlu0 %7244
      %7246 = vrot.lane.b32.xlu0 %v7231, 32
      %v7247 = vpop.permute.xlu0 %7246
      %7256 = vst.msk [vmem:[#allocation3] sm:$0xf] %vm2256, %v7233
      %7257 = vst.msk [vmem:[#allocation3 + $0x4] sm:$0xf] %vm2256, %v7235
      %7258 = vst.msk [vmem:[#allocation3 + $0x8] sm:$0xf] %vm2256, %v7237
      %7259 = vst.msk [vmem:[#allocation3 + $0xc] sm:$0xf] %vm2256, %v7239
      %7260 = vst.msk [vmem:[#allocation3 + $0x10] sm:$0xf] %vm2256, %v7241
      %7261 = vst.msk [vmem:[#allocation3 + $0x14] sm:$0xf] %vm2256, %v7243
      %7262 = vst.msk [vmem:[#allocation3 + $0x18] sm:$0xf] %vm2256, %v7245
      %7263 = vst.msk [vmem:[#allocation3 + $0x1c] sm:$0xf] %vm2256, %v7247
      %v7264 = vld [vmem:[#allocation3] sm:$0xf]
      %v7265 = vld [vmem:[#allocation3 + $0x4] sm:$0xf]
      %v7266 = vld [vmem:[#allocation3 + $0x8] sm:$0xf]
      %v7267 = vld [vmem:[#allocation3 + $0xc] sm:$0xf]
      %v7268 = vld [vmem:[#allocation3 + $0x10] sm:$0xf]
      %v7269 = vld [vmem:[#allocation3 + $0x14] sm:$0xf]
      %v7270 = vld [vmem:[#allocation3 + $0x18] sm:$0xf]
      %v7271 = vld [vmem:[#allocation3 + $0x1c] sm:$0xf]
      %v7272 = vld [vmem:[%s3] sm:$0xf]
      %v7273 = vld [vmem:[%s3 + $0x4] sm:$0xf]
      %v7274 = vld [vmem:[%s3 + $0x8] sm:$0xf]
      %v7275 = vld [vmem:[%s3 + $0xc] sm:$0xf]
      %v7276 = vld [vmem:[%s3 + $0x10] sm:$0x3]
      %v7277 = vld [vmem:[%s4] sm:$0x1]
      %v7279 = vlaneseq
      %v7280 = vshrl.u32 %v7279, 7
      %v7281 = vsub.s32 0, %v7280
      %v7282 = vrot.slane %v7277, %v7281
      %v7292 = vunpack.c.l.b16 %v7264
      %v7293 = vunpack.c.l.b16 %v7265
      %v7294 = vunpack.c.l.b16 %v7266
      %v7295 = vunpack.c.l.b16 %v7267
      %v7296 = vunpack.c.l.b16 %v7268
      %v7297 = vunpack.c.l.b16 %v7269
      %v7298 = vunpack.c.l.b16 %v7270
      %v7299 = vunpack.c.l.b16 %v7271
      %v7300 = vpack.c.b16 %v7293, %v7292
      %v7301 = vpack.c.b16 %v7295, %v7294
      %v7302 = vpack.c.b16 %v7297, %v7296
      %v7303 = vpack.c.b16 %v7299, %v7298
      %v7309 = vunpack.c.l.b16 %v7272
      %v7310 = vunpack.c.l.b16 %v7273
      %v7311 = vunpack.c.l.b16 %v7274
      %v7312 = vunpack.c.l.b16 %v7275
      %v7313 = vunpack.c.l.b16 %v7276
      %v7314 = vpack.c.b16 %v7310, %v7309
      %v7315 = vpack.c.b16 %v7312, %v7311
      %v7316 = vpack.c.b16 %v7313, %v7313
      %v7320 = vsel %vm4621, %v7300, 0
      %v7323 = vsel %vm4621, %v7301, 0
      %v7326 = vsel %vm4621, %v7302, 0
      %v7329 = vsel %vm4621, %v7303, 0
      %v7332 = vsel %vm4670, %v7316, 0
      %7334 = vmatprep.subr.bf16.mxu0 0
      %7335 = vmatpush1.bf16.msra.mxu0 %v7314
      %7336 = vmatprep.subr.bf16.mxu0 0
      %7337 = vmatpush1.bf16.msra.mxu0 %v7315
      %7338 = vmatprep.subr.bf16.mxu0 0
      %7339 = vmatpush1.bf16.msra.mxu0 %v7332
      %7340 = vmatprep.subr.bf16.mxu0 0
      %7341 = vmatpush1.bf16.msra.mxu0 0
      %7342 = vmatprep.subr.bf16.mxu0 0
      %7343 = vmatpush1.bf16.msra.mxu0 0
      %7344 = vmatprep.subr.bf16.mxu0 0
      %7345 = vmatpush1.bf16.msra.mxu0 0
      %7346 = vmatprep.subr.bf16.mxu0 0
      %7347 = vmatpush1.bf16.msra.mxu0 0
      %7348 = vmatprep.subr.bf16.mxu0 0
      %7349 = vmatpush1.bf16.msra.mxu0 0
      %7350 = vmatprep.subr.bf16.mxu0 0
      %7351 = vmatpush1.bf16.msra.mxu0 0
      %7352 = vmatprep.subr.bf16.mxu0 0
      %7353 = vmatpush1.bf16.msra.mxu0 0
      %7354 = vmatprep.subr.bf16.mxu0 0
      %7355 = vmatpush1.bf16.msra.mxu0 0
      %7356 = vmatprep.subr.bf16.mxu0 0
      %7357 = vmatpush1.bf16.msra.mxu0 0
      %7358 = vmatprep.subr.bf16.mxu0 0
      %7359 = vmatpush1.bf16.msra.mxu0 0
      %7360 = vmatprep.subr.bf16.mxu0 0
      %7361 = vmatpush1.bf16.msra.mxu0 0
      %7362 = vmatprep.subr.bf16.mxu0 0
      %7363 = vmatpush1.bf16.msra.mxu0 0
      %7364 = vmatprep.subr.bf16.mxu0 0
      %7365 = vmatpush1.bf16.msra.mxu0 0
      %7366 = vmatprep.mubr.bf16.mxu0 0
      %7367 = vmatmul.mubr.bf16.gmra.mrb[0].mxu0 %v7320
      %v7368 = vpop.f32.mrb[0].mxu0
      %v7369 = vadd.f32 %v7282, %v7368
      %v7370 = vpop.f32.mrb[0].mxu0
      %v7371 = vpop.f32.mrb[0].mxu0
      %v7372 = vadd.f32 %v7282, %v7371
      %v7373 = vpop.f32.mrb[0].mxu0
      %7374 = vmatprep.mubr.bf16.mxu0 0
      %7375 = vmatmul.mubr.bf16.gmra.mrb[0].mxu0 %v7323
      %v7376 = vpop.f32.mrb[0].mxu0
      %v7377 = vadd.f32 %v7282, %v7376
      %v7378 = vpop.f32.mrb[0].mxu0
      %v7379 = vpop.f32.mrb[0].mxu0
      %v7380 = vadd.f32 %v7282, %v7379
      %v7381 = vpop.f32.mrb[0].mxu0
      %7382 = vmatprep.mubr.bf16.mxu0 0
      %7383 = vmatmul.mubr.bf16.gmra.mrb[0].mxu0 %v7326
      %v7384 = vpop.f32.mrb[0].mxu0
      %v7385 = vadd.f32 %v7282, %v7384
      %v7386 = vpop.f32.mrb[0].mxu0
      %v7387 = vpop.f32.mrb[0].mxu0
      %v7388 = vadd.f32 %v7282, %v7387
      %v7389 = vpop.f32.mrb[0].mxu0
      %7390 = vmatprep.mubr.bf16.mxu0 0
      %7391 = vmatmul.mubr.bf16.gmra.mrb[0].mxu0 %v7329
      %v7392 = vpop.f32.mrb[0].mxu0
      %v7393 = vadd.f32 %v7282, %v7392
      %v7394 = vpop.f32.mrb[0].mxu0
      %v7395 = vpop.f32.mrb[0].mxu0
      %v7396 = vadd.f32 %v7282, %v7395
      %v7397 = vpop.f32.mrb[0].mxu0
      %7398 = vdwg.mxu0
      %vm7399 = vcmp.ge.f32.partialorder %v7369, 0.0
      %vm7400 = vcmp.ge.f32.partialorder %v7372, 0.0
      %vm7401 = vcmp.ge.f32.partialorder %v7377, 0.0
      %vm7402 = vcmp.ge.f32.partialorder %v7380, 0.0
      %vm7403 = vcmp.ge.f32.partialorder %v7385, 0.0
      %vm7404 = vcmp.ge.f32.partialorder %v7388, 0.0
      %vm7405 = vcmp.ge.f32.partialorder %v7393, 0.0
      %vm7406 = vcmp.ge.f32.partialorder %v7396, 0.0
      %v7407 = vsel %vm7399, 1.4142135, 0.28284273
      %v7408 = vsel %vm7400, 1.4142135, 0.28284273
      %v7409 = vsel %vm7401, 1.4142135, 0.28284273
      %v7410 = vsel %vm7402, 1.4142135, 0.28284273
      %v7411 = vsel %vm7403, 1.4142135, 0.28284273
      %v7412 = vsel %vm7404, 1.4142135, 0.28284273
      %v7413 = vsel %vm7405, 1.4142135, 0.28284273
      %v7414 = vsel %vm7406, 1.4142135, 0.28284273
      %v7415 = vmul.f32 %v7369, %v7407
      %v7416 = vmul.f32 %v7372, %v7408
      %v7417 = vmul.f32 %v7377, %v7409
      %v7418 = vmul.f32 %v7380, %v7410
      %v7419 = vmul.f32 %v7385, %v7411
      %v7420 = vmul.f32 %v7388, %v7412
      %v7421 = vmul.f32 %v7393, %v7413
      %v7422 = vmul.f32 %v7396, %v7414
      %7423 = vst.msk [vmem:[%s224] sm:$0xff] %vm4931, %v7415
      %7424 = vst.msk [vmem:[%s224 + $0x8] sm:$0xff] %vm4931, %v7416
      %7425 = vst.msk [vmem:[%s224 + $0x10] sm:$0xff] %vm4931, %v7417
      %7426 = vst.msk [vmem:[%s224 + $0x18] sm:$0xff] %vm4931, %v7418
      %7427 = vst.msk [vmem:[%s224 + $0x20] sm:$0xff] %vm4931, %v7419
      %7428 = vst.msk [vmem:[%s224 + $0x28] sm:$0xff] %vm4931, %v7420
      %7429 = vst.msk [vmem:[%s224 + $0x30] sm:$0xff] %vm4931, %v7421
      %7430 = vst.msk [vmem:[%s224 + $0x38] sm:$0xff] %vm4931, %v7422
      %p7431 = scmp.lt.s32.totalorder %s16, 1
      %s7432 = scalar_select %p7431, %s16, 1
      %s7433 = smul.addr %s7432, 8
      %s7434 = smul.addr %s7433, 8
      %s7435 = scalar_lea.vmem %s5, %s7434
      // Predicated region
      $region41: #{disc_block_forward.1} parent=39 // pred_check
        %p7436 = pneg %p144
      $region42: #{disc_block_forward.1} parent=39 // pred_check_branch
        %7438 = sbr.rel (%p7436) target = $region44
      $region43: #{disc_block_forward.1} parent=39 // pred_region
        _
      $region44: #{disc_block_forward.1} parent=39 // pred_fallthru
        _
    $region40: #{disc_block_forward.1} parent=5 // pred_fallthru
      _
    %p7439 = scmp.le.s32.totalorder 2, %s11
    // Predicated region
    $region45: #{disc_block_forward.1} parent=5 // pred_check
      %p7440 = pneg %p7439
    $region46: #{disc_block_forward.1} parent=5 // pred_check_branch
      %7442 = sbr.rel (%p7440) target = $region48
    $region47: #{disc_block_forward.1} parent=5 // pred_region
      %s7443 = ssub.s32 %s11, 2
      // Predicated region
      $region49: #{disc_block_forward.1} parent=47 // pred_check
        %p7444 = pneg %p150
      $region50: #{disc_block_forward.1} parent=47 // pred_check_branch
        %7446 = sbr.rel (%p7444) target = $region52
      $region51: #{disc_block_forward.1} parent=47 // pred_region
        %p7447 = scmp.lt.s32.totalorder %s17, 1
        %s7448 = scalar_select %p7447, %s17, 1
        %s7449 = smul.addr %s7448, 8
        %s7450 = smul.addr %s7449, 8
        %s7451 = scalar_lea.vmem %s5, %s7450
      $region52: #{disc_block_forward.1} parent=47 // pred_fallthru
        _
    $region48: #{disc_block_forward.1} parent=5 // pred_fallthru
      _
  $region6: #{disc_block_forward.1} parent=0 // loop_footer
    %s15 = sadd.s32 1, %s11
  $region7: #{disc_block_forward.1} parent=0 // loop_footer_branch
    %10 = sbr.rel target = $region3
  $region8: #{disc_block_forward.1} parent=0 // loop_exit
    _

</llo_original>
